<compile_context>
chip_gen: v7x
topology: tpu7x:2x2x1
jax: 0.10.0
libtpu: 0.0.40
codegen_flags: <defaults>
</compile_context>

<pallas_src>
import functools

import jax
import jax.numpy as jnp
from jax.experimental import pallas as pl
from jax.experimental.pallas import tpu as pltpu


# ----------------------------- hyper-parameters ------------------------------
OBS_LEN = 8
PRED_LEN = 8          # seq_len used by the decoder loop
BATCH = 4
EMB = 32              # embedding_dim
H_ENC = 32            # encoder_h_dim
H_DEC = 64            # decoder_h_dim
MLP = 128             # mlp_dim
GOAL = 2              # goal_first_dim
BN_EPS = 1e-5


# ------------------------------ fused Pallas kernel --------------------------
def trajectory_intention_kernel(
        obs_flat_ref,                      # (T_obs*B, 2)    observed rel trajectory (flattened)
        goal_ref,                          # (B, 2)          goal input
        enc_wx_ref, enc_bx_ref,            # (2, 4*H_enc), (1, 4*H_enc)  folded emb->W_ih
        enc_whh_ref,                       # (4, H_enc, H_enc)
        ctx_w1_ref, ctx_b1_ref,            # (H_enc, MLP), (1, MLP)       BN folded in
        ctx_w2_ref, ctx_b2_ref,            # (MLP, H_dec-2), (1, H_dec-2) BN folded in
        dec_wlpr_ref, dec_blpr_ref,        # (2, 4*H_dec), (1, 4*H_dec)   folded emb->W_ih
        dec_whh_ctx_ref, dec_whh_goal_ref, # (H_dec-2, 4*H_dec), (2, 4*H_dec)
        dec_wcomb_ref, dec_bcomb_ref,      # (4, H_dec, H_dec), (4, 1, H_dec) pos->emb->W_ih + W_hh
        dec_posw_ref, dec_posb_ref,        # (H_dec, 2), (1, 2)
        out_ref,                           # (T_pred*B, 2)
        h_scr):                            # VMEM scratch (T_pred*B, H_dec)
    B = goal_ref.shape[0]
    H_enc = enc_whh_ref.shape[1]
    H_dec = dec_wcomb_ref.shape[1]
    T_obs = obs_flat_ref.shape[0] // B
    T_pred = out_ref.shape[0] // B
    f32 = jnp.float32

    def dot(a, b):
        return jnp.dot(a, b, preferred_element_type=f32)

    # ------------------------------- Encoder ----------------------------------
    obs_flat = obs_flat_ref[...]
    # Hoisted input path: ONE lane-dense (T*B,2)@(2,4*H_enc) matmul (4*H_enc == 128 lanes)
    # replaces the per-step embedding + input projection inside the serial recurrence.
    xg_all = dot(obs_flat, enc_wx_ref[...]) + enc_bx_ref[...]          # (T*B, 4*H_enc)
    xg = [xg_all[:, k * H_enc:(k + 1) * H_enc] for k in range(4)]      # one-time lane split
    e_whh = [enc_whh_ref[k] for k in range(4)]

    h = jnp.zeros((B, H_enc), f32)
    c = jnp.zeros((B, H_enc), f32)
    for t in range(T_obs):                 # static trip count -> fully unrolled
        r0, r1 = t * B, (t + 1) * B
        gi = xg[0][r0:r1, :] + dot(h, e_whh[0])
        gf = xg[1][r0:r1, :] + dot(h, e_whh[1])
        gg = xg[2][r0:r1, :] + dot(h, e_whh[2])
        go = xg[3][r0:r1, :] + dot(h, e_whh[3])
        c = jax.nn.sigmoid(gf) * c + jax.nn.sigmoid(gi) * jnp.tanh(gg)
        h = jax.nn.sigmoid(go) * jnp.tanh(c)

    # ---------------- mlp_decoder_context (BatchNorm folded in) ----------------
    m = jnp.maximum(dot(h, ctx_w1_ref[...]) + ctx_b1_ref[...], 0.0)
    noise = jnp.maximum(dot(m, ctx_w2_ref[...]) + ctx_b2_ref[...], 0.0)   # (B, H_dec-2)
    goal = goal_ref[...]                                                  # (B, 2)

    # ------------------------------- Decoder -----------------------------------
    # add_goal concat folded into the step-0 gates:
    #   h0 @ W_hh == noise @ W_hh[:H-2, :] + goal @ W_hh[H-2:, :]
    # Step-0 gates are 3 lane-dense matmuls with 4*H_dec-wide outputs (one-time cost,
    # off the serial critical path), then split per gate once.
    lpr = obs_flat[(T_obs - 1) * B:T_obs * B, :]           # last_pos_rel (B, 2)
    g0_all = (dot(lpr, dec_wlpr_ref[...]) + dec_blpr_ref[...]
              + dot(noise, dec_whh_ctx_ref[...]) + dot(goal, dec_whh_goal_ref[...]))
    g0 = [g0_all[:, k * H_dec:(k + 1) * H_dec] for k in range(4)]
    wcomb = [dec_wcomb_ref[k] for k in range(4)]
    bcomb = [dec_bcomb_ref[k] for k in range(4)]

    c_d = jnp.zeros((B, H_dec), f32)
    h_d = None
    for t in range(T_pred):                # static trip count -> fully unrolled
        if t == 0:
            gi, gf, gg, go = g0
        else:
            # hidden2pos + spatial_embedding + input projection are folded into
            # W_comb, so each step is a single (B,H)@(H,H) matmul per gate.
            gi = dot(h_d, wcomb[0]) + bcomb[0]
            gf = dot(h_d, wcomb[1]) + bcomb[1]
            gg = dot(h_d, wcomb[2]) + bcomb[2]
            go = dot(h_d, wcomb[3]) + bcomb[3]
        c_d = jax.nn.sigmoid(gf) * c_d + jax.nn.sigmoid(gi) * jnp.tanh(gg)
        h_d = jax.nn.sigmoid(go) * jnp.tanh(c_d)
        h_scr[t * B:(t + 1) * B, :] = h_d  # stash hidden state; off the critical path

    # Batched hidden2pos: one (T*B, H) @ (H, 2) matmul + one store (no per-step stores).
    out_ref[...] = dot(h_scr[...], dec_posw_ref[...]) + dec_posb_ref[...]


# ------------------------------- JAX wrapper ----------------------------------
@functools.partial(jax.jit, static_argnames=("seq_len",))
def trajectory_intention_forward(folded, obs_traj, obs_traj_rel, goal_input,
                                 seq_len=PRED_LEN):
    """Full TrajectoryIntention.forward. Returns pred_traj_fake_rel (seq_len, B, 2).

    obs_traj is unused by this forward (only needed by pooling, which is disabled)."""
    del obs_traj
    T_obs, B, _ = obs_traj_rel.shape
    obs_flat = obs_traj_rel.reshape(T_obs * B, 2)          # free layout reshape in XLA
    vmem = pl.BlockSpec(memory_space=pltpu.MemorySpace.VMEM)

    out_flat = pl.pallas_call(
        trajectory_intention_kernel,
        out_shape=jax.ShapeDtypeStruct((seq_len * B, 2), jnp.float32),
        in_specs=[vmem] * 17,
        out_specs=vmem,
        scratch_shapes=[pltpu.VMEM((seq_len * B, H_DEC), jnp.float32)],
    )(obs_flat, goal_input.reshape(B, GOAL),
      folded["enc_wx"], folded["enc_bx"], folded["enc_whh"],
      folded["ctx_w1"], folded["ctx_b1"], folded["ctx_w2"], folded["ctx_b2"],
      folded["dec_wlpr"], folded["dec_blpr"],
      folded["dec_whh_ctx"], folded["dec_whh_goal"],
      folded["dec_wcomb"], folded["dec_bcomb"],
      folded["dec_posw"], folded["dec_posb"])
    return out_flat.reshape(seq_len, B, 2)


# ----------------------- host-side weight folding (fp32) -----------------------
def _split_gates(w, h):
    """(in, 4h) -> (4, in, h), stacked per LSTM gate (i, f, g, o)."""
    return jnp.stack([w[:, k * h:(k + 1) * h] for k in range(4)], axis=0)


def fold_params(p):
    f = {}
    # Encoder: fold spatial_embedding Linear(2,E) into the LSTM input projection.
    # Kept gate-concatenated (2, 4*H_ENC) so the batched input path is one lane-dense matmul.
    f["enc_wx"] = p["enc_emb_w"] @ p["enc_w_ih"]                  # (2, 4*H_ENC)
    f["enc_bx"] = p["enc_emb_b"] @ p["enc_w_ih"] + p["enc_b"]     # (1, 4*H_ENC)
    f["enc_whh"] = _split_gates(p["enc_w_hh"], H_ENC)             # per-gate for the recurrence
    # mlp_decoder_context: fold eval-mode BatchNorm scale/shift into the Linear.
    f["ctx_w1"] = p["ctx_w1"] * p["ctx_s1"]
    f["ctx_b1"] = p["ctx_b1"] * p["ctx_s1"] + p["ctx_t1"]
    f["ctx_w2"] = p["ctx_w2"] * p["ctx_s2"]
    f["ctx_b2"] = p["ctx_b2"] * p["ctx_s2"] + p["ctx_t2"]
    # Decoder:
    #   step 0 input: (last_pos_rel @ W_emb + b_emb) @ W_ih + b  ->  lpr @ W_lpr + b_lpr
    #   steps >=1:    x_{t+1} = (h_{t+1} @ W_pos + b_pos) @ W_emb + b_emb
    #                 gates   = h @ (W_pos@W_emb@W_ih + W_hh) + b_comb
    f["dec_wlpr"] = p["dec_emb_w"] @ p["dec_w_ih"]                               # (2, 4*H_DEC)
    f["dec_blpr"] = p["dec_emb_b"] @ p["dec_w_ih"] + p["dec_b"]                  # (1, 4*H_DEC)
    # Split W_hh rows so the goal-concat can be folded into the step-0 gates.
    f["dec_whh_ctx"] = p["dec_w_hh"][:H_DEC - GOAL, :]                           # (H_DEC-2, 4*H_DEC)
    f["dec_whh_goal"] = p["dec_w_hh"][H_DEC - GOAL:, :]                          # (2, 4*H_DEC)
    dec_wcomb = p["dec_pos_w"] @ p["dec_emb_w"] @ p["dec_w_ih"] + p["dec_w_hh"]
    dec_bcomb = (p["dec_pos_b"] @ p["dec_emb_w"] + p["dec_emb_b"]) @ p["dec_w_ih"] + p["dec_b"]
    f["dec_wcomb"] = _split_gates(dec_wcomb, H_DEC)               # per-gate for the recurrence
    f["dec_bcomb"] = _split_gates(dec_bcomb, H_DEC)
    f["dec_posw"] = p["dec_pos_w"]
    f["dec_posb"] = p["dec_pos_b"]
    return jax.tree_util.tree_map(lambda a: a.astype(jnp.float32), f)


# --------------------------- pure-JAX reference -------------------------------
def _lstm_step(x, h, c, w_ih, w_hh, b):
    H = h.shape[1]
    gates = x @ w_ih + h @ w_hh + b
    i = jax.nn.sigmoid(gates[:, 0:H])
    f = jax.nn.sigmoid(gates[:, H:2 * H])
    g = jnp.tanh(gates[:, 2 * H:3 * H])
    o = jax.nn.sigmoid(gates[:, 3 * H:4 * H])
    c = f * c + i * g
    h = o * jnp.tanh(c)
    return h, c


def reference_forward(params, obs_traj, obs_traj_rel, goal_input, seq_len=PRED_LEN):
    B = obs_traj_rel.shape[1]
    h = jnp.zeros((B, H_ENC), jnp.float32)
    c = jnp.zeros((B, H_ENC), jnp.float32)
    for t in range(obs_traj_rel.shape[0]):
        e = obs_traj_rel[t] @ params["enc_emb_w"] + params["enc_emb_b"]
        h, c = _lstm_step(e, h, c, params["enc_w_ih"], params["enc_w_hh"], params["enc_b"])

    x = h @ params["ctx_w1"] + params["ctx_b1"]
    x = jnp.maximum(x * params["ctx_s1"] + params["ctx_t1"], 0.0)
    x = x @ params["ctx_w2"] + params["ctx_b2"]
    x = jnp.maximum(x * params["ctx_s2"] + params["ctx_t2"], 0.0)

    dh = jnp.concatenate([x, goal_input.reshape(B, GOAL)], axis=1)
    dc = jnp.zeros((B, H_DEC), jnp.float32)
    xin = obs_traj_rel[-1] @ params["dec_emb_w"] + params["dec_emb_b"]
    outs = []
    for _ in range(seq_len):
        dh, dc = _lstm_step(xin, dh, dc, params["dec_w_ih"], params["dec_w_hh"], params["dec_b"])
        rel_pos = dh @ params["dec_pos_w"] + params["dec_pos_b"]
        outs.append(rel_pos)
        xin = rel_pos @ params["dec_emb_w"] + params["dec_emb_b"]
    return jnp.stack(outs, axis=0)


# -------------------------------- param init ----------------------------------
def init_params(key):
    ks = jax.random.split(key, 24)
    n = iter(range(24))

    def rnd(shape, scale=0.1):
        return (scale * jax.random.normal(ks[next(n)], shape)).astype(jnp.float32)

    p = {}
    # Encoder: spatial_embedding Linear(2, EMB); LSTM(EMB, H_ENC)
    p["enc_emb_w"] = rnd((2, EMB))
    p["enc_emb_b"] = rnd((1, EMB))
    p["enc_w_ih"] = rnd((EMB, 4 * H_ENC))
    p["enc_w_hh"] = rnd((H_ENC, 4 * H_ENC))
    p["enc_b"] = rnd((1, 4 * H_ENC))          # b_ih + b_hh combined

    # mlp_decoder_context: [H_ENC, MLP, H_DEC - GOAL], Linear + BN(eval) + ReLU.
    # BN (inference mode) folded to per-feature scale/shift from gamma,beta,running stats.
    def bn_fold(dim):
        gamma = rnd((1, dim), 1.0) + 1.0
        beta = rnd((1, dim))
        run_mean = rnd((1, dim))
        run_var = jnp.abs(rnd((1, dim), 1.0)) + 1.0
        scale = gamma / jnp.sqrt(run_var + BN_EPS)
        shift = beta - run_mean * scale
        return scale.astype(jnp.float32), shift.astype(jnp.float32)

    p["ctx_w1"] = rnd((H_ENC, MLP))
    p["ctx_b1"] = rnd((1, MLP))
    p["ctx_s1"], p["ctx_t1"] = bn_fold(MLP)
    p["ctx_w2"] = rnd((MLP, H_DEC - GOAL))
    p["ctx_b2"] = rnd((1, H_DEC - GOAL))
    p["ctx_s2"], p["ctx_t2"] = bn_fold(H_DEC - GOAL)

    # Decoder: spatial_embedding Linear(2, EMB); LSTM(EMB, H_DEC); hidden2pos Linear(H_DEC, 2)
    p["dec_emb_w"] = rnd((2, EMB))
    p["dec_emb_b"] = rnd((1, EMB))
    p["dec_w_ih"] = rnd((EMB, 4 * H_DEC))
    p["dec_w_hh"] = rnd((H_DEC, 4 * H_DEC))
    p["dec_b"] = rnd((1, 4 * H_DEC))
    p["dec_pos_w"] = rnd((H_DEC, 2))
    p["dec_pos_b"] = rnd((1, 2))
    return p


# ------------------------------------ main -------------------------------------
if __name__ == "__main__":
    key = jax.random.PRNGKey(0)
    k_param, k_abs, k_rel, k_goal = jax.random.split(key, 4)

    params = init_params(k_param)
    folded = fold_params(params)   # host-side fp32 weight folding, done once

    obs_traj = jax.random.normal(k_abs, (OBS_LEN, BATCH, 2), dtype=jnp.float32)
    obs_traj_rel = 0.5 * jax.random.normal(k_rel, (OBS_LEN, BATCH, 2), dtype=jnp.float32)
    goal_input = jax.random.normal(k_goal, (BATCH, 2), dtype=jnp.float32)
    # seq_start_end is only used by pooling (pool_every_timestep=False here) -> unused glue.

    out = trajectory_intention_forward(folded, obs_traj, obs_traj_rel, goal_input,
                                       seq_len=PRED_LEN)
    out = jax.block_until_ready(out)
    assert out.shape == (PRED_LEN, BATCH, 2), out.shape

    ref = reference_forward(params, obs_traj, obs_traj_rel, goal_input, seq_len=PRED_LEN)
    assert jnp.allclose(out, ref, atol=1e-4, rtol=1e-4), float(jnp.max(jnp.abs(out - ref)))

    print("KERNEL_OK")
</pallas_src>

<mosaic_0001>
module attributes {stable_mosaic.version = 11 : i64} {
  func.func @trajectory_intention_kernel(%arg0: memref<32x2xf32, #tpu.memory_space<vmem>>, %arg1: memref<4x2xf32, #tpu.memory_space<vmem>>, %arg2: memref<2x128xf32, #tpu.memory_space<vmem>>, %arg3: memref<1x128xf32, #tpu.memory_space<vmem>>, %arg4: memref<4x32x32xf32, #tpu.memory_space<vmem>>, %arg5: memref<32x128xf32, #tpu.memory_space<vmem>>, %arg6: memref<1x128xf32, #tpu.memory_space<vmem>>, %arg7: memref<128x62xf32, #tpu.memory_space<vmem>>, %arg8: memref<1x62xf32, #tpu.memory_space<vmem>>, %arg9: memref<2x256xf32, #tpu.memory_space<vmem>>, %arg10: memref<1x256xf32, #tpu.memory_space<vmem>>, %arg11: memref<62x256xf32, #tpu.memory_space<vmem>>, %arg12: memref<2x256xf32, #tpu.memory_space<vmem>>, %arg13: memref<4x64x64xf32, #tpu.memory_space<vmem>>, %arg14: memref<4x1x64xf32, #tpu.memory_space<vmem>>, %arg15: memref<64x2xf32, #tpu.memory_space<vmem>>, %arg16: memref<1x2xf32, #tpu.memory_space<vmem>>, %arg17: memref<32x2xf32, #tpu.memory_space<vmem>>, %arg18: memref<32x64xf32, #tpu.memory_space<vmem>>) attributes {dimension_semantics = [], scalar_prefetch = 0 : i64, scratch_operands = 1 : i64, tpu.core_type = #tpu.core_type<tc>} {
    %c0 = arith.constant 0 : index
    %c0_0 = arith.constant 0 : index
    %0 = vector.load %arg0[%c0, %c0_0] : memref<32x2xf32, #tpu.memory_space<vmem>>, vector<32x2xf32>
    %c0_1 = arith.constant 0 : index
    %c0_2 = arith.constant 0 : index
    %1 = vector.load %arg2[%c0_1, %c0_2] : memref<2x128xf32, #tpu.memory_space<vmem>>, vector<2x128xf32>
    %cst = arith.constant dense<0.000000e+00> : vector<32x128xf32>
    %2 = tpu.matmul %0, %1, %cst {dimension_numbers = #tpu.dot_dimension_numbers<[1], [0], [0], [1], [0, 0, 1, 1], [], []>} : vector<32x2xf32>, vector<2x128xf32>, vector<32x128xf32> -> vector<32x128xf32>
    %c0_3 = arith.constant 0 : index
    %c0_4 = arith.constant 0 : index
    %3 = vector.load %arg3[%c0_3, %c0_4] : memref<1x128xf32, #tpu.memory_space<vmem>>, vector<1x128xf32>
    %4 = vector.broadcast %3 : vector<1x128xf32> to vector<32x128xf32>
    %5 = arith.addf %2, %4 : vector<32x128xf32>
    %6 = vector.extract_strided_slice %5 {offsets = [0, 0], sizes = [32, 32], strides = [1, 1]} : vector<32x128xf32> to vector<32x32xf32>
    %7 = vector.extract_strided_slice %5 {offsets = [0, 32], sizes = [32, 32], strides = [1, 1]} : vector<32x128xf32> to vector<32x32xf32>
    %8 = vector.extract_strided_slice %5 {offsets = [0, 64], sizes = [32, 32], strides = [1, 1]} : vector<32x128xf32> to vector<32x32xf32>
    %9 = vector.extract_strided_slice %5 {offsets = [0, 96], sizes = [32, 32], strides = [1, 1]} : vector<32x128xf32> to vector<32x32xf32>
    %c0_5 = arith.constant 0 : index
    %c0_6 = arith.constant 0 : index
    %c0_7 = arith.constant 0 : index
    %10 = vector.load %arg4[%c0_5, %c0_6, %c0_7] : memref<4x32x32xf32, #tpu.memory_space<vmem>>, vector<1x32x32xf32>
    %11 = vector.shape_cast %10 : vector<1x32x32xf32> to vector<32x32xf32>
    %c1 = arith.constant 1 : index
    %c0_8 = arith.constant 0 : index
    %c0_9 = arith.constant 0 : index
    %12 = vector.load %arg4[%c1, %c0_8, %c0_9] : memref<4x32x32xf32, #tpu.memory_space<vmem>>, vector<1x32x32xf32>
    %13 = vector.shape_cast %12 : vector<1x32x32xf32> to vector<32x32xf32>
    %c2 = arith.constant 2 : index
    %c0_10 = arith.constant 0 : index
    %c0_11 = arith.constant 0 : index
    %14 = vector.load %arg4[%c2, %c0_10, %c0_11] : memref<4x32x32xf32, #tpu.memory_space<vmem>>, vector<1x32x32xf32>
    %15 = vector.shape_cast %14 : vector<1x32x32xf32> to vector<32x32xf32>
    %c3 = arith.constant 3 : index
    %c0_12 = arith.constant 0 : index
    %c0_13 = arith.constant 0 : index
    %16 = vector.load %arg4[%c3, %c0_12, %c0_13] : memref<4x32x32xf32, #tpu.memory_space<vmem>>, vector<1x32x32xf32>
    %17 = vector.shape_cast %16 : vector<1x32x32xf32> to vector<32x32xf32>
    %cst_14 = arith.constant 0.000000e+00 : f32
    %18 = vector.broadcast %cst_14 : f32 to vector<4x32xf32>
    %cst_15 = arith.constant 0.000000e+00 : f32
    %19 = vector.broadcast %cst_15 : f32 to vector<4x32xf32>
    %20 = vector.extract_strided_slice %6 {offsets = [0, 0], sizes = [4, 32], strides = [1, 1]} : vector<32x32xf32> to vector<4x32xf32>
    %cst_16 = arith.constant dense<0.000000e+00> : vector<4x32xf32>
    %21 = tpu.matmul %18, %11, %cst_16 {dimension_numbers = #tpu.dot_dimension_numbers<[1], [0], [0], [1], [0, 0, 1, 1], [], []>} : vector<4x32xf32>, vector<32x32xf32>, vector<4x32xf32> -> vector<4x32xf32>
    %22 = arith.addf %20, %21 : vector<4x32xf32>
    %23 = vector.extract_strided_slice %7 {offsets = [0, 0], sizes = [4, 32], strides = [1, 1]} : vector<32x32xf32> to vector<4x32xf32>
    %cst_17 = arith.constant dense<0.000000e+00> : vector<4x32xf32>
    %24 = tpu.matmul %18, %13, %cst_17 {dimension_numbers = #tpu.dot_dimension_numbers<[1], [0], [0], [1], [0, 0, 1, 1], [], []>} : vector<4x32xf32>, vector<32x32xf32>, vector<4x32xf32> -> vector<4x32xf32>
    %25 = arith.addf %23, %24 : vector<4x32xf32>
    %26 = vector.extract_strided_slice %8 {offsets = [0, 0], sizes = [4, 32], strides = [1, 1]} : vector<32x32xf32> to vector<4x32xf32>
    %cst_18 = arith.constant dense<0.000000e+00> : vector<4x32xf32>
    %27 = tpu.matmul %18, %15, %cst_18 {dimension_numbers = #tpu.dot_dimension_numbers<[1], [0], [0], [1], [0, 0, 1, 1], [], []>} : vector<4x32xf32>, vector<32x32xf32>, vector<4x32xf32> -> vector<4x32xf32>
    %28 = arith.addf %26, %27 : vector<4x32xf32>
    %29 = vector.extract_strided_slice %9 {offsets = [0, 0], sizes = [4, 32], strides = [1, 1]} : vector<32x32xf32> to vector<4x32xf32>
    %cst_19 = arith.constant dense<0.000000e+00> : vector<4x32xf32>
    %30 = tpu.matmul %18, %17, %cst_19 {dimension_numbers = #tpu.dot_dimension_numbers<[1], [0], [0], [1], [0, 0, 1, 1], [], []>} : vector<4x32xf32>, vector<32x32xf32>, vector<4x32xf32> -> vector<4x32xf32>
    %31 = arith.addf %29, %30 : vector<4x32xf32>
    %32 = arith.negf %25 : vector<4x32xf32>
    %33 = math.exp %32 : vector<4x32xf32>
    %cst_20 = arith.constant 1.000000e+00 : f32
    %34 = vector.broadcast %cst_20 : f32 to vector<4x32xf32>
    %35 = arith.addf %34, %33 : vector<4x32xf32>
    %36 = arith.divf %34, %35 : vector<4x32xf32>
    %37 = arith.mulf %36, %19 : vector<4x32xf32>
    %38 = arith.negf %22 : vector<4x32xf32>
    %39 = math.exp %38 : vector<4x32xf32>
    %cst_21 = arith.constant 1.000000e+00 : f32
    %40 = vector.broadcast %cst_21 : f32 to vector<4x32xf32>
    %41 = arith.addf %40, %39 : vector<4x32xf32>
    %42 = arith.divf %40, %41 : vector<4x32xf32>
    %43 = math.tanh %28 : vector<4x32xf32>
    %44 = arith.mulf %42, %43 : vector<4x32xf32>
    %45 = arith.addf %37, %44 : vector<4x32xf32>
    %46 = arith.negf %31 : vector<4x32xf32>
    %47 = math.exp %46 : vector<4x32xf32>
    %cst_22 = arith.constant 1.000000e+00 : f32
    %48 = vector.broadcast %cst_22 : f32 to vector<4x32xf32>
    %49 = arith.addf %48, %47 : vector<4x32xf32>
    %50 = arith.divf %48, %49 : vector<4x32xf32>
    %51 = math.tanh %45 : vector<4x32xf32>
    %52 = arith.mulf %50, %51 : vector<4x32xf32>
    %53 = vector.extract_strided_slice %6 {offsets = [4, 0], sizes = [4, 32], strides = [1, 1]} : vector<32x32xf32> to vector<4x32xf32>
    %cst_23 = arith.constant dense<0.000000e+00> : vector<4x32xf32>
    %54 = tpu.matmul %52, %11, %cst_23 {dimension_numbers = #tpu.dot_dimension_numbers<[1], [0], [0], [1], [0, 0, 1, 1], [], []>} : vector<4x32xf32>, vector<32x32xf32>, vector<4x32xf32> -> vector<4x32xf32>
    %55 = arith.addf %53, %54 : vector<4x32xf32>
    %56 = vector.extract_strided_slice %7 {offsets = [4, 0], sizes = [4, 32], strides = [1, 1]} : vector<32x32xf32> to vector<4x32xf32>
    %cst_24 = arith.constant dense<0.000000e+00> : vector<4x32xf32>
    %57 = tpu.matmul %52, %13, %cst_24 {dimension_numbers = #tpu.dot_dimension_numbers<[1], [0], [0], [1], [0, 0, 1, 1], [], []>} : vector<4x32xf32>, vector<32x32xf32>, vector<4x32xf32> -> vector<4x32xf32>
    %58 = arith.addf %56, %57 : vector<4x32xf32>
    %59 = vector.extract_strided_slice %8 {offsets = [4, 0], sizes = [4, 32], strides = [1, 1]} : vector<32x32xf32> to vector<4x32xf32>
    %cst_25 = arith.constant dense<0.000000e+00> : vector<4x32xf32>
    %60 = tpu.matmul %52, %15, %cst_25 {dimension_numbers = #tpu.dot_dimension_numbers<[1], [0], [0], [1], [0, 0, 1, 1], [], []>} : vector<4x32xf32>, vector<32x32xf32>, vector<4x32xf32> -> vector<4x32xf32>
    %61 = arith.addf %59, %60 : vector<4x32xf32>
    %62 = vector.extract_strided_slice %9 {offsets = [4, 0], sizes = [4, 32], strides = [1, 1]} : vector<32x32xf32> to vector<4x32xf32>
    %cst_26 = arith.constant dense<0.000000e+00> : vector<4x32xf32>
    %63 = tpu.matmul %52, %17, %cst_26 {dimension_numbers = #tpu.dot_dimension_numbers<[1], [0], [0], [1], [0, 0, 1, 1], [], []>} : vector<4x32xf32>, vector<32x32xf32>, vector<4x32xf32> -> vector<4x32xf32>
    %64 = arith.addf %62, %63 : vector<4x32xf32>
    %65 = arith.negf %58 : vector<4x32xf32>
    %66 = math.exp %65 : vector<4x32xf32>
    %cst_27 = arith.constant 1.000000e+00 : f32
    %67 = vector.broadcast %cst_27 : f32 to vector<4x32xf32>
    %68 = arith.addf %67, %66 : vector<4x32xf32>
    %69 = arith.divf %67, %68 : vector<4x32xf32>
    %70 = arith.mulf %69, %45 : vector<4x32xf32>
    %71 = arith.negf %55 : vector<4x32xf32>
    %72 = math.exp %71 : vector<4x32xf32>
    %cst_28 = arith.constant 1.000000e+00 : f32
    %73 = vector.broadcast %cst_28 : f32 to vector<4x32xf32>
    %74 = arith.addf %73, %72 : vector<4x32xf32>
    %75 = arith.divf %73, %74 : vector<4x32xf32>
    %76 = math.tanh %61 : vector<4x32xf32>
    %77 = arith.mulf %75, %76 : vector<4x32xf32>
    %78 = arith.addf %70, %77 : vector<4x32xf32>
    %79 = arith.negf %64 : vector<4x32xf32>
    %80 = math.exp %79 : vector<4x32xf32>
    %cst_29 = arith.constant 1.000000e+00 : f32
    %81 = vector.broadcast %cst_29 : f32 to vector<4x32xf32>
    %82 = arith.addf %81, %80 : vector<4x32xf32>
    %83 = arith.divf %81, %82 : vector<4x32xf32>
    %84 = math.tanh %78 : vector<4x32xf32>
    %85 = arith.mulf %83, %84 : vector<4x32xf32>
    %86 = vector.extract_strided_slice %6 {offsets = [8, 0], sizes = [4, 32], strides = [1, 1]} : vector<32x32xf32> to vector<4x32xf32>
    %cst_30 = arith.constant dense<0.000000e+00> : vector<4x32xf32>
    %87 = tpu.matmul %85, %11, %cst_30 {dimension_numbers = #tpu.dot_dimension_numbers<[1], [0], [0], [1], [0, 0, 1, 1], [], []>} : vector<4x32xf32>, vector<32x32xf32>, vector<4x32xf32> -> vector<4x32xf32>
    %88 = arith.addf %86, %87 : vector<4x32xf32>
    %89 = vector.extract_strided_slice %7 {offsets = [8, 0], sizes = [4, 32], strides = [1, 1]} : vector<32x32xf32> to vector<4x32xf32>
    %cst_31 = arith.constant dense<0.000000e+00> : vector<4x32xf32>
    %90 = tpu.matmul %85, %13, %cst_31 {dimension_numbers = #tpu.dot_dimension_numbers<[1], [0], [0], [1], [0, 0, 1, 1], [], []>} : vector<4x32xf32>, vector<32x32xf32>, vector<4x32xf32> -> vector<4x32xf32>
    %91 = arith.addf %89, %90 : vector<4x32xf32>
    %92 = vector.extract_strided_slice %8 {offsets = [8, 0], sizes = [4, 32], strides = [1, 1]} : vector<32x32xf32> to vector<4x32xf32>
    %cst_32 = arith.constant dense<0.000000e+00> : vector<4x32xf32>
    %93 = tpu.matmul %85, %15, %cst_32 {dimension_numbers = #tpu.dot_dimension_numbers<[1], [0], [0], [1], [0, 0, 1, 1], [], []>} : vector<4x32xf32>, vector<32x32xf32>, vector<4x32xf32> -> vector<4x32xf32>
    %94 = arith.addf %92, %93 : vector<4x32xf32>
    %95 = vector.extract_strided_slice %9 {offsets = [8, 0], sizes = [4, 32], strides = [1, 1]} : vector<32x32xf32> to vector<4x32xf32>
    %cst_33 = arith.constant dense<0.000000e+00> : vector<4x32xf32>
    %96 = tpu.matmul %85, %17, %cst_33 {dimension_numbers = #tpu.dot_dimension_numbers<[1], [0], [0], [1], [0, 0, 1, 1], [], []>} : vector<4x32xf32>, vector<32x32xf32>, vector<4x32xf32> -> vector<4x32xf32>
    %97 = arith.addf %95, %96 : vector<4x32xf32>
    %98 = arith.negf %91 : vector<4x32xf32>
    %99 = math.exp %98 : vector<4x32xf32>
    %cst_34 = arith.constant 1.000000e+00 : f32
    %100 = vector.broadcast %cst_34 : f32 to vector<4x32xf32>
    %101 = arith.addf %100, %99 : vector<4x32xf32>
    %102 = arith.divf %100, %101 : vector<4x32xf32>
    %103 = arith.mulf %102, %78 : vector<4x32xf32>
    %104 = arith.negf %88 : vector<4x32xf32>
    %105 = math.exp %104 : vector<4x32xf32>
    %cst_35 = arith.constant 1.000000e+00 : f32
    %106 = vector.broadcast %cst_35 : f32 to vector<4x32xf32>
    %107 = arith.addf %106, %105 : vector<4x32xf32>
    %108 = arith.divf %106, %107 : vector<4x32xf32>
    %109 = math.tanh %94 : vector<4x32xf32>
    %110 = arith.mulf %108, %109 : vector<4x32xf32>
    %111 = arith.addf %103, %110 : vector<4x32xf32>
    %112 = arith.negf %97 : vector<4x32xf32>
    %113 = math.exp %112 : vector<4x32xf32>
    %cst_36 = arith.constant 1.000000e+00 : f32
    %114 = vector.broadcast %cst_36 : f32 to vector<4x32xf32>
    %115 = arith.addf %114, %113 : vector<4x32xf32>
    %116 = arith.divf %114, %115 : vector<4x32xf32>
    %117 = math.tanh %111 : vector<4x32xf32>
    %118 = arith.mulf %116, %117 : vector<4x32xf32>
    %119 = vector.extract_strided_slice %6 {offsets = [12, 0], sizes = [4, 32], strides = [1, 1]} : vector<32x32xf32> to vector<4x32xf32>
    %cst_37 = arith.constant dense<0.000000e+00> : vector<4x32xf32>
    %120 = tpu.matmul %118, %11, %cst_37 {dimension_numbers = #tpu.dot_dimension_numbers<[1], [0], [0], [1], [0, 0, 1, 1], [], []>} : vector<4x32xf32>, vector<32x32xf32>, vector<4x32xf32> -> vector<4x32xf32>
    %121 = arith.addf %119, %120 : vector<4x32xf32>
    %122 = vector.extract_strided_slice %7 {offsets = [12, 0], sizes = [4, 32], strides = [1, 1]} : vector<32x32xf32> to vector<4x32xf32>
    %cst_38 = arith.constant dense<0.000000e+00> : vector<4x32xf32>
    %123 = tpu.matmul %118, %13, %cst_38 {dimension_numbers = #tpu.dot_dimension_numbers<[1], [0], [0], [1], [0, 0, 1, 1], [], []>} : vector<4x32xf32>, vector<32x32xf32>, vector<4x32xf32> -> vector<4x32xf32>
    %124 = arith.addf %122, %123 : vector<4x32xf32>
    %125 = vector.extract_strided_slice %8 {offsets = [12, 0], sizes = [4, 32], strides = [1, 1]} : vector<32x32xf32> to vector<4x32xf32>
    %cst_39 = arith.constant dense<0.000000e+00> : vector<4x32xf32>
    %126 = tpu.matmul %118, %15, %cst_39 {dimension_numbers = #tpu.dot_dimension_numbers<[1], [0], [0], [1], [0, 0, 1, 1], [], []>} : vector<4x32xf32>, vector<32x32xf32>, vector<4x32xf32> -> vector<4x32xf32>
    %127 = arith.addf %125, %126 : vector<4x32xf32>
    %128 = vector.extract_strided_slice %9 {offsets = [12, 0], sizes = [4, 32], strides = [1, 1]} : vector<32x32xf32> to vector<4x32xf32>
    %cst_40 = arith.constant dense<0.000000e+00> : vector<4x32xf32>
    %129 = tpu.matmul %118, %17, %cst_40 {dimension_numbers = #tpu.dot_dimension_numbers<[1], [0], [0], [1], [0, 0, 1, 1], [], []>} : vector<4x32xf32>, vector<32x32xf32>, vector<4x32xf32> -> vector<4x32xf32>
    %130 = arith.addf %128, %129 : vector<4x32xf32>
    %131 = arith.negf %124 : vector<4x32xf32>
    %132 = math.exp %131 : vector<4x32xf32>
    %cst_41 = arith.constant 1.000000e+00 : f32
    %133 = vector.broadcast %cst_41 : f32 to vector<4x32xf32>
    %134 = arith.addf %133, %132 : vector<4x32xf32>
    %135 = arith.divf %133, %134 : vector<4x32xf32>
    %136 = arith.mulf %135, %111 : vector<4x32xf32>
    %137 = arith.negf %121 : vector<4x32xf32>
    %138 = math.exp %137 : vector<4x32xf32>
    %cst_42 = arith.constant 1.000000e+00 : f32
    %139 = vector.broadcast %cst_42 : f32 to vector<4x32xf32>
    %140 = arith.addf %139, %138 : vector<4x32xf32>
    %141 = arith.divf %139, %140 : vector<4x32xf32>
    %142 = math.tanh %127 : vector<4x32xf32>
    %143 = arith.mulf %141, %142 : vector<4x32xf32>
    %144 = arith.addf %136, %143 : vector<4x32xf32>
    %145 = arith.negf %130 : vector<4x32xf32>
    %146 = math.exp %145 : vector<4x32xf32>
    %cst_43 = arith.constant 1.000000e+00 : f32
    %147 = vector.broadcast %cst_43 : f32 to vector<4x32xf32>
    %148 = arith.addf %147, %146 : vector<4x32xf32>
    %149 = arith.divf %147, %148 : vector<4x32xf32>
    %150 = math.tanh %144 : vector<4x32xf32>
    %151 = arith.mulf %149, %150 : vector<4x32xf32>
    %152 = vector.extract_strided_slice %6 {offsets = [16, 0], sizes = [4, 32], strides = [1, 1]} : vector<32x32xf32> to vector<4x32xf32>
    %cst_44 = arith.constant dense<0.000000e+00> : vector<4x32xf32>
    %153 = tpu.matmul %151, %11, %cst_44 {dimension_numbers = #tpu.dot_dimension_numbers<[1], [0], [0], [1], [0, 0, 1, 1], [], []>} : vector<4x32xf32>, vector<32x32xf32>, vector<4x32xf32> -> vector<4x32xf32>
    %154 = arith.addf %152, %153 : vector<4x32xf32>
    %155 = vector.extract_strided_slice %7 {offsets = [16, 0], sizes = [4, 32], strides = [1, 1]} : vector<32x32xf32> to vector<4x32xf32>
    %cst_45 = arith.constant dense<0.000000e+00> : vector<4x32xf32>
    %156 = tpu.matmul %151, %13, %cst_45 {dimension_numbers = #tpu.dot_dimension_numbers<[1], [0], [0], [1], [0, 0, 1, 1], [], []>} : vector<4x32xf32>, vector<32x32xf32>, vector<4x32xf32> -> vector<4x32xf32>
    %157 = arith.addf %155, %156 : vector<4x32xf32>
    %158 = vector.extract_strided_slice %8 {offsets = [16, 0], sizes = [4, 32], strides = [1, 1]} : vector<32x32xf32> to vector<4x32xf32>
    %cst_46 = arith.constant dense<0.000000e+00> : vector<4x32xf32>
    %159 = tpu.matmul %151, %15, %cst_46 {dimension_numbers = #tpu.dot_dimension_numbers<[1], [0], [0], [1], [0, 0, 1, 1], [], []>} : vector<4x32xf32>, vector<32x32xf32>, vector<4x32xf32> -> vector<4x32xf32>
    %160 = arith.addf %158, %159 : vector<4x32xf32>
    %161 = vector.extract_strided_slice %9 {offsets = [16, 0], sizes = [4, 32], strides = [1, 1]} : vector<32x32xf32> to vector<4x32xf32>
    %cst_47 = arith.constant dense<0.000000e+00> : vector<4x32xf32>
    %162 = tpu.matmul %151, %17, %cst_47 {dimension_numbers = #tpu.dot_dimension_numbers<[1], [0], [0], [1], [0, 0, 1, 1], [], []>} : vector<4x32xf32>, vector<32x32xf32>, vector<4x32xf32> -> vector<4x32xf32>
    %163 = arith.addf %161, %162 : vector<4x32xf32>
    %164 = arith.negf %157 : vector<4x32xf32>
    %165 = math.exp %164 : vector<4x32xf32>
    %cst_48 = arith.constant 1.000000e+00 : f32
    %166 = vector.broadcast %cst_48 : f32 to vector<4x32xf32>
    %167 = arith.addf %166, %165 : vector<4x32xf32>
    %168 = arith.divf %166, %167 : vector<4x32xf32>
    %169 = arith.mulf %168, %144 : vector<4x32xf32>
    %170 = arith.negf %154 : vector<4x32xf32>
    %171 = math.exp %170 : vector<4x32xf32>
    %cst_49 = arith.constant 1.000000e+00 : f32
    %172 = vector.broadcast %cst_49 : f32 to vector<4x32xf32>
    %173 = arith.addf %172, %171 : vector<4x32xf32>
    %174 = arith.divf %172, %173 : vector<4x32xf32>
    %175 = math.tanh %160 : vector<4x32xf32>
    %176 = arith.mulf %174, %175 : vector<4x32xf32>
    %177 = arith.addf %169, %176 : vector<4x32xf32>
    %178 = arith.negf %163 : vector<4x32xf32>
    %179 = math.exp %178 : vector<4x32xf32>
    %cst_50 = arith.constant 1.000000e+00 : f32
    %180 = vector.broadcast %cst_50 : f32 to vector<4x32xf32>
    %181 = arith.addf %180, %179 : vector<4x32xf32>
    %182 = arith.divf %180, %181 : vector<4x32xf32>
    %183 = math.tanh %177 : vector<4x32xf32>
    %184 = arith.mulf %182, %183 : vector<4x32xf32>
    %185 = vector.extract_strided_slice %6 {offsets = [20, 0], sizes = [4, 32], strides = [1, 1]} : vector<32x32xf32> to vector<4x32xf32>
    %cst_51 = arith.constant dense<0.000000e+00> : vector<4x32xf32>
    %186 = tpu.matmul %184, %11, %cst_51 {dimension_numbers = #tpu.dot_dimension_numbers<[1], [0], [0], [1], [0, 0, 1, 1], [], []>} : vector<4x32xf32>, vector<32x32xf32>, vector<4x32xf32> -> vector<4x32xf32>
    %187 = arith.addf %185, %186 : vector<4x32xf32>
    %188 = vector.extract_strided_slice %7 {offsets = [20, 0], sizes = [4, 32], strides = [1, 1]} : vector<32x32xf32> to vector<4x32xf32>
    %cst_52 = arith.constant dense<0.000000e+00> : vector<4x32xf32>
    %189 = tpu.matmul %184, %13, %cst_52 {dimension_numbers = #tpu.dot_dimension_numbers<[1], [0], [0], [1], [0, 0, 1, 1], [], []>} : vector<4x32xf32>, vector<32x32xf32>, vector<4x32xf32> -> vector<4x32xf32>
    %190 = arith.addf %188, %189 : vector<4x32xf32>
    %191 = vector.extract_strided_slice %8 {offsets = [20, 0], sizes = [4, 32], strides = [1, 1]} : vector<32x32xf32> to vector<4x32xf32>
    %cst_53 = arith.constant dense<0.000000e+00> : vector<4x32xf32>
    %192 = tpu.matmul %184, %15, %cst_53 {dimension_numbers = #tpu.dot_dimension_numbers<[1], [0], [0], [1], [0, 0, 1, 1], [], []>} : vector<4x32xf32>, vector<32x32xf32>, vector<4x32xf32> -> vector<4x32xf32>
    %193 = arith.addf %191, %192 : vector<4x32xf32>
    %194 = vector.extract_strided_slice %9 {offsets = [20, 0], sizes = [4, 32], strides = [1, 1]} : vector<32x32xf32> to vector<4x32xf32>
    %cst_54 = arith.constant dense<0.000000e+00> : vector<4x32xf32>
    %195 = tpu.matmul %184, %17, %cst_54 {dimension_numbers = #tpu.dot_dimension_numbers<[1], [0], [0], [1], [0, 0, 1, 1], [], []>} : vector<4x32xf32>, vector<32x32xf32>, vector<4x32xf32> -> vector<4x32xf32>
    %196 = arith.addf %194, %195 : vector<4x32xf32>
    %197 = arith.negf %190 : vector<4x32xf32>
    %198 = math.exp %197 : vector<4x32xf32>
    %cst_55 = arith.constant 1.000000e+00 : f32
    %199 = vector.broadcast %cst_55 : f32 to vector<4x32xf32>
    %200 = arith.addf %199, %198 : vector<4x32xf32>
    %201 = arith.divf %199, %200 : vector<4x32xf32>
    %202 = arith.mulf %201, %177 : vector<4x32xf32>
    %203 = arith.negf %187 : vector<4x32xf32>
    %204 = math.exp %203 : vector<4x32xf32>
    %cst_56 = arith.constant 1.000000e+00 : f32
    %205 = vector.broadcast %cst_56 : f32 to vector<4x32xf32>
    %206 = arith.addf %205, %204 : vector<4x32xf32>
    %207 = arith.divf %205, %206 : vector<4x32xf32>
    %208 = math.tanh %193 : vector<4x32xf32>
    %209 = arith.mulf %207, %208 : vector<4x32xf32>
    %210 = arith.addf %202, %209 : vector<4x32xf32>
    %211 = arith.negf %196 : vector<4x32xf32>
    %212 = math.exp %211 : vector<4x32xf32>
    %cst_57 = arith.constant 1.000000e+00 : f32
    %213 = vector.broadcast %cst_57 : f32 to vector<4x32xf32>
    %214 = arith.addf %213, %212 : vector<4x32xf32>
    %215 = arith.divf %213, %214 : vector<4x32xf32>
    %216 = math.tanh %210 : vector<4x32xf32>
    %217 = arith.mulf %215, %216 : vector<4x32xf32>
    %218 = vector.extract_strided_slice %6 {offsets = [24, 0], sizes = [4, 32], strides = [1, 1]} : vector<32x32xf32> to vector<4x32xf32>
    %cst_58 = arith.constant dense<0.000000e+00> : vector<4x32xf32>
    %219 = tpu.matmul %217, %11, %cst_58 {dimension_numbers = #tpu.dot_dimension_numbers<[1], [0], [0], [1], [0, 0, 1, 1], [], []>} : vector<4x32xf32>, vector<32x32xf32>, vector<4x32xf32> -> vector<4x32xf32>
    %220 = arith.addf %218, %219 : vector<4x32xf32>
    %221 = vector.extract_strided_slice %7 {offsets = [24, 0], sizes = [4, 32], strides = [1, 1]} : vector<32x32xf32> to vector<4x32xf32>
    %cst_59 = arith.constant dense<0.000000e+00> : vector<4x32xf32>
    %222 = tpu.matmul %217, %13, %cst_59 {dimension_numbers = #tpu.dot_dimension_numbers<[1], [0], [0], [1], [0, 0, 1, 1], [], []>} : vector<4x32xf32>, vector<32x32xf32>, vector<4x32xf32> -> vector<4x32xf32>
    %223 = arith.addf %221, %222 : vector<4x32xf32>
    %224 = vector.extract_strided_slice %8 {offsets = [24, 0], sizes = [4, 32], strides = [1, 1]} : vector<32x32xf32> to vector<4x32xf32>
    %cst_60 = arith.constant dense<0.000000e+00> : vector<4x32xf32>
    %225 = tpu.matmul %217, %15, %cst_60 {dimension_numbers = #tpu.dot_dimension_numbers<[1], [0], [0], [1], [0, 0, 1, 1], [], []>} : vector<4x32xf32>, vector<32x32xf32>, vector<4x32xf32> -> vector<4x32xf32>
    %226 = arith.addf %224, %225 : vector<4x32xf32>
    %227 = vector.extract_strided_slice %9 {offsets = [24, 0], sizes = [4, 32], strides = [1, 1]} : vector<32x32xf32> to vector<4x32xf32>
    %cst_61 = arith.constant dense<0.000000e+00> : vector<4x32xf32>
    %228 = tpu.matmul %217, %17, %cst_61 {dimension_numbers = #tpu.dot_dimension_numbers<[1], [0], [0], [1], [0, 0, 1, 1], [], []>} : vector<4x32xf32>, vector<32x32xf32>, vector<4x32xf32> -> vector<4x32xf32>
    %229 = arith.addf %227, %228 : vector<4x32xf32>
    %230 = arith.negf %223 : vector<4x32xf32>
    %231 = math.exp %230 : vector<4x32xf32>
    %cst_62 = arith.constant 1.000000e+00 : f32
    %232 = vector.broadcast %cst_62 : f32 to vector<4x32xf32>
    %233 = arith.addf %232, %231 : vector<4x32xf32>
    %234 = arith.divf %232, %233 : vector<4x32xf32>
    %235 = arith.mulf %234, %210 : vector<4x32xf32>
    %236 = arith.negf %220 : vector<4x32xf32>
    %237 = math.exp %236 : vector<4x32xf32>
    %cst_63 = arith.constant 1.000000e+00 : f32
    %238 = vector.broadcast %cst_63 : f32 to vector<4x32xf32>
    %239 = arith.addf %238, %237 : vector<4x32xf32>
    %240 = arith.divf %238, %239 : vector<4x32xf32>
    %241 = math.tanh %226 : vector<4x32xf32>
    %242 = arith.mulf %240, %241 : vector<4x32xf32>
    %243 = arith.addf %235, %242 : vector<4x32xf32>
    %244 = arith.negf %229 : vector<4x32xf32>
    %245 = math.exp %244 : vector<4x32xf32>
    %cst_64 = arith.constant 1.000000e+00 : f32
    %246 = vector.broadcast %cst_64 : f32 to vector<4x32xf32>
    %247 = arith.addf %246, %245 : vector<4x32xf32>
    %248 = arith.divf %246, %247 : vector<4x32xf32>
    %249 = math.tanh %243 : vector<4x32xf32>
    %250 = arith.mulf %248, %249 : vector<4x32xf32>
    %251 = vector.extract_strided_slice %6 {offsets = [28, 0], sizes = [4, 32], strides = [1, 1]} : vector<32x32xf32> to vector<4x32xf32>
    %cst_65 = arith.constant dense<0.000000e+00> : vector<4x32xf32>
    %252 = tpu.matmul %250, %11, %cst_65 {dimension_numbers = #tpu.dot_dimension_numbers<[1], [0], [0], [1], [0, 0, 1, 1], [], []>} : vector<4x32xf32>, vector<32x32xf32>, vector<4x32xf32> -> vector<4x32xf32>
    %253 = arith.addf %251, %252 : vector<4x32xf32>
    %254 = vector.extract_strided_slice %7 {offsets = [28, 0], sizes = [4, 32], strides = [1, 1]} : vector<32x32xf32> to vector<4x32xf32>
    %cst_66 = arith.constant dense<0.000000e+00> : vector<4x32xf32>
    %255 = tpu.matmul %250, %13, %cst_66 {dimension_numbers = #tpu.dot_dimension_numbers<[1], [0], [0], [1], [0, 0, 1, 1], [], []>} : vector<4x32xf32>, vector<32x32xf32>, vector<4x32xf32> -> vector<4x32xf32>
    %256 = arith.addf %254, %255 : vector<4x32xf32>
    %257 = vector.extract_strided_slice %8 {offsets = [28, 0], sizes = [4, 32], strides = [1, 1]} : vector<32x32xf32> to vector<4x32xf32>
    %cst_67 = arith.constant dense<0.000000e+00> : vector<4x32xf32>
    %258 = tpu.matmul %250, %15, %cst_67 {dimension_numbers = #tpu.dot_dimension_numbers<[1], [0], [0], [1], [0, 0, 1, 1], [], []>} : vector<4x32xf32>, vector<32x32xf32>, vector<4x32xf32> -> vector<4x32xf32>
    %259 = arith.addf %257, %258 : vector<4x32xf32>
    %260 = vector.extract_strided_slice %9 {offsets = [28, 0], sizes = [4, 32], strides = [1, 1]} : vector<32x32xf32> to vector<4x32xf32>
    %cst_68 = arith.constant dense<0.000000e+00> : vector<4x32xf32>
    %261 = tpu.matmul %250, %17, %cst_68 {dimension_numbers = #tpu.dot_dimension_numbers<[1], [0], [0], [1], [0, 0, 1, 1], [], []>} : vector<4x32xf32>, vector<32x32xf32>, vector<4x32xf32> -> vector<4x32xf32>
    %262 = arith.addf %260, %261 : vector<4x32xf32>
    %263 = arith.negf %256 : vector<4x32xf32>
    %264 = math.exp %263 : vector<4x32xf32>
    %cst_69 = arith.constant 1.000000e+00 : f32
    %265 = vector.broadcast %cst_69 : f32 to vector<4x32xf32>
    %266 = arith.addf %265, %264 : vector<4x32xf32>
    %267 = arith.divf %265, %266 : vector<4x32xf32>
    %268 = arith.mulf %267, %243 : vector<4x32xf32>
    %269 = arith.negf %253 : vector<4x32xf32>
    %270 = math.exp %269 : vector<4x32xf32>
    %cst_70 = arith.constant 1.000000e+00 : f32
    %271 = vector.broadcast %cst_70 : f32 to vector<4x32xf32>
    %272 = arith.addf %271, %270 : vector<4x32xf32>
    %273 = arith.divf %271, %272 : vector<4x32xf32>
    %274 = math.tanh %259 : vector<4x32xf32>
    %275 = arith.mulf %273, %274 : vector<4x32xf32>
    %276 = arith.addf %268, %275 : vector<4x32xf32>
    %277 = arith.negf %262 : vector<4x32xf32>
    %278 = math.exp %277 : vector<4x32xf32>
    %cst_71 = arith.constant 1.000000e+00 : f32
    %279 = vector.broadcast %cst_71 : f32 to vector<4x32xf32>
    %280 = arith.addf %279, %278 : vector<4x32xf32>
    %281 = arith.divf %279, %280 : vector<4x32xf32>
    %282 = math.tanh %276 : vector<4x32xf32>
    %283 = arith.mulf %281, %282 : vector<4x32xf32>
    %c0_72 = arith.constant 0 : index
    %c0_73 = arith.constant 0 : index
    %284 = vector.load %arg5[%c0_72, %c0_73] : memref<32x128xf32, #tpu.memory_space<vmem>>, vector<32x128xf32>
    %cst_74 = arith.constant dense<0.000000e+00> : vector<4x128xf32>
    %285 = tpu.matmul %283, %284, %cst_74 {dimension_numbers = #tpu.dot_dimension_numbers<[1], [0], [0], [1], [0, 0, 1, 1], [], []>} : vector<4x32xf32>, vector<32x128xf32>, vector<4x128xf32> -> vector<4x128xf32>
    %c0_75 = arith.constant 0 : index
    %c0_76 = arith.constant 0 : index
    %286 = vector.load %arg6[%c0_75, %c0_76] : memref<1x128xf32, #tpu.memory_space<vmem>>, vector<1x128xf32>
    %287 = vector.broadcast %286 : vector<1x128xf32> to vector<4x128xf32>
    %288 = arith.addf %285, %287 : vector<4x128xf32>
    %cst_77 = arith.constant 0.000000e+00 : f32
    %289 = vector.broadcast %cst_77 : f32 to vector<4x128xf32>
    %290 = arith.maximumf %288, %289 : vector<4x128xf32>
    %c0_78 = arith.constant 0 : index
    %c0_79 = arith.constant 0 : index
    %291 = vector.load %arg7[%c0_78, %c0_79] : memref<128x62xf32, #tpu.memory_space<vmem>>, vector<128x62xf32>
    %cst_80 = arith.constant dense<0.000000e+00> : vector<4x62xf32>
    %292 = tpu.matmul %290, %291, %cst_80 {dimension_numbers = #tpu.dot_dimension_numbers<[1], [0], [0], [1], [0, 0, 1, 1], [], []>} : vector<4x128xf32>, vector<128x62xf32>, vector<4x62xf32> -> vector<4x62xf32>
    %c0_81 = arith.constant 0 : index
    %c0_82 = arith.constant 0 : index
    %293 = vector.load %arg8[%c0_81, %c0_82] : memref<1x62xf32, #tpu.memory_space<vmem>>, vector<1x62xf32>
    %294 = vector.broadcast %293 : vector<1x62xf32> to vector<4x62xf32>
    %295 = arith.addf %292, %294 : vector<4x62xf32>
    %cst_83 = arith.constant 0.000000e+00 : f32
    %296 = vector.broadcast %cst_83 : f32 to vector<4x62xf32>
    %297 = arith.maximumf %295, %296 : vector<4x62xf32>
    %c0_84 = arith.constant 0 : index
    %c0_85 = arith.constant 0 : index
    %298 = vector.load %arg1[%c0_84, %c0_85] : memref<4x2xf32, #tpu.memory_space<vmem>>, vector<4x2xf32>
    %299 = vector.extract_strided_slice %0 {offsets = [28, 0], sizes = [4, 2], strides = [1, 1]} : vector<32x2xf32> to vector<4x2xf32>
    %c0_86 = arith.constant 0 : index
    %c0_87 = arith.constant 0 : index
    %300 = vector.load %arg9[%c0_86, %c0_87] : memref<2x256xf32, #tpu.memory_space<vmem>>, vector<2x256xf32>
    %cst_88 = arith.constant dense<0.000000e+00> : vector<4x256xf32>
    %301 = tpu.matmul %299, %300, %cst_88 {dimension_numbers = #tpu.dot_dimension_numbers<[1], [0], [0], [1], [0, 0, 1, 1], [], []>} : vector<4x2xf32>, vector<2x256xf32>, vector<4x256xf32> -> vector<4x256xf32>
    %c0_89 = arith.constant 0 : index
    %c0_90 = arith.constant 0 : index
    %302 = vector.load %arg10[%c0_89, %c0_90] : memref<1x256xf32, #tpu.memory_space<vmem>>, vector<1x256xf32>
    %303 = vector.broadcast %302 : vector<1x256xf32> to vector<4x256xf32>
    %304 = arith.addf %301, %303 : vector<4x256xf32>
    %c0_91 = arith.constant 0 : index
    %c0_92 = arith.constant 0 : index
    %305 = vector.load %arg11[%c0_91, %c0_92] : memref<62x256xf32, #tpu.memory_space<vmem>>, vector<62x256xf32>
    %cst_93 = arith.constant dense<0.000000e+00> : vector<4x256xf32>
    %306 = tpu.matmul %297, %305, %cst_93 {dimension_numbers = #tpu.dot_dimension_numbers<[1], [0], [0], [1], [0, 0, 1, 1], [], []>} : vector<4x62xf32>, vector<62x256xf32>, vector<4x256xf32> -> vector<4x256xf32>
    %307 = arith.addf %304, %306 : vector<4x256xf32>
    %c0_94 = arith.constant 0 : index
    %c0_95 = arith.constant 0 : index
    %308 = vector.load %arg12[%c0_94, %c0_95] : memref<2x256xf32, #tpu.memory_space<vmem>>, vector<2x256xf32>
    %cst_96 = arith.constant dense<0.000000e+00> : vector<4x256xf32>
    %309 = tpu.matmul %298, %308, %cst_96 {dimension_numbers = #tpu.dot_dimension_numbers<[1], [0], [0], [1], [0, 0, 1, 1], [], []>} : vector<4x2xf32>, vector<2x256xf32>, vector<4x256xf32> -> vector<4x256xf32>
    %310 = arith.addf %307, %309 : vector<4x256xf32>
    %311 = vector.extract_strided_slice %310 {offsets = [0, 0], sizes = [4, 64], strides = [1, 1]} : vector<4x256xf32> to vector<4x64xf32>
    %312 = vector.extract_strided_slice %310 {offsets = [0, 64], sizes = [4, 64], strides = [1, 1]} : vector<4x256xf32> to vector<4x64xf32>
    %313 = vector.extract_strided_slice %310 {offsets = [0, 128], sizes = [4, 64], strides = [1, 1]} : vector<4x256xf32> to vector<4x64xf32>
    %314 = vector.extract_strided_slice %310 {offsets = [0, 192], sizes = [4, 64], strides = [1, 1]} : vector<4x256xf32> to vector<4x64xf32>
    %c0_97 = arith.constant 0 : index
    %c0_98 = arith.constant 0 : index
    %c0_99 = arith.constant 0 : index
    %315 = vector.load %arg13[%c0_97, %c0_98, %c0_99] : memref<4x64x64xf32, #tpu.memory_space<vmem>>, vector<1x64x64xf32>
    %316 = vector.shape_cast %315 : vector<1x64x64xf32> to vector<64x64xf32>
    %c1_100 = arith.constant 1 : index
    %c0_101 = arith.constant 0 : index
    %c0_102 = arith.constant 0 : index
    %317 = vector.load %arg13[%c1_100, %c0_101, %c0_102] : memref<4x64x64xf32, #tpu.memory_space<vmem>>, vector<1x64x64xf32>
    %318 = vector.shape_cast %317 : vector<1x64x64xf32> to vector<64x64xf32>
    %c2_103 = arith.constant 2 : index
    %c0_104 = arith.constant 0 : index
    %c0_105 = arith.constant 0 : index
    %319 = vector.load %arg13[%c2_103, %c0_104, %c0_105] : memref<4x64x64xf32, #tpu.memory_space<vmem>>, vector<1x64x64xf32>
    %320 = vector.shape_cast %319 : vector<1x64x64xf32> to vector<64x64xf32>
    %c3_106 = arith.constant 3 : index
    %c0_107 = arith.constant 0 : index
    %c0_108 = arith.constant 0 : index
    %321 = vector.load %arg13[%c3_106, %c0_107, %c0_108] : memref<4x64x64xf32, #tpu.memory_space<vmem>>, vector<1x64x64xf32>
    %322 = vector.shape_cast %321 : vector<1x64x64xf32> to vector<64x64xf32>
    %c0_109 = arith.constant 0 : index
    %c0_110 = arith.constant 0 : index
    %c0_111 = arith.constant 0 : index
    %323 = vector.load %arg14[%c0_109, %c0_110, %c0_111] : memref<4x1x64xf32, #tpu.memory_space<vmem>>, vector<1x1x64xf32>
    %324 = vector.shape_cast %323 : vector<1x1x64xf32> to vector<1x64xf32>
    %c1_112 = arith.constant 1 : index
    %c0_113 = arith.constant 0 : index
    %c0_114 = arith.constant 0 : index
    %325 = vector.load %arg14[%c1_112, %c0_113, %c0_114] : memref<4x1x64xf32, #tpu.memory_space<vmem>>, vector<1x1x64xf32>
    %326 = vector.shape_cast %325 : vector<1x1x64xf32> to vector<1x64xf32>
    %c2_115 = arith.constant 2 : index
    %c0_116 = arith.constant 0 : index
    %c0_117 = arith.constant 0 : index
    %327 = vector.load %arg14[%c2_115, %c0_116, %c0_117] : memref<4x1x64xf32, #tpu.memory_space<vmem>>, vector<1x1x64xf32>
    %328 = vector.shape_cast %327 : vector<1x1x64xf32> to vector<1x64xf32>
    %c3_118 = arith.constant 3 : index
    %c0_119 = arith.constant 0 : index
    %c0_120 = arith.constant 0 : index
    %329 = vector.load %arg14[%c3_118, %c0_119, %c0_120] : memref<4x1x64xf32, #tpu.memory_space<vmem>>, vector<1x1x64xf32>
    %330 = vector.shape_cast %329 : vector<1x1x64xf32> to vector<1x64xf32>
    %cst_121 = arith.constant 0.000000e+00 : f32
    %331 = vector.broadcast %cst_121 : f32 to vector<4x64xf32>
    %332 = arith.negf %312 : vector<4x64xf32>
    %333 = math.exp %332 : vector<4x64xf32>
    %cst_122 = arith.constant 1.000000e+00 : f32
    %334 = vector.broadcast %cst_122 : f32 to vector<4x64xf32>
    %335 = arith.addf %334, %333 : vector<4x64xf32>
    %336 = arith.divf %334, %335 : vector<4x64xf32>
    %337 = arith.mulf %336, %331 : vector<4x64xf32>
    %338 = arith.negf %311 : vector<4x64xf32>
    %339 = math.exp %338 : vector<4x64xf32>
    %cst_123 = arith.constant 1.000000e+00 : f32
    %340 = vector.broadcast %cst_123 : f32 to vector<4x64xf32>
    %341 = arith.addf %340, %339 : vector<4x64xf32>
    %342 = arith.divf %340, %341 : vector<4x64xf32>
    %343 = math.tanh %313 : vector<4x64xf32>
    %344 = arith.mulf %342, %343 : vector<4x64xf32>
    %345 = arith.addf %337, %344 : vector<4x64xf32>
    %346 = arith.negf %314 : vector<4x64xf32>
    %347 = math.exp %346 : vector<4x64xf32>
    %cst_124 = arith.constant 1.000000e+00 : f32
    %348 = vector.broadcast %cst_124 : f32 to vector<4x64xf32>
    %349 = arith.addf %348, %347 : vector<4x64xf32>
    %350 = arith.divf %348, %349 : vector<4x64xf32>
    %351 = math.tanh %345 : vector<4x64xf32>
    %352 = arith.mulf %350, %351 : vector<4x64xf32>
    %c0_125 = arith.constant 0 : index
    %c0_126 = arith.constant 0 : index
    %353 = vector.load %arg18[%c0_125, %c0_126] : memref<32x64xf32, #tpu.memory_space<vmem>>, vector<4x64xf32>
    tpu.vector_store %arg18[%c0_125, %c0_126], %352 {strides = array<i32>} : memref<32x64xf32, #tpu.memory_space<vmem>>, vector<4x64xf32>,
    %cst_127 = arith.constant dense<0.000000e+00> : vector<4x64xf32>
    %354 = tpu.matmul %352, %316, %cst_127 {dimension_numbers = #tpu.dot_dimension_numbers<[1], [0], [0], [1], [0, 0, 1, 1], [], []>} : vector<4x64xf32>, vector<64x64xf32>, vector<4x64xf32> -> vector<4x64xf32>
    %355 = vector.broadcast %324 : vector<1x64xf32> to vector<4x64xf32>
    %356 = arith.addf %354, %355 : vector<4x64xf32>
    %cst_128 = arith.constant dense<0.000000e+00> : vector<4x64xf32>
    %357 = tpu.matmul %352, %318, %cst_128 {dimension_numbers = #tpu.dot_dimension_numbers<[1], [0], [0], [1], [0, 0, 1, 1], [], []>} : vector<4x64xf32>, vector<64x64xf32>, vector<4x64xf32> -> vector<4x64xf32>
    %358 = vector.broadcast %326 : vector<1x64xf32> to vector<4x64xf32>
    %359 = arith.addf %357, %358 : vector<4x64xf32>
    %cst_129 = arith.constant dense<0.000000e+00> : vector<4x64xf32>
    %360 = tpu.matmul %352, %320, %cst_129 {dimension_numbers = #tpu.dot_dimension_numbers<[1], [0], [0], [1], [0, 0, 1, 1], [], []>} : vector<4x64xf32>, vector<64x64xf32>, vector<4x64xf32> -> vector<4x64xf32>
    %361 = vector.broadcast %328 : vector<1x64xf32> to vector<4x64xf32>
    %362 = arith.addf %360, %361 : vector<4x64xf32>
    %cst_130 = arith.constant dense<0.000000e+00> : vector<4x64xf32>
    %363 = tpu.matmul %352, %322, %cst_130 {dimension_numbers = #tpu.dot_dimension_numbers<[1], [0], [0], [1], [0, 0, 1, 1], [], []>} : vector<4x64xf32>, vector<64x64xf32>, vector<4x64xf32> -> vector<4x64xf32>
    %364 = vector.broadcast %330 : vector<1x64xf32> to vector<4x64xf32>
    %365 = arith.addf %363, %364 : vector<4x64xf32>
    %366 = arith.negf %359 : vector<4x64xf32>
    %367 = math.exp %366 : vector<4x64xf32>
    %cst_131 = arith.constant 1.000000e+00 : f32
    %368 = vector.broadcast %cst_131 : f32 to vector<4x64xf32>
    %369 = arith.addf %368, %367 : vector<4x64xf32>
    %370 = arith.divf %368, %369 : vector<4x64xf32>
    %371 = arith.mulf %370, %345 : vector<4x64xf32>
    %372 = arith.negf %356 : vector<4x64xf32>
    %373 = math.exp %372 : vector<4x64xf32>
    %cst_132 = arith.constant 1.000000e+00 : f32
    %374 = vector.broadcast %cst_132 : f32 to vector<4x64xf32>
    %375 = arith.addf %374, %373 : vector<4x64xf32>
    %376 = arith.divf %374, %375 : vector<4x64xf32>
    %377 = math.tanh %362 : vector<4x64xf32>
    %378 = arith.mulf %376, %377 : vector<4x64xf32>
    %379 = arith.addf %371, %378 : vector<4x64xf32>
    %380 = arith.negf %365 : vector<4x64xf32>
    %381 = math.exp %380 : vector<4x64xf32>
    %cst_133 = arith.constant 1.000000e+00 : f32
    %382 = vector.broadcast %cst_133 : f32 to vector<4x64xf32>
    %383 = arith.addf %382, %381 : vector<4x64xf32>
    %384 = arith.divf %382, %383 : vector<4x64xf32>
    %385 = math.tanh %379 : vector<4x64xf32>
    %386 = arith.mulf %384, %385 : vector<4x64xf32>
    %c4 = arith.constant 4 : index
    %c0_134 = arith.constant 0 : index
    %387 = vector.load %arg18[%c4, %c0_134] : memref<32x64xf32, #tpu.memory_space<vmem>>, vector<4x64xf32>
    tpu.vector_store %arg18[%c4, %c0_134], %386 {strides = array<i32>} : memref<32x64xf32, #tpu.memory_space<vmem>>, vector<4x64xf32>,
    %cst_135 = arith.constant dense<0.000000e+00> : vector<4x64xf32>
    %388 = tpu.matmul %386, %316, %cst_135 {dimension_numbers = #tpu.dot_dimension_numbers<[1], [0], [0], [1], [0, 0, 1, 1], [], []>} : vector<4x64xf32>, vector<64x64xf32>, vector<4x64xf32> -> vector<4x64xf32>
    %389 = vector.broadcast %324 : vector<1x64xf32> to vector<4x64xf32>
    %390 = arith.addf %388, %389 : vector<4x64xf32>
    %cst_136 = arith.constant dense<0.000000e+00> : vector<4x64xf32>
    %391 = tpu.matmul %386, %318, %cst_136 {dimension_numbers = #tpu.dot_dimension_numbers<[1], [0], [0], [1], [0, 0, 1, 1], [], []>} : vector<4x64xf32>, vector<64x64xf32>, vector<4x64xf32> -> vector<4x64xf32>
    %392 = vector.broadcast %326 : vector<1x64xf32> to vector<4x64xf32>
    %393 = arith.addf %391, %392 : vector<4x64xf32>
    %cst_137 = arith.constant dense<0.000000e+00> : vector<4x64xf32>
    %394 = tpu.matmul %386, %320, %cst_137 {dimension_numbers = #tpu.dot_dimension_numbers<[1], [0], [0], [1], [0, 0, 1, 1], [], []>} : vector<4x64xf32>, vector<64x64xf32>, vector<4x64xf32> -> vector<4x64xf32>
    %395 = vector.broadcast %328 : vector<1x64xf32> to vector<4x64xf32>
    %396 = arith.addf %394, %395 : vector<4x64xf32>
    %cst_138 = arith.constant dense<0.000000e+00> : vector<4x64xf32>
    %397 = tpu.matmul %386, %322, %cst_138 {dimension_numbers = #tpu.dot_dimension_numbers<[1], [0], [0], [1], [0, 0, 1, 1], [], []>} : vector<4x64xf32>, vector<64x64xf32>, vector<4x64xf32> -> vector<4x64xf32>
    %398 = vector.broadcast %330 : vector<1x64xf32> to vector<4x64xf32>
    %399 = arith.addf %397, %398 : vector<4x64xf32>
    %400 = arith.negf %393 : vector<4x64xf32>
    %401 = math.exp %400 : vector<4x64xf32>
    %cst_139 = arith.constant 1.000000e+00 : f32
    %402 = vector.broadcast %cst_139 : f32 to vector<4x64xf32>
    %403 = arith.addf %402, %401 : vector<4x64xf32>
    %404 = arith.divf %402, %403 : vector<4x64xf32>
    %405 = arith.mulf %404, %379 : vector<4x64xf32>
    %406 = arith.negf %390 : vector<4x64xf32>
    %407 = math.exp %406 : vector<4x64xf32>
    %cst_140 = arith.constant 1.000000e+00 : f32
    %408 = vector.broadcast %cst_140 : f32 to vector<4x64xf32>
    %409 = arith.addf %408, %407 : vector<4x64xf32>
    %410 = arith.divf %408, %409 : vector<4x64xf32>
    %411 = math.tanh %396 : vector<4x64xf32>
    %412 = arith.mulf %410, %411 : vector<4x64xf32>
    %413 = arith.addf %405, %412 : vector<4x64xf32>
    %414 = arith.negf %399 : vector<4x64xf32>
    %415 = math.exp %414 : vector<4x64xf32>
    %cst_141 = arith.constant 1.000000e+00 : f32
    %416 = vector.broadcast %cst_141 : f32 to vector<4x64xf32>
    %417 = arith.addf %416, %415 : vector<4x64xf32>
    %418 = arith.divf %416, %417 : vector<4x64xf32>
    %419 = math.tanh %413 : vector<4x64xf32>
    %420 = arith.mulf %418, %419 : vector<4x64xf32>
    %c8 = arith.constant 8 : index
    %c0_142 = arith.constant 0 : index
    %421 = vector.load %arg18[%c8, %c0_142] : memref<32x64xf32, #tpu.memory_space<vmem>>, vector<4x64xf32>
    tpu.vector_store %arg18[%c8, %c0_142], %420 {strides = array<i32>} : memref<32x64xf32, #tpu.memory_space<vmem>>, vector<4x64xf32>,
    %cst_143 = arith.constant dense<0.000000e+00> : vector<4x64xf32>
    %422 = tpu.matmul %420, %316, %cst_143 {dimension_numbers = #tpu.dot_dimension_numbers<[1], [0], [0], [1], [0, 0, 1, 1], [], []>} : vector<4x64xf32>, vector<64x64xf32>, vector<4x64xf32> -> vector<4x64xf32>
    %423 = vector.broadcast %324 : vector<1x64xf32> to vector<4x64xf32>
    %424 = arith.addf %422, %423 : vector<4x64xf32>
    %cst_144 = arith.constant dense<0.000000e+00> : vector<4x64xf32>
    %425 = tpu.matmul %420, %318, %cst_144 {dimension_numbers = #tpu.dot_dimension_numbers<[1], [0], [0], [1], [0, 0, 1, 1], [], []>} : vector<4x64xf32>, vector<64x64xf32>, vector<4x64xf32> -> vector<4x64xf32>
    %426 = vector.broadcast %326 : vector<1x64xf32> to vector<4x64xf32>
    %427 = arith.addf %425, %426 : vector<4x64xf32>
    %cst_145 = arith.constant dense<0.000000e+00> : vector<4x64xf32>
    %428 = tpu.matmul %420, %320, %cst_145 {dimension_numbers = #tpu.dot_dimension_numbers<[1], [0], [0], [1], [0, 0, 1, 1], [], []>} : vector<4x64xf32>, vector<64x64xf32>, vector<4x64xf32> -> vector<4x64xf32>
    %429 = vector.broadcast %328 : vector<1x64xf32> to vector<4x64xf32>
    %430 = arith.addf %428, %429 : vector<4x64xf32>
    %cst_146 = arith.constant dense<0.000000e+00> : vector<4x64xf32>
    %431 = tpu.matmul %420, %322, %cst_146 {dimension_numbers = #tpu.dot_dimension_numbers<[1], [0], [0], [1], [0, 0, 1, 1], [], []>} : vector<4x64xf32>, vector<64x64xf32>, vector<4x64xf32> -> vector<4x64xf32>
    %432 = vector.broadcast %330 : vector<1x64xf32> to vector<4x64xf32>
    %433 = arith.addf %431, %432 : vector<4x64xf32>
    %434 = arith.negf %427 : vector<4x64xf32>
    %435 = math.exp %434 : vector<4x64xf32>
    %cst_147 = arith.constant 1.000000e+00 : f32
    %436 = vector.broadcast %cst_147 : f32 to vector<4x64xf32>
    %437 = arith.addf %436, %435 : vector<4x64xf32>
    %438 = arith.divf %436, %437 : vector<4x64xf32>
    %439 = arith.mulf %438, %413 : vector<4x64xf32>
    %440 = arith.negf %424 : vector<4x64xf32>
    %441 = math.exp %440 : vector<4x64xf32>
    %cst_148 = arith.constant 1.000000e+00 : f32
    %442 = vector.broadcast %cst_148 : f32 to vector<4x64xf32>
    %443 = arith.addf %442, %441 : vector<4x64xf32>
    %444 = arith.divf %442, %443 : vector<4x64xf32>
    %445 = math.tanh %430 : vector<4x64xf32>
    %446 = arith.mulf %444, %445 : vector<4x64xf32>
    %447 = arith.addf %439, %446 : vector<4x64xf32>
    %448 = arith.negf %433 : vector<4x64xf32>
    %449 = math.exp %448 : vector<4x64xf32>
    %cst_149 = arith.constant 1.000000e+00 : f32
    %450 = vector.broadcast %cst_149 : f32 to vector<4x64xf32>
    %451 = arith.addf %450, %449 : vector<4x64xf32>
    %452 = arith.divf %450, %451 : vector<4x64xf32>
    %453 = math.tanh %447 : vector<4x64xf32>
    %454 = arith.mulf %452, %453 : vector<4x64xf32>
    %c12 = arith.constant 12 : index
    %c0_150 = arith.constant 0 : index
    %455 = vector.load %arg18[%c12, %c0_150] : memref<32x64xf32, #tpu.memory_space<vmem>>, vector<4x64xf32>
    tpu.vector_store %arg18[%c12, %c0_150], %454 {strides = array<i32>} : memref<32x64xf32, #tpu.memory_space<vmem>>, vector<4x64xf32>,
    %cst_151 = arith.constant dense<0.000000e+00> : vector<4x64xf32>
    %456 = tpu.matmul %454, %316, %cst_151 {dimension_numbers = #tpu.dot_dimension_numbers<[1], [0], [0], [1], [0, 0, 1, 1], [], []>} : vector<4x64xf32>, vector<64x64xf32>, vector<4x64xf32> -> vector<4x64xf32>
    %457 = vector.broadcast %324 : vector<1x64xf32> to vector<4x64xf32>
    %458 = arith.addf %456, %457 : vector<4x64xf32>
    %cst_152 = arith.constant dense<0.000000e+00> : vector<4x64xf32>
    %459 = tpu.matmul %454, %318, %cst_152 {dimension_numbers = #tpu.dot_dimension_numbers<[1], [0], [0], [1], [0, 0, 1, 1], [], []>} : vector<4x64xf32>, vector<64x64xf32>, vector<4x64xf32> -> vector<4x64xf32>
    %460 = vector.broadcast %326 : vector<1x64xf32> to vector<4x64xf32>
    %461 = arith.addf %459, %460 : vector<4x64xf32>
    %cst_153 = arith.constant dense<0.000000e+00> : vector<4x64xf32>
    %462 = tpu.matmul %454, %320, %cst_153 {dimension_numbers = #tpu.dot_dimension_numbers<[1], [0], [0], [1], [0, 0, 1, 1], [], []>} : vector<4x64xf32>, vector<64x64xf32>, vector<4x64xf32> -> vector<4x64xf32>
    %463 = vector.broadcast %328 : vector<1x64xf32> to vector<4x64xf32>
    %464 = arith.addf %462, %463 : vector<4x64xf32>
    %cst_154 = arith.constant dense<0.000000e+00> : vector<4x64xf32>
    %465 = tpu.matmul %454, %322, %cst_154 {dimension_numbers = #tpu.dot_dimension_numbers<[1], [0], [0], [1], [0, 0, 1, 1], [], []>} : vector<4x64xf32>, vector<64x64xf32>, vector<4x64xf32> -> vector<4x64xf32>
    %466 = vector.broadcast %330 : vector<1x64xf32> to vector<4x64xf32>
    %467 = arith.addf %465, %466 : vector<4x64xf32>
    %468 = arith.negf %461 : vector<4x64xf32>
    %469 = math.exp %468 : vector<4x64xf32>
    %cst_155 = arith.constant 1.000000e+00 : f32
    %470 = vector.broadcast %cst_155 : f32 to vector<4x64xf32>
    %471 = arith.addf %470, %469 : vector<4x64xf32>
    %472 = arith.divf %470, %471 : vector<4x64xf32>
    %473 = arith.mulf %472, %447 : vector<4x64xf32>
    %474 = arith.negf %458 : vector<4x64xf32>
    %475 = math.exp %474 : vector<4x64xf32>
    %cst_156 = arith.constant 1.000000e+00 : f32
    %476 = vector.broadcast %cst_156 : f32 to vector<4x64xf32>
    %477 = arith.addf %476, %475 : vector<4x64xf32>
    %478 = arith.divf %476, %477 : vector<4x64xf32>
    %479 = math.tanh %464 : vector<4x64xf32>
    %480 = arith.mulf %478, %479 : vector<4x64xf32>
    %481 = arith.addf %473, %480 : vector<4x64xf32>
    %482 = arith.negf %467 : vector<4x64xf32>
    %483 = math.exp %482 : vector<4x64xf32>
    %cst_157 = arith.constant 1.000000e+00 : f32
    %484 = vector.broadcast %cst_157 : f32 to vector<4x64xf32>
    %485 = arith.addf %484, %483 : vector<4x64xf32>
    %486 = arith.divf %484, %485 : vector<4x64xf32>
    %487 = math.tanh %481 : vector<4x64xf32>
    %488 = arith.mulf %486, %487 : vector<4x64xf32>
    %c16 = arith.constant 16 : index
    %c0_158 = arith.constant 0 : index
    %489 = vector.load %arg18[%c16, %c0_158] : memref<32x64xf32, #tpu.memory_space<vmem>>, vector<4x64xf32>
    tpu.vector_store %arg18[%c16, %c0_158], %488 {strides = array<i32>} : memref<32x64xf32, #tpu.memory_space<vmem>>, vector<4x64xf32>,
    %cst_159 = arith.constant dense<0.000000e+00> : vector<4x64xf32>
    %490 = tpu.matmul %488, %316, %cst_159 {dimension_numbers = #tpu.dot_dimension_numbers<[1], [0], [0], [1], [0, 0, 1, 1], [], []>} : vector<4x64xf32>, vector<64x64xf32>, vector<4x64xf32> -> vector<4x64xf32>
    %491 = vector.broadcast %324 : vector<1x64xf32> to vector<4x64xf32>
    %492 = arith.addf %490, %491 : vector<4x64xf32>
    %cst_160 = arith.constant dense<0.000000e+00> : vector<4x64xf32>
    %493 = tpu.matmul %488, %318, %cst_160 {dimension_numbers = #tpu.dot_dimension_numbers<[1], [0], [0], [1], [0, 0, 1, 1], [], []>} : vector<4x64xf32>, vector<64x64xf32>, vector<4x64xf32> -> vector<4x64xf32>
    %494 = vector.broadcast %326 : vector<1x64xf32> to vector<4x64xf32>
    %495 = arith.addf %493, %494 : vector<4x64xf32>
    %cst_161 = arith.constant dense<0.000000e+00> : vector<4x64xf32>
    %496 = tpu.matmul %488, %320, %cst_161 {dimension_numbers = #tpu.dot_dimension_numbers<[1], [0], [0], [1], [0, 0, 1, 1], [], []>} : vector<4x64xf32>, vector<64x64xf32>, vector<4x64xf32> -> vector<4x64xf32>
    %497 = vector.broadcast %328 : vector<1x64xf32> to vector<4x64xf32>
    %498 = arith.addf %496, %497 : vector<4x64xf32>
    %cst_162 = arith.constant dense<0.000000e+00> : vector<4x64xf32>
    %499 = tpu.matmul %488, %322, %cst_162 {dimension_numbers = #tpu.dot_dimension_numbers<[1], [0], [0], [1], [0, 0, 1, 1], [], []>} : vector<4x64xf32>, vector<64x64xf32>, vector<4x64xf32> -> vector<4x64xf32>
    %500 = vector.broadcast %330 : vector<1x64xf32> to vector<4x64xf32>
    %501 = arith.addf %499, %500 : vector<4x64xf32>
    %502 = arith.negf %495 : vector<4x64xf32>
    %503 = math.exp %502 : vector<4x64xf32>
    %cst_163 = arith.constant 1.000000e+00 : f32
    %504 = vector.broadcast %cst_163 : f32 to vector<4x64xf32>
    %505 = arith.addf %504, %503 : vector<4x64xf32>
    %506 = arith.divf %504, %505 : vector<4x64xf32>
    %507 = arith.mulf %506, %481 : vector<4x64xf32>
    %508 = arith.negf %492 : vector<4x64xf32>
    %509 = math.exp %508 : vector<4x64xf32>
    %cst_164 = arith.constant 1.000000e+00 : f32
    %510 = vector.broadcast %cst_164 : f32 to vector<4x64xf32>
    %511 = arith.addf %510, %509 : vector<4x64xf32>
    %512 = arith.divf %510, %511 : vector<4x64xf32>
    %513 = math.tanh %498 : vector<4x64xf32>
    %514 = arith.mulf %512, %513 : vector<4x64xf32>
    %515 = arith.addf %507, %514 : vector<4x64xf32>
    %516 = arith.negf %501 : vector<4x64xf32>
    %517 = math.exp %516 : vector<4x64xf32>
    %cst_165 = arith.constant 1.000000e+00 : f32
    %518 = vector.broadcast %cst_165 : f32 to vector<4x64xf32>
    %519 = arith.addf %518, %517 : vector<4x64xf32>
    %520 = arith.divf %518, %519 : vector<4x64xf32>
    %521 = math.tanh %515 : vector<4x64xf32>
    %522 = arith.mulf %520, %521 : vector<4x64xf32>
    %c20 = arith.constant 20 : index
    %c0_166 = arith.constant 0 : index
    %523 = vector.load %arg18[%c20, %c0_166] : memref<32x64xf32, #tpu.memory_space<vmem>>, vector<4x64xf32>
    tpu.vector_store %arg18[%c20, %c0_166], %522 {strides = array<i32>} : memref<32x64xf32, #tpu.memory_space<vmem>>, vector<4x64xf32>,
    %cst_167 = arith.constant dense<0.000000e+00> : vector<4x64xf32>
    %524 = tpu.matmul %522, %316, %cst_167 {dimension_numbers = #tpu.dot_dimension_numbers<[1], [0], [0], [1], [0, 0, 1, 1], [], []>} : vector<4x64xf32>, vector<64x64xf32>, vector<4x64xf32> -> vector<4x64xf32>
    %525 = vector.broadcast %324 : vector<1x64xf32> to vector<4x64xf32>
    %526 = arith.addf %524, %525 : vector<4x64xf32>
    %cst_168 = arith.constant dense<0.000000e+00> : vector<4x64xf32>
    %527 = tpu.matmul %522, %318, %cst_168 {dimension_numbers = #tpu.dot_dimension_numbers<[1], [0], [0], [1], [0, 0, 1, 1], [], []>} : vector<4x64xf32>, vector<64x64xf32>, vector<4x64xf32> -> vector<4x64xf32>
    %528 = vector.broadcast %326 : vector<1x64xf32> to vector<4x64xf32>
    %529 = arith.addf %527, %528 : vector<4x64xf32>
    %cst_169 = arith.constant dense<0.000000e+00> : vector<4x64xf32>
    %530 = tpu.matmul %522, %320, %cst_169 {dimension_numbers = #tpu.dot_dimension_numbers<[1], [0], [0], [1], [0, 0, 1, 1], [], []>} : vector<4x64xf32>, vector<64x64xf32>, vector<4x64xf32> -> vector<4x64xf32>
    %531 = vector.broadcast %328 : vector<1x64xf32> to vector<4x64xf32>
    %532 = arith.addf %530, %531 : vector<4x64xf32>
    %cst_170 = arith.constant dense<0.000000e+00> : vector<4x64xf32>
    %533 = tpu.matmul %522, %322, %cst_170 {dimension_numbers = #tpu.dot_dimension_numbers<[1], [0], [0], [1], [0, 0, 1, 1], [], []>} : vector<4x64xf32>, vector<64x64xf32>, vector<4x64xf32> -> vector<4x64xf32>
    %534 = vector.broadcast %330 : vector<1x64xf32> to vector<4x64xf32>
    %535 = arith.addf %533, %534 : vector<4x64xf32>
    %536 = arith.negf %529 : vector<4x64xf32>
    %537 = math.exp %536 : vector<4x64xf32>
    %cst_171 = arith.constant 1.000000e+00 : f32
    %538 = vector.broadcast %cst_171 : f32 to vector<4x64xf32>
    %539 = arith.addf %538, %537 : vector<4x64xf32>
    %540 = arith.divf %538, %539 : vector<4x64xf32>
    %541 = arith.mulf %540, %515 : vector<4x64xf32>
    %542 = arith.negf %526 : vector<4x64xf32>
    %543 = math.exp %542 : vector<4x64xf32>
    %cst_172 = arith.constant 1.000000e+00 : f32
    %544 = vector.broadcast %cst_172 : f32 to vector<4x64xf32>
    %545 = arith.addf %544, %543 : vector<4x64xf32>
    %546 = arith.divf %544, %545 : vector<4x64xf32>
    %547 = math.tanh %532 : vector<4x64xf32>
    %548 = arith.mulf %546, %547 : vector<4x64xf32>
    %549 = arith.addf %541, %548 : vector<4x64xf32>
    %550 = arith.negf %535 : vector<4x64xf32>
    %551 = math.exp %550 : vector<4x64xf32>
    %cst_173 = arith.constant 1.000000e+00 : f32
    %552 = vector.broadcast %cst_173 : f32 to vector<4x64xf32>
    %553 = arith.addf %552, %551 : vector<4x64xf32>
    %554 = arith.divf %552, %553 : vector<4x64xf32>
    %555 = math.tanh %549 : vector<4x64xf32>
    %556 = arith.mulf %554, %555 : vector<4x64xf32>
    %c24 = arith.constant 24 : index
    %c0_174 = arith.constant 0 : index
    %557 = vector.load %arg18[%c24, %c0_174] : memref<32x64xf32, #tpu.memory_space<vmem>>, vector<4x64xf32>
    tpu.vector_store %arg18[%c24, %c0_174], %556 {strides = array<i32>} : memref<32x64xf32, #tpu.memory_space<vmem>>, vector<4x64xf32>,
    %cst_175 = arith.constant dense<0.000000e+00> : vector<4x64xf32>
    %558 = tpu.matmul %556, %316, %cst_175 {dimension_numbers = #tpu.dot_dimension_numbers<[1], [0], [0], [1], [0, 0, 1, 1], [], []>} : vector<4x64xf32>, vector<64x64xf32>, vector<4x64xf32> -> vector<4x64xf32>
    %559 = vector.broadcast %324 : vector<1x64xf32> to vector<4x64xf32>
    %560 = arith.addf %558, %559 : vector<4x64xf32>
    %cst_176 = arith.constant dense<0.000000e+00> : vector<4x64xf32>
    %561 = tpu.matmul %556, %318, %cst_176 {dimension_numbers = #tpu.dot_dimension_numbers<[1], [0], [0], [1], [0, 0, 1, 1], [], []>} : vector<4x64xf32>, vector<64x64xf32>, vector<4x64xf32> -> vector<4x64xf32>
    %562 = vector.broadcast %326 : vector<1x64xf32> to vector<4x64xf32>
    %563 = arith.addf %561, %562 : vector<4x64xf32>
    %cst_177 = arith.constant dense<0.000000e+00> : vector<4x64xf32>
    %564 = tpu.matmul %556, %320, %cst_177 {dimension_numbers = #tpu.dot_dimension_numbers<[1], [0], [0], [1], [0, 0, 1, 1], [], []>} : vector<4x64xf32>, vector<64x64xf32>, vector<4x64xf32> -> vector<4x64xf32>
    %565 = vector.broadcast %328 : vector<1x64xf32> to vector<4x64xf32>
    %566 = arith.addf %564, %565 : vector<4x64xf32>
    %cst_178 = arith.constant dense<0.000000e+00> : vector<4x64xf32>
    %567 = tpu.matmul %556, %322, %cst_178 {dimension_numbers = #tpu.dot_dimension_numbers<[1], [0], [0], [1], [0, 0, 1, 1], [], []>} : vector<4x64xf32>, vector<64x64xf32>, vector<4x64xf32> -> vector<4x64xf32>
    %568 = vector.broadcast %330 : vector<1x64xf32> to vector<4x64xf32>
    %569 = arith.addf %567, %568 : vector<4x64xf32>
    %570 = arith.negf %563 : vector<4x64xf32>
    %571 = math.exp %570 : vector<4x64xf32>
    %cst_179 = arith.constant 1.000000e+00 : f32
    %572 = vector.broadcast %cst_179 : f32 to vector<4x64xf32>
    %573 = arith.addf %572, %571 : vector<4x64xf32>
    %574 = arith.divf %572, %573 : vector<4x64xf32>
    %575 = arith.mulf %574, %549 : vector<4x64xf32>
    %576 = arith.negf %560 : vector<4x64xf32>
    %577 = math.exp %576 : vector<4x64xf32>
    %cst_180 = arith.constant 1.000000e+00 : f32
    %578 = vector.broadcast %cst_180 : f32 to vector<4x64xf32>
    %579 = arith.addf %578, %577 : vector<4x64xf32>
    %580 = arith.divf %578, %579 : vector<4x64xf32>
    %581 = math.tanh %566 : vector<4x64xf32>
    %582 = arith.mulf %580, %581 : vector<4x64xf32>
    %583 = arith.addf %575, %582 : vector<4x64xf32>
    %584 = arith.negf %569 : vector<4x64xf32>
    %585 = math.exp %584 : vector<4x64xf32>
    %cst_181 = arith.constant 1.000000e+00 : f32
    %586 = vector.broadcast %cst_181 : f32 to vector<4x64xf32>
    %587 = arith.addf %586, %585 : vector<4x64xf32>
    %588 = arith.divf %586, %587 : vector<4x64xf32>
    %589 = math.tanh %583 : vector<4x64xf32>
    %590 = arith.mulf %588, %589 : vector<4x64xf32>
    %c28 = arith.constant 28 : index
    %c0_182 = arith.constant 0 : index
    %591 = vector.load %arg18[%c28, %c0_182] : memref<32x64xf32, #tpu.memory_space<vmem>>, vector<4x64xf32>
    tpu.vector_store %arg18[%c28, %c0_182], %590 {strides = array<i32>} : memref<32x64xf32, #tpu.memory_space<vmem>>, vector<4x64xf32>,
    %c0_183 = arith.constant 0 : index
    %c0_184 = arith.constant 0 : index
    %592 = vector.load %arg18[%c0_183, %c0_184] : memref<32x64xf32, #tpu.memory_space<vmem>>, vector<32x64xf32>
    %c0_185 = arith.constant 0 : index
    %c0_186 = arith.constant 0 : index
    %593 = vector.load %arg15[%c0_185, %c0_186] : memref<64x2xf32, #tpu.memory_space<vmem>>, vector<64x2xf32>
    %cst_187 = arith.constant dense<0.000000e+00> : vector<32x2xf32>
    %594 = tpu.matmul %592, %593, %cst_187 {dimension_numbers = #tpu.dot_dimension_numbers<[1], [0], [0], [1], [0, 0, 1, 1], [], []>} : vector<32x64xf32>, vector<64x2xf32>, vector<32x2xf32> -> vector<32x2xf32>
    %c0_188 = arith.constant 0 : index
    %c0_189 = arith.constant 0 : index
    %595 = vector.load %arg16[%c0_188, %c0_189] : memref<1x2xf32, #tpu.memory_space<vmem>>, vector<1x2xf32>
    %596 = vector.broadcast %595 : vector<1x2xf32> to vector<32x2xf32>
    %597 = arith.addf %594, %596 : vector<32x2xf32>
    %c0_190 = arith.constant 0 : index
    %c0_191 = arith.constant 0 : index
    %598 = vector.load %arg17[%c0_190, %c0_191] : memref<32x2xf32, #tpu.memory_space<vmem>>, vector<32x2xf32>
    tpu.vector_store %arg17[%c0_190, %c0_191], %597 {strides = array<i32>} : memref<32x2xf32, #tpu.memory_space<vmem>>, vector<32x2xf32>,
    return
  }
}

</mosaic_0001>

<llo_original>
// kernel: trajectory_intention_forward.1
$region0: #{trajectory_intention_forward.1}
  #allocation0 [shape = 'u32[]', space=smem, size = 0x4, offset = 0x4, fixed_abs, tag = 'smem constant byte address 0x4 - core index']
  #allocation1 [shape = 'u32[144,128]{1,0:T(1,128)}', space=vmem, size = 0x12000, scoped, tag = 'internal scratch']
  #allocation2 [shape = 'f32[32,64]{1,0:T(8,128)}', space=vmem, size = 0x4000, scoped, tag = 'scratch operand']
  %s0 = inlined_call_operand.vmem [shape: f32[32,2], index: 0, kind: input, shape index: {}]
  %s1 = inlined_call_operand.vmem [shape: f32[4,2], index: 1, kind: input, shape index: {}]
  %s2 = inlined_call_operand.vmem [shape: f32[2,128], index: 2, kind: input, shape index: {}]
  %s3 = inlined_call_operand.vmem [shape: f32[1,128], index: 3, kind: input, shape index: {}]
  %s4 = inlined_call_operand.hbm [shape: f32[4,32,32], index: 4, kind: input, shape index: {}]
  %s5 = inlined_call_operand.vmem [shape: f32[32,128], index: 5, kind: input, shape index: {}]
  %s6 = inlined_call_operand.vmem [shape: f32[1,128], index: 6, kind: input, shape index: {}]
  %s7 = inlined_call_operand.vmem [shape: f32[128,62], index: 7, kind: input, shape index: {}]
  %s8 = inlined_call_operand.vmem [shape: f32[1,62], index: 8, kind: input, shape index: {}]
  %s9 = inlined_call_operand.vmem [shape: f32[2,256], index: 9, kind: input, shape index: {}]
  %s10 = inlined_call_operand.vmem [shape: f32[1,256], index: 10, kind: input, shape index: {}]
  %s11 = inlined_call_operand.hbm [shape: f32[62,256], index: 11, kind: input, shape index: {}]
  %s12 = inlined_call_operand.vmem [shape: f32[2,256], index: 12, kind: input, shape index: {}]
  %s13 = inlined_call_operand.vmem [shape: f32[4,64,64], index: 13, kind: input, shape index: {}]
  %s14 = inlined_call_operand.vmem [shape: f32[4,1,64], index: 14, kind: input, shape index: {}]
  %s15 = inlined_call_operand.vmem [shape: f32[64,2], index: 15, kind: input, shape index: {}]
  %s16 = inlined_call_operand.vmem [shape: f32[1,2], index: 16, kind: input, shape index: {}]
  %s17 = inlined_call_operand.vmem [shape: f32[32,2], index: 17, kind: output, shape index: {}]
  %s18 = sld [smem:[#allocation0]]
  $region86: #{trajectory_intention_forward.1} parent=0
    _
  %s20 = ssub.s32 1, %s18
  %s21 = scalar_select 0, %s20, %s18
  $region1: #{trajectory_intention_forward.1} parent=0
    #allocation3 [shape = 'u8[65536]{0}', space=vmem, size = 0x10000, scoped, tag = 'input window, operand 4, single buffered']
    #allocation4 [shape = 's32[1]{0}', space=sflag, size = 0x4, scoped, tag = 'scoped memory for trajectory_intention_forward.1']
    #allocation5 [shape = 'u8[65536]{0}', space=vmem, size = 0x10000, scoped, tag = 'input window, operand 11, single buffered']
    #allocation6 [shape = 's32[1]{0}', space=sflag, size = 0x4, scoped, tag = 'scoped memory for trajectory_intention_forward.1']
    %22 = vsyncpa [#allocation4], 0
    %23 = vsyncpa [#allocation6], 0
    // Predicated region
    $region2: #{trajectory_intention_forward.1} parent=1 // pred_check
      _
    $region3: #{trajectory_intention_forward.1} parent=1 // pred_check_branch
      %25 = sbr.rel (0) target = $region5
    $region4: #{trajectory_intention_forward.1} parent=1 // pred_region
      _
    $region5: #{trajectory_intention_forward.1} parent=1 // pred_fallthru
      _
    // Predicated region
    $region6: #{trajectory_intention_forward.1} parent=1 // pred_check
      _
    $region7: #{trajectory_intention_forward.1} parent=1 // pred_check_branch
      %27 = sbr.rel (0) target = $region9
    $region8: #{trajectory_intention_forward.1} parent=1 // pred_region
      _
    $region9: #{trajectory_intention_forward.1} parent=1 // pred_fallthru
      _
    // Predicated region
    $region10: #{trajectory_intention_forward.1} parent=1 // pred_check
      _
    $region11: #{trajectory_intention_forward.1} parent=1 // pred_check_branch
      %29 = sbr.rel (0) target = $region13
    $region12: #{trajectory_intention_forward.1} parent=1 // pred_region
      _
    $region13: #{trajectory_intention_forward.1} parent=1 // pred_fallthru
      _
    // Predicated region
    $region14: #{trajectory_intention_forward.1} parent=1 // pred_check
      _
    $region15: #{trajectory_intention_forward.1} parent=1 // pred_check_branch
      %31 = sbr.rel (0) target = $region17
    $region16: #{trajectory_intention_forward.1} parent=1 // pred_region
      _
    $region17: #{trajectory_intention_forward.1} parent=1 // pred_fallthru
      _
    // Predicated region
    $region18: #{trajectory_intention_forward.1} parent=1 // pred_check
      _
    $region19: #{trajectory_intention_forward.1} parent=1 // pred_check_branch
      %33 = sbr.rel (0) target = $region21
    $region20: #{trajectory_intention_forward.1} parent=1 // pred_region
      %s35 = ssub.s32 2048, 2048
      %36 = vsyncadd [#allocation4], %s35
      %s37 = sshll.u32 [#allocation3], 4
      %s38 = int_to_ptr.vmem [resolvable:$true] %s37
      %43 = dma.hbm_to_vmem [thread:$0]  %s4, 2048, %s38, [#allocation4], 128, 128, 8
    $region21: #{trajectory_intention_forward.1} parent=1 // pred_fallthru
      _
    // Predicated region
    $region22: #{trajectory_intention_forward.1} parent=1 // pred_check
      _
    $region23: #{trajectory_intention_forward.1} parent=1 // pred_check_branch
      %45 = sbr.rel (0) target = $region25
    $region24: #{trajectory_intention_forward.1} parent=1 // pred_region
      _
    $region25: #{trajectory_intention_forward.1} parent=1 // pred_fallthru
      _
    // Predicated region
    $region26: #{trajectory_intention_forward.1} parent=1 // pred_check
      _
    $region27: #{trajectory_intention_forward.1} parent=1 // pred_check_branch
      %47 = sbr.rel (0) target = $region29
    $region28: #{trajectory_intention_forward.1} parent=1 // pred_region
      _
    $region29: #{trajectory_intention_forward.1} parent=1 // pred_fallthru
      _
    // Predicated region
    $region30: #{trajectory_intention_forward.1} parent=1 // pred_check
      _
    $region31: #{trajectory_intention_forward.1} parent=1 // pred_check_branch
      %49 = sbr.rel (0) target = $region33
    $region32: #{trajectory_intention_forward.1} parent=1 // pred_region
      _
    $region33: #{trajectory_intention_forward.1} parent=1 // pred_fallthru
      _
    // Predicated region
    $region34: #{trajectory_intention_forward.1} parent=1 // pred_check
      _
    $region35: #{trajectory_intention_forward.1} parent=1 // pred_check_branch
      %51 = sbr.rel (0) target = $region37
    $region36: #{trajectory_intention_forward.1} parent=1 // pred_region
      _
    $region37: #{trajectory_intention_forward.1} parent=1 // pred_fallthru
      _
    // Predicated region
    $region38: #{trajectory_intention_forward.1} parent=1 // pred_check
      _
    $region39: #{trajectory_intention_forward.1} parent=1 // pred_check_branch
      %53 = sbr.rel (0) target = $region41
    $region40: #{trajectory_intention_forward.1} parent=1 // pred_region
      _
    $region41: #{trajectory_intention_forward.1} parent=1 // pred_fallthru
      _
    // Predicated region
    $region42: #{trajectory_intention_forward.1} parent=1 // pred_check
      _
    $region43: #{trajectory_intention_forward.1} parent=1 // pred_check_branch
      %55 = sbr.rel (0) target = $region45
    $region44: #{trajectory_intention_forward.1} parent=1 // pred_region
      _
    $region45: #{trajectory_intention_forward.1} parent=1 // pred_fallthru
      _
    // Predicated region
    $region46: #{trajectory_intention_forward.1} parent=1 // pred_check
      _
    $region47: #{trajectory_intention_forward.1} parent=1 // pred_check_branch
      %57 = sbr.rel (0) target = $region49
    $region48: #{trajectory_intention_forward.1} parent=1 // pred_region
      %s59 = ssub.s32 2048, 2048
      %60 = vsyncadd [#allocation6], %s59
      %s61 = sshll.u32 [#allocation5], 4
      %s62 = int_to_ptr.vmem [resolvable:$true] %s61
      %67 = dma.hbm_to_vmem [thread:$0]  %s11, 2048, %s62, [#allocation6], 256, 256, 16
    $region49: #{trajectory_intention_forward.1} parent=1 // pred_fallthru
      _
    // Predicated region
    $region50: #{trajectory_intention_forward.1} parent=1 // pred_check
      _
    $region51: #{trajectory_intention_forward.1} parent=1 // pred_check_branch
      %69 = sbr.rel (0) target = $region53
    $region52: #{trajectory_intention_forward.1} parent=1 // pred_region
      _
    $region53: #{trajectory_intention_forward.1} parent=1 // pred_fallthru
      _
    // Predicated region
    $region54: #{trajectory_intention_forward.1} parent=1 // pred_check
      _
    $region55: #{trajectory_intention_forward.1} parent=1 // pred_check_branch
      %71 = sbr.rel (0) target = $region57
    $region56: #{trajectory_intention_forward.1} parent=1 // pred_region
      _
    $region57: #{trajectory_intention_forward.1} parent=1 // pred_fallthru
      _
    // Predicated region
    $region58: #{trajectory_intention_forward.1} parent=1 // pred_check
      _
    $region59: #{trajectory_intention_forward.1} parent=1 // pred_check_branch
      %73 = sbr.rel (0) target = $region61
    $region60: #{trajectory_intention_forward.1} parent=1 // pred_region
      _
    $region61: #{trajectory_intention_forward.1} parent=1 // pred_fallthru
      _
    // Predicated region
    $region62: #{trajectory_intention_forward.1} parent=1 // pred_check
      _
    $region63: #{trajectory_intention_forward.1} parent=1 // pred_check_branch
      %75 = sbr.rel (0) target = $region65
    $region64: #{trajectory_intention_forward.1} parent=1 // pred_region
      _
    $region65: #{trajectory_intention_forward.1} parent=1 // pred_fallthru
      _
    // Predicated region
    $region66: #{trajectory_intention_forward.1} parent=1 // pred_check
      _
    $region67: #{trajectory_intention_forward.1} parent=1 // pred_check_branch
      %77 = sbr.rel (0) target = $region69
    $region68: #{trajectory_intention_forward.1} parent=1 // pred_region
      _
    $region69: #{trajectory_intention_forward.1} parent=1 // pred_fallthru
      _
    // Predicated region
    $region70: #{trajectory_intention_forward.1} parent=1 // pred_check
      _
    $region71: #{trajectory_intention_forward.1} parent=1 // pred_check_branch
      %79 = sbr.rel (0) target = $region73
    $region72: #{trajectory_intention_forward.1} parent=1 // pred_region
      %80 = dma.done [#allocation4], 2048
    $region73: #{trajectory_intention_forward.1} parent=1 // pred_fallthru
      _
    // Predicated region
    $region74: #{trajectory_intention_forward.1} parent=1 // pred_check
      _
    $region75: #{trajectory_intention_forward.1} parent=1 // pred_check_branch
      %82 = sbr.rel (0) target = $region77
    $region76: #{trajectory_intention_forward.1} parent=1 // pred_region
      %83 = dma.done [#allocation6], 2048
    $region77: #{trajectory_intention_forward.1} parent=1 // pred_fallthru
      _
    %v84 = vld [vmem:[%s0] sm:$0xff]
    %v85 = vld [vmem:[%s0 + $0x8] sm:$0xff]
    %v86 = vld [vmem:[%s0 + $0x10] sm:$0xff]
    %v87 = vld [vmem:[%s0 + $0x18] sm:$0xff]
    %v88 = vld [vmem:[%s2] sm:$0x3]
    %v89 = vld [vmem:[%s3] sm:$0x1]
    %v91 = vlaneseq
    %v92 = vshrl.u32 %v91, 7
    %v93 = vsub.s32 0, %v92
    %v94 = vrot.slane %v89, %v93
    %vm96 = vcmask 15360
    %v98 = vsel %vm96, %v84, 0
    %v101 = vsel %vm96, %v85, 0
    %v104 = vsel %vm96, %v86, 0
    %v107 = vsel %vm96, %v87, 0
    %vm109 = vcmask 1041408
    %v111 = vsel %vm109, %v88, 0
    %113 = vmatprep.subr.mxu0 0.0
    %114 = vmatpush1.msra.mxu0 %v111
    %115 = vmatprep.subr.mxu0 0.0
    %116 = vmatpush1.msra.mxu0 0.0
    %117 = vmatprep.subr.mxu0 0.0
    %118 = vmatpush1.msra.mxu0 0.0
    %119 = vmatprep.subr.mxu0 0.0
    %120 = vmatpush1.msra.mxu0 0.0
    %121 = vmatprep.subr.mxu0 0.0
    %122 = vmatpush1.msra.mxu0 0.0
    %123 = vmatprep.subr.mxu0 0.0
    %124 = vmatpush1.msra.mxu0 0.0
    %125 = vmatprep.subr.mxu0 0.0
    %126 = vmatpush1.msra.mxu0 0.0
    %127 = vmatprep.subr.mxu0 0.0
    %128 = vmatpush1.msra.mxu0 0.0
    %129 = vmatprep.subr.mxu0 0.0
    %130 = vmatpush1.msra.mxu0 0.0
    %131 = vmatprep.subr.mxu0 0.0
    %132 = vmatpush1.msra.mxu0 0.0
    %133 = vmatprep.subr.mxu0 0.0
    %134 = vmatpush1.msra.mxu0 0.0
    %135 = vmatprep.subr.mxu0 0.0
    %136 = vmatpush1.msra.mxu0 0.0
    %137 = vmatprep.subr.mxu0 0.0
    %138 = vmatpush1.msra.mxu0 0.0
    %139 = vmatprep.subr.mxu0 0.0
    %140 = vmatpush1.msra.mxu0 0.0
    %141 = vmatprep.subr.mxu0 0.0
    %142 = vmatpush1.msra.mxu0 0.0
    %143 = vmatprep.subr.mxu0 0.0
    %144 = vmatpush1.msra.mxu0 0.0
    %145 = vmatprep.subr.mxu0 0.0
    %146 = vmatpush1.msra.mxu0 0.0
    %147 = vmatprep.subr.mxu0 0.0
    %148 = vmatpush1.msra.mxu0 0.0
    %149 = vmatprep.subr.mxu0 0.0
    %150 = vmatpush1.msra.mxu0 0.0
    %151 = vmatprep.subr.mxu0 0.0
    %152 = vmatpush1.msra.mxu0 0.0
    %153 = vmatprep.subr.mxu0 0.0
    %154 = vmatpush1.msra.mxu0 0.0
    %155 = vmatprep.subr.mxu0 0.0
    %156 = vmatpush1.msra.mxu0 0.0
    %157 = vmatprep.subr.mxu0 0.0
    %158 = vmatpush1.msra.mxu0 0.0
    %159 = vmatprep.subr.mxu0 0.0
    %160 = vmatpush1.msra.mxu0 0.0
    %161 = vmatprep.subr.mxu0 0.0
    %162 = vmatpush1.msra.mxu0 0.0
    %163 = vmatprep.subr.mxu0 0.0
    %164 = vmatpush1.msra.mxu0 0.0
    %165 = vmatprep.subr.mxu0 0.0
    %166 = vmatpush1.msra.mxu0 0.0
    %167 = vmatprep.subr.mxu0 0.0
    %168 = vmatpush1.msra.mxu0 0.0
    %169 = vmatprep.subr.mxu0 0.0
    %170 = vmatpush1.msra.mxu0 0.0
    %171 = vmatprep.subr.mxu0 0.0
    %172 = vmatpush1.msra.mxu0 0.0
    %173 = vmatprep.subr.mxu0 0.0
    %174 = vmatpush1.msra.mxu0 0.0
    %175 = vmatprep.subr.mxu0 0.0
    %176 = vmatpush1.msra.mxu0 0.0
    %177 = vmatprep.mubr.f32.mxu0 0.0
    %178 = vmatmul.mubr.f32.gmra.mrb[0].mxu0 %v98
    %v179 = vpop.f32.mrb[0].mxu0
    %v180 = vadd.f32 %v94, %v179
    %v181 = vpop.f32.mrb[0].mxu0
    %182 = vmatprep.mubr.f32.mxu0 0.0
    %183 = vmatmul.mubr.f32.gmra.mrb[0].mxu0 %v101
    %v184 = vpop.f32.mrb[0].mxu0
    %v185 = vadd.f32 %v94, %v184
    %v186 = vpop.f32.mrb[0].mxu0
    %187 = vmatprep.mubr.f32.mxu0 0.0
    %188 = vmatmul.mubr.f32.gmra.mrb[0].mxu0 %v104
    %v189 = vpop.f32.mrb[0].mxu0
    %v190 = vadd.f32 %v94, %v189
    %v191 = vpop.f32.mrb[0].mxu0
    %192 = vmatprep.mubr.f32.mxu0 0.0
    %193 = vmatmul.mubr.f32.gmra.mrb[0].mxu0 %v107
    %v194 = vpop.f32.mrb[0].mxu0
    %v195 = vadd.f32 %v94, %v194
    %v196 = vpop.f32.mrb[0].mxu0
    %197 = vdwg.mxu0
    %v198 = vld [vmem:[#allocation3] sm:$0xff]
    %v199 = vld [vmem:[#allocation3 + $0x8] sm:$0xff]
    %v200 = vld [vmem:[#allocation3 + $0x10] sm:$0xff]
    %v201 = vld [vmem:[#allocation3 + $0x18] sm:$0xff]
    %s202 = scalar_lea.vmem [#allocation3], 32
    %v203 = vld [vmem:[%s202] sm:$0xff]
    %v204 = vld [vmem:[%s202 + $0x8] sm:$0xff]
    %v205 = vld [vmem:[%s202 + $0x10] sm:$0xff]
    %v206 = vld [vmem:[%s202 + $0x18] sm:$0xff]
    %s207 = scalar_lea.vmem [#allocation3], 64
    %v208 = vld [vmem:[%s207] sm:$0xff]
    %v209 = vld [vmem:[%s207 + $0x8] sm:$0xff]
    %v210 = vld [vmem:[%s207 + $0x10] sm:$0xff]
    %v211 = vld [vmem:[%s207 + $0x18] sm:$0xff]
    %s212 = scalar_lea.vmem [#allocation3], 96
    %v213 = vld [vmem:[%s212] sm:$0xff]
    %v214 = vld [vmem:[%s212 + $0x8] sm:$0xff]
    %v215 = vld [vmem:[%s212 + $0x10] sm:$0xff]
    %v216 = vld [vmem:[%s212 + $0x18] sm:$0xff]
    %vm217 = vcmask 261120
    %v219 = vsel %vm217, 0.0, 0
    %221 = vmatprep.subr.mxu0 0.0
    %222 = vmatpush1.msra.mxu0 %v198
    %223 = vmatprep.subr.mxu0 0.0
    %224 = vmatpush1.msra.mxu0 %v199
    %225 = vmatprep.subr.mxu0 0.0
    %226 = vmatpush1.msra.mxu0 %v200
    %227 = vmatprep.subr.mxu0 0.0
    %228 = vmatpush1.msra.mxu0 %v201
    %229 = vmatprep.subr.mxu0 0.0
    %230 = vmatpush1.msra.mxu0 0.0
    %231 = vmatprep.subr.mxu0 0.0
    %232 = vmatpush1.msra.mxu0 0.0
    %233 = vmatprep.subr.mxu0 0.0
    %234 = vmatpush1.msra.mxu0 0.0
    %235 = vmatprep.subr.mxu0 0.0
    %236 = vmatpush1.msra.mxu0 0.0
    %237 = vmatprep.subr.mxu0 0.0
    %238 = vmatpush1.msra.mxu0 0.0
    %239 = vmatprep.subr.mxu0 0.0
    %240 = vmatpush1.msra.mxu0 0.0
    %241 = vmatprep.subr.mxu0 0.0
    %242 = vmatpush1.msra.mxu0 0.0
    %243 = vmatprep.subr.mxu0 0.0
    %244 = vmatpush1.msra.mxu0 0.0
    %245 = vmatprep.subr.mxu0 0.0
    %246 = vmatpush1.msra.mxu0 0.0
    %247 = vmatprep.subr.mxu0 0.0
    %248 = vmatpush1.msra.mxu0 0.0
    %249 = vmatprep.subr.mxu0 0.0
    %250 = vmatpush1.msra.mxu0 0.0
    %251 = vmatprep.subr.mxu0 0.0
    %252 = vmatpush1.msra.mxu0 0.0
    %253 = vmatprep.subr.mxu0 0.0
    %254 = vmatpush1.msra.mxu0 0.0
    %255 = vmatprep.subr.mxu0 0.0
    %256 = vmatpush1.msra.mxu0 0.0
    %257 = vmatprep.subr.mxu0 0.0
    %258 = vmatpush1.msra.mxu0 0.0
    %259 = vmatprep.subr.mxu0 0.0
    %260 = vmatpush1.msra.mxu0 0.0
    %261 = vmatprep.subr.mxu0 0.0
    %262 = vmatpush1.msra.mxu0 0.0
    %263 = vmatprep.subr.mxu0 0.0
    %264 = vmatpush1.msra.mxu0 0.0
    %265 = vmatprep.subr.mxu0 0.0
    %266 = vmatpush1.msra.mxu0 0.0
    %267 = vmatprep.subr.mxu0 0.0
    %268 = vmatpush1.msra.mxu0 0.0
    %269 = vmatprep.subr.mxu0 0.0
    %270 = vmatpush1.msra.mxu0 0.0
    %271 = vmatprep.subr.mxu0 0.0
    %272 = vmatpush1.msra.mxu0 0.0
    %273 = vmatprep.subr.mxu0 0.0
    %274 = vmatpush1.msra.mxu0 0.0
    %275 = vmatprep.subr.mxu0 0.0
    %276 = vmatpush1.msra.mxu0 0.0
    %277 = vmatprep.subr.mxu0 0.0
    %278 = vmatpush1.msra.mxu0 0.0
    %279 = vmatprep.subr.mxu0 0.0
    %280 = vmatpush1.msra.mxu0 0.0
    %281 = vmatprep.subr.mxu0 0.0
    %282 = vmatpush1.msra.mxu0 0.0
    %283 = vmatprep.subr.mxu0 0.0
    %284 = vmatpush1.msra.mxu0 0.0
    %285 = vmatprep.mubr.f32.mxu0 0.0
    %286 = vmatmul.mubr.f32.gmra.mrb[0].mxu0 %v219
    %v287 = vpop.f32.mrb[0].mxu0
    %v288 = vadd.f32 0.0, %v287
    %v289 = vpop.f32.mrb[0].mxu0
    %290 = vdwg.mxu0
    %v291 = vadd.f32 %v180, %v288
    %292 = vmatprep.subr.mxu0 0.0
    %293 = vmatpush1.msra.mxu0 %v203
    %294 = vmatprep.subr.mxu0 0.0
    %295 = vmatpush1.msra.mxu0 %v204
    %296 = vmatprep.subr.mxu0 0.0
    %297 = vmatpush1.msra.mxu0 %v205
    %298 = vmatprep.subr.mxu0 0.0
    %299 = vmatpush1.msra.mxu0 %v206
    %300 = vmatprep.subr.mxu0 0.0
    %301 = vmatpush1.msra.mxu0 0.0
    %302 = vmatprep.subr.mxu0 0.0
    %303 = vmatpush1.msra.mxu0 0.0
    %304 = vmatprep.subr.mxu0 0.0
    %305 = vmatpush1.msra.mxu0 0.0
    %306 = vmatprep.subr.mxu0 0.0
    %307 = vmatpush1.msra.mxu0 0.0
    %308 = vmatprep.subr.mxu0 0.0
    %309 = vmatpush1.msra.mxu0 0.0
    %310 = vmatprep.subr.mxu0 0.0
    %311 = vmatpush1.msra.mxu0 0.0
    %312 = vmatprep.subr.mxu0 0.0
    %313 = vmatpush1.msra.mxu0 0.0
    %314 = vmatprep.subr.mxu0 0.0
    %315 = vmatpush1.msra.mxu0 0.0
    %316 = vmatprep.subr.mxu0 0.0
    %317 = vmatpush1.msra.mxu0 0.0
    %318 = vmatprep.subr.mxu0 0.0
    %319 = vmatpush1.msra.mxu0 0.0
    %320 = vmatprep.subr.mxu0 0.0
    %321 = vmatpush1.msra.mxu0 0.0
    %322 = vmatprep.subr.mxu0 0.0
    %323 = vmatpush1.msra.mxu0 0.0
    %324 = vmatprep.subr.mxu0 0.0
    %325 = vmatpush1.msra.mxu0 0.0
    %326 = vmatprep.subr.mxu0 0.0
    %327 = vmatpush1.msra.mxu0 0.0
    %328 = vmatprep.subr.mxu0 0.0
    %329 = vmatpush1.msra.mxu0 0.0
    %330 = vmatprep.subr.mxu0 0.0
    %331 = vmatpush1.msra.mxu0 0.0
    %332 = vmatprep.subr.mxu0 0.0
    %333 = vmatpush1.msra.mxu0 0.0
    %334 = vmatprep.subr.mxu0 0.0
    %335 = vmatpush1.msra.mxu0 0.0
    %336 = vmatprep.subr.mxu0 0.0
    %337 = vmatpush1.msra.mxu0 0.0
    %338 = vmatprep.subr.mxu0 0.0
    %339 = vmatpush1.msra.mxu0 0.0
    %340 = vmatprep.subr.mxu0 0.0
    %341 = vmatpush1.msra.mxu0 0.0
    %342 = vmatprep.subr.mxu0 0.0
    %343 = vmatpush1.msra.mxu0 0.0
    %344 = vmatprep.subr.mxu0 0.0
    %345 = vmatpush1.msra.mxu0 0.0
    %346 = vmatprep.subr.mxu0 0.0
    %347 = vmatpush1.msra.mxu0 0.0
    %348 = vmatprep.subr.mxu0 0.0
    %349 = vmatpush1.msra.mxu0 0.0
    %350 = vmatprep.subr.mxu0 0.0
    %351 = vmatpush1.msra.mxu0 0.0
    %352 = vmatprep.subr.mxu0 0.0
    %353 = vmatpush1.msra.mxu0 0.0
    %354 = vmatprep.subr.mxu0 0.0
    %355 = vmatpush1.msra.mxu0 0.0
    %356 = vmatprep.mubr.f32.mxu0 0.0
    %357 = vmatmul.mubr.f32.gmra.mrb[0].mxu0 %v219
    %v358 = vpop.f32.mrb[0].mxu0
    %v359 = vadd.f32 0.0, %v358
    %v360 = vpop.f32.mrb[0].mxu0
    %361 = vdwg.mxu0
    %363 = vrot.lane.b32.xlu0 %v359, 32
    %v364 = vpop.permute.xlu0 %363
    %v366 = vadd.f32 %v180, %v364
    %367 = vmatprep.subr.mxu0 0.0
    %368 = vmatpush1.msra.mxu0 %v208
    %369 = vmatprep.subr.mxu0 0.0
    %370 = vmatpush1.msra.mxu0 %v209
    %371 = vmatprep.subr.mxu0 0.0
    %372 = vmatpush1.msra.mxu0 %v210
    %373 = vmatprep.subr.mxu0 0.0
    %374 = vmatpush1.msra.mxu0 %v211
    %375 = vmatprep.subr.mxu0 0.0
    %376 = vmatpush1.msra.mxu0 0.0
    %377 = vmatprep.subr.mxu0 0.0
    %378 = vmatpush1.msra.mxu0 0.0
    %379 = vmatprep.subr.mxu0 0.0
    %380 = vmatpush1.msra.mxu0 0.0
    %381 = vmatprep.subr.mxu0 0.0
    %382 = vmatpush1.msra.mxu0 0.0
    %383 = vmatprep.subr.mxu0 0.0
    %384 = vmatpush1.msra.mxu0 0.0
    %385 = vmatprep.subr.mxu0 0.0
    %386 = vmatpush1.msra.mxu0 0.0
    %387 = vmatprep.subr.mxu0 0.0
    %388 = vmatpush1.msra.mxu0 0.0
    %389 = vmatprep.subr.mxu0 0.0
    %390 = vmatpush1.msra.mxu0 0.0
    %391 = vmatprep.subr.mxu0 0.0
    %392 = vmatpush1.msra.mxu0 0.0
    %393 = vmatprep.subr.mxu0 0.0
    %394 = vmatpush1.msra.mxu0 0.0
    %395 = vmatprep.subr.mxu0 0.0
    %396 = vmatpush1.msra.mxu0 0.0
    %397 = vmatprep.subr.mxu0 0.0
    %398 = vmatpush1.msra.mxu0 0.0
    %399 = vmatprep.subr.mxu0 0.0
    %400 = vmatpush1.msra.mxu0 0.0
    %401 = vmatprep.subr.mxu0 0.0
    %402 = vmatpush1.msra.mxu0 0.0
    %403 = vmatprep.subr.mxu0 0.0
    %404 = vmatpush1.msra.mxu0 0.0
    %405 = vmatprep.subr.mxu0 0.0
    %406 = vmatpush1.msra.mxu0 0.0
    %407 = vmatprep.subr.mxu0 0.0
    %408 = vmatpush1.msra.mxu0 0.0
    %409 = vmatprep.subr.mxu0 0.0
    %410 = vmatpush1.msra.mxu0 0.0
    %411 = vmatprep.subr.mxu0 0.0
    %412 = vmatpush1.msra.mxu0 0.0
    %413 = vmatprep.subr.mxu0 0.0
    %414 = vmatpush1.msra.mxu0 0.0
    %415 = vmatprep.subr.mxu0 0.0
    %416 = vmatpush1.msra.mxu0 0.0
    %417 = vmatprep.subr.mxu0 0.0
    %418 = vmatpush1.msra.mxu0 0.0
    %419 = vmatprep.subr.mxu0 0.0
    %420 = vmatpush1.msra.mxu0 0.0
    %421 = vmatprep.subr.mxu0 0.0
    %422 = vmatpush1.msra.mxu0 0.0
    %423 = vmatprep.subr.mxu0 0.0
    %424 = vmatpush1.msra.mxu0 0.0
    %425 = vmatprep.subr.mxu0 0.0
    %426 = vmatpush1.msra.mxu0 0.0
    %427 = vmatprep.subr.mxu0 0.0
    %428 = vmatpush1.msra.mxu0 0.0
    %429 = vmatprep.subr.mxu0 0.0
    %430 = vmatpush1.msra.mxu0 0.0
    %431 = vmatprep.mubr.f32.mxu0 0.0
    %432 = vmatmul.mubr.f32.gmra.mrb[0].mxu0 %v219
    %v433 = vpop.f32.mrb[0].mxu0
    %v434 = vadd.f32 0.0, %v433
    %v435 = vpop.f32.mrb[0].mxu0
    %436 = vdwg.mxu0
    %438 = vrot.lane.b32.xlu0 %v434, 64
    %v439 = vpop.permute.xlu0 %438
    %v441 = vadd.f32 %v180, %v439
    %442 = vmatprep.subr.mxu0 0.0
    %443 = vmatpush1.msra.mxu0 %v213
    %444 = vmatprep.subr.mxu0 0.0
    %445 = vmatpush1.msra.mxu0 %v214
    %446 = vmatprep.subr.mxu0 0.0
    %447 = vmatpush1.msra.mxu0 %v215
    %448 = vmatprep.subr.mxu0 0.0
    %449 = vmatpush1.msra.mxu0 %v216
    %450 = vmatprep.subr.mxu0 0.0
    %451 = vmatpush1.msra.mxu0 0.0
    %452 = vmatprep.subr.mxu0 0.0
    %453 = vmatpush1.msra.mxu0 0.0
    %454 = vmatprep.subr.mxu0 0.0
    %455 = vmatpush1.msra.mxu0 0.0
    %456 = vmatprep.subr.mxu0 0.0
    %457 = vmatpush1.msra.mxu0 0.0
    %458 = vmatprep.subr.mxu0 0.0
    %459 = vmatpush1.msra.mxu0 0.0
    %460 = vmatprep.subr.mxu0 0.0
    %461 = vmatpush1.msra.mxu0 0.0
    %462 = vmatprep.subr.mxu0 0.0
    %463 = vmatpush1.msra.mxu0 0.0
    %464 = vmatprep.subr.mxu0 0.0
    %465 = vmatpush1.msra.mxu0 0.0
    %466 = vmatprep.subr.mxu0 0.0
    %467 = vmatpush1.msra.mxu0 0.0
    %468 = vmatprep.subr.mxu0 0.0
    %469 = vmatpush1.msra.mxu0 0.0
    %470 = vmatprep.subr.mxu0 0.0
    %471 = vmatpush1.msra.mxu0 0.0
    %472 = vmatprep.subr.mxu0 0.0
    %473 = vmatpush1.msra.mxu0 0.0
    %474 = vmatprep.subr.mxu0 0.0
    %475 = vmatpush1.msra.mxu0 0.0
    %476 = vmatprep.subr.mxu0 0.0
    %477 = vmatpush1.msra.mxu0 0.0
    %478 = vmatprep.subr.mxu0 0.0
    %479 = vmatpush1.msra.mxu0 0.0
    %480 = vmatprep.subr.mxu0 0.0
    %481 = vmatpush1.msra.mxu0 0.0
    %482 = vmatprep.subr.mxu0 0.0
    %483 = vmatpush1.msra.mxu0 0.0
    %484 = vmatprep.subr.mxu0 0.0
    %485 = vmatpush1.msra.mxu0 0.0
    %486 = vmatprep.subr.mxu0 0.0
    %487 = vmatpush1.msra.mxu0 0.0
    %488 = vmatprep.subr.mxu0 0.0
    %489 = vmatpush1.msra.mxu0 0.0
    %490 = vmatprep.subr.mxu0 0.0
    %491 = vmatpush1.msra.mxu0 0.0
    %492 = vmatprep.subr.mxu0 0.0
    %493 = vmatpush1.msra.mxu0 0.0
    %494 = vmatprep.subr.mxu0 0.0
    %495 = vmatpush1.msra.mxu0 0.0
    %496 = vmatprep.subr.mxu0 0.0
    %497 = vmatpush1.msra.mxu0 0.0
    %498 = vmatprep.subr.mxu0 0.0
    %499 = vmatpush1.msra.mxu0 0.0
    %500 = vmatprep.subr.mxu0 0.0
    %501 = vmatpush1.msra.mxu0 0.0
    %502 = vmatprep.subr.mxu0 0.0
    %503 = vmatpush1.msra.mxu0 0.0
    %504 = vmatprep.subr.mxu0 0.0
    %505 = vmatpush1.msra.mxu0 0.0
    %506 = vmatprep.mubr.f32.mxu0 0.0
    %507 = vmatmul.mubr.f32.gmra.mrb[0].mxu0 %v219
    %v508 = vpop.f32.mrb[0].mxu0
    %v509 = vadd.f32 0.0, %v508
    %v510 = vpop.f32.mrb[0].mxu0
    %511 = vdwg.mxu0
    %513 = vrot.lane.b32.xlu0 %v509, 96
    %v514 = vpop.permute.xlu0 %513
    %v516 = vadd.f32 %v180, %v514
    %v517 = vxor.u32 %v366, 2147483648
    %v518 = vmul.f32 %v517, 1.442695
    %v519 = vpow.pop %v518
    %v520 = vadd.f32 %v519, 1.0
    %v521 = vrcp.pop %v520
    %v522 = vmul.f32 1.0, %v521
    %v523 = vmul.f32 %v522, 0.0
    %v524 = vxor.u32 %v291, 2147483648
    %v525 = vmul.f32 %v524, 1.442695
    %v526 = vpow.pop %v525
    %v527 = vadd.f32 %v526, 1.0
    %v528 = vrcp.pop %v527
    %v529 = vmul.f32 1.0, %v528
    %v530 = vtanh.pop %v441
    %532 = vrot.lane.b32.xlu0 %v530, 64
    %v533 = vpop.permute.xlu0 %532
    %v535 = vmul.f32 %v529, %v533
    %537 = vrot.lane.b32.xlu0 %v535, 32
    %v538 = vpop.permute.xlu0 %537
    %v540 = vadd.f32 %v523, %v538
    %v541 = vxor.u32 %v516, 2147483648
    %v542 = vmul.f32 %v541, 1.442695
    %v543 = vpow.pop %v542
    %v544 = vadd.f32 %v543, 1.0
    %v545 = vrcp.pop %v544
    %v546 = vmul.f32 1.0, %v545
    %v547 = vtanh.pop %v540
    %549 = vrot.lane.b32.xlu0 %v547, 64
    %v550 = vpop.permute.xlu0 %549
    %v552 = vmul.f32 %v546, %v550
    %554 = vrot.lane.b32.xlu0 %v552, 32
    %v555 = vpop.permute.xlu0 %554
    %v556 = vsel %vm217, %v555, 0
    %558 = vmatprep.subr.mxu0 0.0
    %559 = vmatpush1.msra.mxu0 %v198
    %560 = vmatprep.subr.mxu0 0.0
    %561 = vmatpush1.msra.mxu0 %v199
    %562 = vmatprep.subr.mxu0 0.0
    %563 = vmatpush1.msra.mxu0 %v200
    %564 = vmatprep.subr.mxu0 0.0
    %565 = vmatpush1.msra.mxu0 %v201
    %566 = vmatprep.subr.mxu0 0.0
    %567 = vmatpush1.msra.mxu0 0.0
    %568 = vmatprep.subr.mxu0 0.0
    %569 = vmatpush1.msra.mxu0 0.0
    %570 = vmatprep.subr.mxu0 0.0
    %571 = vmatpush1.msra.mxu0 0.0
    %572 = vmatprep.subr.mxu0 0.0
    %573 = vmatpush1.msra.mxu0 0.0
    %574 = vmatprep.subr.mxu0 0.0
    %575 = vmatpush1.msra.mxu0 0.0
    %576 = vmatprep.subr.mxu0 0.0
    %577 = vmatpush1.msra.mxu0 0.0
    %578 = vmatprep.subr.mxu0 0.0
    %579 = vmatpush1.msra.mxu0 0.0
    %580 = vmatprep.subr.mxu0 0.0
    %581 = vmatpush1.msra.mxu0 0.0
    %582 = vmatprep.subr.mxu0 0.0
    %583 = vmatpush1.msra.mxu0 0.0
    %584 = vmatprep.subr.mxu0 0.0
    %585 = vmatpush1.msra.mxu0 0.0
    %586 = vmatprep.subr.mxu0 0.0
    %587 = vmatpush1.msra.mxu0 0.0
    %588 = vmatprep.subr.mxu0 0.0
    %589 = vmatpush1.msra.mxu0 0.0
    %590 = vmatprep.subr.mxu0 0.0
    %591 = vmatpush1.msra.mxu0 0.0
    %592 = vmatprep.subr.mxu0 0.0
    %593 = vmatpush1.msra.mxu0 0.0
    %594 = vmatprep.subr.mxu0 0.0
    %595 = vmatpush1.msra.mxu0 0.0
    %596 = vmatprep.subr.mxu0 0.0
    %597 = vmatpush1.msra.mxu0 0.0
    %598 = vmatprep.subr.mxu0 0.0
    %599 = vmatpush1.msra.mxu0 0.0
    %600 = vmatprep.subr.mxu0 0.0
    %601 = vmatpush1.msra.mxu0 0.0
    %602 = vmatprep.subr.mxu0 0.0
    %603 = vmatpush1.msra.mxu0 0.0
    %604 = vmatprep.subr.mxu0 0.0
    %605 = vmatpush1.msra.mxu0 0.0
    %606 = vmatprep.subr.mxu0 0.0
    %607 = vmatpush1.msra.mxu0 0.0
    %608 = vmatprep.subr.mxu0 0.0
    %609 = vmatpush1.msra.mxu0 0.0
    %610 = vmatprep.subr.mxu0 0.0
    %611 = vmatpush1.msra.mxu0 0.0
    %612 = vmatprep.subr.mxu0 0.0
    %613 = vmatpush1.msra.mxu0 0.0
    %614 = vmatprep.subr.mxu0 0.0
    %615 = vmatpush1.msra.mxu0 0.0
    %616 = vmatprep.subr.mxu0 0.0
    %617 = vmatpush1.msra.mxu0 0.0
    %618 = vmatprep.subr.mxu0 0.0
    %619 = vmatpush1.msra.mxu0 0.0
    %620 = vmatprep.subr.mxu0 0.0
    %621 = vmatpush1.msra.mxu0 0.0
    %622 = vmatprep.mubr.f32.mxu0 0.0
    %623 = vmatmul.mubr.f32.gmra.mrb[0].mxu0 %v556
    %v624 = vpop.f32.mrb[0].mxu0
    %v625 = vadd.f32 0.0, %v624
    %v626 = vpop.f32.mrb[0].mxu0
    %627 = vdwg.mxu0
    %v629 = vrot.slane %v625, 4
    %v631 = vadd.f32 %v180, %v629
    %632 = vmatprep.subr.mxu0 0.0
    %633 = vmatpush1.msra.mxu0 %v203
    %634 = vmatprep.subr.mxu0 0.0
    %635 = vmatpush1.msra.mxu0 %v204
    %636 = vmatprep.subr.mxu0 0.0
    %637 = vmatpush1.msra.mxu0 %v205
    %638 = vmatprep.subr.mxu0 0.0
    %639 = vmatpush1.msra.mxu0 %v206
    %640 = vmatprep.subr.mxu0 0.0
    %641 = vmatpush1.msra.mxu0 0.0
    %642 = vmatprep.subr.mxu0 0.0
    %643 = vmatpush1.msra.mxu0 0.0
    %644 = vmatprep.subr.mxu0 0.0
    %645 = vmatpush1.msra.mxu0 0.0
    %646 = vmatprep.subr.mxu0 0.0
    %647 = vmatpush1.msra.mxu0 0.0
    %648 = vmatprep.subr.mxu0 0.0
    %649 = vmatpush1.msra.mxu0 0.0
    %650 = vmatprep.subr.mxu0 0.0
    %651 = vmatpush1.msra.mxu0 0.0
    %652 = vmatprep.subr.mxu0 0.0
    %653 = vmatpush1.msra.mxu0 0.0
    %654 = vmatprep.subr.mxu0 0.0
    %655 = vmatpush1.msra.mxu0 0.0
    %656 = vmatprep.subr.mxu0 0.0
    %657 = vmatpush1.msra.mxu0 0.0
    %658 = vmatprep.subr.mxu0 0.0
    %659 = vmatpush1.msra.mxu0 0.0
    %660 = vmatprep.subr.mxu0 0.0
    %661 = vmatpush1.msra.mxu0 0.0
    %662 = vmatprep.subr.mxu0 0.0
    %663 = vmatpush1.msra.mxu0 0.0
    %664 = vmatprep.subr.mxu0 0.0
    %665 = vmatpush1.msra.mxu0 0.0
    %666 = vmatprep.subr.mxu0 0.0
    %667 = vmatpush1.msra.mxu0 0.0
    %668 = vmatprep.subr.mxu0 0.0
    %669 = vmatpush1.msra.mxu0 0.0
    %670 = vmatprep.subr.mxu0 0.0
    %671 = vmatpush1.msra.mxu0 0.0
    %672 = vmatprep.subr.mxu0 0.0
    %673 = vmatpush1.msra.mxu0 0.0
    %674 = vmatprep.subr.mxu0 0.0
    %675 = vmatpush1.msra.mxu0 0.0
    %676 = vmatprep.subr.mxu0 0.0
    %677 = vmatpush1.msra.mxu0 0.0
    %678 = vmatprep.subr.mxu0 0.0
    %679 = vmatpush1.msra.mxu0 0.0
    %680 = vmatprep.subr.mxu0 0.0
    %681 = vmatpush1.msra.mxu0 0.0
    %682 = vmatprep.subr.mxu0 0.0
    %683 = vmatpush1.msra.mxu0 0.0
    %684 = vmatprep.subr.mxu0 0.0
    %685 = vmatpush1.msra.mxu0 0.0
    %686 = vmatprep.subr.mxu0 0.0
    %687 = vmatpush1.msra.mxu0 0.0
    %688 = vmatprep.subr.mxu0 0.0
    %689 = vmatpush1.msra.mxu0 0.0
    %690 = vmatprep.subr.mxu0 0.0
    %691 = vmatpush1.msra.mxu0 0.0
    %692 = vmatprep.subr.mxu0 0.0
    %693 = vmatpush1.msra.mxu0 0.0
    %694 = vmatprep.subr.mxu0 0.0
    %695 = vmatpush1.msra.mxu0 0.0
    %696 = vmatprep.mubr.f32.mxu0 0.0
    %697 = vmatmul.mubr.f32.gmra.mrb[0].mxu0 %v556
    %v698 = vpop.f32.mrb[0].mxu0
    %v699 = vadd.f32 0.0, %v698
    %v700 = vpop.f32.mrb[0].mxu0
    %701 = vdwg.mxu0
    %v703 = vrot.slane %v699, 4
    %704 = vrot.lane.b32.xlu0 %v703, 32
    %v705 = vpop.permute.xlu0 %704
    %v707 = vadd.f32 %v180, %v705
    %708 = vmatprep.subr.mxu0 0.0
    %709 = vmatpush1.msra.mxu0 %v208
    %710 = vmatprep.subr.mxu0 0.0
    %711 = vmatpush1.msra.mxu0 %v209
    %712 = vmatprep.subr.mxu0 0.0
    %713 = vmatpush1.msra.mxu0 %v210
    %714 = vmatprep.subr.mxu0 0.0
    %715 = vmatpush1.msra.mxu0 %v211
    %716 = vmatprep.subr.mxu0 0.0
    %717 = vmatpush1.msra.mxu0 0.0
    %718 = vmatprep.subr.mxu0 0.0
    %719 = vmatpush1.msra.mxu0 0.0
    %720 = vmatprep.subr.mxu0 0.0
    %721 = vmatpush1.msra.mxu0 0.0
    %722 = vmatprep.subr.mxu0 0.0
    %723 = vmatpush1.msra.mxu0 0.0
    %724 = vmatprep.subr.mxu0 0.0
    %725 = vmatpush1.msra.mxu0 0.0
    %726 = vmatprep.subr.mxu0 0.0
    %727 = vmatpush1.msra.mxu0 0.0
    %728 = vmatprep.subr.mxu0 0.0
    %729 = vmatpush1.msra.mxu0 0.0
    %730 = vmatprep.subr.mxu0 0.0
    %731 = vmatpush1.msra.mxu0 0.0
    %732 = vmatprep.subr.mxu0 0.0
    %733 = vmatpush1.msra.mxu0 0.0
    %734 = vmatprep.subr.mxu0 0.0
    %735 = vmatpush1.msra.mxu0 0.0
    %736 = vmatprep.subr.mxu0 0.0
    %737 = vmatpush1.msra.mxu0 0.0
    %738 = vmatprep.subr.mxu0 0.0
    %739 = vmatpush1.msra.mxu0 0.0
    %740 = vmatprep.subr.mxu0 0.0
    %741 = vmatpush1.msra.mxu0 0.0
    %742 = vmatprep.subr.mxu0 0.0
    %743 = vmatpush1.msra.mxu0 0.0
    %744 = vmatprep.subr.mxu0 0.0
    %745 = vmatpush1.msra.mxu0 0.0
    %746 = vmatprep.subr.mxu0 0.0
    %747 = vmatpush1.msra.mxu0 0.0
    %748 = vmatprep.subr.mxu0 0.0
    %749 = vmatpush1.msra.mxu0 0.0
    %750 = vmatprep.subr.mxu0 0.0
    %751 = vmatpush1.msra.mxu0 0.0
    %752 = vmatprep.subr.mxu0 0.0
    %753 = vmatpush1.msra.mxu0 0.0
    %754 = vmatprep.subr.mxu0 0.0
    %755 = vmatpush1.msra.mxu0 0.0
    %756 = vmatprep.subr.mxu0 0.0
    %757 = vmatpush1.msra.mxu0 0.0
    %758 = vmatprep.subr.mxu0 0.0
    %759 = vmatpush1.msra.mxu0 0.0
    %760 = vmatprep.subr.mxu0 0.0
    %761 = vmatpush1.msra.mxu0 0.0
    %762 = vmatprep.subr.mxu0 0.0
    %763 = vmatpush1.msra.mxu0 0.0
    %764 = vmatprep.subr.mxu0 0.0
    %765 = vmatpush1.msra.mxu0 0.0
    %766 = vmatprep.subr.mxu0 0.0
    %767 = vmatpush1.msra.mxu0 0.0
    %768 = vmatprep.subr.mxu0 0.0
    %769 = vmatpush1.msra.mxu0 0.0
    %770 = vmatprep.subr.mxu0 0.0
    %771 = vmatpush1.msra.mxu0 0.0
    %772 = vmatprep.mubr.f32.mxu0 0.0
    %773 = vmatmul.mubr.f32.gmra.mrb[0].mxu0 %v556
    %v774 = vpop.f32.mrb[0].mxu0
    %v775 = vadd.f32 0.0, %v774
    %v776 = vpop.f32.mrb[0].mxu0
    %777 = vdwg.mxu0
    %v779 = vrot.slane %v775, 4
    %780 = vrot.lane.b32.xlu0 %v779, 64
    %v781 = vpop.permute.xlu0 %780
    %v783 = vadd.f32 %v180, %v781
    %784 = vmatprep.subr.mxu0 0.0
    %785 = vmatpush1.msra.mxu0 %v213
    %786 = vmatprep.subr.mxu0 0.0
    %787 = vmatpush1.msra.mxu0 %v214
    %788 = vmatprep.subr.mxu0 0.0
    %789 = vmatpush1.msra.mxu0 %v215
    %790 = vmatprep.subr.mxu0 0.0
    %791 = vmatpush1.msra.mxu0 %v216
    %792 = vmatprep.subr.mxu0 0.0
    %793 = vmatpush1.msra.mxu0 0.0
    %794 = vmatprep.subr.mxu0 0.0
    %795 = vmatpush1.msra.mxu0 0.0
    %796 = vmatprep.subr.mxu0 0.0
    %797 = vmatpush1.msra.mxu0 0.0
    %798 = vmatprep.subr.mxu0 0.0
    %799 = vmatpush1.msra.mxu0 0.0
    %800 = vmatprep.subr.mxu0 0.0
    %801 = vmatpush1.msra.mxu0 0.0
    %802 = vmatprep.subr.mxu0 0.0
    %803 = vmatpush1.msra.mxu0 0.0
    %804 = vmatprep.subr.mxu0 0.0
    %805 = vmatpush1.msra.mxu0 0.0
    %806 = vmatprep.subr.mxu0 0.0
    %807 = vmatpush1.msra.mxu0 0.0
    %808 = vmatprep.subr.mxu0 0.0
    %809 = vmatpush1.msra.mxu0 0.0
    %810 = vmatprep.subr.mxu0 0.0
    %811 = vmatpush1.msra.mxu0 0.0
    %812 = vmatprep.subr.mxu0 0.0
    %813 = vmatpush1.msra.mxu0 0.0
    %814 = vmatprep.subr.mxu0 0.0
    %815 = vmatpush1.msra.mxu0 0.0
    %816 = vmatprep.subr.mxu0 0.0
    %817 = vmatpush1.msra.mxu0 0.0
    %818 = vmatprep.subr.mxu0 0.0
    %819 = vmatpush1.msra.mxu0 0.0
    %820 = vmatprep.subr.mxu0 0.0
    %821 = vmatpush1.msra.mxu0 0.0
    %822 = vmatprep.subr.mxu0 0.0
    %823 = vmatpush1.msra.mxu0 0.0
    %824 = vmatprep.subr.mxu0 0.0
    %825 = vmatpush1.msra.mxu0 0.0
    %826 = vmatprep.subr.mxu0 0.0
    %827 = vmatpush1.msra.mxu0 0.0
    %828 = vmatprep.subr.mxu0 0.0
    %829 = vmatpush1.msra.mxu0 0.0
    %830 = vmatprep.subr.mxu0 0.0
    %831 = vmatpush1.msra.mxu0 0.0
    %832 = vmatprep.subr.mxu0 0.0
    %833 = vmatpush1.msra.mxu0 0.0
    %834 = vmatprep.subr.mxu0 0.0
    %835 = vmatpush1.msra.mxu0 0.0
    %836 = vmatprep.subr.mxu0 0.0
    %837 = vmatpush1.msra.mxu0 0.0
    %838 = vmatprep.subr.mxu0 0.0
    %839 = vmatpush1.msra.mxu0 0.0
    %840 = vmatprep.subr.mxu0 0.0
    %841 = vmatpush1.msra.mxu0 0.0
    %842 = vmatprep.subr.mxu0 0.0
    %843 = vmatpush1.msra.mxu0 0.0
    %844 = vmatprep.subr.mxu0 0.0
    %845 = vmatpush1.msra.mxu0 0.0
    %846 = vmatprep.subr.mxu0 0.0
    %847 = vmatpush1.msra.mxu0 0.0
    %848 = vmatprep.mubr.f32.mxu0 0.0
    %849 = vmatmul.mubr.f32.gmra.mrb[0].mxu0 %v556
    %v850 = vpop.f32.mrb[0].mxu0
    %v851 = vadd.f32 0.0, %v850
    %v852 = vpop.f32.mrb[0].mxu0
    %853 = vdwg.mxu0
    %v855 = vrot.slane %v851, 4
    %856 = vrot.lane.b32.xlu0 %v855, 96
    %v857 = vpop.permute.xlu0 %856
    %v859 = vadd.f32 %v180, %v857
    %v860 = vxor.u32 %v707, 2147483648
    %v861 = vmul.f32 %v860, 1.442695
    %v862 = vpow.pop %v861
    %v863 = vadd.f32 %v862, 1.0
    %v864 = vrcp.pop %v863
    %v865 = vmul.f32 1.0, %v864
    %v867 = vrot.slane %v540, 4
    %v869 = vmul.f32 %v865, %v867
    %v870 = vxor.u32 %v631, 2147483648
    %v871 = vmul.f32 %v870, 1.442695
    %v872 = vpow.pop %v871
    %v873 = vadd.f32 %v872, 1.0
    %v874 = vrcp.pop %v873
    %v875 = vmul.f32 1.0, %v874
    %v876 = vtanh.pop %v783
    %878 = vrot.lane.b32.xlu0 %v876, 64
    %v879 = vpop.permute.xlu0 %878
    %v881 = vmul.f32 %v875, %v879
    %883 = vrot.lane.b32.xlu0 %v881, 32
    %v884 = vpop.permute.xlu0 %883
    %v886 = vadd.f32 %v869, %v884
    %v887 = vxor.u32 %v859, 2147483648
    %v888 = vmul.f32 %v887, 1.442695
    %v889 = vpow.pop %v888
    %v890 = vadd.f32 %v889, 1.0
    %v891 = vrcp.pop %v890
    %v892 = vmul.f32 1.0, %v891
    %v893 = vtanh.pop %v886
    %895 = vrot.lane.b32.xlu0 %v893, 64
    %v896 = vpop.permute.xlu0 %895
    %v898 = vmul.f32 %v892, %v896
    %v900 = vrot.slane %v898, 4
    %901 = vrot.lane.b32.xlu0 %v900, 32
    %v902 = vpop.permute.xlu0 %901
    %v903 = vsel %vm217, %v902, 0
    %905 = vmatprep.subr.mxu0 0.0
    %906 = vmatpush1.msra.mxu0 %v198
    %907 = vmatprep.subr.mxu0 0.0
    %908 = vmatpush1.msra.mxu0 %v199
    %909 = vmatprep.subr.mxu0 0.0
    %910 = vmatpush1.msra.mxu0 %v200
    %911 = vmatprep.subr.mxu0 0.0
    %912 = vmatpush1.msra.mxu0 %v201
    %913 = vmatprep.subr.mxu0 0.0
    %914 = vmatpush1.msra.mxu0 0.0
    %915 = vmatprep.subr.mxu0 0.0
    %916 = vmatpush1.msra.mxu0 0.0
    %917 = vmatprep.subr.mxu0 0.0
    %918 = vmatpush1.msra.mxu0 0.0
    %919 = vmatprep.subr.mxu0 0.0
    %920 = vmatpush1.msra.mxu0 0.0
    %921 = vmatprep.subr.mxu0 0.0
    %922 = vmatpush1.msra.mxu0 0.0
    %923 = vmatprep.subr.mxu0 0.0
    %924 = vmatpush1.msra.mxu0 0.0
    %925 = vmatprep.subr.mxu0 0.0
    %926 = vmatpush1.msra.mxu0 0.0
    %927 = vmatprep.subr.mxu0 0.0
    %928 = vmatpush1.msra.mxu0 0.0
    %929 = vmatprep.subr.mxu0 0.0
    %930 = vmatpush1.msra.mxu0 0.0
    %931 = vmatprep.subr.mxu0 0.0
    %932 = vmatpush1.msra.mxu0 0.0
    %933 = vmatprep.subr.mxu0 0.0
    %934 = vmatpush1.msra.mxu0 0.0
    %935 = vmatprep.subr.mxu0 0.0
    %936 = vmatpush1.msra.mxu0 0.0
    %937 = vmatprep.subr.mxu0 0.0
    %938 = vmatpush1.msra.mxu0 0.0
    %939 = vmatprep.subr.mxu0 0.0
    %940 = vmatpush1.msra.mxu0 0.0
    %941 = vmatprep.subr.mxu0 0.0
    %942 = vmatpush1.msra.mxu0 0.0
    %943 = vmatprep.subr.mxu0 0.0
    %944 = vmatpush1.msra.mxu0 0.0
    %945 = vmatprep.subr.mxu0 0.0
    %946 = vmatpush1.msra.mxu0 0.0
    %947 = vmatprep.subr.mxu0 0.0
    %948 = vmatpush1.msra.mxu0 0.0
    %949 = vmatprep.subr.mxu0 0.0
    %950 = vmatpush1.msra.mxu0 0.0
    %951 = vmatprep.subr.mxu0 0.0
    %952 = vmatpush1.msra.mxu0 0.0
    %953 = vmatprep.subr.mxu0 0.0
    %954 = vmatpush1.msra.mxu0 0.0
    %955 = vmatprep.subr.mxu0 0.0
    %956 = vmatpush1.msra.mxu0 0.0
    %957 = vmatprep.subr.mxu0 0.0
    %958 = vmatpush1.msra.mxu0 0.0
    %959 = vmatprep.subr.mxu0 0.0
    %960 = vmatpush1.msra.mxu0 0.0
    %961 = vmatprep.subr.mxu0 0.0
    %962 = vmatpush1.msra.mxu0 0.0
    %963 = vmatprep.subr.mxu0 0.0
    %964 = vmatpush1.msra.mxu0 0.0
    %965 = vmatprep.subr.mxu0 0.0
    %966 = vmatpush1.msra.mxu0 0.0
    %967 = vmatprep.subr.mxu0 0.0
    %968 = vmatpush1.msra.mxu0 0.0
    %969 = vmatprep.mubr.f32.mxu0 0.0
    %970 = vmatmul.mubr.f32.gmra.mrb[0].mxu0 %v903
    %v971 = vpop.f32.mrb[0].mxu0
    %v972 = vadd.f32 0.0, %v971
    %v973 = vpop.f32.mrb[0].mxu0
    %974 = vdwg.mxu0
    %v975 = vadd.f32 %v185, %v972
    %976 = vmatprep.subr.mxu0 0.0
    %977 = vmatpush1.msra.mxu0 %v203
    %978 = vmatprep.subr.mxu0 0.0
    %979 = vmatpush1.msra.mxu0 %v204
    %980 = vmatprep.subr.mxu0 0.0
    %981 = vmatpush1.msra.mxu0 %v205
    %982 = vmatprep.subr.mxu0 0.0
    %983 = vmatpush1.msra.mxu0 %v206
    %984 = vmatprep.subr.mxu0 0.0
    %985 = vmatpush1.msra.mxu0 0.0
    %986 = vmatprep.subr.mxu0 0.0
    %987 = vmatpush1.msra.mxu0 0.0
    %988 = vmatprep.subr.mxu0 0.0
    %989 = vmatpush1.msra.mxu0 0.0
    %990 = vmatprep.subr.mxu0 0.0
    %991 = vmatpush1.msra.mxu0 0.0
    %992 = vmatprep.subr.mxu0 0.0
    %993 = vmatpush1.msra.mxu0 0.0
    %994 = vmatprep.subr.mxu0 0.0
    %995 = vmatpush1.msra.mxu0 0.0
    %996 = vmatprep.subr.mxu0 0.0
    %997 = vmatpush1.msra.mxu0 0.0
    %998 = vmatprep.subr.mxu0 0.0
    %999 = vmatpush1.msra.mxu0 0.0
    %1000 = vmatprep.subr.mxu0 0.0
    %1001 = vmatpush1.msra.mxu0 0.0
    %1002 = vmatprep.subr.mxu0 0.0
    %1003 = vmatpush1.msra.mxu0 0.0
    %1004 = vmatprep.subr.mxu0 0.0
    %1005 = vmatpush1.msra.mxu0 0.0
    %1006 = vmatprep.subr.mxu0 0.0
    %1007 = vmatpush1.msra.mxu0 0.0
    %1008 = vmatprep.subr.mxu0 0.0
    %1009 = vmatpush1.msra.mxu0 0.0
    %1010 = vmatprep.subr.mxu0 0.0
    %1011 = vmatpush1.msra.mxu0 0.0
    %1012 = vmatprep.subr.mxu0 0.0
    %1013 = vmatpush1.msra.mxu0 0.0
    %1014 = vmatprep.subr.mxu0 0.0
    %1015 = vmatpush1.msra.mxu0 0.0
    %1016 = vmatprep.subr.mxu0 0.0
    %1017 = vmatpush1.msra.mxu0 0.0
    %1018 = vmatprep.subr.mxu0 0.0
    %1019 = vmatpush1.msra.mxu0 0.0
    %1020 = vmatprep.subr.mxu0 0.0
    %1021 = vmatpush1.msra.mxu0 0.0
    %1022 = vmatprep.subr.mxu0 0.0
    %1023 = vmatpush1.msra.mxu0 0.0
    %1024 = vmatprep.subr.mxu0 0.0
    %1025 = vmatpush1.msra.mxu0 0.0
    %1026 = vmatprep.subr.mxu0 0.0
    %1027 = vmatpush1.msra.mxu0 0.0
    %1028 = vmatprep.subr.mxu0 0.0
    %1029 = vmatpush1.msra.mxu0 0.0
    %1030 = vmatprep.subr.mxu0 0.0
    %1031 = vmatpush1.msra.mxu0 0.0
    %1032 = vmatprep.subr.mxu0 0.0
    %1033 = vmatpush1.msra.mxu0 0.0
    %1034 = vmatprep.subr.mxu0 0.0
    %1035 = vmatpush1.msra.mxu0 0.0
    %1036 = vmatprep.subr.mxu0 0.0
    %1037 = vmatpush1.msra.mxu0 0.0
    %1038 = vmatprep.subr.mxu0 0.0
    %1039 = vmatpush1.msra.mxu0 0.0
    %1040 = vmatprep.mubr.f32.mxu0 0.0
    %1041 = vmatmul.mubr.f32.gmra.mrb[0].mxu0 %v903
    %v1042 = vpop.f32.mrb[0].mxu0
    %v1043 = vadd.f32 0.0, %v1042
    %v1044 = vpop.f32.mrb[0].mxu0
    %1045 = vdwg.mxu0
    %1047 = vrot.lane.b32.xlu0 %v1043, 32
    %v1048 = vpop.permute.xlu0 %1047
    %v1050 = vadd.f32 %v185, %v1048
    %1051 = vmatprep.subr.mxu0 0.0
    %1052 = vmatpush1.msra.mxu0 %v208
    %1053 = vmatprep.subr.mxu0 0.0
    %1054 = vmatpush1.msra.mxu0 %v209
    %1055 = vmatprep.subr.mxu0 0.0
    %1056 = vmatpush1.msra.mxu0 %v210
    %1057 = vmatprep.subr.mxu0 0.0
    %1058 = vmatpush1.msra.mxu0 %v211
    %1059 = vmatprep.subr.mxu0 0.0
    %1060 = vmatpush1.msra.mxu0 0.0
    %1061 = vmatprep.subr.mxu0 0.0
    %1062 = vmatpush1.msra.mxu0 0.0
    %1063 = vmatprep.subr.mxu0 0.0
    %1064 = vmatpush1.msra.mxu0 0.0
    %1065 = vmatprep.subr.mxu0 0.0
    %1066 = vmatpush1.msra.mxu0 0.0
    %1067 = vmatprep.subr.mxu0 0.0
    %1068 = vmatpush1.msra.mxu0 0.0
    %1069 = vmatprep.subr.mxu0 0.0
    %1070 = vmatpush1.msra.mxu0 0.0
    %1071 = vmatprep.subr.mxu0 0.0
    %1072 = vmatpush1.msra.mxu0 0.0
    %1073 = vmatprep.subr.mxu0 0.0
    %1074 = vmatpush1.msra.mxu0 0.0
    %1075 = vmatprep.subr.mxu0 0.0
    %1076 = vmatpush1.msra.mxu0 0.0
    %1077 = vmatprep.subr.mxu0 0.0
    %1078 = vmatpush1.msra.mxu0 0.0
    %1079 = vmatprep.subr.mxu0 0.0
    %1080 = vmatpush1.msra.mxu0 0.0
    %1081 = vmatprep.subr.mxu0 0.0
    %1082 = vmatpush1.msra.mxu0 0.0
    %1083 = vmatprep.subr.mxu0 0.0
    %1084 = vmatpush1.msra.mxu0 0.0
    %1085 = vmatprep.subr.mxu0 0.0
    %1086 = vmatpush1.msra.mxu0 0.0
    %1087 = vmatprep.subr.mxu0 0.0
    %1088 = vmatpush1.msra.mxu0 0.0
    %1089 = vmatprep.subr.mxu0 0.0
    %1090 = vmatpush1.msra.mxu0 0.0
    %1091 = vmatprep.subr.mxu0 0.0
    %1092 = vmatpush1.msra.mxu0 0.0
    %1093 = vmatprep.subr.mxu0 0.0
    %1094 = vmatpush1.msra.mxu0 0.0
    %1095 = vmatprep.subr.mxu0 0.0
    %1096 = vmatpush1.msra.mxu0 0.0
    %1097 = vmatprep.subr.mxu0 0.0
    %1098 = vmatpush1.msra.mxu0 0.0
    %1099 = vmatprep.subr.mxu0 0.0
    %1100 = vmatpush1.msra.mxu0 0.0
    %1101 = vmatprep.subr.mxu0 0.0
    %1102 = vmatpush1.msra.mxu0 0.0
    %1103 = vmatprep.subr.mxu0 0.0
    %1104 = vmatpush1.msra.mxu0 0.0
    %1105 = vmatprep.subr.mxu0 0.0
    %1106 = vmatpush1.msra.mxu0 0.0
    %1107 = vmatprep.subr.mxu0 0.0
    %1108 = vmatpush1.msra.mxu0 0.0
    %1109 = vmatprep.subr.mxu0 0.0
    %1110 = vmatpush1.msra.mxu0 0.0
    %1111 = vmatprep.subr.mxu0 0.0
    %1112 = vmatpush1.msra.mxu0 0.0
    %1113 = vmatprep.subr.mxu0 0.0
    %1114 = vmatpush1.msra.mxu0 0.0
    %1115 = vmatprep.mubr.f32.mxu0 0.0
    %1116 = vmatmul.mubr.f32.gmra.mrb[0].mxu0 %v903
    %v1117 = vpop.f32.mrb[0].mxu0
    %v1118 = vadd.f32 0.0, %v1117
    %v1119 = vpop.f32.mrb[0].mxu0
    %1120 = vdwg.mxu0
    %1122 = vrot.lane.b32.xlu0 %v1118, 64
    %v1123 = vpop.permute.xlu0 %1122
    %v1125 = vadd.f32 %v185, %v1123
    %1126 = vmatprep.subr.mxu0 0.0
    %1127 = vmatpush1.msra.mxu0 %v213
    %1128 = vmatprep.subr.mxu0 0.0
    %1129 = vmatpush1.msra.mxu0 %v214
    %1130 = vmatprep.subr.mxu0 0.0
    %1131 = vmatpush1.msra.mxu0 %v215
    %1132 = vmatprep.subr.mxu0 0.0
    %1133 = vmatpush1.msra.mxu0 %v216
    %1134 = vmatprep.subr.mxu0 0.0
    %1135 = vmatpush1.msra.mxu0 0.0
    %1136 = vmatprep.subr.mxu0 0.0
    %1137 = vmatpush1.msra.mxu0 0.0
    %1138 = vmatprep.subr.mxu0 0.0
    %1139 = vmatpush1.msra.mxu0 0.0
    %1140 = vmatprep.subr.mxu0 0.0
    %1141 = vmatpush1.msra.mxu0 0.0
    %1142 = vmatprep.subr.mxu0 0.0
    %1143 = vmatpush1.msra.mxu0 0.0
    %1144 = vmatprep.subr.mxu0 0.0
    %1145 = vmatpush1.msra.mxu0 0.0
    %1146 = vmatprep.subr.mxu0 0.0
    %1147 = vmatpush1.msra.mxu0 0.0
    %1148 = vmatprep.subr.mxu0 0.0
    %1149 = vmatpush1.msra.mxu0 0.0
    %1150 = vmatprep.subr.mxu0 0.0
    %1151 = vmatpush1.msra.mxu0 0.0
    %1152 = vmatprep.subr.mxu0 0.0
    %1153 = vmatpush1.msra.mxu0 0.0
    %1154 = vmatprep.subr.mxu0 0.0
    %1155 = vmatpush1.msra.mxu0 0.0
    %1156 = vmatprep.subr.mxu0 0.0
    %1157 = vmatpush1.msra.mxu0 0.0
    %1158 = vmatprep.subr.mxu0 0.0
    %1159 = vmatpush1.msra.mxu0 0.0
    %1160 = vmatprep.subr.mxu0 0.0
    %1161 = vmatpush1.msra.mxu0 0.0
    %1162 = vmatprep.subr.mxu0 0.0
    %1163 = vmatpush1.msra.mxu0 0.0
    %1164 = vmatprep.subr.mxu0 0.0
    %1165 = vmatpush1.msra.mxu0 0.0
    %1166 = vmatprep.subr.mxu0 0.0
    %1167 = vmatpush1.msra.mxu0 0.0
    %1168 = vmatprep.subr.mxu0 0.0
    %1169 = vmatpush1.msra.mxu0 0.0
    %1170 = vmatprep.subr.mxu0 0.0
    %1171 = vmatpush1.msra.mxu0 0.0
    %1172 = vmatprep.subr.mxu0 0.0
    %1173 = vmatpush1.msra.mxu0 0.0
    %1174 = vmatprep.subr.mxu0 0.0
    %1175 = vmatpush1.msra.mxu0 0.0
    %1176 = vmatprep.subr.mxu0 0.0
    %1177 = vmatpush1.msra.mxu0 0.0
    %1178 = vmatprep.subr.mxu0 0.0
    %1179 = vmatpush1.msra.mxu0 0.0
    %1180 = vmatprep.subr.mxu0 0.0
    %1181 = vmatpush1.msra.mxu0 0.0
    %1182 = vmatprep.subr.mxu0 0.0
    %1183 = vmatpush1.msra.mxu0 0.0
    %1184 = vmatprep.subr.mxu0 0.0
    %1185 = vmatpush1.msra.mxu0 0.0
    %1186 = vmatprep.subr.mxu0 0.0
    %1187 = vmatpush1.msra.mxu0 0.0
    %1188 = vmatprep.subr.mxu0 0.0
    %1189 = vmatpush1.msra.mxu0 0.0
    %1190 = vmatprep.mubr.f32.mxu0 0.0
    %1191 = vmatmul.mubr.f32.gmra.mrb[0].mxu0 %v903
    %v1192 = vpop.f32.mrb[0].mxu0
    %v1193 = vadd.f32 0.0, %v1192
    %v1194 = vpop.f32.mrb[0].mxu0
    %1195 = vdwg.mxu0
    %1197 = vrot.lane.b32.xlu0 %v1193, 96
    %v1198 = vpop.permute.xlu0 %1197
    %v1200 = vadd.f32 %v185, %v1198
    %v1201 = vxor.u32 %v1050, 2147483648
    %v1202 = vmul.f32 %v1201, 1.442695
    %v1203 = vpow.pop %v1202
    %v1204 = vadd.f32 %v1203, 1.0
    %v1205 = vrcp.pop %v1204
    %v1206 = vmul.f32 1.0, %v1205
    %v1208 = vrot.slane %v886, 4
    %v1210 = vmul.f32 %v1206, %v1208
    %v1211 = vxor.u32 %v975, 2147483648
    %v1212 = vmul.f32 %v1211, 1.442695
    %v1213 = vpow.pop %v1212
    %v1214 = vadd.f32 %v1213, 1.0
    %v1215 = vrcp.pop %v1214
    %v1216 = vmul.f32 1.0, %v1215
    %v1217 = vtanh.pop %v1125
    %1219 = vrot.lane.b32.xlu0 %v1217, 64
    %v1220 = vpop.permute.xlu0 %1219
    %v1222 = vmul.f32 %v1216, %v1220
    %1224 = vrot.lane.b32.xlu0 %v1222, 32
    %v1225 = vpop.permute.xlu0 %1224
    %v1227 = vadd.f32 %v1210, %v1225
    %v1228 = vxor.u32 %v1200, 2147483648
    %v1229 = vmul.f32 %v1228, 1.442695
    %v1230 = vpow.pop %v1229
    %v1231 = vadd.f32 %v1230, 1.0
    %v1232 = vrcp.pop %v1231
    %v1233 = vmul.f32 1.0, %v1232
    %v1234 = vtanh.pop %v1227
    %1236 = vrot.lane.b32.xlu0 %v1234, 64
    %v1237 = vpop.permute.xlu0 %1236
    %v1239 = vmul.f32 %v1233, %v1237
    %1241 = vrot.lane.b32.xlu0 %v1239, 32
    %v1242 = vpop.permute.xlu0 %1241
    %v1243 = vsel %vm217, %v1242, 0
    %1245 = vmatprep.subr.mxu0 0.0
    %1246 = vmatpush1.msra.mxu0 %v198
    %1247 = vmatprep.subr.mxu0 0.0
    %1248 = vmatpush1.msra.mxu0 %v199
    %1249 = vmatprep.subr.mxu0 0.0
    %1250 = vmatpush1.msra.mxu0 %v200
    %1251 = vmatprep.subr.mxu0 0.0
    %1252 = vmatpush1.msra.mxu0 %v201
    %1253 = vmatprep.subr.mxu0 0.0
    %1254 = vmatpush1.msra.mxu0 0.0
    %1255 = vmatprep.subr.mxu0 0.0
    %1256 = vmatpush1.msra.mxu0 0.0
    %1257 = vmatprep.subr.mxu0 0.0
    %1258 = vmatpush1.msra.mxu0 0.0
    %1259 = vmatprep.subr.mxu0 0.0
    %1260 = vmatpush1.msra.mxu0 0.0
    %1261 = vmatprep.subr.mxu0 0.0
    %1262 = vmatpush1.msra.mxu0 0.0
    %1263 = vmatprep.subr.mxu0 0.0
    %1264 = vmatpush1.msra.mxu0 0.0
    %1265 = vmatprep.subr.mxu0 0.0
    %1266 = vmatpush1.msra.mxu0 0.0
    %1267 = vmatprep.subr.mxu0 0.0
    %1268 = vmatpush1.msra.mxu0 0.0
    %1269 = vmatprep.subr.mxu0 0.0
    %1270 = vmatpush1.msra.mxu0 0.0
    %1271 = vmatprep.subr.mxu0 0.0
    %1272 = vmatpush1.msra.mxu0 0.0
    %1273 = vmatprep.subr.mxu0 0.0
    %1274 = vmatpush1.msra.mxu0 0.0
    %1275 = vmatprep.subr.mxu0 0.0
    %1276 = vmatpush1.msra.mxu0 0.0
    %1277 = vmatprep.subr.mxu0 0.0
    %1278 = vmatpush1.msra.mxu0 0.0
    %1279 = vmatprep.subr.mxu0 0.0
    %1280 = vmatpush1.msra.mxu0 0.0
    %1281 = vmatprep.subr.mxu0 0.0
    %1282 = vmatpush1.msra.mxu0 0.0
    %1283 = vmatprep.subr.mxu0 0.0
    %1284 = vmatpush1.msra.mxu0 0.0
    %1285 = vmatprep.subr.mxu0 0.0
    %1286 = vmatpush1.msra.mxu0 0.0
    %1287 = vmatprep.subr.mxu0 0.0
    %1288 = vmatpush1.msra.mxu0 0.0
    %1289 = vmatprep.subr.mxu0 0.0
    %1290 = vmatpush1.msra.mxu0 0.0
    %1291 = vmatprep.subr.mxu0 0.0
    %1292 = vmatpush1.msra.mxu0 0.0
    %1293 = vmatprep.subr.mxu0 0.0
    %1294 = vmatpush1.msra.mxu0 0.0
    %1295 = vmatprep.subr.mxu0 0.0
    %1296 = vmatpush1.msra.mxu0 0.0
    %1297 = vmatprep.subr.mxu0 0.0
    %1298 = vmatpush1.msra.mxu0 0.0
    %1299 = vmatprep.subr.mxu0 0.0
    %1300 = vmatpush1.msra.mxu0 0.0
    %1301 = vmatprep.subr.mxu0 0.0
    %1302 = vmatpush1.msra.mxu0 0.0
    %1303 = vmatprep.subr.mxu0 0.0
    %1304 = vmatpush1.msra.mxu0 0.0
    %1305 = vmatprep.subr.mxu0 0.0
    %1306 = vmatpush1.msra.mxu0 0.0
    %1307 = vmatprep.subr.mxu0 0.0
    %1308 = vmatpush1.msra.mxu0 0.0
    %1309 = vmatprep.mubr.f32.mxu0 0.0
    %1310 = vmatmul.mubr.f32.gmra.mrb[0].mxu0 %v1243
    %v1311 = vpop.f32.mrb[0].mxu0
    %v1312 = vadd.f32 0.0, %v1311
    %v1313 = vpop.f32.mrb[0].mxu0
    %1314 = vdwg.mxu0
    %v1316 = vrot.slane %v1312, 4
    %v1318 = vadd.f32 %v185, %v1316
    %1319 = vmatprep.subr.mxu0 0.0
    %1320 = vmatpush1.msra.mxu0 %v203
    %1321 = vmatprep.subr.mxu0 0.0
    %1322 = vmatpush1.msra.mxu0 %v204
    %1323 = vmatprep.subr.mxu0 0.0
    %1324 = vmatpush1.msra.mxu0 %v205
    %1325 = vmatprep.subr.mxu0 0.0
    %1326 = vmatpush1.msra.mxu0 %v206
    %1327 = vmatprep.subr.mxu0 0.0
    %1328 = vmatpush1.msra.mxu0 0.0
    %1329 = vmatprep.subr.mxu0 0.0
    %1330 = vmatpush1.msra.mxu0 0.0
    %1331 = vmatprep.subr.mxu0 0.0
    %1332 = vmatpush1.msra.mxu0 0.0
    %1333 = vmatprep.subr.mxu0 0.0
    %1334 = vmatpush1.msra.mxu0 0.0
    %1335 = vmatprep.subr.mxu0 0.0
    %1336 = vmatpush1.msra.mxu0 0.0
    %1337 = vmatprep.subr.mxu0 0.0
    %1338 = vmatpush1.msra.mxu0 0.0
    %1339 = vmatprep.subr.mxu0 0.0
    %1340 = vmatpush1.msra.mxu0 0.0
    %1341 = vmatprep.subr.mxu0 0.0
    %1342 = vmatpush1.msra.mxu0 0.0
    %1343 = vmatprep.subr.mxu0 0.0
    %1344 = vmatpush1.msra.mxu0 0.0
    %1345 = vmatprep.subr.mxu0 0.0
    %1346 = vmatpush1.msra.mxu0 0.0
    %1347 = vmatprep.subr.mxu0 0.0
    %1348 = vmatpush1.msra.mxu0 0.0
    %1349 = vmatprep.subr.mxu0 0.0
    %1350 = vmatpush1.msra.mxu0 0.0
    %1351 = vmatprep.subr.mxu0 0.0
    %1352 = vmatpush1.msra.mxu0 0.0
    %1353 = vmatprep.subr.mxu0 0.0
    %1354 = vmatpush1.msra.mxu0 0.0
    %1355 = vmatprep.subr.mxu0 0.0
    %1356 = vmatpush1.msra.mxu0 0.0
    %1357 = vmatprep.subr.mxu0 0.0
    %1358 = vmatpush1.msra.mxu0 0.0
    %1359 = vmatprep.subr.mxu0 0.0
    %1360 = vmatpush1.msra.mxu0 0.0
    %1361 = vmatprep.subr.mxu0 0.0
    %1362 = vmatpush1.msra.mxu0 0.0
    %1363 = vmatprep.subr.mxu0 0.0
    %1364 = vmatpush1.msra.mxu0 0.0
    %1365 = vmatprep.subr.mxu0 0.0
    %1366 = vmatpush1.msra.mxu0 0.0
    %1367 = vmatprep.subr.mxu0 0.0
    %1368 = vmatpush1.msra.mxu0 0.0
    %1369 = vmatprep.subr.mxu0 0.0
    %1370 = vmatpush1.msra.mxu0 0.0
    %1371 = vmatprep.subr.mxu0 0.0
    %1372 = vmatpush1.msra.mxu0 0.0
    %1373 = vmatprep.subr.mxu0 0.0
    %1374 = vmatpush1.msra.mxu0 0.0
    %1375 = vmatprep.subr.mxu0 0.0
    %1376 = vmatpush1.msra.mxu0 0.0
    %1377 = vmatprep.subr.mxu0 0.0
    %1378 = vmatpush1.msra.mxu0 0.0
    %1379 = vmatprep.subr.mxu0 0.0
    %1380 = vmatpush1.msra.mxu0 0.0
    %1381 = vmatprep.subr.mxu0 0.0
    %1382 = vmatpush1.msra.mxu0 0.0
    %1383 = vmatprep.mubr.f32.mxu0 0.0
    %1384 = vmatmul.mubr.f32.gmra.mrb[0].mxu0 %v1243
    %v1385 = vpop.f32.mrb[0].mxu0
    %v1386 = vadd.f32 0.0, %v1385
    %v1387 = vpop.f32.mrb[0].mxu0
    %1388 = vdwg.mxu0
    %v1390 = vrot.slane %v1386, 4
    %1391 = vrot.lane.b32.xlu0 %v1390, 32
    %v1392 = vpop.permute.xlu0 %1391
    %v1394 = vadd.f32 %v185, %v1392
    %1395 = vmatprep.subr.mxu0 0.0
    %1396 = vmatpush1.msra.mxu0 %v208
    %1397 = vmatprep.subr.mxu0 0.0
    %1398 = vmatpush1.msra.mxu0 %v209
    %1399 = vmatprep.subr.mxu0 0.0
    %1400 = vmatpush1.msra.mxu0 %v210
    %1401 = vmatprep.subr.mxu0 0.0
    %1402 = vmatpush1.msra.mxu0 %v211
    %1403 = vmatprep.subr.mxu0 0.0
    %1404 = vmatpush1.msra.mxu0 0.0
    %1405 = vmatprep.subr.mxu0 0.0
    %1406 = vmatpush1.msra.mxu0 0.0
    %1407 = vmatprep.subr.mxu0 0.0
    %1408 = vmatpush1.msra.mxu0 0.0
    %1409 = vmatprep.subr.mxu0 0.0
    %1410 = vmatpush1.msra.mxu0 0.0
    %1411 = vmatprep.subr.mxu0 0.0
    %1412 = vmatpush1.msra.mxu0 0.0
    %1413 = vmatprep.subr.mxu0 0.0
    %1414 = vmatpush1.msra.mxu0 0.0
    %1415 = vmatprep.subr.mxu0 0.0
    %1416 = vmatpush1.msra.mxu0 0.0
    %1417 = vmatprep.subr.mxu0 0.0
    %1418 = vmatpush1.msra.mxu0 0.0
    %1419 = vmatprep.subr.mxu0 0.0
    %1420 = vmatpush1.msra.mxu0 0.0
    %1421 = vmatprep.subr.mxu0 0.0
    %1422 = vmatpush1.msra.mxu0 0.0
    %1423 = vmatprep.subr.mxu0 0.0
    %1424 = vmatpush1.msra.mxu0 0.0
    %1425 = vmatprep.subr.mxu0 0.0
    %1426 = vmatpush1.msra.mxu0 0.0
    %1427 = vmatprep.subr.mxu0 0.0
    %1428 = vmatpush1.msra.mxu0 0.0
    %1429 = vmatprep.subr.mxu0 0.0
    %1430 = vmatpush1.msra.mxu0 0.0
    %1431 = vmatprep.subr.mxu0 0.0
    %1432 = vmatpush1.msra.mxu0 0.0
    %1433 = vmatprep.subr.mxu0 0.0
    %1434 = vmatpush1.msra.mxu0 0.0
    %1435 = vmatprep.subr.mxu0 0.0
    %1436 = vmatpush1.msra.mxu0 0.0
    %1437 = vmatprep.subr.mxu0 0.0
    %1438 = vmatpush1.msra.mxu0 0.0
    %1439 = vmatprep.subr.mxu0 0.0
    %1440 = vmatpush1.msra.mxu0 0.0
    %1441 = vmatprep.subr.mxu0 0.0
    %1442 = vmatpush1.msra.mxu0 0.0
    %1443 = vmatprep.subr.mxu0 0.0
    %1444 = vmatpush1.msra.mxu0 0.0
    %1445 = vmatprep.subr.mxu0 0.0
    %1446 = vmatpush1.msra.mxu0 0.0
    %1447 = vmatprep.subr.mxu0 0.0
    %1448 = vmatpush1.msra.mxu0 0.0
    %1449 = vmatprep.subr.mxu0 0.0
    %1450 = vmatpush1.msra.mxu0 0.0
    %1451 = vmatprep.subr.mxu0 0.0
    %1452 = vmatpush1.msra.mxu0 0.0
    %1453 = vmatprep.subr.mxu0 0.0
    %1454 = vmatpush1.msra.mxu0 0.0
    %1455 = vmatprep.subr.mxu0 0.0
    %1456 = vmatpush1.msra.mxu0 0.0
    %1457 = vmatprep.subr.mxu0 0.0
    %1458 = vmatpush1.msra.mxu0 0.0
    %1459 = vmatprep.mubr.f32.mxu0 0.0
    %1460 = vmatmul.mubr.f32.gmra.mrb[0].mxu0 %v1243
    %v1461 = vpop.f32.mrb[0].mxu0
    %v1462 = vadd.f32 0.0, %v1461
    %v1463 = vpop.f32.mrb[0].mxu0
    %1464 = vdwg.mxu0
    %v1466 = vrot.slane %v1462, 4
    %1467 = vrot.lane.b32.xlu0 %v1466, 64
    %v1468 = vpop.permute.xlu0 %1467
    %v1470 = vadd.f32 %v185, %v1468
    %1471 = vmatprep.subr.mxu0 0.0
    %1472 = vmatpush1.msra.mxu0 %v213
    %1473 = vmatprep.subr.mxu0 0.0
    %1474 = vmatpush1.msra.mxu0 %v214
    %1475 = vmatprep.subr.mxu0 0.0
    %1476 = vmatpush1.msra.mxu0 %v215
    %1477 = vmatprep.subr.mxu0 0.0
    %1478 = vmatpush1.msra.mxu0 %v216
    %1479 = vmatprep.subr.mxu0 0.0
    %1480 = vmatpush1.msra.mxu0 0.0
    %1481 = vmatprep.subr.mxu0 0.0
    %1482 = vmatpush1.msra.mxu0 0.0
    %1483 = vmatprep.subr.mxu0 0.0
    %1484 = vmatpush1.msra.mxu0 0.0
    %1485 = vmatprep.subr.mxu0 0.0
    %1486 = vmatpush1.msra.mxu0 0.0
    %1487 = vmatprep.subr.mxu0 0.0
    %1488 = vmatpush1.msra.mxu0 0.0
    %1489 = vmatprep.subr.mxu0 0.0
    %1490 = vmatpush1.msra.mxu0 0.0
    %1491 = vmatprep.subr.mxu0 0.0
    %1492 = vmatpush1.msra.mxu0 0.0
    %1493 = vmatprep.subr.mxu0 0.0
    %1494 = vmatpush1.msra.mxu0 0.0
    %1495 = vmatprep.subr.mxu0 0.0
    %1496 = vmatpush1.msra.mxu0 0.0
    %1497 = vmatprep.subr.mxu0 0.0
    %1498 = vmatpush1.msra.mxu0 0.0
    %1499 = vmatprep.subr.mxu0 0.0
    %1500 = vmatpush1.msra.mxu0 0.0
    %1501 = vmatprep.subr.mxu0 0.0
    %1502 = vmatpush1.msra.mxu0 0.0
    %1503 = vmatprep.subr.mxu0 0.0
    %1504 = vmatpush1.msra.mxu0 0.0
    %1505 = vmatprep.subr.mxu0 0.0
    %1506 = vmatpush1.msra.mxu0 0.0
    %1507 = vmatprep.subr.mxu0 0.0
    %1508 = vmatpush1.msra.mxu0 0.0
    %1509 = vmatprep.subr.mxu0 0.0
    %1510 = vmatpush1.msra.mxu0 0.0
    %1511 = vmatprep.subr.mxu0 0.0
    %1512 = vmatpush1.msra.mxu0 0.0
    %1513 = vmatprep.subr.mxu0 0.0
    %1514 = vmatpush1.msra.mxu0 0.0
    %1515 = vmatprep.subr.mxu0 0.0
    %1516 = vmatpush1.msra.mxu0 0.0
    %1517 = vmatprep.subr.mxu0 0.0
    %1518 = vmatpush1.msra.mxu0 0.0
    %1519 = vmatprep.subr.mxu0 0.0
    %1520 = vmatpush1.msra.mxu0 0.0
    %1521 = vmatprep.subr.mxu0 0.0
    %1522 = vmatpush1.msra.mxu0 0.0
    %1523 = vmatprep.subr.mxu0 0.0
    %1524 = vmatpush1.msra.mxu0 0.0
    %1525 = vmatprep.subr.mxu0 0.0
    %1526 = vmatpush1.msra.mxu0 0.0
    %1527 = vmatprep.subr.mxu0 0.0
    %1528 = vmatpush1.msra.mxu0 0.0
    %1529 = vmatprep.subr.mxu0 0.0
    %1530 = vmatpush1.msra.mxu0 0.0
    %1531 = vmatprep.subr.mxu0 0.0
    %1532 = vmatpush1.msra.mxu0 0.0
    %1533 = vmatprep.subr.mxu0 0.0
    %1534 = vmatpush1.msra.mxu0 0.0
    %1535 = vmatprep.mubr.f32.mxu0 0.0
    %1536 = vmatmul.mubr.f32.gmra.mrb[0].mxu0 %v1243
    %v1537 = vpop.f32.mrb[0].mxu0
    %v1538 = vadd.f32 0.0, %v1537
    %v1539 = vpop.f32.mrb[0].mxu0
    %1540 = vdwg.mxu0
    %v1542 = vrot.slane %v1538, 4
    %1543 = vrot.lane.b32.xlu0 %v1542, 96
    %v1544 = vpop.permute.xlu0 %1543
    %v1546 = vadd.f32 %v185, %v1544
    %v1547 = vxor.u32 %v1394, 2147483648
    %v1548 = vmul.f32 %v1547, 1.442695
    %v1549 = vpow.pop %v1548
    %v1550 = vadd.f32 %v1549, 1.0
    %v1551 = vrcp.pop %v1550
    %v1552 = vmul.f32 1.0, %v1551
    %v1554 = vrot.slane %v1227, 4
    %v1556 = vmul.f32 %v1552, %v1554
    %v1557 = vxor.u32 %v1318, 2147483648
    %v1558 = vmul.f32 %v1557, 1.442695
    %v1559 = vpow.pop %v1558
    %v1560 = vadd.f32 %v1559, 1.0
    %v1561 = vrcp.pop %v1560
    %v1562 = vmul.f32 1.0, %v1561
    %v1563 = vtanh.pop %v1470
    %1565 = vrot.lane.b32.xlu0 %v1563, 64
    %v1566 = vpop.permute.xlu0 %1565
    %v1568 = vmul.f32 %v1562, %v1566
    %1570 = vrot.lane.b32.xlu0 %v1568, 32
    %v1571 = vpop.permute.xlu0 %1570
    %v1573 = vadd.f32 %v1556, %v1571
    %v1574 = vxor.u32 %v1546, 2147483648
    %v1575 = vmul.f32 %v1574, 1.442695
    %v1576 = vpow.pop %v1575
    %v1577 = vadd.f32 %v1576, 1.0
    %v1578 = vrcp.pop %v1577
    %v1579 = vmul.f32 1.0, %v1578
    %v1580 = vtanh.pop %v1573
    %1582 = vrot.lane.b32.xlu0 %v1580, 64
    %v1583 = vpop.permute.xlu0 %1582
    %v1585 = vmul.f32 %v1579, %v1583
    %v1587 = vrot.slane %v1585, 4
    %1588 = vrot.lane.b32.xlu0 %v1587, 32
    %v1589 = vpop.permute.xlu0 %1588
    %v1590 = vsel %vm217, %v1589, 0
    %1592 = vmatprep.subr.mxu0 0.0
    %1593 = vmatpush1.msra.mxu0 %v198
    %1594 = vmatprep.subr.mxu0 0.0
    %1595 = vmatpush1.msra.mxu0 %v199
    %1596 = vmatprep.subr.mxu0 0.0
    %1597 = vmatpush1.msra.mxu0 %v200
    %1598 = vmatprep.subr.mxu0 0.0
    %1599 = vmatpush1.msra.mxu0 %v201
    %1600 = vmatprep.subr.mxu0 0.0
    %1601 = vmatpush1.msra.mxu0 0.0
    %1602 = vmatprep.subr.mxu0 0.0
    %1603 = vmatpush1.msra.mxu0 0.0
    %1604 = vmatprep.subr.mxu0 0.0
    %1605 = vmatpush1.msra.mxu0 0.0
    %1606 = vmatprep.subr.mxu0 0.0
    %1607 = vmatpush1.msra.mxu0 0.0
    %1608 = vmatprep.subr.mxu0 0.0
    %1609 = vmatpush1.msra.mxu0 0.0
    %1610 = vmatprep.subr.mxu0 0.0
    %1611 = vmatpush1.msra.mxu0 0.0
    %1612 = vmatprep.subr.mxu0 0.0
    %1613 = vmatpush1.msra.mxu0 0.0
    %1614 = vmatprep.subr.mxu0 0.0
    %1615 = vmatpush1.msra.mxu0 0.0
    %1616 = vmatprep.subr.mxu0 0.0
    %1617 = vmatpush1.msra.mxu0 0.0
    %1618 = vmatprep.subr.mxu0 0.0
    %1619 = vmatpush1.msra.mxu0 0.0
    %1620 = vmatprep.subr.mxu0 0.0
    %1621 = vmatpush1.msra.mxu0 0.0
    %1622 = vmatprep.subr.mxu0 0.0
    %1623 = vmatpush1.msra.mxu0 0.0
    %1624 = vmatprep.subr.mxu0 0.0
    %1625 = vmatpush1.msra.mxu0 0.0
    %1626 = vmatprep.subr.mxu0 0.0
    %1627 = vmatpush1.msra.mxu0 0.0
    %1628 = vmatprep.subr.mxu0 0.0
    %1629 = vmatpush1.msra.mxu0 0.0
    %1630 = vmatprep.subr.mxu0 0.0
    %1631 = vmatpush1.msra.mxu0 0.0
    %1632 = vmatprep.subr.mxu0 0.0
    %1633 = vmatpush1.msra.mxu0 0.0
    %1634 = vmatprep.subr.mxu0 0.0
    %1635 = vmatpush1.msra.mxu0 0.0
    %1636 = vmatprep.subr.mxu0 0.0
    %1637 = vmatpush1.msra.mxu0 0.0
    %1638 = vmatprep.subr.mxu0 0.0
    %1639 = vmatpush1.msra.mxu0 0.0
    %1640 = vmatprep.subr.mxu0 0.0
    %1641 = vmatpush1.msra.mxu0 0.0
    %1642 = vmatprep.subr.mxu0 0.0
    %1643 = vmatpush1.msra.mxu0 0.0
    %1644 = vmatprep.subr.mxu0 0.0
    %1645 = vmatpush1.msra.mxu0 0.0
    %1646 = vmatprep.subr.mxu0 0.0
    %1647 = vmatpush1.msra.mxu0 0.0
    %1648 = vmatprep.subr.mxu0 0.0
    %1649 = vmatpush1.msra.mxu0 0.0
    %1650 = vmatprep.subr.mxu0 0.0
    %1651 = vmatpush1.msra.mxu0 0.0
    %1652 = vmatprep.subr.mxu0 0.0
    %1653 = vmatpush1.msra.mxu0 0.0
    %1654 = vmatprep.subr.mxu0 0.0
    %1655 = vmatpush1.msra.mxu0 0.0
    %1656 = vmatprep.mubr.f32.mxu0 0.0
    %1657 = vmatmul.mubr.f32.gmra.mrb[0].mxu0 %v1590
    %v1658 = vpop.f32.mrb[0].mxu0
    %v1659 = vadd.f32 0.0, %v1658
    %v1660 = vpop.f32.mrb[0].mxu0
    %1661 = vdwg.mxu0
    %v1662 = vadd.f32 %v190, %v1659
    %1663 = vmatprep.subr.mxu0 0.0
    %1664 = vmatpush1.msra.mxu0 %v203
    %1665 = vmatprep.subr.mxu0 0.0
    %1666 = vmatpush1.msra.mxu0 %v204
    %1667 = vmatprep.subr.mxu0 0.0
    %1668 = vmatpush1.msra.mxu0 %v205
    %1669 = vmatprep.subr.mxu0 0.0
    %1670 = vmatpush1.msra.mxu0 %v206
    %1671 = vmatprep.subr.mxu0 0.0
    %1672 = vmatpush1.msra.mxu0 0.0
    %1673 = vmatprep.subr.mxu0 0.0
    %1674 = vmatpush1.msra.mxu0 0.0
    %1675 = vmatprep.subr.mxu0 0.0
    %1676 = vmatpush1.msra.mxu0 0.0
    %1677 = vmatprep.subr.mxu0 0.0
    %1678 = vmatpush1.msra.mxu0 0.0
    %1679 = vmatprep.subr.mxu0 0.0
    %1680 = vmatpush1.msra.mxu0 0.0
    %1681 = vmatprep.subr.mxu0 0.0
    %1682 = vmatpush1.msra.mxu0 0.0
    %1683 = vmatprep.subr.mxu0 0.0
    %1684 = vmatpush1.msra.mxu0 0.0
    %1685 = vmatprep.subr.mxu0 0.0
    %1686 = vmatpush1.msra.mxu0 0.0
    %1687 = vmatprep.subr.mxu0 0.0
    %1688 = vmatpush1.msra.mxu0 0.0
    %1689 = vmatprep.subr.mxu0 0.0
    %1690 = vmatpush1.msra.mxu0 0.0
    %1691 = vmatprep.subr.mxu0 0.0
    %1692 = vmatpush1.msra.mxu0 0.0
    %1693 = vmatprep.subr.mxu0 0.0
    %1694 = vmatpush1.msra.mxu0 0.0
    %1695 = vmatprep.subr.mxu0 0.0
    %1696 = vmatpush1.msra.mxu0 0.0
    %1697 = vmatprep.subr.mxu0 0.0
    %1698 = vmatpush1.msra.mxu0 0.0
    %1699 = vmatprep.subr.mxu0 0.0
    %1700 = vmatpush1.msra.mxu0 0.0
    %1701 = vmatprep.subr.mxu0 0.0
    %1702 = vmatpush1.msra.mxu0 0.0
    %1703 = vmatprep.subr.mxu0 0.0
    %1704 = vmatpush1.msra.mxu0 0.0
    %1705 = vmatprep.subr.mxu0 0.0
    %1706 = vmatpush1.msra.mxu0 0.0
    %1707 = vmatprep.subr.mxu0 0.0
    %1708 = vmatpush1.msra.mxu0 0.0
    %1709 = vmatprep.subr.mxu0 0.0
    %1710 = vmatpush1.msra.mxu0 0.0
    %1711 = vmatprep.subr.mxu0 0.0
    %1712 = vmatpush1.msra.mxu0 0.0
    %1713 = vmatprep.subr.mxu0 0.0
    %1714 = vmatpush1.msra.mxu0 0.0
    %1715 = vmatprep.subr.mxu0 0.0
    %1716 = vmatpush1.msra.mxu0 0.0
    %1717 = vmatprep.subr.mxu0 0.0
    %1718 = vmatpush1.msra.mxu0 0.0
    %1719 = vmatprep.subr.mxu0 0.0
    %1720 = vmatpush1.msra.mxu0 0.0
    %1721 = vmatprep.subr.mxu0 0.0
    %1722 = vmatpush1.msra.mxu0 0.0
    %1723 = vmatprep.subr.mxu0 0.0
    %1724 = vmatpush1.msra.mxu0 0.0
    %1725 = vmatprep.subr.mxu0 0.0
    %1726 = vmatpush1.msra.mxu0 0.0
    %1727 = vmatprep.mubr.f32.mxu0 0.0
    %1728 = vmatmul.mubr.f32.gmra.mrb[0].mxu0 %v1590
    %v1729 = vpop.f32.mrb[0].mxu0
    %v1730 = vadd.f32 0.0, %v1729
    %v1731 = vpop.f32.mrb[0].mxu0
    %1732 = vdwg.mxu0
    %1734 = vrot.lane.b32.xlu0 %v1730, 32
    %v1735 = vpop.permute.xlu0 %1734
    %v1737 = vadd.f32 %v190, %v1735
    %1738 = vmatprep.subr.mxu0 0.0
    %1739 = vmatpush1.msra.mxu0 %v208
    %1740 = vmatprep.subr.mxu0 0.0
    %1741 = vmatpush1.msra.mxu0 %v209
    %1742 = vmatprep.subr.mxu0 0.0
    %1743 = vmatpush1.msra.mxu0 %v210
    %1744 = vmatprep.subr.mxu0 0.0
    %1745 = vmatpush1.msra.mxu0 %v211
    %1746 = vmatprep.subr.mxu0 0.0
    %1747 = vmatpush1.msra.mxu0 0.0
    %1748 = vmatprep.subr.mxu0 0.0
    %1749 = vmatpush1.msra.mxu0 0.0
    %1750 = vmatprep.subr.mxu0 0.0
    %1751 = vmatpush1.msra.mxu0 0.0
    %1752 = vmatprep.subr.mxu0 0.0
    %1753 = vmatpush1.msra.mxu0 0.0
    %1754 = vmatprep.subr.mxu0 0.0
    %1755 = vmatpush1.msra.mxu0 0.0
    %1756 = vmatprep.subr.mxu0 0.0
    %1757 = vmatpush1.msra.mxu0 0.0
    %1758 = vmatprep.subr.mxu0 0.0
    %1759 = vmatpush1.msra.mxu0 0.0
    %1760 = vmatprep.subr.mxu0 0.0
    %1761 = vmatpush1.msra.mxu0 0.0
    %1762 = vmatprep.subr.mxu0 0.0
    %1763 = vmatpush1.msra.mxu0 0.0
    %1764 = vmatprep.subr.mxu0 0.0
    %1765 = vmatpush1.msra.mxu0 0.0
    %1766 = vmatprep.subr.mxu0 0.0
    %1767 = vmatpush1.msra.mxu0 0.0
    %1768 = vmatprep.subr.mxu0 0.0
    %1769 = vmatpush1.msra.mxu0 0.0
    %1770 = vmatprep.subr.mxu0 0.0
    %1771 = vmatpush1.msra.mxu0 0.0
    %1772 = vmatprep.subr.mxu0 0.0
    %1773 = vmatpush1.msra.mxu0 0.0
    %1774 = vmatprep.subr.mxu0 0.0
    %1775 = vmatpush1.msra.mxu0 0.0
    %1776 = vmatprep.subr.mxu0 0.0
    %1777 = vmatpush1.msra.mxu0 0.0
    %1778 = vmatprep.subr.mxu0 0.0
    %1779 = vmatpush1.msra.mxu0 0.0
    %1780 = vmatprep.subr.mxu0 0.0
    %1781 = vmatpush1.msra.mxu0 0.0
    %1782 = vmatprep.subr.mxu0 0.0
    %1783 = vmatpush1.msra.mxu0 0.0
    %1784 = vmatprep.subr.mxu0 0.0
    %1785 = vmatpush1.msra.mxu0 0.0
    %1786 = vmatprep.subr.mxu0 0.0
    %1787 = vmatpush1.msra.mxu0 0.0
    %1788 = vmatprep.subr.mxu0 0.0
    %1789 = vmatpush1.msra.mxu0 0.0
    %1790 = vmatprep.subr.mxu0 0.0
    %1791 = vmatpush1.msra.mxu0 0.0
    %1792 = vmatprep.subr.mxu0 0.0
    %1793 = vmatpush1.msra.mxu0 0.0
    %1794 = vmatprep.subr.mxu0 0.0
    %1795 = vmatpush1.msra.mxu0 0.0
    %1796 = vmatprep.subr.mxu0 0.0
    %1797 = vmatpush1.msra.mxu0 0.0
    %1798 = vmatprep.subr.mxu0 0.0
    %1799 = vmatpush1.msra.mxu0 0.0
    %1800 = vmatprep.subr.mxu0 0.0
    %1801 = vmatpush1.msra.mxu0 0.0
    %1802 = vmatprep.mubr.f32.mxu0 0.0
    %1803 = vmatmul.mubr.f32.gmra.mrb[0].mxu0 %v1590
    %v1804 = vpop.f32.mrb[0].mxu0
    %v1805 = vadd.f32 0.0, %v1804
    %v1806 = vpop.f32.mrb[0].mxu0
    %1807 = vdwg.mxu0
    %1809 = vrot.lane.b32.xlu0 %v1805, 64
    %v1810 = vpop.permute.xlu0 %1809
    %v1812 = vadd.f32 %v190, %v1810
    %1813 = vmatprep.subr.mxu0 0.0
    %1814 = vmatpush1.msra.mxu0 %v213
    %1815 = vmatprep.subr.mxu0 0.0
    %1816 = vmatpush1.msra.mxu0 %v214
    %1817 = vmatprep.subr.mxu0 0.0
    %1818 = vmatpush1.msra.mxu0 %v215
    %1819 = vmatprep.subr.mxu0 0.0
    %1820 = vmatpush1.msra.mxu0 %v216
    %1821 = vmatprep.subr.mxu0 0.0
    %1822 = vmatpush1.msra.mxu0 0.0
    %1823 = vmatprep.subr.mxu0 0.0
    %1824 = vmatpush1.msra.mxu0 0.0
    %1825 = vmatprep.subr.mxu0 0.0
    %1826 = vmatpush1.msra.mxu0 0.0
    %1827 = vmatprep.subr.mxu0 0.0
    %1828 = vmatpush1.msra.mxu0 0.0
    %1829 = vmatprep.subr.mxu0 0.0
    %1830 = vmatpush1.msra.mxu0 0.0
    %1831 = vmatprep.subr.mxu0 0.0
    %1832 = vmatpush1.msra.mxu0 0.0
    %1833 = vmatprep.subr.mxu0 0.0
    %1834 = vmatpush1.msra.mxu0 0.0
    %1835 = vmatprep.subr.mxu0 0.0
    %1836 = vmatpush1.msra.mxu0 0.0
    %1837 = vmatprep.subr.mxu0 0.0
    %1838 = vmatpush1.msra.mxu0 0.0
    %1839 = vmatprep.subr.mxu0 0.0
    %1840 = vmatpush1.msra.mxu0 0.0
    %1841 = vmatprep.subr.mxu0 0.0
    %1842 = vmatpush1.msra.mxu0 0.0
    %1843 = vmatprep.subr.mxu0 0.0
    %1844 = vmatpush1.msra.mxu0 0.0
    %1845 = vmatprep.subr.mxu0 0.0
    %1846 = vmatpush1.msra.mxu0 0.0
    %1847 = vmatprep.subr.mxu0 0.0
    %1848 = vmatpush1.msra.mxu0 0.0
    %1849 = vmatprep.subr.mxu0 0.0
    %1850 = vmatpush1.msra.mxu0 0.0
    %1851 = vmatprep.subr.mxu0 0.0
    %1852 = vmatpush1.msra.mxu0 0.0
    %1853 = vmatprep.subr.mxu0 0.0
    %1854 = vmatpush1.msra.mxu0 0.0
    %1855 = vmatprep.subr.mxu0 0.0
    %1856 = vmatpush1.msra.mxu0 0.0
    %1857 = vmatprep.subr.mxu0 0.0
    %1858 = vmatpush1.msra.mxu0 0.0
    %1859 = vmatprep.subr.mxu0 0.0
    %1860 = vmatpush1.msra.mxu0 0.0
    %1861 = vmatprep.subr.mxu0 0.0
    %1862 = vmatpush1.msra.mxu0 0.0
    %1863 = vmatprep.subr.mxu0 0.0
    %1864 = vmatpush1.msra.mxu0 0.0
    %1865 = vmatprep.subr.mxu0 0.0
    %1866 = vmatpush1.msra.mxu0 0.0
    %1867 = vmatprep.subr.mxu0 0.0
    %1868 = vmatpush1.msra.mxu0 0.0
    %1869 = vmatprep.subr.mxu0 0.0
    %1870 = vmatpush1.msra.mxu0 0.0
    %1871 = vmatprep.subr.mxu0 0.0
    %1872 = vmatpush1.msra.mxu0 0.0
    %1873 = vmatprep.subr.mxu0 0.0
    %1874 = vmatpush1.msra.mxu0 0.0
    %1875 = vmatprep.subr.mxu0 0.0
    %1876 = vmatpush1.msra.mxu0 0.0
    %1877 = vmatprep.mubr.f32.mxu0 0.0
    %1878 = vmatmul.mubr.f32.gmra.mrb[0].mxu0 %v1590
    %v1879 = vpop.f32.mrb[0].mxu0
    %v1880 = vadd.f32 0.0, %v1879
    %v1881 = vpop.f32.mrb[0].mxu0
    %1882 = vdwg.mxu0
    %1884 = vrot.lane.b32.xlu0 %v1880, 96
    %v1885 = vpop.permute.xlu0 %1884
    %v1887 = vadd.f32 %v190, %v1885
    %v1888 = vxor.u32 %v1737, 2147483648
    %v1889 = vmul.f32 %v1888, 1.442695
    %v1890 = vpow.pop %v1889
    %v1891 = vadd.f32 %v1890, 1.0
    %v1892 = vrcp.pop %v1891
    %v1893 = vmul.f32 1.0, %v1892
    %v1895 = vrot.slane %v1573, 4
    %v1897 = vmul.f32 %v1893, %v1895
    %v1898 = vxor.u32 %v1662, 2147483648
    %v1899 = vmul.f32 %v1898, 1.442695
    %v1900 = vpow.pop %v1899
    %v1901 = vadd.f32 %v1900, 1.0
    %v1902 = vrcp.pop %v1901
    %v1903 = vmul.f32 1.0, %v1902
    %v1904 = vtanh.pop %v1812
    %1906 = vrot.lane.b32.xlu0 %v1904, 64
    %v1907 = vpop.permute.xlu0 %1906
    %v1909 = vmul.f32 %v1903, %v1907
    %1911 = vrot.lane.b32.xlu0 %v1909, 32
    %v1912 = vpop.permute.xlu0 %1911
    %v1914 = vadd.f32 %v1897, %v1912
    %v1915 = vxor.u32 %v1887, 2147483648
    %v1916 = vmul.f32 %v1915, 1.442695
    %v1917 = vpow.pop %v1916
    %v1918 = vadd.f32 %v1917, 1.0
    %v1919 = vrcp.pop %v1918
    %v1920 = vmul.f32 1.0, %v1919
    %v1921 = vtanh.pop %v1914
    %1923 = vrot.lane.b32.xlu0 %v1921, 64
    %v1924 = vpop.permute.xlu0 %1923
    %v1926 = vmul.f32 %v1920, %v1924
    %1928 = vrot.lane.b32.xlu0 %v1926, 32
    %v1929 = vpop.permute.xlu0 %1928
    %v1930 = vsel %vm217, %v1929, 0
    %1932 = vmatprep.subr.mxu0 0.0
    %1933 = vmatpush1.msra.mxu0 %v198
    %1934 = vmatprep.subr.mxu0 0.0
    %1935 = vmatpush1.msra.mxu0 %v199
    %1936 = vmatprep.subr.mxu0 0.0
    %1937 = vmatpush1.msra.mxu0 %v200
    %1938 = vmatprep.subr.mxu0 0.0
    %1939 = vmatpush1.msra.mxu0 %v201
    %1940 = vmatprep.subr.mxu0 0.0
    %1941 = vmatpush1.msra.mxu0 0.0
    %1942 = vmatprep.subr.mxu0 0.0
    %1943 = vmatpush1.msra.mxu0 0.0
    %1944 = vmatprep.subr.mxu0 0.0
    %1945 = vmatpush1.msra.mxu0 0.0
    %1946 = vmatprep.subr.mxu0 0.0
    %1947 = vmatpush1.msra.mxu0 0.0
    %1948 = vmatprep.subr.mxu0 0.0
    %1949 = vmatpush1.msra.mxu0 0.0
    %1950 = vmatprep.subr.mxu0 0.0
    %1951 = vmatpush1.msra.mxu0 0.0
    %1952 = vmatprep.subr.mxu0 0.0
    %1953 = vmatpush1.msra.mxu0 0.0
    %1954 = vmatprep.subr.mxu0 0.0
    %1955 = vmatpush1.msra.mxu0 0.0
    %1956 = vmatprep.subr.mxu0 0.0
    %1957 = vmatpush1.msra.mxu0 0.0
    %1958 = vmatprep.subr.mxu0 0.0
    %1959 = vmatpush1.msra.mxu0 0.0
    %1960 = vmatprep.subr.mxu0 0.0
    %1961 = vmatpush1.msra.mxu0 0.0
    %1962 = vmatprep.subr.mxu0 0.0
    %1963 = vmatpush1.msra.mxu0 0.0
    %1964 = vmatprep.subr.mxu0 0.0
    %1965 = vmatpush1.msra.mxu0 0.0
    %1966 = vmatprep.subr.mxu0 0.0
    %1967 = vmatpush1.msra.mxu0 0.0
    %1968 = vmatprep.subr.mxu0 0.0
    %1969 = vmatpush1.msra.mxu0 0.0
    %1970 = vmatprep.subr.mxu0 0.0
    %1971 = vmatpush1.msra.mxu0 0.0
    %1972 = vmatprep.subr.mxu0 0.0
    %1973 = vmatpush1.msra.mxu0 0.0
    %1974 = vmatprep.subr.mxu0 0.0
    %1975 = vmatpush1.msra.mxu0 0.0
    %1976 = vmatprep.subr.mxu0 0.0
    %1977 = vmatpush1.msra.mxu0 0.0
    %1978 = vmatprep.subr.mxu0 0.0
    %1979 = vmatpush1.msra.mxu0 0.0
    %1980 = vmatprep.subr.mxu0 0.0
    %1981 = vmatpush1.msra.mxu0 0.0
    %1982 = vmatprep.subr.mxu0 0.0
    %1983 = vmatpush1.msra.mxu0 0.0
    %1984 = vmatprep.subr.mxu0 0.0
    %1985 = vmatpush1.msra.mxu0 0.0
    %1986 = vmatprep.subr.mxu0 0.0
    %1987 = vmatpush1.msra.mxu0 0.0
    %1988 = vmatprep.subr.mxu0 0.0
    %1989 = vmatpush1.msra.mxu0 0.0
    %1990 = vmatprep.subr.mxu0 0.0
    %1991 = vmatpush1.msra.mxu0 0.0
    %1992 = vmatprep.subr.mxu0 0.0
    %1993 = vmatpush1.msra.mxu0 0.0
    %1994 = vmatprep.subr.mxu0 0.0
    %1995 = vmatpush1.msra.mxu0 0.0
    %1996 = vmatprep.mubr.f32.mxu0 0.0
    %1997 = vmatmul.mubr.f32.gmra.mrb[0].mxu0 %v1930
    %v1998 = vpop.f32.mrb[0].mxu0
    %v1999 = vadd.f32 0.0, %v1998
    %v2000 = vpop.f32.mrb[0].mxu0
    %2001 = vdwg.mxu0
    %v2003 = vrot.slane %v1999, 4
    %v2005 = vadd.f32 %v190, %v2003
    %2006 = vmatprep.subr.mxu0 0.0
    %2007 = vmatpush1.msra.mxu0 %v203
    %2008 = vmatprep.subr.mxu0 0.0
    %2009 = vmatpush1.msra.mxu0 %v204
    %2010 = vmatprep.subr.mxu0 0.0
    %2011 = vmatpush1.msra.mxu0 %v205
    %2012 = vmatprep.subr.mxu0 0.0
    %2013 = vmatpush1.msra.mxu0 %v206
    %2014 = vmatprep.subr.mxu0 0.0
    %2015 = vmatpush1.msra.mxu0 0.0
    %2016 = vmatprep.subr.mxu0 0.0
    %2017 = vmatpush1.msra.mxu0 0.0
    %2018 = vmatprep.subr.mxu0 0.0
    %2019 = vmatpush1.msra.mxu0 0.0
    %2020 = vmatprep.subr.mxu0 0.0
    %2021 = vmatpush1.msra.mxu0 0.0
    %2022 = vmatprep.subr.mxu0 0.0
    %2023 = vmatpush1.msra.mxu0 0.0
    %2024 = vmatprep.subr.mxu0 0.0
    %2025 = vmatpush1.msra.mxu0 0.0
    %2026 = vmatprep.subr.mxu0 0.0
    %2027 = vmatpush1.msra.mxu0 0.0
    %2028 = vmatprep.subr.mxu0 0.0
    %2029 = vmatpush1.msra.mxu0 0.0
    %2030 = vmatprep.subr.mxu0 0.0
    %2031 = vmatpush1.msra.mxu0 0.0
    %2032 = vmatprep.subr.mxu0 0.0
    %2033 = vmatpush1.msra.mxu0 0.0
    %2034 = vmatprep.subr.mxu0 0.0
    %2035 = vmatpush1.msra.mxu0 0.0
    %2036 = vmatprep.subr.mxu0 0.0
    %2037 = vmatpush1.msra.mxu0 0.0
    %2038 = vmatprep.subr.mxu0 0.0
    %2039 = vmatpush1.msra.mxu0 0.0
    %2040 = vmatprep.subr.mxu0 0.0
    %2041 = vmatpush1.msra.mxu0 0.0
    %2042 = vmatprep.subr.mxu0 0.0
    %2043 = vmatpush1.msra.mxu0 0.0
    %2044 = vmatprep.subr.mxu0 0.0
    %2045 = vmatpush1.msra.mxu0 0.0
    %2046 = vmatprep.subr.mxu0 0.0
    %2047 = vmatpush1.msra.mxu0 0.0
    %2048 = vmatprep.subr.mxu0 0.0
    %2049 = vmatpush1.msra.mxu0 0.0
    %2050 = vmatprep.subr.mxu0 0.0
    %2051 = vmatpush1.msra.mxu0 0.0
    %2052 = vmatprep.subr.mxu0 0.0
    %2053 = vmatpush1.msra.mxu0 0.0
    %2054 = vmatprep.subr.mxu0 0.0
    %2055 = vmatpush1.msra.mxu0 0.0
    %2056 = vmatprep.subr.mxu0 0.0
    %2057 = vmatpush1.msra.mxu0 0.0
    %2058 = vmatprep.subr.mxu0 0.0
    %2059 = vmatpush1.msra.mxu0 0.0
    %2060 = vmatprep.subr.mxu0 0.0
    %2061 = vmatpush1.msra.mxu0 0.0
    %2062 = vmatprep.subr.mxu0 0.0
    %2063 = vmatpush1.msra.mxu0 0.0
    %2064 = vmatprep.subr.mxu0 0.0
    %2065 = vmatpush1.msra.mxu0 0.0
    %2066 = vmatprep.subr.mxu0 0.0
    %2067 = vmatpush1.msra.mxu0 0.0
    %2068 = vmatprep.subr.mxu0 0.0
    %2069 = vmatpush1.msra.mxu0 0.0
    %2070 = vmatprep.mubr.f32.mxu0 0.0
    %2071 = vmatmul.mubr.f32.gmra.mrb[0].mxu0 %v1930
    %v2072 = vpop.f32.mrb[0].mxu0
    %v2073 = vadd.f32 0.0, %v2072
    %v2074 = vpop.f32.mrb[0].mxu0
    %2075 = vdwg.mxu0
    %v2077 = vrot.slane %v2073, 4
    %2078 = vrot.lane.b32.xlu0 %v2077, 32
    %v2079 = vpop.permute.xlu0 %2078
    %v2081 = vadd.f32 %v190, %v2079
    %2082 = vmatprep.subr.mxu0 0.0
    %2083 = vmatpush1.msra.mxu0 %v208
    %2084 = vmatprep.subr.mxu0 0.0
    %2085 = vmatpush1.msra.mxu0 %v209
    %2086 = vmatprep.subr.mxu0 0.0
    %2087 = vmatpush1.msra.mxu0 %v210
    %2088 = vmatprep.subr.mxu0 0.0
    %2089 = vmatpush1.msra.mxu0 %v211
    %2090 = vmatprep.subr.mxu0 0.0
    %2091 = vmatpush1.msra.mxu0 0.0
    %2092 = vmatprep.subr.mxu0 0.0
    %2093 = vmatpush1.msra.mxu0 0.0
    %2094 = vmatprep.subr.mxu0 0.0
    %2095 = vmatpush1.msra.mxu0 0.0
    %2096 = vmatprep.subr.mxu0 0.0
    %2097 = vmatpush1.msra.mxu0 0.0
    %2098 = vmatprep.subr.mxu0 0.0
    %2099 = vmatpush1.msra.mxu0 0.0
    %2100 = vmatprep.subr.mxu0 0.0
    %2101 = vmatpush1.msra.mxu0 0.0
    %2102 = vmatprep.subr.mxu0 0.0
    %2103 = vmatpush1.msra.mxu0 0.0
    %2104 = vmatprep.subr.mxu0 0.0
    %2105 = vmatpush1.msra.mxu0 0.0
    %2106 = vmatprep.subr.mxu0 0.0
    %2107 = vmatpush1.msra.mxu0 0.0
    %2108 = vmatprep.subr.mxu0 0.0
    %2109 = vmatpush1.msra.mxu0 0.0
    %2110 = vmatprep.subr.mxu0 0.0
    %2111 = vmatpush1.msra.mxu0 0.0
    %2112 = vmatprep.subr.mxu0 0.0
    %2113 = vmatpush1.msra.mxu0 0.0
    %2114 = vmatprep.subr.mxu0 0.0
    %2115 = vmatpush1.msra.mxu0 0.0
    %2116 = vmatprep.subr.mxu0 0.0
    %2117 = vmatpush1.msra.mxu0 0.0
    %2118 = vmatprep.subr.mxu0 0.0
    %2119 = vmatpush1.msra.mxu0 0.0
    %2120 = vmatprep.subr.mxu0 0.0
    %2121 = vmatpush1.msra.mxu0 0.0
    %2122 = vmatprep.subr.mxu0 0.0
    %2123 = vmatpush1.msra.mxu0 0.0
    %2124 = vmatprep.subr.mxu0 0.0
    %2125 = vmatpush1.msra.mxu0 0.0
    %2126 = vmatprep.subr.mxu0 0.0
    %2127 = vmatpush1.msra.mxu0 0.0
    %2128 = vmatprep.subr.mxu0 0.0
    %2129 = vmatpush1.msra.mxu0 0.0
    %2130 = vmatprep.subr.mxu0 0.0
    %2131 = vmatpush1.msra.mxu0 0.0
    %2132 = vmatprep.subr.mxu0 0.0
    %2133 = vmatpush1.msra.mxu0 0.0
    %2134 = vmatprep.subr.mxu0 0.0
    %2135 = vmatpush1.msra.mxu0 0.0
    %2136 = vmatprep.subr.mxu0 0.0
    %2137 = vmatpush1.msra.mxu0 0.0
    %2138 = vmatprep.subr.mxu0 0.0
    %2139 = vmatpush1.msra.mxu0 0.0
    %2140 = vmatprep.subr.mxu0 0.0
    %2141 = vmatpush1.msra.mxu0 0.0
    %2142 = vmatprep.subr.mxu0 0.0
    %2143 = vmatpush1.msra.mxu0 0.0
    %2144 = vmatprep.subr.mxu0 0.0
    %2145 = vmatpush1.msra.mxu0 0.0
    %2146 = vmatprep.mubr.f32.mxu0 0.0
    %2147 = vmatmul.mubr.f32.gmra.mrb[0].mxu0 %v1930
    %v2148 = vpop.f32.mrb[0].mxu0
    %v2149 = vadd.f32 0.0, %v2148
    %v2150 = vpop.f32.mrb[0].mxu0
    %2151 = vdwg.mxu0
    %v2153 = vrot.slane %v2149, 4
    %2154 = vrot.lane.b32.xlu0 %v2153, 64
    %v2155 = vpop.permute.xlu0 %2154
    %v2157 = vadd.f32 %v190, %v2155
    %2158 = vmatprep.subr.mxu0 0.0
    %2159 = vmatpush1.msra.mxu0 %v213
    %2160 = vmatprep.subr.mxu0 0.0
    %2161 = vmatpush1.msra.mxu0 %v214
    %2162 = vmatprep.subr.mxu0 0.0
    %2163 = vmatpush1.msra.mxu0 %v215
    %2164 = vmatprep.subr.mxu0 0.0
    %2165 = vmatpush1.msra.mxu0 %v216
    %2166 = vmatprep.subr.mxu0 0.0
    %2167 = vmatpush1.msra.mxu0 0.0
    %2168 = vmatprep.subr.mxu0 0.0
    %2169 = vmatpush1.msra.mxu0 0.0
    %2170 = vmatprep.subr.mxu0 0.0
    %2171 = vmatpush1.msra.mxu0 0.0
    %2172 = vmatprep.subr.mxu0 0.0
    %2173 = vmatpush1.msra.mxu0 0.0
    %2174 = vmatprep.subr.mxu0 0.0
    %2175 = vmatpush1.msra.mxu0 0.0
    %2176 = vmatprep.subr.mxu0 0.0
    %2177 = vmatpush1.msra.mxu0 0.0
    %2178 = vmatprep.subr.mxu0 0.0
    %2179 = vmatpush1.msra.mxu0 0.0
    %2180 = vmatprep.subr.mxu0 0.0
    %2181 = vmatpush1.msra.mxu0 0.0
    %2182 = vmatprep.subr.mxu0 0.0
    %2183 = vmatpush1.msra.mxu0 0.0
    %2184 = vmatprep.subr.mxu0 0.0
    %2185 = vmatpush1.msra.mxu0 0.0
    %2186 = vmatprep.subr.mxu0 0.0
    %2187 = vmatpush1.msra.mxu0 0.0
    %2188 = vmatprep.subr.mxu0 0.0
    %2189 = vmatpush1.msra.mxu0 0.0
    %2190 = vmatprep.subr.mxu0 0.0
    %2191 = vmatpush1.msra.mxu0 0.0
    %2192 = vmatprep.subr.mxu0 0.0
    %2193 = vmatpush1.msra.mxu0 0.0
    %2194 = vmatprep.subr.mxu0 0.0
    %2195 = vmatpush1.msra.mxu0 0.0
    %2196 = vmatprep.subr.mxu0 0.0
    %2197 = vmatpush1.msra.mxu0 0.0
    %2198 = vmatprep.subr.mxu0 0.0
    %2199 = vmatpush1.msra.mxu0 0.0
    %2200 = vmatprep.subr.mxu0 0.0
    %2201 = vmatpush1.msra.mxu0 0.0
    %2202 = vmatprep.subr.mxu0 0.0
    %2203 = vmatpush1.msra.mxu0 0.0
    %2204 = vmatprep.subr.mxu0 0.0
    %2205 = vmatpush1.msra.mxu0 0.0
    %2206 = vmatprep.subr.mxu0 0.0
    %2207 = vmatpush1.msra.mxu0 0.0
    %2208 = vmatprep.subr.mxu0 0.0
    %2209 = vmatpush1.msra.mxu0 0.0
    %2210 = vmatprep.subr.mxu0 0.0
    %2211 = vmatpush1.msra.mxu0 0.0
    %2212 = vmatprep.subr.mxu0 0.0
    %2213 = vmatpush1.msra.mxu0 0.0
    %2214 = vmatprep.subr.mxu0 0.0
    %2215 = vmatpush1.msra.mxu0 0.0
    %2216 = vmatprep.subr.mxu0 0.0
    %2217 = vmatpush1.msra.mxu0 0.0
    %2218 = vmatprep.subr.mxu0 0.0
    %2219 = vmatpush1.msra.mxu0 0.0
    %2220 = vmatprep.subr.mxu0 0.0
    %2221 = vmatpush1.msra.mxu0 0.0
    %2222 = vmatprep.mubr.f32.mxu0 0.0
    %2223 = vmatmul.mubr.f32.gmra.mrb[0].mxu0 %v1930
    %v2224 = vpop.f32.mrb[0].mxu0
    %v2225 = vadd.f32 0.0, %v2224
    %v2226 = vpop.f32.mrb[0].mxu0
    %2227 = vdwg.mxu0
    %v2229 = vrot.slane %v2225, 4
    %2230 = vrot.lane.b32.xlu0 %v2229, 96
    %v2231 = vpop.permute.xlu0 %2230
    %v2233 = vadd.f32 %v190, %v2231
    %v2234 = vxor.u32 %v2081, 2147483648
    %v2235 = vmul.f32 %v2234, 1.442695
    %v2236 = vpow.pop %v2235
    %v2237 = vadd.f32 %v2236, 1.0
    %v2238 = vrcp.pop %v2237
    %v2239 = vmul.f32 1.0, %v2238
    %v2241 = vrot.slane %v1914, 4
    %v2243 = vmul.f32 %v2239, %v2241
    %v2244 = vxor.u32 %v2005, 2147483648
    %v2245 = vmul.f32 %v2244, 1.442695
    %v2246 = vpow.pop %v2245
    %v2247 = vadd.f32 %v2246, 1.0
    %v2248 = vrcp.pop %v2247
    %v2249 = vmul.f32 1.0, %v2248
    %v2250 = vtanh.pop %v2157
    %2252 = vrot.lane.b32.xlu0 %v2250, 64
    %v2253 = vpop.permute.xlu0 %2252
    %v2255 = vmul.f32 %v2249, %v2253
    %2257 = vrot.lane.b32.xlu0 %v2255, 32
    %v2258 = vpop.permute.xlu0 %2257
    %v2260 = vadd.f32 %v2243, %v2258
    %v2261 = vxor.u32 %v2233, 2147483648
    %v2262 = vmul.f32 %v2261, 1.442695
    %v2263 = vpow.pop %v2262
    %v2264 = vadd.f32 %v2263, 1.0
    %v2265 = vrcp.pop %v2264
    %v2266 = vmul.f32 1.0, %v2265
    %v2267 = vtanh.pop %v2260
    %2269 = vrot.lane.b32.xlu0 %v2267, 64
    %v2270 = vpop.permute.xlu0 %2269
    %v2272 = vmul.f32 %v2266, %v2270
    %v2274 = vrot.slane %v2272, 4
    %2275 = vrot.lane.b32.xlu0 %v2274, 32
    %v2276 = vpop.permute.xlu0 %2275
    %v2277 = vsel %vm217, %v2276, 0
    %2279 = vmatprep.subr.mxu0 0.0
    %2280 = vmatpush1.msra.mxu0 %v198
    %2281 = vmatprep.subr.mxu0 0.0
    %2282 = vmatpush1.msra.mxu0 %v199
    %2283 = vmatprep.subr.mxu0 0.0
    %2284 = vmatpush1.msra.mxu0 %v200
    %2285 = vmatprep.subr.mxu0 0.0
    %2286 = vmatpush1.msra.mxu0 %v201
    %2287 = vmatprep.subr.mxu0 0.0
    %2288 = vmatpush1.msra.mxu0 0.0
    %2289 = vmatprep.subr.mxu0 0.0
    %2290 = vmatpush1.msra.mxu0 0.0
    %2291 = vmatprep.subr.mxu0 0.0
    %2292 = vmatpush1.msra.mxu0 0.0
    %2293 = vmatprep.subr.mxu0 0.0
    %2294 = vmatpush1.msra.mxu0 0.0
    %2295 = vmatprep.subr.mxu0 0.0
    %2296 = vmatpush1.msra.mxu0 0.0
    %2297 = vmatprep.subr.mxu0 0.0
    %2298 = vmatpush1.msra.mxu0 0.0
    %2299 = vmatprep.subr.mxu0 0.0
    %2300 = vmatpush1.msra.mxu0 0.0
    %2301 = vmatprep.subr.mxu0 0.0
    %2302 = vmatpush1.msra.mxu0 0.0
    %2303 = vmatprep.subr.mxu0 0.0
    %2304 = vmatpush1.msra.mxu0 0.0
    %2305 = vmatprep.subr.mxu0 0.0
    %2306 = vmatpush1.msra.mxu0 0.0
    %2307 = vmatprep.subr.mxu0 0.0
    %2308 = vmatpush1.msra.mxu0 0.0
    %2309 = vmatprep.subr.mxu0 0.0
    %2310 = vmatpush1.msra.mxu0 0.0
    %2311 = vmatprep.subr.mxu0 0.0
    %2312 = vmatpush1.msra.mxu0 0.0
    %2313 = vmatprep.subr.mxu0 0.0
    %2314 = vmatpush1.msra.mxu0 0.0
    %2315 = vmatprep.subr.mxu0 0.0
    %2316 = vmatpush1.msra.mxu0 0.0
    %2317 = vmatprep.subr.mxu0 0.0
    %2318 = vmatpush1.msra.mxu0 0.0
    %2319 = vmatprep.subr.mxu0 0.0
    %2320 = vmatpush1.msra.mxu0 0.0
    %2321 = vmatprep.subr.mxu0 0.0
    %2322 = vmatpush1.msra.mxu0 0.0
    %2323 = vmatprep.subr.mxu0 0.0
    %2324 = vmatpush1.msra.mxu0 0.0
    %2325 = vmatprep.subr.mxu0 0.0
    %2326 = vmatpush1.msra.mxu0 0.0
    %2327 = vmatprep.subr.mxu0 0.0
    %2328 = vmatpush1.msra.mxu0 0.0
    %2329 = vmatprep.subr.mxu0 0.0
    %2330 = vmatpush1.msra.mxu0 0.0
    %2331 = vmatprep.subr.mxu0 0.0
    %2332 = vmatpush1.msra.mxu0 0.0
    %2333 = vmatprep.subr.mxu0 0.0
    %2334 = vmatpush1.msra.mxu0 0.0
    %2335 = vmatprep.subr.mxu0 0.0
    %2336 = vmatpush1.msra.mxu0 0.0
    %2337 = vmatprep.subr.mxu0 0.0
    %2338 = vmatpush1.msra.mxu0 0.0
    %2339 = vmatprep.subr.mxu0 0.0
    %2340 = vmatpush1.msra.mxu0 0.0
    %2341 = vmatprep.subr.mxu0 0.0
    %2342 = vmatpush1.msra.mxu0 0.0
    %2343 = vmatprep.mubr.f32.mxu0 0.0
    %2344 = vmatmul.mubr.f32.gmra.mrb[0].mxu0 %v2277
    %v2345 = vpop.f32.mrb[0].mxu0
    %v2346 = vadd.f32 0.0, %v2345
    %v2347 = vpop.f32.mrb[0].mxu0
    %2348 = vdwg.mxu0
    %v2349 = vadd.f32 %v195, %v2346
    %2350 = vmatprep.subr.mxu0 0.0
    %2351 = vmatpush1.msra.mxu0 %v203
    %2352 = vmatprep.subr.mxu0 0.0
    %2353 = vmatpush1.msra.mxu0 %v204
    %2354 = vmatprep.subr.mxu0 0.0
    %2355 = vmatpush1.msra.mxu0 %v205
    %2356 = vmatprep.subr.mxu0 0.0
    %2357 = vmatpush1.msra.mxu0 %v206
    %2358 = vmatprep.subr.mxu0 0.0
    %2359 = vmatpush1.msra.mxu0 0.0
    %2360 = vmatprep.subr.mxu0 0.0
    %2361 = vmatpush1.msra.mxu0 0.0
    %2362 = vmatprep.subr.mxu0 0.0
    %2363 = vmatpush1.msra.mxu0 0.0
    %2364 = vmatprep.subr.mxu0 0.0
    %2365 = vmatpush1.msra.mxu0 0.0
    %2366 = vmatprep.subr.mxu0 0.0
    %2367 = vmatpush1.msra.mxu0 0.0
    %2368 = vmatprep.subr.mxu0 0.0
    %2369 = vmatpush1.msra.mxu0 0.0
    %2370 = vmatprep.subr.mxu0 0.0
    %2371 = vmatpush1.msra.mxu0 0.0
    %2372 = vmatprep.subr.mxu0 0.0
    %2373 = vmatpush1.msra.mxu0 0.0
    %2374 = vmatprep.subr.mxu0 0.0
    %2375 = vmatpush1.msra.mxu0 0.0
    %2376 = vmatprep.subr.mxu0 0.0
    %2377 = vmatpush1.msra.mxu0 0.0
    %2378 = vmatprep.subr.mxu0 0.0
    %2379 = vmatpush1.msra.mxu0 0.0
    %2380 = vmatprep.subr.mxu0 0.0
    %2381 = vmatpush1.msra.mxu0 0.0
    %2382 = vmatprep.subr.mxu0 0.0
    %2383 = vmatpush1.msra.mxu0 0.0
    %2384 = vmatprep.subr.mxu0 0.0
    %2385 = vmatpush1.msra.mxu0 0.0
    %2386 = vmatprep.subr.mxu0 0.0
    %2387 = vmatpush1.msra.mxu0 0.0
    %2388 = vmatprep.subr.mxu0 0.0
    %2389 = vmatpush1.msra.mxu0 0.0
    %2390 = vmatprep.subr.mxu0 0.0
    %2391 = vmatpush1.msra.mxu0 0.0
    %2392 = vmatprep.subr.mxu0 0.0
    %2393 = vmatpush1.msra.mxu0 0.0
    %2394 = vmatprep.subr.mxu0 0.0
    %2395 = vmatpush1.msra.mxu0 0.0
    %2396 = vmatprep.subr.mxu0 0.0
    %2397 = vmatpush1.msra.mxu0 0.0
    %2398 = vmatprep.subr.mxu0 0.0
    %2399 = vmatpush1.msra.mxu0 0.0
    %2400 = vmatprep.subr.mxu0 0.0
    %2401 = vmatpush1.msra.mxu0 0.0
    %2402 = vmatprep.subr.mxu0 0.0
    %2403 = vmatpush1.msra.mxu0 0.0
    %2404 = vmatprep.subr.mxu0 0.0
    %2405 = vmatpush1.msra.mxu0 0.0
    %2406 = vmatprep.subr.mxu0 0.0
    %2407 = vmatpush1.msra.mxu0 0.0
    %2408 = vmatprep.subr.mxu0 0.0
    %2409 = vmatpush1.msra.mxu0 0.0
    %2410 = vmatprep.subr.mxu0 0.0
    %2411 = vmatpush1.msra.mxu0 0.0
    %2412 = vmatprep.subr.mxu0 0.0
    %2413 = vmatpush1.msra.mxu0 0.0
    %2414 = vmatprep.mubr.f32.mxu0 0.0
    %2415 = vmatmul.mubr.f32.gmra.mrb[0].mxu0 %v2277
    %v2416 = vpop.f32.mrb[0].mxu0
    %v2417 = vadd.f32 0.0, %v2416
    %v2418 = vpop.f32.mrb[0].mxu0
    %2419 = vdwg.mxu0
    %2421 = vrot.lane.b32.xlu0 %v2417, 32
    %v2422 = vpop.permute.xlu0 %2421
    %v2424 = vadd.f32 %v195, %v2422
    %2425 = vmatprep.subr.mxu0 0.0
    %2426 = vmatpush1.msra.mxu0 %v208
    %2427 = vmatprep.subr.mxu0 0.0
    %2428 = vmatpush1.msra.mxu0 %v209
    %2429 = vmatprep.subr.mxu0 0.0
    %2430 = vmatpush1.msra.mxu0 %v210
    %2431 = vmatprep.subr.mxu0 0.0
    %2432 = vmatpush1.msra.mxu0 %v211
    %2433 = vmatprep.subr.mxu0 0.0
    %2434 = vmatpush1.msra.mxu0 0.0
    %2435 = vmatprep.subr.mxu0 0.0
    %2436 = vmatpush1.msra.mxu0 0.0
    %2437 = vmatprep.subr.mxu0 0.0
    %2438 = vmatpush1.msra.mxu0 0.0
    %2439 = vmatprep.subr.mxu0 0.0
    %2440 = vmatpush1.msra.mxu0 0.0
    %2441 = vmatprep.subr.mxu0 0.0
    %2442 = vmatpush1.msra.mxu0 0.0
    %2443 = vmatprep.subr.mxu0 0.0
    %2444 = vmatpush1.msra.mxu0 0.0
    %2445 = vmatprep.subr.mxu0 0.0
    %2446 = vmatpush1.msra.mxu0 0.0
    %2447 = vmatprep.subr.mxu0 0.0
    %2448 = vmatpush1.msra.mxu0 0.0
    %2449 = vmatprep.subr.mxu0 0.0
    %2450 = vmatpush1.msra.mxu0 0.0
    %2451 = vmatprep.subr.mxu0 0.0
    %2452 = vmatpush1.msra.mxu0 0.0
    %2453 = vmatprep.subr.mxu0 0.0
    %2454 = vmatpush1.msra.mxu0 0.0
    %2455 = vmatprep.subr.mxu0 0.0
    %2456 = vmatpush1.msra.mxu0 0.0
    %2457 = vmatprep.subr.mxu0 0.0
    %2458 = vmatpush1.msra.mxu0 0.0
    %2459 = vmatprep.subr.mxu0 0.0
    %2460 = vmatpush1.msra.mxu0 0.0
    %2461 = vmatprep.subr.mxu0 0.0
    %2462 = vmatpush1.msra.mxu0 0.0
    %2463 = vmatprep.subr.mxu0 0.0
    %2464 = vmatpush1.msra.mxu0 0.0
    %2465 = vmatprep.subr.mxu0 0.0
    %2466 = vmatpush1.msra.mxu0 0.0
    %2467 = vmatprep.subr.mxu0 0.0
    %2468 = vmatpush1.msra.mxu0 0.0
    %2469 = vmatprep.subr.mxu0 0.0
    %2470 = vmatpush1.msra.mxu0 0.0
    %2471 = vmatprep.subr.mxu0 0.0
    %2472 = vmatpush1.msra.mxu0 0.0
    %2473 = vmatprep.subr.mxu0 0.0
    %2474 = vmatpush1.msra.mxu0 0.0
    %2475 = vmatprep.subr.mxu0 0.0
    %2476 = vmatpush1.msra.mxu0 0.0
    %2477 = vmatprep.subr.mxu0 0.0
    %2478 = vmatpush1.msra.mxu0 0.0
    %2479 = vmatprep.subr.mxu0 0.0
    %2480 = vmatpush1.msra.mxu0 0.0
    %2481 = vmatprep.subr.mxu0 0.0
    %2482 = vmatpush1.msra.mxu0 0.0
    %2483 = vmatprep.subr.mxu0 0.0
    %2484 = vmatpush1.msra.mxu0 0.0
    %2485 = vmatprep.subr.mxu0 0.0
    %2486 = vmatpush1.msra.mxu0 0.0
    %2487 = vmatprep.subr.mxu0 0.0
    %2488 = vmatpush1.msra.mxu0 0.0
    %2489 = vmatprep.mubr.f32.mxu0 0.0
    %2490 = vmatmul.mubr.f32.gmra.mrb[0].mxu0 %v2277
    %v2491 = vpop.f32.mrb[0].mxu0
    %v2492 = vadd.f32 0.0, %v2491
    %v2493 = vpop.f32.mrb[0].mxu0
    %2494 = vdwg.mxu0
    %2496 = vrot.lane.b32.xlu0 %v2492, 64
    %v2497 = vpop.permute.xlu0 %2496
    %v2499 = vadd.f32 %v195, %v2497
    %2500 = vmatprep.subr.mxu0 0.0
    %2501 = vmatpush1.msra.mxu0 %v213
    %2502 = vmatprep.subr.mxu0 0.0
    %2503 = vmatpush1.msra.mxu0 %v214
    %2504 = vmatprep.subr.mxu0 0.0
    %2505 = vmatpush1.msra.mxu0 %v215
    %2506 = vmatprep.subr.mxu0 0.0
    %2507 = vmatpush1.msra.mxu0 %v216
    %2508 = vmatprep.subr.mxu0 0.0
    %2509 = vmatpush1.msra.mxu0 0.0
    %2510 = vmatprep.subr.mxu0 0.0
    %2511 = vmatpush1.msra.mxu0 0.0
    %2512 = vmatprep.subr.mxu0 0.0
    %2513 = vmatpush1.msra.mxu0 0.0
    %2514 = vmatprep.subr.mxu0 0.0
    %2515 = vmatpush1.msra.mxu0 0.0
    %2516 = vmatprep.subr.mxu0 0.0
    %2517 = vmatpush1.msra.mxu0 0.0
    %2518 = vmatprep.subr.mxu0 0.0
    %2519 = vmatpush1.msra.mxu0 0.0
    %2520 = vmatprep.subr.mxu0 0.0
    %2521 = vmatpush1.msra.mxu0 0.0
    %2522 = vmatprep.subr.mxu0 0.0
    %2523 = vmatpush1.msra.mxu0 0.0
    %2524 = vmatprep.subr.mxu0 0.0
    %2525 = vmatpush1.msra.mxu0 0.0
    %2526 = vmatprep.subr.mxu0 0.0
    %2527 = vmatpush1.msra.mxu0 0.0
    %2528 = vmatprep.subr.mxu0 0.0
    %2529 = vmatpush1.msra.mxu0 0.0
    %2530 = vmatprep.subr.mxu0 0.0
    %2531 = vmatpush1.msra.mxu0 0.0
    %2532 = vmatprep.subr.mxu0 0.0
    %2533 = vmatpush1.msra.mxu0 0.0
    %2534 = vmatprep.subr.mxu0 0.0
    %2535 = vmatpush1.msra.mxu0 0.0
    %2536 = vmatprep.subr.mxu0 0.0
    %2537 = vmatpush1.msra.mxu0 0.0
    %2538 = vmatprep.subr.mxu0 0.0
    %2539 = vmatpush1.msra.mxu0 0.0
    %2540 = vmatprep.subr.mxu0 0.0
    %2541 = vmatpush1.msra.mxu0 0.0
    %2542 = vmatprep.subr.mxu0 0.0
    %2543 = vmatpush1.msra.mxu0 0.0
    %2544 = vmatprep.subr.mxu0 0.0
    %2545 = vmatpush1.msra.mxu0 0.0
    %2546 = vmatprep.subr.mxu0 0.0
    %2547 = vmatpush1.msra.mxu0 0.0
    %2548 = vmatprep.subr.mxu0 0.0
    %2549 = vmatpush1.msra.mxu0 0.0
    %2550 = vmatprep.subr.mxu0 0.0
    %2551 = vmatpush1.msra.mxu0 0.0
    %2552 = vmatprep.subr.mxu0 0.0
    %2553 = vmatpush1.msra.mxu0 0.0
    %2554 = vmatprep.subr.mxu0 0.0
    %2555 = vmatpush1.msra.mxu0 0.0
    %2556 = vmatprep.subr.mxu0 0.0
    %2557 = vmatpush1.msra.mxu0 0.0
    %2558 = vmatprep.subr.mxu0 0.0
    %2559 = vmatpush1.msra.mxu0 0.0
    %2560 = vmatprep.subr.mxu0 0.0
    %2561 = vmatpush1.msra.mxu0 0.0
    %2562 = vmatprep.subr.mxu0 0.0
    %2563 = vmatpush1.msra.mxu0 0.0
    %2564 = vmatprep.mubr.f32.mxu0 0.0
    %2565 = vmatmul.mubr.f32.gmra.mrb[0].mxu0 %v2277
    %v2566 = vpop.f32.mrb[0].mxu0
    %v2567 = vadd.f32 0.0, %v2566
    %v2568 = vpop.f32.mrb[0].mxu0
    %2569 = vdwg.mxu0
    %2571 = vrot.lane.b32.xlu0 %v2567, 96
    %v2572 = vpop.permute.xlu0 %2571
    %v2574 = vadd.f32 %v195, %v2572
    %v2575 = vxor.u32 %v2424, 2147483648
    %v2576 = vmul.f32 %v2575, 1.442695
    %v2577 = vpow.pop %v2576
    %v2578 = vadd.f32 %v2577, 1.0
    %v2579 = vrcp.pop %v2578
    %v2580 = vmul.f32 1.0, %v2579
    %v2582 = vrot.slane %v2260, 4
    %v2584 = vmul.f32 %v2580, %v2582
    %v2585 = vxor.u32 %v2349, 2147483648
    %v2586 = vmul.f32 %v2585, 1.442695
    %v2587 = vpow.pop %v2586
    %v2588 = vadd.f32 %v2587, 1.0
    %v2589 = vrcp.pop %v2588
    %v2590 = vmul.f32 1.0, %v2589
    %v2591 = vtanh.pop %v2499
    %2593 = vrot.lane.b32.xlu0 %v2591, 64
    %v2594 = vpop.permute.xlu0 %2593
    %v2596 = vmul.f32 %v2590, %v2594
    %2598 = vrot.lane.b32.xlu0 %v2596, 32
    %v2599 = vpop.permute.xlu0 %2598
    %v2601 = vadd.f32 %v2584, %v2599
    %v2602 = vxor.u32 %v2574, 2147483648
    %v2603 = vmul.f32 %v2602, 1.442695
    %v2604 = vpow.pop %v2603
    %v2605 = vadd.f32 %v2604, 1.0
    %v2606 = vrcp.pop %v2605
    %v2607 = vmul.f32 1.0, %v2606
    %v2608 = vtanh.pop %v2601
    %2610 = vrot.lane.b32.xlu0 %v2608, 64
    %v2611 = vpop.permute.xlu0 %2610
    %v2613 = vmul.f32 %v2607, %v2611
    %2615 = vrot.lane.b32.xlu0 %v2613, 32
    %v2616 = vpop.permute.xlu0 %2615
    %v2617 = vsel %vm217, %v2616, 0
    %2619 = vmatprep.subr.mxu0 0.0
    %2620 = vmatpush1.msra.mxu0 %v198
    %2621 = vmatprep.subr.mxu0 0.0
    %2622 = vmatpush1.msra.mxu0 %v199
    %2623 = vmatprep.subr.mxu0 0.0
    %2624 = vmatpush1.msra.mxu0 %v200
    %2625 = vmatprep.subr.mxu0 0.0
    %2626 = vmatpush1.msra.mxu0 %v201
    %2627 = vmatprep.subr.mxu0 0.0
    %2628 = vmatpush1.msra.mxu0 0.0
    %2629 = vmatprep.subr.mxu0 0.0
    %2630 = vmatpush1.msra.mxu0 0.0
    %2631 = vmatprep.subr.mxu0 0.0
    %2632 = vmatpush1.msra.mxu0 0.0
    %2633 = vmatprep.subr.mxu0 0.0
    %2634 = vmatpush1.msra.mxu0 0.0
    %2635 = vmatprep.subr.mxu0 0.0
    %2636 = vmatpush1.msra.mxu0 0.0
    %2637 = vmatprep.subr.mxu0 0.0
    %2638 = vmatpush1.msra.mxu0 0.0
    %2639 = vmatprep.subr.mxu0 0.0
    %2640 = vmatpush1.msra.mxu0 0.0
    %2641 = vmatprep.subr.mxu0 0.0
    %2642 = vmatpush1.msra.mxu0 0.0
    %2643 = vmatprep.subr.mxu0 0.0
    %2644 = vmatpush1.msra.mxu0 0.0
    %2645 = vmatprep.subr.mxu0 0.0
    %2646 = vmatpush1.msra.mxu0 0.0
    %2647 = vmatprep.subr.mxu0 0.0
    %2648 = vmatpush1.msra.mxu0 0.0
    %2649 = vmatprep.subr.mxu0 0.0
    %2650 = vmatpush1.msra.mxu0 0.0
    %2651 = vmatprep.subr.mxu0 0.0
    %2652 = vmatpush1.msra.mxu0 0.0
    %2653 = vmatprep.subr.mxu0 0.0
    %2654 = vmatpush1.msra.mxu0 0.0
    %2655 = vmatprep.subr.mxu0 0.0
    %2656 = vmatpush1.msra.mxu0 0.0
    %2657 = vmatprep.subr.mxu0 0.0
    %2658 = vmatpush1.msra.mxu0 0.0
    %2659 = vmatprep.subr.mxu0 0.0
    %2660 = vmatpush1.msra.mxu0 0.0
    %2661 = vmatprep.subr.mxu0 0.0
    %2662 = vmatpush1.msra.mxu0 0.0
    %2663 = vmatprep.subr.mxu0 0.0
    %2664 = vmatpush1.msra.mxu0 0.0
    %2665 = vmatprep.subr.mxu0 0.0
    %2666 = vmatpush1.msra.mxu0 0.0
    %2667 = vmatprep.subr.mxu0 0.0
    %2668 = vmatpush1.msra.mxu0 0.0
    %2669 = vmatprep.subr.mxu0 0.0
    %2670 = vmatpush1.msra.mxu0 0.0
    %2671 = vmatprep.subr.mxu0 0.0
    %2672 = vmatpush1.msra.mxu0 0.0
    %2673 = vmatprep.subr.mxu0 0.0
    %2674 = vmatpush1.msra.mxu0 0.0
    %2675 = vmatprep.subr.mxu0 0.0
    %2676 = vmatpush1.msra.mxu0 0.0
    %2677 = vmatprep.subr.mxu0 0.0
    %2678 = vmatpush1.msra.mxu0 0.0
    %2679 = vmatprep.subr.mxu0 0.0
    %2680 = vmatpush1.msra.mxu0 0.0
    %2681 = vmatprep.subr.mxu0 0.0
    %2682 = vmatpush1.msra.mxu0 0.0
    %2683 = vmatprep.mubr.f32.mxu0 0.0
    %2684 = vmatmul.mubr.f32.gmra.mrb[0].mxu0 %v2617
    %v2685 = vpop.f32.mrb[0].mxu0
    %v2686 = vadd.f32 0.0, %v2685
    %v2687 = vpop.f32.mrb[0].mxu0
    %2688 = vdwg.mxu0
    %v2690 = vrot.slane %v2686, 4
    %v2692 = vadd.f32 %v195, %v2690
    %2693 = vmatprep.subr.mxu0 0.0
    %2694 = vmatpush1.msra.mxu0 %v203
    %2695 = vmatprep.subr.mxu0 0.0
    %2696 = vmatpush1.msra.mxu0 %v204
    %2697 = vmatprep.subr.mxu0 0.0
    %2698 = vmatpush1.msra.mxu0 %v205
    %2699 = vmatprep.subr.mxu0 0.0
    %2700 = vmatpush1.msra.mxu0 %v206
    %2701 = vmatprep.subr.mxu0 0.0
    %2702 = vmatpush1.msra.mxu0 0.0
    %2703 = vmatprep.subr.mxu0 0.0
    %2704 = vmatpush1.msra.mxu0 0.0
    %2705 = vmatprep.subr.mxu0 0.0
    %2706 = vmatpush1.msra.mxu0 0.0
    %2707 = vmatprep.subr.mxu0 0.0
    %2708 = vmatpush1.msra.mxu0 0.0
    %2709 = vmatprep.subr.mxu0 0.0
    %2710 = vmatpush1.msra.mxu0 0.0
    %2711 = vmatprep.subr.mxu0 0.0
    %2712 = vmatpush1.msra.mxu0 0.0
    %2713 = vmatprep.subr.mxu0 0.0
    %2714 = vmatpush1.msra.mxu0 0.0
    %2715 = vmatprep.subr.mxu0 0.0
    %2716 = vmatpush1.msra.mxu0 0.0
    %2717 = vmatprep.subr.mxu0 0.0
    %2718 = vmatpush1.msra.mxu0 0.0
    %2719 = vmatprep.subr.mxu0 0.0
    %2720 = vmatpush1.msra.mxu0 0.0
    %2721 = vmatprep.subr.mxu0 0.0
    %2722 = vmatpush1.msra.mxu0 0.0
    %2723 = vmatprep.subr.mxu0 0.0
    %2724 = vmatpush1.msra.mxu0 0.0
    %2725 = vmatprep.subr.mxu0 0.0
    %2726 = vmatpush1.msra.mxu0 0.0
    %2727 = vmatprep.subr.mxu0 0.0
    %2728 = vmatpush1.msra.mxu0 0.0
    %2729 = vmatprep.subr.mxu0 0.0
    %2730 = vmatpush1.msra.mxu0 0.0
    %2731 = vmatprep.subr.mxu0 0.0
    %2732 = vmatpush1.msra.mxu0 0.0
    %2733 = vmatprep.subr.mxu0 0.0
    %2734 = vmatpush1.msra.mxu0 0.0
    %2735 = vmatprep.subr.mxu0 0.0
    %2736 = vmatpush1.msra.mxu0 0.0
    %2737 = vmatprep.subr.mxu0 0.0
    %2738 = vmatpush1.msra.mxu0 0.0
    %2739 = vmatprep.subr.mxu0 0.0
    %2740 = vmatpush1.msra.mxu0 0.0
    %2741 = vmatprep.subr.mxu0 0.0
    %2742 = vmatpush1.msra.mxu0 0.0
    %2743 = vmatprep.subr.mxu0 0.0
    %2744 = vmatpush1.msra.mxu0 0.0
    %2745 = vmatprep.subr.mxu0 0.0
    %2746 = vmatpush1.msra.mxu0 0.0
    %2747 = vmatprep.subr.mxu0 0.0
    %2748 = vmatpush1.msra.mxu0 0.0
    %2749 = vmatprep.subr.mxu0 0.0
    %2750 = vmatpush1.msra.mxu0 0.0
    %2751 = vmatprep.subr.mxu0 0.0
    %2752 = vmatpush1.msra.mxu0 0.0
    %2753 = vmatprep.subr.mxu0 0.0
    %2754 = vmatpush1.msra.mxu0 0.0
    %2755 = vmatprep.subr.mxu0 0.0
    %2756 = vmatpush1.msra.mxu0 0.0
    %2757 = vmatprep.mubr.f32.mxu0 0.0
    %2758 = vmatmul.mubr.f32.gmra.mrb[0].mxu0 %v2617
    %v2759 = vpop.f32.mrb[0].mxu0
    %v2760 = vadd.f32 0.0, %v2759
    %v2761 = vpop.f32.mrb[0].mxu0
    %2762 = vdwg.mxu0
    %v2764 = vrot.slane %v2760, 4
    %2765 = vrot.lane.b32.xlu0 %v2764, 32
    %v2766 = vpop.permute.xlu0 %2765
    %v2768 = vadd.f32 %v195, %v2766
    %2769 = vmatprep.subr.mxu0 0.0
    %2770 = vmatpush1.msra.mxu0 %v208
    %2771 = vmatprep.subr.mxu0 0.0
    %2772 = vmatpush1.msra.mxu0 %v209
    %2773 = vmatprep.subr.mxu0 0.0
    %2774 = vmatpush1.msra.mxu0 %v210
    %2775 = vmatprep.subr.mxu0 0.0
    %2776 = vmatpush1.msra.mxu0 %v211
    %2777 = vmatprep.subr.mxu0 0.0
    %2778 = vmatpush1.msra.mxu0 0.0
    %2779 = vmatprep.subr.mxu0 0.0
    %2780 = vmatpush1.msra.mxu0 0.0
    %2781 = vmatprep.subr.mxu0 0.0
    %2782 = vmatpush1.msra.mxu0 0.0
    %2783 = vmatprep.subr.mxu0 0.0
    %2784 = vmatpush1.msra.mxu0 0.0
    %2785 = vmatprep.subr.mxu0 0.0
    %2786 = vmatpush1.msra.mxu0 0.0
    %2787 = vmatprep.subr.mxu0 0.0
    %2788 = vmatpush1.msra.mxu0 0.0
    %2789 = vmatprep.subr.mxu0 0.0
    %2790 = vmatpush1.msra.mxu0 0.0
    %2791 = vmatprep.subr.mxu0 0.0
    %2792 = vmatpush1.msra.mxu0 0.0
    %2793 = vmatprep.subr.mxu0 0.0
    %2794 = vmatpush1.msra.mxu0 0.0
    %2795 = vmatprep.subr.mxu0 0.0
    %2796 = vmatpush1.msra.mxu0 0.0
    %2797 = vmatprep.subr.mxu0 0.0
    %2798 = vmatpush1.msra.mxu0 0.0
    %2799 = vmatprep.subr.mxu0 0.0
    %2800 = vmatpush1.msra.mxu0 0.0
    %2801 = vmatprep.subr.mxu0 0.0
    %2802 = vmatpush1.msra.mxu0 0.0
    %2803 = vmatprep.subr.mxu0 0.0
    %2804 = vmatpush1.msra.mxu0 0.0
    %2805 = vmatprep.subr.mxu0 0.0
    %2806 = vmatpush1.msra.mxu0 0.0
    %2807 = vmatprep.subr.mxu0 0.0
    %2808 = vmatpush1.msra.mxu0 0.0
    %2809 = vmatprep.subr.mxu0 0.0
    %2810 = vmatpush1.msra.mxu0 0.0
    %2811 = vmatprep.subr.mxu0 0.0
    %2812 = vmatpush1.msra.mxu0 0.0
    %2813 = vmatprep.subr.mxu0 0.0
    %2814 = vmatpush1.msra.mxu0 0.0
    %2815 = vmatprep.subr.mxu0 0.0
    %2816 = vmatpush1.msra.mxu0 0.0
    %2817 = vmatprep.subr.mxu0 0.0
    %2818 = vmatpush1.msra.mxu0 0.0
    %2819 = vmatprep.subr.mxu0 0.0
    %2820 = vmatpush1.msra.mxu0 0.0
    %2821 = vmatprep.subr.mxu0 0.0
    %2822 = vmatpush1.msra.mxu0 0.0
    %2823 = vmatprep.subr.mxu0 0.0
    %2824 = vmatpush1.msra.mxu0 0.0
    %2825 = vmatprep.subr.mxu0 0.0
    %2826 = vmatpush1.msra.mxu0 0.0
    %2827 = vmatprep.subr.mxu0 0.0
    %2828 = vmatpush1.msra.mxu0 0.0
    %2829 = vmatprep.subr.mxu0 0.0
    %2830 = vmatpush1.msra.mxu0 0.0
    %2831 = vmatprep.subr.mxu0 0.0
    %2832 = vmatpush1.msra.mxu0 0.0
    %2833 = vmatprep.mubr.f32.mxu0 0.0
    %2834 = vmatmul.mubr.f32.gmra.mrb[0].mxu0 %v2617
    %v2835 = vpop.f32.mrb[0].mxu0
    %v2836 = vadd.f32 0.0, %v2835
    %v2837 = vpop.f32.mrb[0].mxu0
    %2838 = vdwg.mxu0
    %v2840 = vrot.slane %v2836, 4
    %2841 = vrot.lane.b32.xlu0 %v2840, 64
    %v2842 = vpop.permute.xlu0 %2841
    %v2844 = vadd.f32 %v195, %v2842
    %2845 = vmatprep.subr.mxu0 0.0
    %2846 = vmatpush1.msra.mxu0 %v213
    %2847 = vmatprep.subr.mxu0 0.0
    %2848 = vmatpush1.msra.mxu0 %v214
    %2849 = vmatprep.subr.mxu0 0.0
    %2850 = vmatpush1.msra.mxu0 %v215
    %2851 = vmatprep.subr.mxu0 0.0
    %2852 = vmatpush1.msra.mxu0 %v216
    %2853 = vmatprep.subr.mxu0 0.0
    %2854 = vmatpush1.msra.mxu0 0.0
    %2855 = vmatprep.subr.mxu0 0.0
    %2856 = vmatpush1.msra.mxu0 0.0
    %2857 = vmatprep.subr.mxu0 0.0
    %2858 = vmatpush1.msra.mxu0 0.0
    %2859 = vmatprep.subr.mxu0 0.0
    %2860 = vmatpush1.msra.mxu0 0.0
    %2861 = vmatprep.subr.mxu0 0.0
    %2862 = vmatpush1.msra.mxu0 0.0
    %2863 = vmatprep.subr.mxu0 0.0
    %2864 = vmatpush1.msra.mxu0 0.0
    %2865 = vmatprep.subr.mxu0 0.0
    %2866 = vmatpush1.msra.mxu0 0.0
    %2867 = vmatprep.subr.mxu0 0.0
    %2868 = vmatpush1.msra.mxu0 0.0
    %2869 = vmatprep.subr.mxu0 0.0
    %2870 = vmatpush1.msra.mxu0 0.0
    %2871 = vmatprep.subr.mxu0 0.0
    %2872 = vmatpush1.msra.mxu0 0.0
    %2873 = vmatprep.subr.mxu0 0.0
    %2874 = vmatpush1.msra.mxu0 0.0
    %2875 = vmatprep.subr.mxu0 0.0
    %2876 = vmatpush1.msra.mxu0 0.0
    %2877 = vmatprep.subr.mxu0 0.0
    %2878 = vmatpush1.msra.mxu0 0.0
    %2879 = vmatprep.subr.mxu0 0.0
    %2880 = vmatpush1.msra.mxu0 0.0
    %2881 = vmatprep.subr.mxu0 0.0
    %2882 = vmatpush1.msra.mxu0 0.0
    %2883 = vmatprep.subr.mxu0 0.0
    %2884 = vmatpush1.msra.mxu0 0.0
    %2885 = vmatprep.subr.mxu0 0.0
    %2886 = vmatpush1.msra.mxu0 0.0
    %2887 = vmatprep.subr.mxu0 0.0
    %2888 = vmatpush1.msra.mxu0 0.0
    %2889 = vmatprep.subr.mxu0 0.0
    %2890 = vmatpush1.msra.mxu0 0.0
    %2891 = vmatprep.subr.mxu0 0.0
    %2892 = vmatpush1.msra.mxu0 0.0
    %2893 = vmatprep.subr.mxu0 0.0
    %2894 = vmatpush1.msra.mxu0 0.0
    %2895 = vmatprep.subr.mxu0 0.0
    %2896 = vmatpush1.msra.mxu0 0.0
    %2897 = vmatprep.subr.mxu0 0.0
    %2898 = vmatpush1.msra.mxu0 0.0
    %2899 = vmatprep.subr.mxu0 0.0
    %2900 = vmatpush1.msra.mxu0 0.0
    %2901 = vmatprep.subr.mxu0 0.0
    %2902 = vmatpush1.msra.mxu0 0.0
    %2903 = vmatprep.subr.mxu0 0.0
    %2904 = vmatpush1.msra.mxu0 0.0
    %2905 = vmatprep.subr.mxu0 0.0
    %2906 = vmatpush1.msra.mxu0 0.0
    %2907 = vmatprep.subr.mxu0 0.0
    %2908 = vmatpush1.msra.mxu0 0.0
    %2909 = vmatprep.mubr.f32.mxu0 0.0
    %2910 = vmatmul.mubr.f32.gmra.mrb[0].mxu0 %v2617
    %v2911 = vpop.f32.mrb[0].mxu0
    %v2912 = vadd.f32 0.0, %v2911
    %v2913 = vpop.f32.mrb[0].mxu0
    %2914 = vdwg.mxu0
    %v2916 = vrot.slane %v2912, 4
    %2917 = vrot.lane.b32.xlu0 %v2916, 96
    %v2918 = vpop.permute.xlu0 %2917
    %v2920 = vadd.f32 %v195, %v2918
    %v2921 = vxor.u32 %v2768, 2147483648
    %v2922 = vmul.f32 %v2921, 1.442695
    %v2923 = vpow.pop %v2922
    %v2924 = vadd.f32 %v2923, 1.0
    %v2925 = vrcp.pop %v2924
    %v2926 = vmul.f32 1.0, %v2925
    %v2928 = vrot.slane %v2601, 4
    %v2930 = vmul.f32 %v2926, %v2928
    %v2931 = vxor.u32 %v2692, 2147483648
    %v2932 = vmul.f32 %v2931, 1.442695
    %v2933 = vpow.pop %v2932
    %v2934 = vadd.f32 %v2933, 1.0
    %v2935 = vrcp.pop %v2934
    %v2936 = vmul.f32 1.0, %v2935
    %v2937 = vtanh.pop %v2844
    %2939 = vrot.lane.b32.xlu0 %v2937, 64
    %v2940 = vpop.permute.xlu0 %2939
    %v2942 = vmul.f32 %v2936, %v2940
    %2944 = vrot.lane.b32.xlu0 %v2942, 32
    %v2945 = vpop.permute.xlu0 %2944
    %v2947 = vadd.f32 %v2930, %v2945
    %v2948 = vxor.u32 %v2920, 2147483648
    %v2949 = vmul.f32 %v2948, 1.442695
    %v2950 = vpow.pop %v2949
    %v2951 = vadd.f32 %v2950, 1.0
    %v2952 = vrcp.pop %v2951
    %v2953 = vmul.f32 1.0, %v2952
    %v2954 = vtanh.pop %v2947
    %2956 = vrot.lane.b32.xlu0 %v2954, 64
    %v2957 = vpop.permute.xlu0 %2956
    %v2959 = vmul.f32 %v2953, %v2957
    %v2960 = vld [vmem:[%s5] sm:$0xff]
    %v2961 = vld [vmem:[%s5 + $0x8] sm:$0xff]
    %v2962 = vld [vmem:[%s5 + $0x10] sm:$0xff]
    %v2963 = vld [vmem:[%s5 + $0x18] sm:$0xff]
    %v2964 = vld [vmem:[%s6] sm:$0x1]
    %v2966 = vlaneseq
    %v2967 = vshrl.u32 %v2966, 7
    %v2968 = vsub.s32 0, %v2967
    %v2969 = vrot.slane %v2964, %v2968
    %v2972 = vrot.slane %v2959, 4
    %2973 = vrot.lane.b32.xlu0 %v2972, 32
    %v2974 = vpop.permute.xlu0 %2973
    %v2975 = vsel %vm217, %v2974, 0
    %2977 = vmatprep.subr.mxu0 0.0
    %2978 = vmatpush1.msra.mxu0 %v2960
    %2979 = vmatprep.subr.mxu0 0.0
    %2980 = vmatpush1.msra.mxu0 %v2961
    %2981 = vmatprep.subr.mxu0 0.0
    %2982 = vmatpush1.msra.mxu0 %v2962
    %2983 = vmatprep.subr.mxu0 0.0
    %2984 = vmatpush1.msra.mxu0 %v2963
    %2985 = vmatprep.subr.mxu0 0.0
    %2986 = vmatpush1.msra.mxu0 0.0
    %2987 = vmatprep.subr.mxu0 0.0
    %2988 = vmatpush1.msra.mxu0 0.0
    %2989 = vmatprep.subr.mxu0 0.0
    %2990 = vmatpush1.msra.mxu0 0.0
    %2991 = vmatprep.subr.mxu0 0.0
    %2992 = vmatpush1.msra.mxu0 0.0
    %2993 = vmatprep.subr.mxu0 0.0
    %2994 = vmatpush1.msra.mxu0 0.0
    %2995 = vmatprep.subr.mxu0 0.0
    %2996 = vmatpush1.msra.mxu0 0.0
    %2997 = vmatprep.subr.mxu0 0.0
    %2998 = vmatpush1.msra.mxu0 0.0
    %2999 = vmatprep.subr.mxu0 0.0
    %3000 = vmatpush1.msra.mxu0 0.0
    %3001 = vmatprep.subr.mxu0 0.0
    %3002 = vmatpush1.msra.mxu0 0.0
    %3003 = vmatprep.subr.mxu0 0.0
    %3004 = vmatpush1.msra.mxu0 0.0
    %3005 = vmatprep.subr.mxu0 0.0
    %3006 = vmatpush1.msra.mxu0 0.0
    %3007 = vmatprep.subr.mxu0 0.0
    %3008 = vmatpush1.msra.mxu0 0.0
    %3009 = vmatprep.subr.mxu0 0.0
    %3010 = vmatpush1.msra.mxu0 0.0
    %3011 = vmatprep.subr.mxu0 0.0
    %3012 = vmatpush1.msra.mxu0 0.0
    %3013 = vmatprep.subr.mxu0 0.0
    %3014 = vmatpush1.msra.mxu0 0.0
    %3015 = vmatprep.subr.mxu0 0.0
    %3016 = vmatpush1.msra.mxu0 0.0
    %3017 = vmatprep.subr.mxu0 0.0
    %3018 = vmatpush1.msra.mxu0 0.0
    %3019 = vmatprep.subr.mxu0 0.0
    %3020 = vmatpush1.msra.mxu0 0.0
    %3021 = vmatprep.subr.mxu0 0.0
    %3022 = vmatpush1.msra.mxu0 0.0
    %3023 = vmatprep.subr.mxu0 0.0
    %3024 = vmatpush1.msra.mxu0 0.0
    %3025 = vmatprep.subr.mxu0 0.0
    %3026 = vmatpush1.msra.mxu0 0.0
    %3027 = vmatprep.subr.mxu0 0.0
    %3028 = vmatpush1.msra.mxu0 0.0
    %3029 = vmatprep.subr.mxu0 0.0
    %3030 = vmatpush1.msra.mxu0 0.0
    %3031 = vmatprep.subr.mxu0 0.0
    %3032 = vmatpush1.msra.mxu0 0.0
    %3033 = vmatprep.subr.mxu0 0.0
    %3034 = vmatpush1.msra.mxu0 0.0
    %3035 = vmatprep.subr.mxu0 0.0
    %3036 = vmatpush1.msra.mxu0 0.0
    %3037 = vmatprep.subr.mxu0 0.0
    %3038 = vmatpush1.msra.mxu0 0.0
    %3039 = vmatprep.subr.mxu0 0.0
    %3040 = vmatpush1.msra.mxu0 0.0
    %3041 = vmatprep.mubr.f32.mxu0 0.0
    %3042 = vmatmul.mubr.f32.gmra.mrb[0].mxu0 %v2975
    %v3043 = vpop.f32.mrb[0].mxu0
    %v3044 = vadd.f32 %v2969, %v3043
    %v3045 = vpop.f32.mrb[0].mxu0
    %3046 = vdwg.mxu0
    %v3047 = vmax.f32 %v3044, 0.0
    %v3048 = vld [vmem:[%s7] sm:$0xff]
    %v3049 = vld [vmem:[%s7 + $0x8] sm:$0xff]
    %v3050 = vld [vmem:[%s7 + $0x10] sm:$0xff]
    %v3051 = vld [vmem:[%s7 + $0x18] sm:$0xff]
    %v3052 = vld [vmem:[%s7 + $0x20] sm:$0xff]
    %v3053 = vld [vmem:[%s7 + $0x28] sm:$0xff]
    %v3054 = vld [vmem:[%s7 + $0x30] sm:$0xff]
    %v3055 = vld [vmem:[%s7 + $0x38] sm:$0xff]
    %v3056 = vld [vmem:[%s7 + $0x40] sm:$0xff]
    %v3057 = vld [vmem:[%s7 + $0x48] sm:$0xff]
    %v3058 = vld [vmem:[%s7 + $0x50] sm:$0xff]
    %v3059 = vld [vmem:[%s7 + $0x58] sm:$0xff]
    %v3060 = vld [vmem:[%s7 + $0x60] sm:$0xff]
    %v3061 = vld [vmem:[%s7 + $0x68] sm:$0xff]
    %v3062 = vld [vmem:[%s7 + $0x70] sm:$0xff]
    %v3063 = vld [vmem:[%s7 + $0x78] sm:$0xff]
    %v3064 = vld [vmem:[%s8] sm:$0x1]
    %v3066 = vlaneseq
    %v3067 = vshrl.u32 %v3066, 7
    %v3068 = vsub.s32 0, %v3067
    %v3069 = vrot.slane %v3064, %v3068
    %3071 = vmatprep.subr.mxu0 0.0
    %3072 = vmatpush1.msra.mxu0 %v3048
    %3073 = vmatprep.subr.mxu0 0.0
    %3074 = vmatpush1.msra.mxu0 %v3049
    %3075 = vmatprep.subr.mxu0 0.0
    %3076 = vmatpush1.msra.mxu0 %v3050
    %3077 = vmatprep.subr.mxu0 0.0
    %3078 = vmatpush1.msra.mxu0 %v3051
    %3079 = vmatprep.subr.mxu0 0.0
    %3080 = vmatpush1.msra.mxu0 %v3052
    %3081 = vmatprep.subr.mxu0 0.0
    %3082 = vmatpush1.msra.mxu0 %v3053
    %3083 = vmatprep.subr.mxu0 0.0
    %3084 = vmatpush1.msra.mxu0 %v3054
    %3085 = vmatprep.subr.mxu0 0.0
    %3086 = vmatpush1.msra.mxu0 %v3055
    %3087 = vmatprep.subr.mxu0 0.0
    %3088 = vmatpush1.msra.mxu0 %v3056
    %3089 = vmatprep.subr.mxu0 0.0
    %3090 = vmatpush1.msra.mxu0 %v3057
    %3091 = vmatprep.subr.mxu0 0.0
    %3092 = vmatpush1.msra.mxu0 %v3058
    %3093 = vmatprep.subr.mxu0 0.0
    %3094 = vmatpush1.msra.mxu0 %v3059
    %3095 = vmatprep.subr.mxu0 0.0
    %3096 = vmatpush1.msra.mxu0 %v3060
    %3097 = vmatprep.subr.mxu0 0.0
    %3098 = vmatpush1.msra.mxu0 %v3061
    %3099 = vmatprep.subr.mxu0 0.0
    %3100 = vmatpush1.msra.mxu0 %v3062
    %3101 = vmatprep.subr.mxu0 0.0
    %3102 = vmatpush1.msra.mxu0 %v3063
    %3103 = vmatprep.subr.mxu0 0.0
    %3104 = vmatpush1.msra.mxu0 0.0
    %3105 = vmatprep.subr.mxu0 0.0
    %3106 = vmatpush1.msra.mxu0 0.0
    %3107 = vmatprep.subr.mxu0 0.0
    %3108 = vmatpush1.msra.mxu0 0.0
    %3109 = vmatprep.subr.mxu0 0.0
    %3110 = vmatpush1.msra.mxu0 0.0
    %3111 = vmatprep.subr.mxu0 0.0
    %3112 = vmatpush1.msra.mxu0 0.0
    %3113 = vmatprep.subr.mxu0 0.0
    %3114 = vmatpush1.msra.mxu0 0.0
    %3115 = vmatprep.subr.mxu0 0.0
    %3116 = vmatpush1.msra.mxu0 0.0
    %3117 = vmatprep.subr.mxu0 0.0
    %3118 = vmatpush1.msra.mxu0 0.0
    %3119 = vmatprep.subr.mxu0 0.0
    %3120 = vmatpush1.msra.mxu0 0.0
    %3121 = vmatprep.subr.mxu0 0.0
    %3122 = vmatpush1.msra.mxu0 0.0
    %3123 = vmatprep.subr.mxu0 0.0
    %3124 = vmatpush1.msra.mxu0 0.0
    %3125 = vmatprep.subr.mxu0 0.0
    %3126 = vmatpush1.msra.mxu0 0.0
    %3127 = vmatprep.subr.mxu0 0.0
    %3128 = vmatpush1.msra.mxu0 0.0
    %3129 = vmatprep.subr.mxu0 0.0
    %3130 = vmatpush1.msra.mxu0 0.0
    %3131 = vmatprep.subr.mxu0 0.0
    %3132 = vmatpush1.msra.mxu0 0.0
    %3133 = vmatprep.subr.mxu0 0.0
    %3134 = vmatpush1.msra.mxu0 0.0
    %3135 = vmatprep.mubr.f32.mxu0 0.0
    %3136 = vmatmul.mubr.f32.gmra.mrb[0].mxu0 %v3047
    %v3137 = vpop.f32.mrb[0].mxu0
    %v3138 = vadd.f32 %v3069, %v3137
    %v3139 = vpop.f32.mrb[0].mxu0
    %3140 = vdwg.mxu0
    %v3141 = vmax.f32 %v3138, 0.0
    %v3142 = vld [vmem:[%s1] sm:$0xf]
    %v3143 = vld [vmem:[%s9] sm:$0xf]
    %v3144 = vld [vmem:[%s10] sm:$0x3]
    %v3146 = vlaneseq
    %v3147 = vshrl.u32 %v3146, 7
    %v3148 = vsub.s32 0, %v3147
    %v3149 = vrot.slane %v3144, %v3148
    %v3150 = vlaneseq
    %v3151 = vshrl.u32 %v3150, 7
    %v3152 = vsub.s32 1, %v3151
    %v3153 = vrot.slane %v3144, %v3152
    %v3156 = vrot.slane %v87, 4
    %v3159 = vunpack.c.l.s4 1983009808
    %v3160 = vunpack.c.0.s8 %v3159
    %v3161 = vlaneseq
    %v3162 = vshrl.u32 %v3161, 7
    %v3163 = vsub.s32 %v3160, %v3162
    %v3164 = vrot.slane %v3143, %v3163
    %v3165 = vcombine.high %v3164, %v3164
    %v3166 = vsel %vm96, %v3156, 0
    %v3168 = vsel %vm109, %v3164, 0
    %v3170 = vsel %vm109, %v3165, 0
    %3172 = vmatprep.subr.mxu0 %v3170
    %3173 = vmatpush1.msra.mxu0 %v3168
    %3174 = vmatprep.subr.mxu0 0.0
    %3175 = vmatpush1.msra.mxu0 0.0
    %3176 = vmatprep.subr.mxu0 0.0
    %3177 = vmatpush1.msra.mxu0 0.0
    %3178 = vmatprep.subr.mxu0 0.0
    %3179 = vmatpush1.msra.mxu0 0.0
    %3180 = vmatprep.subr.mxu0 0.0
    %3181 = vmatpush1.msra.mxu0 0.0
    %3182 = vmatprep.subr.mxu0 0.0
    %3183 = vmatpush1.msra.mxu0 0.0
    %3184 = vmatprep.subr.mxu0 0.0
    %3185 = vmatpush1.msra.mxu0 0.0
    %3186 = vmatprep.subr.mxu0 0.0
    %3187 = vmatpush1.msra.mxu0 0.0
    %3188 = vmatprep.subr.mxu0 0.0
    %3189 = vmatpush1.msra.mxu0 0.0
    %3190 = vmatprep.subr.mxu0 0.0
    %3191 = vmatpush1.msra.mxu0 0.0
    %3192 = vmatprep.subr.mxu0 0.0
    %3193 = vmatpush1.msra.mxu0 0.0
    %3194 = vmatprep.subr.mxu0 0.0
    %3195 = vmatpush1.msra.mxu0 0.0
    %3196 = vmatprep.subr.mxu0 0.0
    %3197 = vmatpush1.msra.mxu0 0.0
    %3198 = vmatprep.subr.mxu0 0.0
    %3199 = vmatpush1.msra.mxu0 0.0
    %3200 = vmatprep.subr.mxu0 0.0
    %3201 = vmatpush1.msra.mxu0 0.0
    %3202 = vmatprep.subr.mxu0 0.0
    %3203 = vmatpush1.msra.mxu0 0.0
    %3204 = vmatprep.subr.mxu0 0.0
    %3205 = vmatpush1.msra.mxu0 0.0
    %3206 = vmatprep.subr.mxu0 0.0
    %3207 = vmatpush1.msra.mxu0 0.0
    %3208 = vmatprep.subr.mxu0 0.0
    %3209 = vmatpush1.msra.mxu0 0.0
    %3210 = vmatprep.subr.mxu0 0.0
    %3211 = vmatpush1.msra.mxu0 0.0
    %3212 = vmatprep.subr.mxu0 0.0
    %3213 = vmatpush1.msra.mxu0 0.0
    %3214 = vmatprep.subr.mxu0 0.0
    %3215 = vmatpush1.msra.mxu0 0.0
    %3216 = vmatprep.subr.mxu0 0.0
    %3217 = vmatpush1.msra.mxu0 0.0
    %3218 = vmatprep.subr.mxu0 0.0
    %3219 = vmatpush1.msra.mxu0 0.0
    %3220 = vmatprep.subr.mxu0 0.0
    %3221 = vmatpush1.msra.mxu0 0.0
    %3222 = vmatprep.subr.mxu0 0.0
    %3223 = vmatpush1.msra.mxu0 0.0
    %3224 = vmatprep.subr.mxu0 0.0
    %3225 = vmatpush1.msra.mxu0 0.0
    %3226 = vmatprep.subr.mxu0 0.0
    %3227 = vmatpush1.msra.mxu0 0.0
    %3228 = vmatprep.subr.mxu0 0.0
    %3229 = vmatpush1.msra.mxu0 0.0
    %3230 = vmatprep.subr.mxu0 0.0
    %3231 = vmatpush1.msra.mxu0 0.0
    %3232 = vmatprep.subr.mxu0 0.0
    %3233 = vmatpush1.msra.mxu0 0.0
    %3234 = vmatprep.subr.mxu0 0.0
    %3235 = vmatpush1.msra.mxu0 0.0
    %3236 = vmatprep.mubr.f32.mxu0 0.0
    %3237 = vmatmul.mubr.f32.gmra.mrb[0].mxu0 %v3166
    %v3238 = vpop.f32.mrb[0].mxu0
    %v3239 = vadd.f32 %v3149, %v3238
    %v3240 = vpop.f32.mrb[0].mxu0
    %v3241 = vadd.f32 %v3153, %v3240
    %3242 = vdwg.mxu0
    %v3243 = vld [vmem:[#allocation5] sm:$0xff]
    %v3244 = vld [vmem:[#allocation5 + $0x8] sm:$0xff]
    %v3245 = vld [vmem:[#allocation5 + $0x10] sm:$0xff]
    %v3246 = vld [vmem:[#allocation5 + $0x18] sm:$0xff]
    %v3247 = vld [vmem:[#allocation5 + $0x20] sm:$0xff]
    %v3248 = vld [vmem:[#allocation5 + $0x28] sm:$0xff]
    %v3249 = vld [vmem:[#allocation5 + $0x30] sm:$0xff]
    %v3250 = vld [vmem:[#allocation5 + $0x38] sm:$0xff]
    %v3251 = vld [vmem:[#allocation5 + $0x40] sm:$0xff]
    %v3252 = vld [vmem:[#allocation5 + $0x48] sm:$0xff]
    %v3253 = vld [vmem:[#allocation5 + $0x50] sm:$0xff]
    %v3254 = vld [vmem:[#allocation5 + $0x58] sm:$0xff]
    %v3255 = vld [vmem:[#allocation5 + $0x60] sm:$0xff]
    %v3256 = vld [vmem:[#allocation5 + $0x68] sm:$0xff]
    %v3257 = vld [vmem:[#allocation5 + $0x70] sm:$0x3f]
    %v3258 = vld [vmem:[#allocation5 + $0x78] sm:$0x3f]
    %vm3259 = vcmask 506880
    %v3261 = vsel %vm3259, %v3141, 0
    %vm3263 = vcmask 1045504
    %v3265 = vsel %vm3263, %v3257, 0
    %v3268 = vsel %vm3263, %v3258, 0
    %3270 = vmatprep.subr.mxu0 %v3244
    %3271 = vmatpush1.msra.mxu0 %v3243
    %3272 = vmatprep.subr.mxu0 %v3246
    %3273 = vmatpush1.msra.mxu0 %v3245
    %3274 = vmatprep.subr.mxu0 %v3248
    %3275 = vmatpush1.msra.mxu0 %v3247
    %3276 = vmatprep.subr.mxu0 %v3250
    %3277 = vmatpush1.msra.mxu0 %v3249
    %3278 = vmatprep.subr.mxu0 %v3252
    %3279 = vmatpush1.msra.mxu0 %v3251
    %3280 = vmatprep.subr.mxu0 %v3254
    %3281 = vmatpush1.msra.mxu0 %v3253
    %3282 = vmatprep.subr.mxu0 %v3256
    %3283 = vmatpush1.msra.mxu0 %v3255
    %3284 = vmatprep.subr.mxu0 %v3268
    %3285 = vmatpush1.msra.mxu0 %v3265
    %3286 = vmatprep.subr.mxu0 0.0
    %3287 = vmatpush1.msra.mxu0 0.0
    %3288 = vmatprep.subr.mxu0 0.0
    %3289 = vmatpush1.msra.mxu0 0.0
    %3290 = vmatprep.subr.mxu0 0.0
    %3291 = vmatpush1.msra.mxu0 0.0
    %3292 = vmatprep.subr.mxu0 0.0
    %3293 = vmatpush1.msra.mxu0 0.0
    %3294 = vmatprep.subr.mxu0 0.0
    %3295 = vmatpush1.msra.mxu0 0.0
    %3296 = vmatprep.subr.mxu0 0.0
    %3297 = vmatpush1.msra.mxu0 0.0
    %3298 = vmatprep.subr.mxu0 0.0
    %3299 = vmatpush1.msra.mxu0 0.0
    %3300 = vmatprep.subr.mxu0 0.0
    %3301 = vmatpush1.msra.mxu0 0.0
    %3302 = vmatprep.subr.mxu0 0.0
    %3303 = vmatpush1.msra.mxu0 0.0
    %3304 = vmatprep.subr.mxu0 0.0
    %3305 = vmatpush1.msra.mxu0 0.0
    %3306 = vmatprep.subr.mxu0 0.0
    %3307 = vmatpush1.msra.mxu0 0.0
    %3308 = vmatprep.subr.mxu0 0.0
    %3309 = vmatpush1.msra.mxu0 0.0
    %3310 = vmatprep.subr.mxu0 0.0
    %3311 = vmatpush1.msra.mxu0 0.0
    %3312 = vmatprep.subr.mxu0 0.0
    %3313 = vmatpush1.msra.mxu0 0.0
    %3314 = vmatprep.subr.mxu0 0.0
    %3315 = vmatpush1.msra.mxu0 0.0
    %3316 = vmatprep.subr.mxu0 0.0
    %3317 = vmatpush1.msra.mxu0 0.0
    %3318 = vmatprep.subr.mxu0 0.0
    %3319 = vmatpush1.msra.mxu0 0.0
    %3320 = vmatprep.subr.mxu0 0.0
    %3321 = vmatpush1.msra.mxu0 0.0
    %3322 = vmatprep.subr.mxu0 0.0
    %3323 = vmatpush1.msra.mxu0 0.0
    %3324 = vmatprep.subr.mxu0 0.0
    %3325 = vmatpush1.msra.mxu0 0.0
    %3326 = vmatprep.subr.mxu0 0.0
    %3327 = vmatpush1.msra.mxu0 0.0
    %3328 = vmatprep.subr.mxu0 0.0
    %3329 = vmatpush1.msra.mxu0 0.0
    %3330 = vmatprep.subr.mxu0 0.0
    %3331 = vmatpush1.msra.mxu0 0.0
    %3332 = vmatprep.subr.mxu0 0.0
    %3333 = vmatpush1.msra.mxu0 0.0
    %3334 = vmatprep.mubr.f32.mxu0 0.0
    %3335 = vmatmul.mubr.f32.gmra.mrb[0].mxu0 %v3261
    %v3336 = vpop.f32.mrb[0].mxu0
    %v3337 = vadd.f32 0.0, %v3336
    %v3338 = vpop.f32.mrb[0].mxu0
    %v3339 = vadd.f32 0.0, %v3338
    %3340 = vdwg.mxu0
    %v3341 = vadd.f32 %v3239, %v3337
    %v3342 = vadd.f32 %v3241, %v3339
    %v3343 = vld [vmem:[%s12] sm:$0xf]
    %v3346 = vunpack.c.l.s4 1983009808
    %v3347 = vunpack.c.0.s8 %v3346
    %v3348 = vlaneseq
    %v3349 = vshrl.u32 %v3348, 7
    %v3350 = vsub.s32 %v3347, %v3349
    %v3351 = vrot.slane %v3343, %v3350
    %v3352 = vcombine.high %v3351, %v3351
    %v3354 = vsel %vm96, %v3142, 0
    %v3356 = vsel %vm109, %v3351, 0
    %v3358 = vsel %vm109, %v3352, 0
    %3360 = vmatprep.subr.mxu0 %v3358
    %3361 = vmatpush1.msra.mxu0 %v3356
    %3362 = vmatprep.subr.mxu0 0.0
    %3363 = vmatpush1.msra.mxu0 0.0
    %3364 = vmatprep.subr.mxu0 0.0
    %3365 = vmatpush1.msra.mxu0 0.0
    %3366 = vmatprep.subr.mxu0 0.0
    %3367 = vmatpush1.msra.mxu0 0.0
    %3368 = vmatprep.subr.mxu0 0.0
    %3369 = vmatpush1.msra.mxu0 0.0
    %3370 = vmatprep.subr.mxu0 0.0
    %3371 = vmatpush1.msra.mxu0 0.0
    %3372 = vmatprep.subr.mxu0 0.0
    %3373 = vmatpush1.msra.mxu0 0.0
    %3374 = vmatprep.subr.mxu0 0.0
    %3375 = vmatpush1.msra.mxu0 0.0
    %3376 = vmatprep.subr.mxu0 0.0
    %3377 = vmatpush1.msra.mxu0 0.0
    %3378 = vmatprep.subr.mxu0 0.0
    %3379 = vmatpush1.msra.mxu0 0.0
    %3380 = vmatprep.subr.mxu0 0.0
    %3381 = vmatpush1.msra.mxu0 0.0
    %3382 = vmatprep.subr.mxu0 0.0
    %3383 = vmatpush1.msra.mxu0 0.0
    %3384 = vmatprep.subr.mxu0 0.0
    %3385 = vmatpush1.msra.mxu0 0.0
    %3386 = vmatprep.subr.mxu0 0.0
    %3387 = vmatpush1.msra.mxu0 0.0
    %3388 = vmatprep.subr.mxu0 0.0
    %3389 = vmatpush1.msra.mxu0 0.0
    %3390 = vmatprep.subr.mxu0 0.0
    %3391 = vmatpush1.msra.mxu0 0.0
    %3392 = vmatprep.subr.mxu0 0.0
    %3393 = vmatpush1.msra.mxu0 0.0
    %3394 = vmatprep.subr.mxu0 0.0
    %3395 = vmatpush1.msra.mxu0 0.0
    %3396 = vmatprep.subr.mxu0 0.0
    %3397 = vmatpush1.msra.mxu0 0.0
    %3398 = vmatprep.subr.mxu0 0.0
    %3399 = vmatpush1.msra.mxu0 0.0
    %3400 = vmatprep.subr.mxu0 0.0
    %3401 = vmatpush1.msra.mxu0 0.0
    %3402 = vmatprep.subr.mxu0 0.0
    %3403 = vmatpush1.msra.mxu0 0.0
    %3404 = vmatprep.subr.mxu0 0.0
    %3405 = vmatpush1.msra.mxu0 0.0
    %3406 = vmatprep.subr.mxu0 0.0
    %3407 = vmatpush1.msra.mxu0 0.0
    %3408 = vmatprep.subr.mxu0 0.0
    %3409 = vmatpush1.msra.mxu0 0.0
    %3410 = vmatprep.subr.mxu0 0.0
    %3411 = vmatpush1.msra.mxu0 0.0
    %3412 = vmatprep.subr.mxu0 0.0
    %3413 = vmatpush1.msra.mxu0 0.0
    %3414 = vmatprep.subr.mxu0 0.0
    %3415 = vmatpush1.msra.mxu0 0.0
    %3416 = vmatprep.subr.mxu0 0.0
    %3417 = vmatpush1.msra.mxu0 0.0
    %3418 = vmatprep.subr.mxu0 0.0
    %3419 = vmatpush1.msra.mxu0 0.0
    %3420 = vmatprep.subr.mxu0 0.0
    %3421 = vmatpush1.msra.mxu0 0.0
    %3422 = vmatprep.subr.mxu0 0.0
    %3423 = vmatpush1.msra.mxu0 0.0
    %3424 = vmatprep.mubr.f32.mxu0 0.0
    %3425 = vmatmul.mubr.f32.gmra.mrb[0].mxu0 %v3354
    %v3426 = vpop.f32.mrb[0].mxu0
    %v3427 = vadd.f32 0.0, %v3426
    %v3428 = vpop.f32.mrb[0].mxu0
    %v3429 = vadd.f32 0.0, %v3428
    %3430 = vdwg.mxu0
    %v3431 = vadd.f32 %v3341, %v3427
    %v3432 = vadd.f32 %v3342, %v3429
    %v3433 = vld [vmem:[%s13] sm:$0xff]
    %v3434 = vld [vmem:[%s13 + $0x8] sm:$0xff]
    %v3435 = vld [vmem:[%s13 + $0x10] sm:$0xff]
    %v3436 = vld [vmem:[%s13 + $0x18] sm:$0xff]
    %v3437 = vld [vmem:[%s13 + $0x20] sm:$0xff]
    %v3438 = vld [vmem:[%s13 + $0x28] sm:$0xff]
    %v3439 = vld [vmem:[%s13 + $0x30] sm:$0xff]
    %v3440 = vld [vmem:[%s13 + $0x38] sm:$0xff]
    %s3441 = scalar_lea.vmem %s13, 64
    %v3442 = vld [vmem:[%s3441] sm:$0xff]
    %v3443 = vld [vmem:[%s3441 + $0x8] sm:$0xff]
    %v3444 = vld [vmem:[%s3441 + $0x10] sm:$0xff]
    %v3445 = vld [vmem:[%s3441 + $0x18] sm:$0xff]
    %v3446 = vld [vmem:[%s3441 + $0x20] sm:$0xff]
    %v3447 = vld [vmem:[%s3441 + $0x28] sm:$0xff]
    %v3448 = vld [vmem:[%s3441 + $0x30] sm:$0xff]
    %v3449 = vld [vmem:[%s3441 + $0x38] sm:$0xff]
    %s3450 = scalar_lea.vmem %s13, 128
    %v3451 = vld [vmem:[%s3450] sm:$0xff]
    %v3452 = vld [vmem:[%s3450 + $0x8] sm:$0xff]
    %v3453 = vld [vmem:[%s3450 + $0x10] sm:$0xff]
    %v3454 = vld [vmem:[%s3450 + $0x18] sm:$0xff]
    %v3455 = vld [vmem:[%s3450 + $0x20] sm:$0xff]
    %v3456 = vld [vmem:[%s3450 + $0x28] sm:$0xff]
    %v3457 = vld [vmem:[%s3450 + $0x30] sm:$0xff]
    %v3458 = vld [vmem:[%s3450 + $0x38] sm:$0xff]
    %s3459 = scalar_lea.vmem %s13, 192
    %v3460 = vld [vmem:[%s3459] sm:$0xff]
    %v3461 = vld [vmem:[%s3459 + $0x8] sm:$0xff]
    %v3462 = vld [vmem:[%s3459 + $0x10] sm:$0xff]
    %v3463 = vld [vmem:[%s3459 + $0x18] sm:$0xff]
    %v3464 = vld [vmem:[%s3459 + $0x20] sm:$0xff]
    %v3465 = vld [vmem:[%s3459 + $0x28] sm:$0xff]
    %v3466 = vld [vmem:[%s3459 + $0x30] sm:$0xff]
    %v3467 = vld [vmem:[%s3459 + $0x38] sm:$0xff]
    %v3468 = vld [vmem:[%s14] sm:$0x1]
    %s3469 = scalar_lea.vmem %s14, 1
    %v3470 = vld [vmem:[%s3469] sm:$0x1]
    %s3471 = scalar_lea.vmem %s14, 2
    %v3472 = vld [vmem:[%s3471] sm:$0x1]
    %s3473 = scalar_lea.vmem %s14, 3
    %v3474 = vld [vmem:[%s3473] sm:$0x1]
    %v3475 = vxor.u32 %v3431, 2147483648
    %v3476 = vmul.f32 %v3475, 1.442695
    %v3477 = vpow.pop %v3476
    %v3478 = vadd.f32 %v3477, 1.0
    %v3479 = vrcp.pop %v3478
    %v3480 = vmul.f32 1.0, %v3479
    %v3481 = vmul.f32 %v3480, 0.0
    %v3482 = vtanh.pop %v3432
    %v3483 = vmul.f32 %v3480, %v3482
    %3485 = vrot.lane.b32.xlu0 %v3483, 64
    %v3486 = vpop.permute.xlu0 %3485
    %v3488 = vadd.f32 %v3481, %v3486
    %v3489 = vxor.u32 %v3432, 2147483648
    %v3490 = vmul.f32 %v3489, 1.442695
    %v3491 = vpow.pop %v3490
    %v3492 = vadd.f32 %v3491, 1.0
    %v3493 = vrcp.pop %v3492
    %v3494 = vmul.f32 1.0, %v3493
    %v3495 = vtanh.pop %v3488
    %v3496 = vmul.f32 %v3494, %v3495
    %3498 = vrot.lane.b32.xlu0 %v3496, 64
    %v3499 = vpop.permute.xlu0 %3498
    %vm3501 = vcmask 519168
    %3502 = vst.msk [vmem:[#allocation2] sm:$0xf] %vm3501, %v3499
    %v3504 = vlaneseq
    %v3505 = vshrl.u32 %v3504, 7
    %v3506 = vsub.s32 0, %v3505
    %v3507 = vrot.slane %v3468, %v3506
    %vm3509 = vcmask 523264
    %v3510 = vsel %vm3509, %v3499, 0
    %3512 = vmatprep.subr.mxu0 0.0
    %3513 = vmatpush1.msra.mxu0 %v3433
    %3514 = vmatprep.subr.mxu0 0.0
    %3515 = vmatpush1.msra.mxu0 %v3434
    %3516 = vmatprep.subr.mxu0 0.0
    %3517 = vmatpush1.msra.mxu0 %v3435
    %3518 = vmatprep.subr.mxu0 0.0
    %3519 = vmatpush1.msra.mxu0 %v3436
    %3520 = vmatprep.subr.mxu0 0.0
    %3521 = vmatpush1.msra.mxu0 %v3437
    %3522 = vmatprep.subr.mxu0 0.0
    %3523 = vmatpush1.msra.mxu0 %v3438
    %3524 = vmatprep.subr.mxu0 0.0
    %3525 = vmatpush1.msra.mxu0 %v3439
    %3526 = vmatprep.subr.mxu0 0.0
    %3527 = vmatpush1.msra.mxu0 %v3440
    %3528 = vmatprep.subr.mxu0 0.0
    %3529 = vmatpush1.msra.mxu0 0.0
    %3530 = vmatprep.subr.mxu0 0.0
    %3531 = vmatpush1.msra.mxu0 0.0
    %3532 = vmatprep.subr.mxu0 0.0
    %3533 = vmatpush1.msra.mxu0 0.0
    %3534 = vmatprep.subr.mxu0 0.0
    %3535 = vmatpush1.msra.mxu0 0.0
    %3536 = vmatprep.subr.mxu0 0.0
    %3537 = vmatpush1.msra.mxu0 0.0
    %3538 = vmatprep.subr.mxu0 0.0
    %3539 = vmatpush1.msra.mxu0 0.0
    %3540 = vmatprep.subr.mxu0 0.0
    %3541 = vmatpush1.msra.mxu0 0.0
    %3542 = vmatprep.subr.mxu0 0.0
    %3543 = vmatpush1.msra.mxu0 0.0
    %3544 = vmatprep.subr.mxu0 0.0
    %3545 = vmatpush1.msra.mxu0 0.0
    %3546 = vmatprep.subr.mxu0 0.0
    %3547 = vmatpush1.msra.mxu0 0.0
    %3548 = vmatprep.subr.mxu0 0.0
    %3549 = vmatpush1.msra.mxu0 0.0
    %3550 = vmatprep.subr.mxu0 0.0
    %3551 = vmatpush1.msra.mxu0 0.0
    %3552 = vmatprep.subr.mxu0 0.0
    %3553 = vmatpush1.msra.mxu0 0.0
    %3554 = vmatprep.subr.mxu0 0.0
    %3555 = vmatpush1.msra.mxu0 0.0
    %3556 = vmatprep.subr.mxu0 0.0
    %3557 = vmatpush1.msra.mxu0 0.0
    %3558 = vmatprep.subr.mxu0 0.0
    %3559 = vmatpush1.msra.mxu0 0.0
    %3560 = vmatprep.subr.mxu0 0.0
    %3561 = vmatpush1.msra.mxu0 0.0
    %3562 = vmatprep.subr.mxu0 0.0
    %3563 = vmatpush1.msra.mxu0 0.0
    %3564 = vmatprep.subr.mxu0 0.0
    %3565 = vmatpush1.msra.mxu0 0.0
    %3566 = vmatprep.subr.mxu0 0.0
    %3567 = vmatpush1.msra.mxu0 0.0
    %3568 = vmatprep.subr.mxu0 0.0
    %3569 = vmatpush1.msra.mxu0 0.0
    %3570 = vmatprep.subr.mxu0 0.0
    %3571 = vmatpush1.msra.mxu0 0.0
    %3572 = vmatprep.subr.mxu0 0.0
    %3573 = vmatpush1.msra.mxu0 0.0
    %3574 = vmatprep.subr.mxu0 0.0
    %3575 = vmatpush1.msra.mxu0 0.0
    %3576 = vmatprep.mubr.f32.mxu0 0.0
    %3577 = vmatmul.mubr.f32.gmra.mrb[0].mxu0 %v3510
    %v3578 = vpop.f32.mrb[0].mxu0
    %v3579 = vadd.f32 %v3507, %v3578
    %v3580 = vpop.f32.mrb[0].mxu0
    %3581 = vdwg.mxu0
    %v3583 = vlaneseq
    %v3584 = vshrl.u32 %v3583, 7
    %v3585 = vsub.s32 0, %v3584
    %v3586 = vrot.slane %v3470, %v3585
    %3588 = vmatprep.subr.mxu0 0.0
    %3589 = vmatpush1.msra.mxu0 %v3442
    %3590 = vmatprep.subr.mxu0 0.0
    %3591 = vmatpush1.msra.mxu0 %v3443
    %3592 = vmatprep.subr.mxu0 0.0
    %3593 = vmatpush1.msra.mxu0 %v3444
    %3594 = vmatprep.subr.mxu0 0.0
    %3595 = vmatpush1.msra.mxu0 %v3445
    %3596 = vmatprep.subr.mxu0 0.0
    %3597 = vmatpush1.msra.mxu0 %v3446
    %3598 = vmatprep.subr.mxu0 0.0
    %3599 = vmatpush1.msra.mxu0 %v3447
    %3600 = vmatprep.subr.mxu0 0.0
    %3601 = vmatpush1.msra.mxu0 %v3448
    %3602 = vmatprep.subr.mxu0 0.0
    %3603 = vmatpush1.msra.mxu0 %v3449
    %3604 = vmatprep.subr.mxu0 0.0
    %3605 = vmatpush1.msra.mxu0 0.0
    %3606 = vmatprep.subr.mxu0 0.0
    %3607 = vmatpush1.msra.mxu0 0.0
    %3608 = vmatprep.subr.mxu0 0.0
    %3609 = vmatpush1.msra.mxu0 0.0
    %3610 = vmatprep.subr.mxu0 0.0
    %3611 = vmatpush1.msra.mxu0 0.0
    %3612 = vmatprep.subr.mxu0 0.0
    %3613 = vmatpush1.msra.mxu0 0.0
    %3614 = vmatprep.subr.mxu0 0.0
    %3615 = vmatpush1.msra.mxu0 0.0
    %3616 = vmatprep.subr.mxu0 0.0
    %3617 = vmatpush1.msra.mxu0 0.0
    %3618 = vmatprep.subr.mxu0 0.0
    %3619 = vmatpush1.msra.mxu0 0.0
    %3620 = vmatprep.subr.mxu0 0.0
    %3621 = vmatpush1.msra.mxu0 0.0
    %3622 = vmatprep.subr.mxu0 0.0
    %3623 = vmatpush1.msra.mxu0 0.0
    %3624 = vmatprep.subr.mxu0 0.0
    %3625 = vmatpush1.msra.mxu0 0.0
    %3626 = vmatprep.subr.mxu0 0.0
    %3627 = vmatpush1.msra.mxu0 0.0
    %3628 = vmatprep.subr.mxu0 0.0
    %3629 = vmatpush1.msra.mxu0 0.0
    %3630 = vmatprep.subr.mxu0 0.0
    %3631 = vmatpush1.msra.mxu0 0.0
    %3632 = vmatprep.subr.mxu0 0.0
    %3633 = vmatpush1.msra.mxu0 0.0
    %3634 = vmatprep.subr.mxu0 0.0
    %3635 = vmatpush1.msra.mxu0 0.0
    %3636 = vmatprep.subr.mxu0 0.0
    %3637 = vmatpush1.msra.mxu0 0.0
    %3638 = vmatprep.subr.mxu0 0.0
    %3639 = vmatpush1.msra.mxu0 0.0
    %3640 = vmatprep.subr.mxu0 0.0
    %3641 = vmatpush1.msra.mxu0 0.0
    %3642 = vmatprep.subr.mxu0 0.0
    %3643 = vmatpush1.msra.mxu0 0.0
    %3644 = vmatprep.subr.mxu0 0.0
    %3645 = vmatpush1.msra.mxu0 0.0
    %3646 = vmatprep.subr.mxu0 0.0
    %3647 = vmatpush1.msra.mxu0 0.0
    %3648 = vmatprep.subr.mxu0 0.0
    %3649 = vmatpush1.msra.mxu0 0.0
    %3650 = vmatprep.subr.mxu0 0.0
    %3651 = vmatpush1.msra.mxu0 0.0
    %3652 = vmatprep.mubr.f32.mxu0 0.0
    %3653 = vmatmul.mubr.f32.gmra.mrb[0].mxu0 %v3510
    %v3654 = vpop.f32.mrb[0].mxu0
    %v3655 = vadd.f32 %v3586, %v3654
    %v3656 = vpop.f32.mrb[0].mxu0
    %3657 = vdwg.mxu0
    %v3659 = vlaneseq
    %v3660 = vshrl.u32 %v3659, 7
    %v3661 = vsub.s32 0, %v3660
    %v3662 = vrot.slane %v3472, %v3661
    %3664 = vmatprep.subr.mxu0 0.0
    %3665 = vmatpush1.msra.mxu0 %v3451
    %3666 = vmatprep.subr.mxu0 0.0
    %3667 = vmatpush1.msra.mxu0 %v3452
    %3668 = vmatprep.subr.mxu0 0.0
    %3669 = vmatpush1.msra.mxu0 %v3453
    %3670 = vmatprep.subr.mxu0 0.0
    %3671 = vmatpush1.msra.mxu0 %v3454
    %3672 = vmatprep.subr.mxu0 0.0
    %3673 = vmatpush1.msra.mxu0 %v3455
    %3674 = vmatprep.subr.mxu0 0.0
    %3675 = vmatpush1.msra.mxu0 %v3456
    %3676 = vmatprep.subr.mxu0 0.0
    %3677 = vmatpush1.msra.mxu0 %v3457
    %3678 = vmatprep.subr.mxu0 0.0
    %3679 = vmatpush1.msra.mxu0 %v3458
    %3680 = vmatprep.subr.mxu0 0.0
    %3681 = vmatpush1.msra.mxu0 0.0
    %3682 = vmatprep.subr.mxu0 0.0
    %3683 = vmatpush1.msra.mxu0 0.0
    %3684 = vmatprep.subr.mxu0 0.0
    %3685 = vmatpush1.msra.mxu0 0.0
    %3686 = vmatprep.subr.mxu0 0.0
    %3687 = vmatpush1.msra.mxu0 0.0
    %3688 = vmatprep.subr.mxu0 0.0
    %3689 = vmatpush1.msra.mxu0 0.0
    %3690 = vmatprep.subr.mxu0 0.0
    %3691 = vmatpush1.msra.mxu0 0.0
    %3692 = vmatprep.subr.mxu0 0.0
    %3693 = vmatpush1.msra.mxu0 0.0
    %3694 = vmatprep.subr.mxu0 0.0
    %3695 = vmatpush1.msra.mxu0 0.0
    %3696 = vmatprep.subr.mxu0 0.0
    %3697 = vmatpush1.msra.mxu0 0.0
    %3698 = vmatprep.subr.mxu0 0.0
    %3699 = vmatpush1.msra.mxu0 0.0
    %3700 = vmatprep.subr.mxu0 0.0
    %3701 = vmatpush1.msra.mxu0 0.0
    %3702 = vmatprep.subr.mxu0 0.0
    %3703 = vmatpush1.msra.mxu0 0.0
    %3704 = vmatprep.subr.mxu0 0.0
    %3705 = vmatpush1.msra.mxu0 0.0
    %3706 = vmatprep.subr.mxu0 0.0
    %3707 = vmatpush1.msra.mxu0 0.0
    %3708 = vmatprep.subr.mxu0 0.0
    %3709 = vmatpush1.msra.mxu0 0.0
    %3710 = vmatprep.subr.mxu0 0.0
    %3711 = vmatpush1.msra.mxu0 0.0
    %3712 = vmatprep.subr.mxu0 0.0
    %3713 = vmatpush1.msra.mxu0 0.0
    %3714 = vmatprep.subr.mxu0 0.0
    %3715 = vmatpush1.msra.mxu0 0.0
    %3716 = vmatprep.subr.mxu0 0.0
    %3717 = vmatpush1.msra.mxu0 0.0
    %3718 = vmatprep.subr.mxu0 0.0
    %3719 = vmatpush1.msra.mxu0 0.0
    %3720 = vmatprep.subr.mxu0 0.0
    %3721 = vmatpush1.msra.mxu0 0.0
    %3722 = vmatprep.subr.mxu0 0.0
    %3723 = vmatpush1.msra.mxu0 0.0
    %3724 = vmatprep.subr.mxu0 0.0
    %3725 = vmatpush1.msra.mxu0 0.0
    %3726 = vmatprep.subr.mxu0 0.0
    %3727 = vmatpush1.msra.mxu0 0.0
    %3728 = vmatprep.mubr.f32.mxu0 0.0
    %3729 = vmatmul.mubr.f32.gmra.mrb[0].mxu0 %v3510
    %v3730 = vpop.f32.mrb[0].mxu0
    %v3731 = vadd.f32 %v3662, %v3730
    %v3732 = vpop.f32.mrb[0].mxu0
    %3733 = vdwg.mxu0
    %v3735 = vlaneseq
    %v3736 = vshrl.u32 %v3735, 7
    %v3737 = vsub.s32 0, %v3736
    %v3738 = vrot.slane %v3474, %v3737
    %3740 = vmatprep.subr.mxu0 0.0
    %3741 = vmatpush1.msra.mxu0 %v3460
    %3742 = vmatprep.subr.mxu0 0.0
    %3743 = vmatpush1.msra.mxu0 %v3461
    %3744 = vmatprep.subr.mxu0 0.0
    %3745 = vmatpush1.msra.mxu0 %v3462
    %3746 = vmatprep.subr.mxu0 0.0
    %3747 = vmatpush1.msra.mxu0 %v3463
    %3748 = vmatprep.subr.mxu0 0.0
    %3749 = vmatpush1.msra.mxu0 %v3464
    %3750 = vmatprep.subr.mxu0 0.0
    %3751 = vmatpush1.msra.mxu0 %v3465
    %3752 = vmatprep.subr.mxu0 0.0
    %3753 = vmatpush1.msra.mxu0 %v3466
    %3754 = vmatprep.subr.mxu0 0.0
    %3755 = vmatpush1.msra.mxu0 %v3467
    %3756 = vmatprep.subr.mxu0 0.0
    %3757 = vmatpush1.msra.mxu0 0.0
    %3758 = vmatprep.subr.mxu0 0.0
    %3759 = vmatpush1.msra.mxu0 0.0
    %3760 = vmatprep.subr.mxu0 0.0
    %3761 = vmatpush1.msra.mxu0 0.0
    %3762 = vmatprep.subr.mxu0 0.0
    %3763 = vmatpush1.msra.mxu0 0.0
    %3764 = vmatprep.subr.mxu0 0.0
    %3765 = vmatpush1.msra.mxu0 0.0
    %3766 = vmatprep.subr.mxu0 0.0
    %3767 = vmatpush1.msra.mxu0 0.0
    %3768 = vmatprep.subr.mxu0 0.0
    %3769 = vmatpush1.msra.mxu0 0.0
    %3770 = vmatprep.subr.mxu0 0.0
    %3771 = vmatpush1.msra.mxu0 0.0
    %3772 = vmatprep.subr.mxu0 0.0
    %3773 = vmatpush1.msra.mxu0 0.0
    %3774 = vmatprep.subr.mxu0 0.0
    %3775 = vmatpush1.msra.mxu0 0.0
    %3776 = vmatprep.subr.mxu0 0.0
    %3777 = vmatpush1.msra.mxu0 0.0
    %3778 = vmatprep.subr.mxu0 0.0
    %3779 = vmatpush1.msra.mxu0 0.0
    %3780 = vmatprep.subr.mxu0 0.0
    %3781 = vmatpush1.msra.mxu0 0.0
    %3782 = vmatprep.subr.mxu0 0.0
    %3783 = vmatpush1.msra.mxu0 0.0
    %3784 = vmatprep.subr.mxu0 0.0
    %3785 = vmatpush1.msra.mxu0 0.0
    %3786 = vmatprep.subr.mxu0 0.0
    %3787 = vmatpush1.msra.mxu0 0.0
    %3788 = vmatprep.subr.mxu0 0.0
    %3789 = vmatpush1.msra.mxu0 0.0
    %3790 = vmatprep.subr.mxu0 0.0
    %3791 = vmatpush1.msra.mxu0 0.0
    %3792 = vmatprep.subr.mxu0 0.0
    %3793 = vmatpush1.msra.mxu0 0.0
    %3794 = vmatprep.subr.mxu0 0.0
    %3795 = vmatpush1.msra.mxu0 0.0
    %3796 = vmatprep.subr.mxu0 0.0
    %3797 = vmatpush1.msra.mxu0 0.0
    %3798 = vmatprep.subr.mxu0 0.0
    %3799 = vmatpush1.msra.mxu0 0.0
    %3800 = vmatprep.subr.mxu0 0.0
    %3801 = vmatpush1.msra.mxu0 0.0
    %3802 = vmatprep.subr.mxu0 0.0
    %3803 = vmatpush1.msra.mxu0 0.0
    %3804 = vmatprep.mubr.f32.mxu0 0.0
    %3805 = vmatmul.mubr.f32.gmra.mrb[0].mxu0 %v3510
    %v3806 = vpop.f32.mrb[0].mxu0
    %v3807 = vadd.f32 %v3738, %v3806
    %v3808 = vpop.f32.mrb[0].mxu0
    %3809 = vdwg.mxu0
    %v3810 = vxor.u32 %v3655, 2147483648
    %v3811 = vmul.f32 %v3810, 1.442695
    %v3812 = vpow.pop %v3811
    %v3813 = vadd.f32 %v3812, 1.0
    %v3814 = vrcp.pop %v3813
    %v3815 = vmul.f32 1.0, %v3814
    %3817 = vrot.lane.b32.xlu0 %v3488, 64
    %v3818 = vpop.permute.xlu0 %3817
    %v3820 = vmul.f32 %v3815, %v3818
    %v3821 = vxor.u32 %v3579, 2147483648
    %v3822 = vmul.f32 %v3821, 1.442695
    %v3823 = vpow.pop %v3822
    %v3824 = vadd.f32 %v3823, 1.0
    %v3825 = vrcp.pop %v3824
    %v3826 = vmul.f32 1.0, %v3825
    %v3827 = vtanh.pop %v3731
    %v3828 = vmul.f32 %v3826, %v3827
    %v3829 = vadd.f32 %v3820, %v3828
    %v3830 = vxor.u32 %v3807, 2147483648
    %v3831 = vmul.f32 %v3830, 1.442695
    %v3832 = vpow.pop %v3831
    %v3833 = vadd.f32 %v3832, 1.0
    %v3834 = vrcp.pop %v3833
    %v3835 = vmul.f32 1.0, %v3834
    %v3836 = vtanh.pop %v3829
    %v3837 = vmul.f32 %v3835, %v3836
    %3838 = vst.msk [vmem:[#allocation2 + $0x4] sm:$0xf] %vm3501, %v3837
    %v3840 = vsel %vm3509, %v3837, 0
    %3842 = vmatprep.subr.mxu0 0.0
    %3843 = vmatpush1.msra.mxu0 %v3433
    %3844 = vmatprep.subr.mxu0 0.0
    %3845 = vmatpush1.msra.mxu0 %v3434
    %3846 = vmatprep.subr.mxu0 0.0
    %3847 = vmatpush1.msra.mxu0 %v3435
    %3848 = vmatprep.subr.mxu0 0.0
    %3849 = vmatpush1.msra.mxu0 %v3436
    %3850 = vmatprep.subr.mxu0 0.0
    %3851 = vmatpush1.msra.mxu0 %v3437
    %3852 = vmatprep.subr.mxu0 0.0
    %3853 = vmatpush1.msra.mxu0 %v3438
    %3854 = vmatprep.subr.mxu0 0.0
    %3855 = vmatpush1.msra.mxu0 %v3439
    %3856 = vmatprep.subr.mxu0 0.0
    %3857 = vmatpush1.msra.mxu0 %v3440
    %3858 = vmatprep.subr.mxu0 0.0
    %3859 = vmatpush1.msra.mxu0 0.0
    %3860 = vmatprep.subr.mxu0 0.0
    %3861 = vmatpush1.msra.mxu0 0.0
    %3862 = vmatprep.subr.mxu0 0.0
    %3863 = vmatpush1.msra.mxu0 0.0
    %3864 = vmatprep.subr.mxu0 0.0
    %3865 = vmatpush1.msra.mxu0 0.0
    %3866 = vmatprep.subr.mxu0 0.0
    %3867 = vmatpush1.msra.mxu0 0.0
    %3868 = vmatprep.subr.mxu0 0.0
    %3869 = vmatpush1.msra.mxu0 0.0
    %3870 = vmatprep.subr.mxu0 0.0
    %3871 = vmatpush1.msra.mxu0 0.0
    %3872 = vmatprep.subr.mxu0 0.0
    %3873 = vmatpush1.msra.mxu0 0.0
    %3874 = vmatprep.subr.mxu0 0.0
    %3875 = vmatpush1.msra.mxu0 0.0
    %3876 = vmatprep.subr.mxu0 0.0
    %3877 = vmatpush1.msra.mxu0 0.0
    %3878 = vmatprep.subr.mxu0 0.0
    %3879 = vmatpush1.msra.mxu0 0.0
    %3880 = vmatprep.subr.mxu0 0.0
    %3881 = vmatpush1.msra.mxu0 0.0
    %3882 = vmatprep.subr.mxu0 0.0
    %3883 = vmatpush1.msra.mxu0 0.0
    %3884 = vmatprep.subr.mxu0 0.0
    %3885 = vmatpush1.msra.mxu0 0.0
    %3886 = vmatprep.subr.mxu0 0.0
    %3887 = vmatpush1.msra.mxu0 0.0
    %3888 = vmatprep.subr.mxu0 0.0
    %3889 = vmatpush1.msra.mxu0 0.0
    %3890 = vmatprep.subr.mxu0 0.0
    %3891 = vmatpush1.msra.mxu0 0.0
    %3892 = vmatprep.subr.mxu0 0.0
    %3893 = vmatpush1.msra.mxu0 0.0
    %3894 = vmatprep.subr.mxu0 0.0
    %3895 = vmatpush1.msra.mxu0 0.0
    %3896 = vmatprep.subr.mxu0 0.0
    %3897 = vmatpush1.msra.mxu0 0.0
    %3898 = vmatprep.subr.mxu0 0.0
    %3899 = vmatpush1.msra.mxu0 0.0
    %3900 = vmatprep.subr.mxu0 0.0
    %3901 = vmatpush1.msra.mxu0 0.0
    %3902 = vmatprep.subr.mxu0 0.0
    %3903 = vmatpush1.msra.mxu0 0.0
    %3904 = vmatprep.subr.mxu0 0.0
    %3905 = vmatpush1.msra.mxu0 0.0
    %3906 = vmatprep.mubr.f32.mxu0 0.0
    %3907 = vmatmul.mubr.f32.gmra.mrb[0].mxu0 %v3840
    %v3908 = vpop.f32.mrb[0].mxu0
    %v3909 = vadd.f32 %v3507, %v3908
    %v3910 = vpop.f32.mrb[0].mxu0
    %3911 = vdwg.mxu0
    %3912 = vmatprep.subr.mxu0 0.0
    %3913 = vmatpush1.msra.mxu0 %v3442
    %3914 = vmatprep.subr.mxu0 0.0
    %3915 = vmatpush1.msra.mxu0 %v3443
    %3916 = vmatprep.subr.mxu0 0.0
    %3917 = vmatpush1.msra.mxu0 %v3444
    %3918 = vmatprep.subr.mxu0 0.0
    %3919 = vmatpush1.msra.mxu0 %v3445
    %3920 = vmatprep.subr.mxu0 0.0
    %3921 = vmatpush1.msra.mxu0 %v3446
    %3922 = vmatprep.subr.mxu0 0.0
    %3923 = vmatpush1.msra.mxu0 %v3447
    %3924 = vmatprep.subr.mxu0 0.0
    %3925 = vmatpush1.msra.mxu0 %v3448
    %3926 = vmatprep.subr.mxu0 0.0
    %3927 = vmatpush1.msra.mxu0 %v3449
    %3928 = vmatprep.subr.mxu0 0.0
    %3929 = vmatpush1.msra.mxu0 0.0
    %3930 = vmatprep.subr.mxu0 0.0
    %3931 = vmatpush1.msra.mxu0 0.0
    %3932 = vmatprep.subr.mxu0 0.0
    %3933 = vmatpush1.msra.mxu0 0.0
    %3934 = vmatprep.subr.mxu0 0.0
    %3935 = vmatpush1.msra.mxu0 0.0
    %3936 = vmatprep.subr.mxu0 0.0
    %3937 = vmatpush1.msra.mxu0 0.0
    %3938 = vmatprep.subr.mxu0 0.0
    %3939 = vmatpush1.msra.mxu0 0.0
    %3940 = vmatprep.subr.mxu0 0.0
    %3941 = vmatpush1.msra.mxu0 0.0
    %3942 = vmatprep.subr.mxu0 0.0
    %3943 = vmatpush1.msra.mxu0 0.0
    %3944 = vmatprep.subr.mxu0 0.0
    %3945 = vmatpush1.msra.mxu0 0.0
    %3946 = vmatprep.subr.mxu0 0.0
    %3947 = vmatpush1.msra.mxu0 0.0
    %3948 = vmatprep.subr.mxu0 0.0
    %3949 = vmatpush1.msra.mxu0 0.0
    %3950 = vmatprep.subr.mxu0 0.0
    %3951 = vmatpush1.msra.mxu0 0.0
    %3952 = vmatprep.subr.mxu0 0.0
    %3953 = vmatpush1.msra.mxu0 0.0
    %3954 = vmatprep.subr.mxu0 0.0
    %3955 = vmatpush1.msra.mxu0 0.0
    %3956 = vmatprep.subr.mxu0 0.0
    %3957 = vmatpush1.msra.mxu0 0.0
    %3958 = vmatprep.subr.mxu0 0.0
    %3959 = vmatpush1.msra.mxu0 0.0
    %3960 = vmatprep.subr.mxu0 0.0
    %3961 = vmatpush1.msra.mxu0 0.0
    %3962 = vmatprep.subr.mxu0 0.0
    %3963 = vmatpush1.msra.mxu0 0.0
    %3964 = vmatprep.subr.mxu0 0.0
    %3965 = vmatpush1.msra.mxu0 0.0
    %3966 = vmatprep.subr.mxu0 0.0
    %3967 = vmatpush1.msra.mxu0 0.0
    %3968 = vmatprep.subr.mxu0 0.0
    %3969 = vmatpush1.msra.mxu0 0.0
    %3970 = vmatprep.subr.mxu0 0.0
    %3971 = vmatpush1.msra.mxu0 0.0
    %3972 = vmatprep.subr.mxu0 0.0
    %3973 = vmatpush1.msra.mxu0 0.0
    %3974 = vmatprep.subr.mxu0 0.0
    %3975 = vmatpush1.msra.mxu0 0.0
    %3976 = vmatprep.mubr.f32.mxu0 0.0
    %3977 = vmatmul.mubr.f32.gmra.mrb[0].mxu0 %v3840
    %v3978 = vpop.f32.mrb[0].mxu0
    %v3979 = vadd.f32 %v3586, %v3978
    %v3980 = vpop.f32.mrb[0].mxu0
    %3981 = vdwg.mxu0
    %3982 = vmatprep.subr.mxu0 0.0
    %3983 = vmatpush1.msra.mxu0 %v3451
    %3984 = vmatprep.subr.mxu0 0.0
    %3985 = vmatpush1.msra.mxu0 %v3452
    %3986 = vmatprep.subr.mxu0 0.0
    %3987 = vmatpush1.msra.mxu0 %v3453
    %3988 = vmatprep.subr.mxu0 0.0
    %3989 = vmatpush1.msra.mxu0 %v3454
    %3990 = vmatprep.subr.mxu0 0.0
    %3991 = vmatpush1.msra.mxu0 %v3455
    %3992 = vmatprep.subr.mxu0 0.0
    %3993 = vmatpush1.msra.mxu0 %v3456
    %3994 = vmatprep.subr.mxu0 0.0
    %3995 = vmatpush1.msra.mxu0 %v3457
    %3996 = vmatprep.subr.mxu0 0.0
    %3997 = vmatpush1.msra.mxu0 %v3458
    %3998 = vmatprep.subr.mxu0 0.0
    %3999 = vmatpush1.msra.mxu0 0.0
    %4000 = vmatprep.subr.mxu0 0.0
    %4001 = vmatpush1.msra.mxu0 0.0
    %4002 = vmatprep.subr.mxu0 0.0
    %4003 = vmatpush1.msra.mxu0 0.0
    %4004 = vmatprep.subr.mxu0 0.0
    %4005 = vmatpush1.msra.mxu0 0.0
    %4006 = vmatprep.subr.mxu0 0.0
    %4007 = vmatpush1.msra.mxu0 0.0
    %4008 = vmatprep.subr.mxu0 0.0
    %4009 = vmatpush1.msra.mxu0 0.0
    %4010 = vmatprep.subr.mxu0 0.0
    %4011 = vmatpush1.msra.mxu0 0.0
    %4012 = vmatprep.subr.mxu0 0.0
    %4013 = vmatpush1.msra.mxu0 0.0
    %4014 = vmatprep.subr.mxu0 0.0
    %4015 = vmatpush1.msra.mxu0 0.0
    %4016 = vmatprep.subr.mxu0 0.0
    %4017 = vmatpush1.msra.mxu0 0.0
    %4018 = vmatprep.subr.mxu0 0.0
    %4019 = vmatpush1.msra.mxu0 0.0
    %4020 = vmatprep.subr.mxu0 0.0
    %4021 = vmatpush1.msra.mxu0 0.0
    %4022 = vmatprep.subr.mxu0 0.0
    %4023 = vmatpush1.msra.mxu0 0.0
    %4024 = vmatprep.subr.mxu0 0.0
    %4025 = vmatpush1.msra.mxu0 0.0
    %4026 = vmatprep.subr.mxu0 0.0
    %4027 = vmatpush1.msra.mxu0 0.0
    %4028 = vmatprep.subr.mxu0 0.0
    %4029 = vmatpush1.msra.mxu0 0.0
    %4030 = vmatprep.subr.mxu0 0.0
    %4031 = vmatpush1.msra.mxu0 0.0
    %4032 = vmatprep.subr.mxu0 0.0
    %4033 = vmatpush1.msra.mxu0 0.0
    %4034 = vmatprep.subr.mxu0 0.0
    %4035 = vmatpush1.msra.mxu0 0.0
    %4036 = vmatprep.subr.mxu0 0.0
    %4037 = vmatpush1.msra.mxu0 0.0
    %4038 = vmatprep.subr.mxu0 0.0
    %4039 = vmatpush1.msra.mxu0 0.0
    %4040 = vmatprep.subr.mxu0 0.0
    %4041 = vmatpush1.msra.mxu0 0.0
    %4042 = vmatprep.subr.mxu0 0.0
    %4043 = vmatpush1.msra.mxu0 0.0
    %4044 = vmatprep.subr.mxu0 0.0
    %4045 = vmatpush1.msra.mxu0 0.0
    %4046 = vmatprep.mubr.f32.mxu0 0.0
    %4047 = vmatmul.mubr.f32.gmra.mrb[0].mxu0 %v3840
    %v4048 = vpop.f32.mrb[0].mxu0
    %v4049 = vadd.f32 %v3662, %v4048
    %v4050 = vpop.f32.mrb[0].mxu0
    %4051 = vdwg.mxu0
    %4052 = vmatprep.subr.mxu0 0.0
    %4053 = vmatpush1.msra.mxu0 %v3460
    %4054 = vmatprep.subr.mxu0 0.0
    %4055 = vmatpush1.msra.mxu0 %v3461
    %4056 = vmatprep.subr.mxu0 0.0
    %4057 = vmatpush1.msra.mxu0 %v3462
    %4058 = vmatprep.subr.mxu0 0.0
    %4059 = vmatpush1.msra.mxu0 %v3463
    %4060 = vmatprep.subr.mxu0 0.0
    %4061 = vmatpush1.msra.mxu0 %v3464
    %4062 = vmatprep.subr.mxu0 0.0
    %4063 = vmatpush1.msra.mxu0 %v3465
    %4064 = vmatprep.subr.mxu0 0.0
    %4065 = vmatpush1.msra.mxu0 %v3466
    %4066 = vmatprep.subr.mxu0 0.0
    %4067 = vmatpush1.msra.mxu0 %v3467
    %4068 = vmatprep.subr.mxu0 0.0
    %4069 = vmatpush1.msra.mxu0 0.0
    %4070 = vmatprep.subr.mxu0 0.0
    %4071 = vmatpush1.msra.mxu0 0.0
    %4072 = vmatprep.subr.mxu0 0.0
    %4073 = vmatpush1.msra.mxu0 0.0
    %4074 = vmatprep.subr.mxu0 0.0
    %4075 = vmatpush1.msra.mxu0 0.0
    %4076 = vmatprep.subr.mxu0 0.0
    %4077 = vmatpush1.msra.mxu0 0.0
    %4078 = vmatprep.subr.mxu0 0.0
    %4079 = vmatpush1.msra.mxu0 0.0
    %4080 = vmatprep.subr.mxu0 0.0
    %4081 = vmatpush1.msra.mxu0 0.0
    %4082 = vmatprep.subr.mxu0 0.0
    %4083 = vmatpush1.msra.mxu0 0.0
    %4084 = vmatprep.subr.mxu0 0.0
    %4085 = vmatpush1.msra.mxu0 0.0
    %4086 = vmatprep.subr.mxu0 0.0
    %4087 = vmatpush1.msra.mxu0 0.0
    %4088 = vmatprep.subr.mxu0 0.0
    %4089 = vmatpush1.msra.mxu0 0.0
    %4090 = vmatprep.subr.mxu0 0.0
    %4091 = vmatpush1.msra.mxu0 0.0
    %4092 = vmatprep.subr.mxu0 0.0
    %4093 = vmatpush1.msra.mxu0 0.0
    %4094 = vmatprep.subr.mxu0 0.0
    %4095 = vmatpush1.msra.mxu0 0.0
    %4096 = vmatprep.subr.mxu0 0.0
    %4097 = vmatpush1.msra.mxu0 0.0
    %4098 = vmatprep.subr.mxu0 0.0
    %4099 = vmatpush1.msra.mxu0 0.0
    %4100 = vmatprep.subr.mxu0 0.0
    %4101 = vmatpush1.msra.mxu0 0.0
    %4102 = vmatprep.subr.mxu0 0.0
    %4103 = vmatpush1.msra.mxu0 0.0
    %4104 = vmatprep.subr.mxu0 0.0
    %4105 = vmatpush1.msra.mxu0 0.0
    %4106 = vmatprep.subr.mxu0 0.0
    %4107 = vmatpush1.msra.mxu0 0.0
    %4108 = vmatprep.subr.mxu0 0.0
    %4109 = vmatpush1.msra.mxu0 0.0
    %4110 = vmatprep.subr.mxu0 0.0
    %4111 = vmatpush1.msra.mxu0 0.0
    %4112 = vmatprep.subr.mxu0 0.0
    %4113 = vmatpush1.msra.mxu0 0.0
    %4114 = vmatprep.subr.mxu0 0.0
    %4115 = vmatpush1.msra.mxu0 0.0
    %4116 = vmatprep.mubr.f32.mxu0 0.0
    %4117 = vmatmul.mubr.f32.gmra.mrb[0].mxu0 %v3840
    %v4118 = vpop.f32.mrb[0].mxu0
    %v4119 = vadd.f32 %v3738, %v4118
    %v4120 = vpop.f32.mrb[0].mxu0
    %4121 = vdwg.mxu0
    %v4122 = vxor.u32 %v3979, 2147483648
    %v4123 = vmul.f32 %v4122, 1.442695
    %v4124 = vpow.pop %v4123
    %v4125 = vadd.f32 %v4124, 1.0
    %v4126 = vrcp.pop %v4125
    %v4127 = vmul.f32 1.0, %v4126
    %v4128 = vmul.f32 %v4127, %v3829
    %v4129 = vxor.u32 %v3909, 2147483648
    %v4130 = vmul.f32 %v4129, 1.442695
    %v4131 = vpow.pop %v4130
    %v4132 = vadd.f32 %v4131, 1.0
    %v4133 = vrcp.pop %v4132
    %v4134 = vmul.f32 1.0, %v4133
    %v4135 = vtanh.pop %v4049
    %v4136 = vmul.f32 %v4134, %v4135
    %v4137 = vadd.f32 %v4128, %v4136
    %v4138 = vxor.u32 %v4119, 2147483648
    %v4139 = vmul.f32 %v4138, 1.442695
    %v4140 = vpow.pop %v4139
    %v4141 = vadd.f32 %v4140, 1.0
    %v4142 = vrcp.pop %v4141
    %v4143 = vmul.f32 1.0, %v4142
    %v4144 = vtanh.pop %v4137
    %v4145 = vmul.f32 %v4143, %v4144
    %4146 = vst.msk [vmem:[#allocation2 + $0x8] sm:$0xf] %vm3501, %v4145
    %v4148 = vsel %vm3509, %v4145, 0
    %4150 = vmatprep.subr.mxu0 0.0
    %4151 = vmatpush1.msra.mxu0 %v3433
    %4152 = vmatprep.subr.mxu0 0.0
    %4153 = vmatpush1.msra.mxu0 %v3434
    %4154 = vmatprep.subr.mxu0 0.0
    %4155 = vmatpush1.msra.mxu0 %v3435
    %4156 = vmatprep.subr.mxu0 0.0
    %4157 = vmatpush1.msra.mxu0 %v3436
    %4158 = vmatprep.subr.mxu0 0.0
    %4159 = vmatpush1.msra.mxu0 %v3437
    %4160 = vmatprep.subr.mxu0 0.0
    %4161 = vmatpush1.msra.mxu0 %v3438
    %4162 = vmatprep.subr.mxu0 0.0
    %4163 = vmatpush1.msra.mxu0 %v3439
    %4164 = vmatprep.subr.mxu0 0.0
    %4165 = vmatpush1.msra.mxu0 %v3440
    %4166 = vmatprep.subr.mxu0 0.0
    %4167 = vmatpush1.msra.mxu0 0.0
    %4168 = vmatprep.subr.mxu0 0.0
    %4169 = vmatpush1.msra.mxu0 0.0
    %4170 = vmatprep.subr.mxu0 0.0
    %4171 = vmatpush1.msra.mxu0 0.0
    %4172 = vmatprep.subr.mxu0 0.0
    %4173 = vmatpush1.msra.mxu0 0.0
    %4174 = vmatprep.subr.mxu0 0.0
    %4175 = vmatpush1.msra.mxu0 0.0
    %4176 = vmatprep.subr.mxu0 0.0
    %4177 = vmatpush1.msra.mxu0 0.0
    %4178 = vmatprep.subr.mxu0 0.0
    %4179 = vmatpush1.msra.mxu0 0.0
    %4180 = vmatprep.subr.mxu0 0.0
    %4181 = vmatpush1.msra.mxu0 0.0
    %4182 = vmatprep.subr.mxu0 0.0
    %4183 = vmatpush1.msra.mxu0 0.0
    %4184 = vmatprep.subr.mxu0 0.0
    %4185 = vmatpush1.msra.mxu0 0.0
    %4186 = vmatprep.subr.mxu0 0.0
    %4187 = vmatpush1.msra.mxu0 0.0
    %4188 = vmatprep.subr.mxu0 0.0
    %4189 = vmatpush1.msra.mxu0 0.0
    %4190 = vmatprep.subr.mxu0 0.0
    %4191 = vmatpush1.msra.mxu0 0.0
    %4192 = vmatprep.subr.mxu0 0.0
    %4193 = vmatpush1.msra.mxu0 0.0
    %4194 = vmatprep.subr.mxu0 0.0
    %4195 = vmatpush1.msra.mxu0 0.0
    %4196 = vmatprep.subr.mxu0 0.0
    %4197 = vmatpush1.msra.mxu0 0.0
    %4198 = vmatprep.subr.mxu0 0.0
    %4199 = vmatpush1.msra.mxu0 0.0
    %4200 = vmatprep.subr.mxu0 0.0
    %4201 = vmatpush1.msra.mxu0 0.0
    %4202 = vmatprep.subr.mxu0 0.0
    %4203 = vmatpush1.msra.mxu0 0.0
    %4204 = vmatprep.subr.mxu0 0.0
    %4205 = vmatpush1.msra.mxu0 0.0
    %4206 = vmatprep.subr.mxu0 0.0
    %4207 = vmatpush1.msra.mxu0 0.0
    %4208 = vmatprep.subr.mxu0 0.0
    %4209 = vmatpush1.msra.mxu0 0.0
    %4210 = vmatprep.subr.mxu0 0.0
    %4211 = vmatpush1.msra.mxu0 0.0
    %4212 = vmatprep.subr.mxu0 0.0
    %4213 = vmatpush1.msra.mxu0 0.0
    %4214 = vmatprep.mubr.f32.mxu0 0.0
    %4215 = vmatmul.mubr.f32.gmra.mrb[0].mxu0 %v4148
    %v4216 = vpop.f32.mrb[0].mxu0
    %v4217 = vadd.f32 %v3507, %v4216
    %v4218 = vpop.f32.mrb[0].mxu0
    %4219 = vdwg.mxu0
    %4220 = vmatprep.subr.mxu0 0.0
    %4221 = vmatpush1.msra.mxu0 %v3442
    %4222 = vmatprep.subr.mxu0 0.0
    %4223 = vmatpush1.msra.mxu0 %v3443
    %4224 = vmatprep.subr.mxu0 0.0
    %4225 = vmatpush1.msra.mxu0 %v3444
    %4226 = vmatprep.subr.mxu0 0.0
    %4227 = vmatpush1.msra.mxu0 %v3445
    %4228 = vmatprep.subr.mxu0 0.0
    %4229 = vmatpush1.msra.mxu0 %v3446
    %4230 = vmatprep.subr.mxu0 0.0
    %4231 = vmatpush1.msra.mxu0 %v3447
    %4232 = vmatprep.subr.mxu0 0.0
    %4233 = vmatpush1.msra.mxu0 %v3448
    %4234 = vmatprep.subr.mxu0 0.0
    %4235 = vmatpush1.msra.mxu0 %v3449
    %4236 = vmatprep.subr.mxu0 0.0
    %4237 = vmatpush1.msra.mxu0 0.0
    %4238 = vmatprep.subr.mxu0 0.0
    %4239 = vmatpush1.msra.mxu0 0.0
    %4240 = vmatprep.subr.mxu0 0.0
    %4241 = vmatpush1.msra.mxu0 0.0
    %4242 = vmatprep.subr.mxu0 0.0
    %4243 = vmatpush1.msra.mxu0 0.0
    %4244 = vmatprep.subr.mxu0 0.0
    %4245 = vmatpush1.msra.mxu0 0.0
    %4246 = vmatprep.subr.mxu0 0.0
    %4247 = vmatpush1.msra.mxu0 0.0
    %4248 = vmatprep.subr.mxu0 0.0
    %4249 = vmatpush1.msra.mxu0 0.0
    %4250 = vmatprep.subr.mxu0 0.0
    %4251 = vmatpush1.msra.mxu0 0.0
    %4252 = vmatprep.subr.mxu0 0.0
    %4253 = vmatpush1.msra.mxu0 0.0
    %4254 = vmatprep.subr.mxu0 0.0
    %4255 = vmatpush1.msra.mxu0 0.0
    %4256 = vmatprep.subr.mxu0 0.0
    %4257 = vmatpush1.msra.mxu0 0.0
    %4258 = vmatprep.subr.mxu0 0.0
    %4259 = vmatpush1.msra.mxu0 0.0
    %4260 = vmatprep.subr.mxu0 0.0
    %4261 = vmatpush1.msra.mxu0 0.0
    %4262 = vmatprep.subr.mxu0 0.0
    %4263 = vmatpush1.msra.mxu0 0.0
    %4264 = vmatprep.subr.mxu0 0.0
    %4265 = vmatpush1.msra.mxu0 0.0
    %4266 = vmatprep.subr.mxu0 0.0
    %4267 = vmatpush1.msra.mxu0 0.0
    %4268 = vmatprep.subr.mxu0 0.0
    %4269 = vmatpush1.msra.mxu0 0.0
    %4270 = vmatprep.subr.mxu0 0.0
    %4271 = vmatpush1.msra.mxu0 0.0
    %4272 = vmatprep.subr.mxu0 0.0
    %4273 = vmatpush1.msra.mxu0 0.0
    %4274 = vmatprep.subr.mxu0 0.0
    %4275 = vmatpush1.msra.mxu0 0.0
    %4276 = vmatprep.subr.mxu0 0.0
    %4277 = vmatpush1.msra.mxu0 0.0
    %4278 = vmatprep.subr.mxu0 0.0
    %4279 = vmatpush1.msra.mxu0 0.0
    %4280 = vmatprep.subr.mxu0 0.0
    %4281 = vmatpush1.msra.mxu0 0.0
    %4282 = vmatprep.subr.mxu0 0.0
    %4283 = vmatpush1.msra.mxu0 0.0
    %4284 = vmatprep.mubr.f32.mxu0 0.0
    %4285 = vmatmul.mubr.f32.gmra.mrb[0].mxu0 %v4148
    %v4286 = vpop.f32.mrb[0].mxu0
    %v4287 = vadd.f32 %v3586, %v4286
    %v4288 = vpop.f32.mrb[0].mxu0
    %4289 = vdwg.mxu0
    %4290 = vmatprep.subr.mxu0 0.0
    %4291 = vmatpush1.msra.mxu0 %v3451
    %4292 = vmatprep.subr.mxu0 0.0
    %4293 = vmatpush1.msra.mxu0 %v3452
    %4294 = vmatprep.subr.mxu0 0.0
    %4295 = vmatpush1.msra.mxu0 %v3453
    %4296 = vmatprep.subr.mxu0 0.0
    %4297 = vmatpush1.msra.mxu0 %v3454
    %4298 = vmatprep.subr.mxu0 0.0
    %4299 = vmatpush1.msra.mxu0 %v3455
    %4300 = vmatprep.subr.mxu0 0.0
    %4301 = vmatpush1.msra.mxu0 %v3456
    %4302 = vmatprep.subr.mxu0 0.0
    %4303 = vmatpush1.msra.mxu0 %v3457
    %4304 = vmatprep.subr.mxu0 0.0
    %4305 = vmatpush1.msra.mxu0 %v3458
    %4306 = vmatprep.subr.mxu0 0.0
    %4307 = vmatpush1.msra.mxu0 0.0
    %4308 = vmatprep.subr.mxu0 0.0
    %4309 = vmatpush1.msra.mxu0 0.0
    %4310 = vmatprep.subr.mxu0 0.0
    %4311 = vmatpush1.msra.mxu0 0.0
    %4312 = vmatprep.subr.mxu0 0.0
    %4313 = vmatpush1.msra.mxu0 0.0
    %4314 = vmatprep.subr.mxu0 0.0
    %4315 = vmatpush1.msra.mxu0 0.0
    %4316 = vmatprep.subr.mxu0 0.0
    %4317 = vmatpush1.msra.mxu0 0.0
    %4318 = vmatprep.subr.mxu0 0.0
    %4319 = vmatpush1.msra.mxu0 0.0
    %4320 = vmatprep.subr.mxu0 0.0
    %4321 = vmatpush1.msra.mxu0 0.0
    %4322 = vmatprep.subr.mxu0 0.0
    %4323 = vmatpush1.msra.mxu0 0.0
    %4324 = vmatprep.subr.mxu0 0.0
    %4325 = vmatpush1.msra.mxu0 0.0
    %4326 = vmatprep.subr.mxu0 0.0
    %4327 = vmatpush1.msra.mxu0 0.0
    %4328 = vmatprep.subr.mxu0 0.0
    %4329 = vmatpush1.msra.mxu0 0.0
    %4330 = vmatprep.subr.mxu0 0.0
    %4331 = vmatpush1.msra.mxu0 0.0
    %4332 = vmatprep.subr.mxu0 0.0
    %4333 = vmatpush1.msra.mxu0 0.0
    %4334 = vmatprep.subr.mxu0 0.0
    %4335 = vmatpush1.msra.mxu0 0.0
    %4336 = vmatprep.subr.mxu0 0.0
    %4337 = vmatpush1.msra.mxu0 0.0
    %4338 = vmatprep.subr.mxu0 0.0
    %4339 = vmatpush1.msra.mxu0 0.0
    %4340 = vmatprep.subr.mxu0 0.0
    %4341 = vmatpush1.msra.mxu0 0.0
    %4342 = vmatprep.subr.mxu0 0.0
    %4343 = vmatpush1.msra.mxu0 0.0
    %4344 = vmatprep.subr.mxu0 0.0
    %4345 = vmatpush1.msra.mxu0 0.0
    %4346 = vmatprep.subr.mxu0 0.0
    %4347 = vmatpush1.msra.mxu0 0.0
    %4348 = vmatprep.subr.mxu0 0.0
    %4349 = vmatpush1.msra.mxu0 0.0
    %4350 = vmatprep.subr.mxu0 0.0
    %4351 = vmatpush1.msra.mxu0 0.0
    %4352 = vmatprep.subr.mxu0 0.0
    %4353 = vmatpush1.msra.mxu0 0.0
    %4354 = vmatprep.mubr.f32.mxu0 0.0
    %4355 = vmatmul.mubr.f32.gmra.mrb[0].mxu0 %v4148
    %v4356 = vpop.f32.mrb[0].mxu0
    %v4357 = vadd.f32 %v3662, %v4356
    %v4358 = vpop.f32.mrb[0].mxu0
    %4359 = vdwg.mxu0
    %4360 = vmatprep.subr.mxu0 0.0
    %4361 = vmatpush1.msra.mxu0 %v3460
    %4362 = vmatprep.subr.mxu0 0.0
    %4363 = vmatpush1.msra.mxu0 %v3461
    %4364 = vmatprep.subr.mxu0 0.0
    %4365 = vmatpush1.msra.mxu0 %v3462
    %4366 = vmatprep.subr.mxu0 0.0
    %4367 = vmatpush1.msra.mxu0 %v3463
    %4368 = vmatprep.subr.mxu0 0.0
    %4369 = vmatpush1.msra.mxu0 %v3464
    %4370 = vmatprep.subr.mxu0 0.0
    %4371 = vmatpush1.msra.mxu0 %v3465
    %4372 = vmatprep.subr.mxu0 0.0
    %4373 = vmatpush1.msra.mxu0 %v3466
    %4374 = vmatprep.subr.mxu0 0.0
    %4375 = vmatpush1.msra.mxu0 %v3467
    %4376 = vmatprep.subr.mxu0 0.0
    %4377 = vmatpush1.msra.mxu0 0.0
    %4378 = vmatprep.subr.mxu0 0.0
    %4379 = vmatpush1.msra.mxu0 0.0
    %4380 = vmatprep.subr.mxu0 0.0
    %4381 = vmatpush1.msra.mxu0 0.0
    %4382 = vmatprep.subr.mxu0 0.0
    %4383 = vmatpush1.msra.mxu0 0.0
    %4384 = vmatprep.subr.mxu0 0.0
    %4385 = vmatpush1.msra.mxu0 0.0
    %4386 = vmatprep.subr.mxu0 0.0
    %4387 = vmatpush1.msra.mxu0 0.0
    %4388 = vmatprep.subr.mxu0 0.0
    %4389 = vmatpush1.msra.mxu0 0.0
    %4390 = vmatprep.subr.mxu0 0.0
    %4391 = vmatpush1.msra.mxu0 0.0
    %4392 = vmatprep.subr.mxu0 0.0
    %4393 = vmatpush1.msra.mxu0 0.0
    %4394 = vmatprep.subr.mxu0 0.0
    %4395 = vmatpush1.msra.mxu0 0.0
    %4396 = vmatprep.subr.mxu0 0.0
    %4397 = vmatpush1.msra.mxu0 0.0
    %4398 = vmatprep.subr.mxu0 0.0
    %4399 = vmatpush1.msra.mxu0 0.0
    %4400 = vmatprep.subr.mxu0 0.0
    %4401 = vmatpush1.msra.mxu0 0.0
    %4402 = vmatprep.subr.mxu0 0.0
    %4403 = vmatpush1.msra.mxu0 0.0
    %4404 = vmatprep.subr.mxu0 0.0
    %4405 = vmatpush1.msra.mxu0 0.0
    %4406 = vmatprep.subr.mxu0 0.0
    %4407 = vmatpush1.msra.mxu0 0.0
    %4408 = vmatprep.subr.mxu0 0.0
    %4409 = vmatpush1.msra.mxu0 0.0
    %4410 = vmatprep.subr.mxu0 0.0
    %4411 = vmatpush1.msra.mxu0 0.0
    %4412 = vmatprep.subr.mxu0 0.0
    %4413 = vmatpush1.msra.mxu0 0.0
    %4414 = vmatprep.subr.mxu0 0.0
    %4415 = vmatpush1.msra.mxu0 0.0
    %4416 = vmatprep.subr.mxu0 0.0
    %4417 = vmatpush1.msra.mxu0 0.0
    %4418 = vmatprep.subr.mxu0 0.0
    %4419 = vmatpush1.msra.mxu0 0.0
    %4420 = vmatprep.subr.mxu0 0.0
    %4421 = vmatpush1.msra.mxu0 0.0
    %4422 = vmatprep.subr.mxu0 0.0
    %4423 = vmatpush1.msra.mxu0 0.0
    %4424 = vmatprep.mubr.f32.mxu0 0.0
    %4425 = vmatmul.mubr.f32.gmra.mrb[0].mxu0 %v4148
    %v4426 = vpop.f32.mrb[0].mxu0
    %v4427 = vadd.f32 %v3738, %v4426
    %v4428 = vpop.f32.mrb[0].mxu0
    %4429 = vdwg.mxu0
    %v4430 = vxor.u32 %v4287, 2147483648
    %v4431 = vmul.f32 %v4430, 1.442695
    %v4432 = vpow.pop %v4431
    %v4433 = vadd.f32 %v4432, 1.0
    %v4434 = vrcp.pop %v4433
    %v4435 = vmul.f32 1.0, %v4434
    %v4436 = vmul.f32 %v4435, %v4137
    %v4437 = vxor.u32 %v4217, 2147483648
    %v4438 = vmul.f32 %v4437, 1.442695
    %v4439 = vpow.pop %v4438
    %v4440 = vadd.f32 %v4439, 1.0
    %v4441 = vrcp.pop %v4440
    %v4442 = vmul.f32 1.0, %v4441
    %v4443 = vtanh.pop %v4357
    %v4444 = vmul.f32 %v4442, %v4443
    %v4445 = vadd.f32 %v4436, %v4444
    %v4446 = vxor.u32 %v4427, 2147483648
    %v4447 = vmul.f32 %v4446, 1.442695
    %v4448 = vpow.pop %v4447
    %v4449 = vadd.f32 %v4448, 1.0
    %v4450 = vrcp.pop %v4449
    %v4451 = vmul.f32 1.0, %v4450
    %v4452 = vtanh.pop %v4445
    %v4453 = vmul.f32 %v4451, %v4452
    %4454 = vst.msk [vmem:[#allocation2 + $0xc] sm:$0xf] %vm3501, %v4453
    %v4456 = vsel %vm3509, %v4453, 0
    %4458 = vmatprep.subr.mxu0 0.0
    %4459 = vmatpush1.msra.mxu0 %v3433
    %4460 = vmatprep.subr.mxu0 0.0
    %4461 = vmatpush1.msra.mxu0 %v3434
    %4462 = vmatprep.subr.mxu0 0.0
    %4463 = vmatpush1.msra.mxu0 %v3435
    %4464 = vmatprep.subr.mxu0 0.0
    %4465 = vmatpush1.msra.mxu0 %v3436
    %4466 = vmatprep.subr.mxu0 0.0
    %4467 = vmatpush1.msra.mxu0 %v3437
    %4468 = vmatprep.subr.mxu0 0.0
    %4469 = vmatpush1.msra.mxu0 %v3438
    %4470 = vmatprep.subr.mxu0 0.0
    %4471 = vmatpush1.msra.mxu0 %v3439
    %4472 = vmatprep.subr.mxu0 0.0
    %4473 = vmatpush1.msra.mxu0 %v3440
    %4474 = vmatprep.subr.mxu0 0.0
    %4475 = vmatpush1.msra.mxu0 0.0
    %4476 = vmatprep.subr.mxu0 0.0
    %4477 = vmatpush1.msra.mxu0 0.0
    %4478 = vmatprep.subr.mxu0 0.0
    %4479 = vmatpush1.msra.mxu0 0.0
    %4480 = vmatprep.subr.mxu0 0.0
    %4481 = vmatpush1.msra.mxu0 0.0
    %4482 = vmatprep.subr.mxu0 0.0
    %4483 = vmatpush1.msra.mxu0 0.0
    %4484 = vmatprep.subr.mxu0 0.0
    %4485 = vmatpush1.msra.mxu0 0.0
    %4486 = vmatprep.subr.mxu0 0.0
    %4487 = vmatpush1.msra.mxu0 0.0
    %4488 = vmatprep.subr.mxu0 0.0
    %4489 = vmatpush1.msra.mxu0 0.0
    %4490 = vmatprep.subr.mxu0 0.0
    %4491 = vmatpush1.msra.mxu0 0.0
    %4492 = vmatprep.subr.mxu0 0.0
    %4493 = vmatpush1.msra.mxu0 0.0
    %4494 = vmatprep.subr.mxu0 0.0
    %4495 = vmatpush1.msra.mxu0 0.0
    %4496 = vmatprep.subr.mxu0 0.0
    %4497 = vmatpush1.msra.mxu0 0.0
    %4498 = vmatprep.subr.mxu0 0.0
    %4499 = vmatpush1.msra.mxu0 0.0
    %4500 = vmatprep.subr.mxu0 0.0
    %4501 = vmatpush1.msra.mxu0 0.0
    %4502 = vmatprep.subr.mxu0 0.0
    %4503 = vmatpush1.msra.mxu0 0.0
    %4504 = vmatprep.subr.mxu0 0.0
    %4505 = vmatpush1.msra.mxu0 0.0
    %4506 = vmatprep.subr.mxu0 0.0
    %4507 = vmatpush1.msra.mxu0 0.0
    %4508 = vmatprep.subr.mxu0 0.0
    %4509 = vmatpush1.msra.mxu0 0.0
    %4510 = vmatprep.subr.mxu0 0.0
    %4511 = vmatpush1.msra.mxu0 0.0
    %4512 = vmatprep.subr.mxu0 0.0
    %4513 = vmatpush1.msra.mxu0 0.0
    %4514 = vmatprep.subr.mxu0 0.0
    %4515 = vmatpush1.msra.mxu0 0.0
    %4516 = vmatprep.subr.mxu0 0.0
    %4517 = vmatpush1.msra.mxu0 0.0
    %4518 = vmatprep.subr.mxu0 0.0
    %4519 = vmatpush1.msra.mxu0 0.0
    %4520 = vmatprep.subr.mxu0 0.0
    %4521 = vmatpush1.msra.mxu0 0.0
    %4522 = vmatprep.mubr.f32.mxu0 0.0
    %4523 = vmatmul.mubr.f32.gmra.mrb[0].mxu0 %v4456
    %v4524 = vpop.f32.mrb[0].mxu0
    %v4525 = vadd.f32 %v3507, %v4524
    %v4526 = vpop.f32.mrb[0].mxu0
    %4527 = vdwg.mxu0
    %4528 = vmatprep.subr.mxu0 0.0
    %4529 = vmatpush1.msra.mxu0 %v3442
    %4530 = vmatprep.subr.mxu0 0.0
    %4531 = vmatpush1.msra.mxu0 %v3443
    %4532 = vmatprep.subr.mxu0 0.0
    %4533 = vmatpush1.msra.mxu0 %v3444
    %4534 = vmatprep.subr.mxu0 0.0
    %4535 = vmatpush1.msra.mxu0 %v3445
    %4536 = vmatprep.subr.mxu0 0.0
    %4537 = vmatpush1.msra.mxu0 %v3446
    %4538 = vmatprep.subr.mxu0 0.0
    %4539 = vmatpush1.msra.mxu0 %v3447
    %4540 = vmatprep.subr.mxu0 0.0
    %4541 = vmatpush1.msra.mxu0 %v3448
    %4542 = vmatprep.subr.mxu0 0.0
    %4543 = vmatpush1.msra.mxu0 %v3449
    %4544 = vmatprep.subr.mxu0 0.0
    %4545 = vmatpush1.msra.mxu0 0.0
    %4546 = vmatprep.subr.mxu0 0.0
    %4547 = vmatpush1.msra.mxu0 0.0
    %4548 = vmatprep.subr.mxu0 0.0
    %4549 = vmatpush1.msra.mxu0 0.0
    %4550 = vmatprep.subr.mxu0 0.0
    %4551 = vmatpush1.msra.mxu0 0.0
    %4552 = vmatprep.subr.mxu0 0.0
    %4553 = vmatpush1.msra.mxu0 0.0
    %4554 = vmatprep.subr.mxu0 0.0
    %4555 = vmatpush1.msra.mxu0 0.0
    %4556 = vmatprep.subr.mxu0 0.0
    %4557 = vmatpush1.msra.mxu0 0.0
    %4558 = vmatprep.subr.mxu0 0.0
    %4559 = vmatpush1.msra.mxu0 0.0
    %4560 = vmatprep.subr.mxu0 0.0
    %4561 = vmatpush1.msra.mxu0 0.0
    %4562 = vmatprep.subr.mxu0 0.0
    %4563 = vmatpush1.msra.mxu0 0.0
    %4564 = vmatprep.subr.mxu0 0.0
    %4565 = vmatpush1.msra.mxu0 0.0
    %4566 = vmatprep.subr.mxu0 0.0
    %4567 = vmatpush1.msra.mxu0 0.0
    %4568 = vmatprep.subr.mxu0 0.0
    %4569 = vmatpush1.msra.mxu0 0.0
    %4570 = vmatprep.subr.mxu0 0.0
    %4571 = vmatpush1.msra.mxu0 0.0
    %4572 = vmatprep.subr.mxu0 0.0
    %4573 = vmatpush1.msra.mxu0 0.0
    %4574 = vmatprep.subr.mxu0 0.0
    %4575 = vmatpush1.msra.mxu0 0.0
    %4576 = vmatprep.subr.mxu0 0.0
    %4577 = vmatpush1.msra.mxu0 0.0
    %4578 = vmatprep.subr.mxu0 0.0
    %4579 = vmatpush1.msra.mxu0 0.0
    %4580 = vmatprep.subr.mxu0 0.0
    %4581 = vmatpush1.msra.mxu0 0.0
    %4582 = vmatprep.subr.mxu0 0.0
    %4583 = vmatpush1.msra.mxu0 0.0
    %4584 = vmatprep.subr.mxu0 0.0
    %4585 = vmatpush1.msra.mxu0 0.0
    %4586 = vmatprep.subr.mxu0 0.0
    %4587 = vmatpush1.msra.mxu0 0.0
    %4588 = vmatprep.subr.mxu0 0.0
    %4589 = vmatpush1.msra.mxu0 0.0
    %4590 = vmatprep.subr.mxu0 0.0
    %4591 = vmatpush1.msra.mxu0 0.0
    %4592 = vmatprep.mubr.f32.mxu0 0.0
    %4593 = vmatmul.mubr.f32.gmra.mrb[0].mxu0 %v4456
    %v4594 = vpop.f32.mrb[0].mxu0
    %v4595 = vadd.f32 %v3586, %v4594
    %v4596 = vpop.f32.mrb[0].mxu0
    %4597 = vdwg.mxu0
    %4598 = vmatprep.subr.mxu0 0.0
    %4599 = vmatpush1.msra.mxu0 %v3451
    %4600 = vmatprep.subr.mxu0 0.0
    %4601 = vmatpush1.msra.mxu0 %v3452
    %4602 = vmatprep.subr.mxu0 0.0
    %4603 = vmatpush1.msra.mxu0 %v3453
    %4604 = vmatprep.subr.mxu0 0.0
    %4605 = vmatpush1.msra.mxu0 %v3454
    %4606 = vmatprep.subr.mxu0 0.0
    %4607 = vmatpush1.msra.mxu0 %v3455
    %4608 = vmatprep.subr.mxu0 0.0
    %4609 = vmatpush1.msra.mxu0 %v3456
    %4610 = vmatprep.subr.mxu0 0.0
    %4611 = vmatpush1.msra.mxu0 %v3457
    %4612 = vmatprep.subr.mxu0 0.0
    %4613 = vmatpush1.msra.mxu0 %v3458
    %4614 = vmatprep.subr.mxu0 0.0
    %4615 = vmatpush1.msra.mxu0 0.0
    %4616 = vmatprep.subr.mxu0 0.0
    %4617 = vmatpush1.msra.mxu0 0.0
    %4618 = vmatprep.subr.mxu0 0.0
    %4619 = vmatpush1.msra.mxu0 0.0
    %4620 = vmatprep.subr.mxu0 0.0
    %4621 = vmatpush1.msra.mxu0 0.0
    %4622 = vmatprep.subr.mxu0 0.0
    %4623 = vmatpush1.msra.mxu0 0.0
    %4624 = vmatprep.subr.mxu0 0.0
    %4625 = vmatpush1.msra.mxu0 0.0
    %4626 = vmatprep.subr.mxu0 0.0
    %4627 = vmatpush1.msra.mxu0 0.0
    %4628 = vmatprep.subr.mxu0 0.0
    %4629 = vmatpush1.msra.mxu0 0.0
    %4630 = vmatprep.subr.mxu0 0.0
    %4631 = vmatpush1.msra.mxu0 0.0
    %4632 = vmatprep.subr.mxu0 0.0
    %4633 = vmatpush1.msra.mxu0 0.0
    %4634 = vmatprep.subr.mxu0 0.0
    %4635 = vmatpush1.msra.mxu0 0.0
    %4636 = vmatprep.subr.mxu0 0.0
    %4637 = vmatpush1.msra.mxu0 0.0
    %4638 = vmatprep.subr.mxu0 0.0
    %4639 = vmatpush1.msra.mxu0 0.0
    %4640 = vmatprep.subr.mxu0 0.0
    %4641 = vmatpush1.msra.mxu0 0.0
    %4642 = vmatprep.subr.mxu0 0.0
    %4643 = vmatpush1.msra.mxu0 0.0
    %4644 = vmatprep.subr.mxu0 0.0
    %4645 = vmatpush1.msra.mxu0 0.0
    %4646 = vmatprep.subr.mxu0 0.0
    %4647 = vmatpush1.msra.mxu0 0.0
    %4648 = vmatprep.subr.mxu0 0.0
    %4649 = vmatpush1.msra.mxu0 0.0
    %4650 = vmatprep.subr.mxu0 0.0
    %4651 = vmatpush1.msra.mxu0 0.0
    %4652 = vmatprep.subr.mxu0 0.0
    %4653 = vmatpush1.msra.mxu0 0.0
    %4654 = vmatprep.subr.mxu0 0.0
    %4655 = vmatpush1.msra.mxu0 0.0
    %4656 = vmatprep.subr.mxu0 0.0
    %4657 = vmatpush1.msra.mxu0 0.0
    %4658 = vmatprep.subr.mxu0 0.0
    %4659 = vmatpush1.msra.mxu0 0.0
    %4660 = vmatprep.subr.mxu0 0.0
    %4661 = vmatpush1.msra.mxu0 0.0
    %4662 = vmatprep.mubr.f32.mxu0 0.0
    %4663 = vmatmul.mubr.f32.gmra.mrb[0].mxu0 %v4456
    %v4664 = vpop.f32.mrb[0].mxu0
    %v4665 = vadd.f32 %v3662, %v4664
    %v4666 = vpop.f32.mrb[0].mxu0
    %4667 = vdwg.mxu0
    %4668 = vmatprep.subr.mxu0 0.0
    %4669 = vmatpush1.msra.mxu0 %v3460
    %4670 = vmatprep.subr.mxu0 0.0
    %4671 = vmatpush1.msra.mxu0 %v3461
    %4672 = vmatprep.subr.mxu0 0.0
    %4673 = vmatpush1.msra.mxu0 %v3462
    %4674 = vmatprep.subr.mxu0 0.0
    %4675 = vmatpush1.msra.mxu0 %v3463
    %4676 = vmatprep.subr.mxu0 0.0
    %4677 = vmatpush1.msra.mxu0 %v3464
    %4678 = vmatprep.subr.mxu0 0.0
    %4679 = vmatpush1.msra.mxu0 %v3465
    %4680 = vmatprep.subr.mxu0 0.0
    %4681 = vmatpush1.msra.mxu0 %v3466
    %4682 = vmatprep.subr.mxu0 0.0
    %4683 = vmatpush1.msra.mxu0 %v3467
    %4684 = vmatprep.subr.mxu0 0.0
    %4685 = vmatpush1.msra.mxu0 0.0
    %4686 = vmatprep.subr.mxu0 0.0
    %4687 = vmatpush1.msra.mxu0 0.0
    %4688 = vmatprep.subr.mxu0 0.0
    %4689 = vmatpush1.msra.mxu0 0.0
    %4690 = vmatprep.subr.mxu0 0.0
    %4691 = vmatpush1.msra.mxu0 0.0
    %4692 = vmatprep.subr.mxu0 0.0
    %4693 = vmatpush1.msra.mxu0 0.0
    %4694 = vmatprep.subr.mxu0 0.0
    %4695 = vmatpush1.msra.mxu0 0.0
    %4696 = vmatprep.subr.mxu0 0.0
    %4697 = vmatpush1.msra.mxu0 0.0
    %4698 = vmatprep.subr.mxu0 0.0
    %4699 = vmatpush1.msra.mxu0 0.0
    %4700 = vmatprep.subr.mxu0 0.0
    %4701 = vmatpush1.msra.mxu0 0.0
    %4702 = vmatprep.subr.mxu0 0.0
    %4703 = vmatpush1.msra.mxu0 0.0
    %4704 = vmatprep.subr.mxu0 0.0
    %4705 = vmatpush1.msra.mxu0 0.0
    %4706 = vmatprep.subr.mxu0 0.0
    %4707 = vmatpush1.msra.mxu0 0.0
    %4708 = vmatprep.subr.mxu0 0.0
    %4709 = vmatpush1.msra.mxu0 0.0
    %4710 = vmatprep.subr.mxu0 0.0
    %4711 = vmatpush1.msra.mxu0 0.0
    %4712 = vmatprep.subr.mxu0 0.0
    %4713 = vmatpush1.msra.mxu0 0.0
    %4714 = vmatprep.subr.mxu0 0.0
    %4715 = vmatpush1.msra.mxu0 0.0
    %4716 = vmatprep.subr.mxu0 0.0
    %4717 = vmatpush1.msra.mxu0 0.0
    %4718 = vmatprep.subr.mxu0 0.0
    %4719 = vmatpush1.msra.mxu0 0.0
    %4720 = vmatprep.subr.mxu0 0.0
    %4721 = vmatpush1.msra.mxu0 0.0
    %4722 = vmatprep.subr.mxu0 0.0
    %4723 = vmatpush1.msra.mxu0 0.0
    %4724 = vmatprep.subr.mxu0 0.0
    %4725 = vmatpush1.msra.mxu0 0.0
    %4726 = vmatprep.subr.mxu0 0.0
    %4727 = vmatpush1.msra.mxu0 0.0
    %4728 = vmatprep.subr.mxu0 0.0
    %4729 = vmatpush1.msra.mxu0 0.0
    %4730 = vmatprep.subr.mxu0 0.0
    %4731 = vmatpush1.msra.mxu0 0.0
    %4732 = vmatprep.mubr.f32.mxu0 0.0
    %4733 = vmatmul.mubr.f32.gmra.mrb[0].mxu0 %v4456
    %v4734 = vpop.f32.mrb[0].mxu0
    %v4735 = vadd.f32 %v3738, %v4734
    %v4736 = vpop.f32.mrb[0].mxu0
    %4737 = vdwg.mxu0
    %v4738 = vxor.u32 %v4595, 2147483648
    %v4739 = vmul.f32 %v4738, 1.442695
    %v4740 = vpow.pop %v4739
    %v4741 = vadd.f32 %v4740, 1.0
    %v4742 = vrcp.pop %v4741
    %v4743 = vmul.f32 1.0, %v4742
    %v4744 = vmul.f32 %v4743, %v4445
    %v4745 = vxor.u32 %v4525, 2147483648
    %v4746 = vmul.f32 %v4745, 1.442695
    %v4747 = vpow.pop %v4746
    %v4748 = vadd.f32 %v4747, 1.0
    %v4749 = vrcp.pop %v4748
    %v4750 = vmul.f32 1.0, %v4749
    %v4751 = vtanh.pop %v4665
    %v4752 = vmul.f32 %v4750, %v4751
    %v4753 = vadd.f32 %v4744, %v4752
    %v4754 = vxor.u32 %v4735, 2147483648
    %v4755 = vmul.f32 %v4754, 1.442695
    %v4756 = vpow.pop %v4755
    %v4757 = vadd.f32 %v4756, 1.0
    %v4758 = vrcp.pop %v4757
    %v4759 = vmul.f32 1.0, %v4758
    %v4760 = vtanh.pop %v4753
    %v4761 = vmul.f32 %v4759, %v4760
    %4762 = vst.msk [vmem:[#allocation2 + $0x10] sm:$0xf] %vm3501, %v4761
    %v4764 = vsel %vm3509, %v4761, 0
    %4766 = vmatprep.subr.mxu0 0.0
    %4767 = vmatpush1.msra.mxu0 %v3433
    %4768 = vmatprep.subr.mxu0 0.0
    %4769 = vmatpush1.msra.mxu0 %v3434
    %4770 = vmatprep.subr.mxu0 0.0
    %4771 = vmatpush1.msra.mxu0 %v3435
    %4772 = vmatprep.subr.mxu0 0.0
    %4773 = vmatpush1.msra.mxu0 %v3436
    %4774 = vmatprep.subr.mxu0 0.0
    %4775 = vmatpush1.msra.mxu0 %v3437
    %4776 = vmatprep.subr.mxu0 0.0
    %4777 = vmatpush1.msra.mxu0 %v3438
    %4778 = vmatprep.subr.mxu0 0.0
    %4779 = vmatpush1.msra.mxu0 %v3439
    %4780 = vmatprep.subr.mxu0 0.0
    %4781 = vmatpush1.msra.mxu0 %v3440
    %4782 = vmatprep.subr.mxu0 0.0
    %4783 = vmatpush1.msra.mxu0 0.0
    %4784 = vmatprep.subr.mxu0 0.0
    %4785 = vmatpush1.msra.mxu0 0.0
    %4786 = vmatprep.subr.mxu0 0.0
    %4787 = vmatpush1.msra.mxu0 0.0
    %4788 = vmatprep.subr.mxu0 0.0
    %4789 = vmatpush1.msra.mxu0 0.0
    %4790 = vmatprep.subr.mxu0 0.0
    %4791 = vmatpush1.msra.mxu0 0.0
    %4792 = vmatprep.subr.mxu0 0.0
    %4793 = vmatpush1.msra.mxu0 0.0
    %4794 = vmatprep.subr.mxu0 0.0
    %4795 = vmatpush1.msra.mxu0 0.0
    %4796 = vmatprep.subr.mxu0 0.0
    %4797 = vmatpush1.msra.mxu0 0.0
    %4798 = vmatprep.subr.mxu0 0.0
    %4799 = vmatpush1.msra.mxu0 0.0
    %4800 = vmatprep.subr.mxu0 0.0
    %4801 = vmatpush1.msra.mxu0 0.0
    %4802 = vmatprep.subr.mxu0 0.0
    %4803 = vmatpush1.msra.mxu0 0.0
    %4804 = vmatprep.subr.mxu0 0.0
    %4805 = vmatpush1.msra.mxu0 0.0
    %4806 = vmatprep.subr.mxu0 0.0
    %4807 = vmatpush1.msra.mxu0 0.0
    %4808 = vmatprep.subr.mxu0 0.0
    %4809 = vmatpush1.msra.mxu0 0.0
    %4810 = vmatprep.subr.mxu0 0.0
    %4811 = vmatpush1.msra.mxu0 0.0
    %4812 = vmatprep.subr.mxu0 0.0
    %4813 = vmatpush1.msra.mxu0 0.0
    %4814 = vmatprep.subr.mxu0 0.0
    %4815 = vmatpush1.msra.mxu0 0.0
    %4816 = vmatprep.subr.mxu0 0.0
    %4817 = vmatpush1.msra.mxu0 0.0
    %4818 = vmatprep.subr.mxu0 0.0
    %4819 = vmatpush1.msra.mxu0 0.0
    %4820 = vmatprep.subr.mxu0 0.0
    %4821 = vmatpush1.msra.mxu0 0.0
    %4822 = vmatprep.subr.mxu0 0.0
    %4823 = vmatpush1.msra.mxu0 0.0
    %4824 = vmatprep.subr.mxu0 0.0
    %4825 = vmatpush1.msra.mxu0 0.0
    %4826 = vmatprep.subr.mxu0 0.0
    %4827 = vmatpush1.msra.mxu0 0.0
    %4828 = vmatprep.subr.mxu0 0.0
    %4829 = vmatpush1.msra.mxu0 0.0
    %4830 = vmatprep.mubr.f32.mxu0 0.0
    %4831 = vmatmul.mubr.f32.gmra.mrb[0].mxu0 %v4764
    %v4832 = vpop.f32.mrb[0].mxu0
    %v4833 = vadd.f32 %v3507, %v4832
    %v4834 = vpop.f32.mrb[0].mxu0
    %4835 = vdwg.mxu0
    %4836 = vmatprep.subr.mxu0 0.0
    %4837 = vmatpush1.msra.mxu0 %v3442
    %4838 = vmatprep.subr.mxu0 0.0
    %4839 = vmatpush1.msra.mxu0 %v3443
    %4840 = vmatprep.subr.mxu0 0.0
    %4841 = vmatpush1.msra.mxu0 %v3444
    %4842 = vmatprep.subr.mxu0 0.0
    %4843 = vmatpush1.msra.mxu0 %v3445
    %4844 = vmatprep.subr.mxu0 0.0
    %4845 = vmatpush1.msra.mxu0 %v3446
    %4846 = vmatprep.subr.mxu0 0.0
    %4847 = vmatpush1.msra.mxu0 %v3447
    %4848 = vmatprep.subr.mxu0 0.0
    %4849 = vmatpush1.msra.mxu0 %v3448
    %4850 = vmatprep.subr.mxu0 0.0
    %4851 = vmatpush1.msra.mxu0 %v3449
    %4852 = vmatprep.subr.mxu0 0.0
    %4853 = vmatpush1.msra.mxu0 0.0
    %4854 = vmatprep.subr.mxu0 0.0
    %4855 = vmatpush1.msra.mxu0 0.0
    %4856 = vmatprep.subr.mxu0 0.0
    %4857 = vmatpush1.msra.mxu0 0.0
    %4858 = vmatprep.subr.mxu0 0.0
    %4859 = vmatpush1.msra.mxu0 0.0
    %4860 = vmatprep.subr.mxu0 0.0
    %4861 = vmatpush1.msra.mxu0 0.0
    %4862 = vmatprep.subr.mxu0 0.0
    %4863 = vmatpush1.msra.mxu0 0.0
    %4864 = vmatprep.subr.mxu0 0.0
    %4865 = vmatpush1.msra.mxu0 0.0
    %4866 = vmatprep.subr.mxu0 0.0
    %4867 = vmatpush1.msra.mxu0 0.0
    %4868 = vmatprep.subr.mxu0 0.0
    %4869 = vmatpush1.msra.mxu0 0.0
    %4870 = vmatprep.subr.mxu0 0.0
    %4871 = vmatpush1.msra.mxu0 0.0
    %4872 = vmatprep.subr.mxu0 0.0
    %4873 = vmatpush1.msra.mxu0 0.0
    %4874 = vmatprep.subr.mxu0 0.0
    %4875 = vmatpush1.msra.mxu0 0.0
    %4876 = vmatprep.subr.mxu0 0.0
    %4877 = vmatpush1.msra.mxu0 0.0
    %4878 = vmatprep.subr.mxu0 0.0
    %4879 = vmatpush1.msra.mxu0 0.0
    %4880 = vmatprep.subr.mxu0 0.0
    %4881 = vmatpush1.msra.mxu0 0.0
    %4882 = vmatprep.subr.mxu0 0.0
    %4883 = vmatpush1.msra.mxu0 0.0
    %4884 = vmatprep.subr.mxu0 0.0
    %4885 = vmatpush1.msra.mxu0 0.0
    %4886 = vmatprep.subr.mxu0 0.0
    %4887 = vmatpush1.msra.mxu0 0.0
    %4888 = vmatprep.subr.mxu0 0.0
    %4889 = vmatpush1.msra.mxu0 0.0
    %4890 = vmatprep.subr.mxu0 0.0
    %4891 = vmatpush1.msra.mxu0 0.0
    %4892 = vmatprep.subr.mxu0 0.0
    %4893 = vmatpush1.msra.mxu0 0.0
    %4894 = vmatprep.subr.mxu0 0.0
    %4895 = vmatpush1.msra.mxu0 0.0
    %4896 = vmatprep.subr.mxu0 0.0
    %4897 = vmatpush1.msra.mxu0 0.0
    %4898 = vmatprep.subr.mxu0 0.0
    %4899 = vmatpush1.msra.mxu0 0.0
    %4900 = vmatprep.mubr.f32.mxu0 0.0
    %4901 = vmatmul.mubr.f32.gmra.mrb[0].mxu0 %v4764
    %v4902 = vpop.f32.mrb[0].mxu0
    %v4903 = vadd.f32 %v3586, %v4902
    %v4904 = vpop.f32.mrb[0].mxu0
    %4905 = vdwg.mxu0
    %4906 = vmatprep.subr.mxu0 0.0
    %4907 = vmatpush1.msra.mxu0 %v3451
    %4908 = vmatprep.subr.mxu0 0.0
    %4909 = vmatpush1.msra.mxu0 %v3452
    %4910 = vmatprep.subr.mxu0 0.0
    %4911 = vmatpush1.msra.mxu0 %v3453
    %4912 = vmatprep.subr.mxu0 0.0
    %4913 = vmatpush1.msra.mxu0 %v3454
    %4914 = vmatprep.subr.mxu0 0.0
    %4915 = vmatpush1.msra.mxu0 %v3455
    %4916 = vmatprep.subr.mxu0 0.0
    %4917 = vmatpush1.msra.mxu0 %v3456
    %4918 = vmatprep.subr.mxu0 0.0
    %4919 = vmatpush1.msra.mxu0 %v3457
    %4920 = vmatprep.subr.mxu0 0.0
    %4921 = vmatpush1.msra.mxu0 %v3458
    %4922 = vmatprep.subr.mxu0 0.0
    %4923 = vmatpush1.msra.mxu0 0.0
    %4924 = vmatprep.subr.mxu0 0.0
    %4925 = vmatpush1.msra.mxu0 0.0
    %4926 = vmatprep.subr.mxu0 0.0
    %4927 = vmatpush1.msra.mxu0 0.0
    %4928 = vmatprep.subr.mxu0 0.0
    %4929 = vmatpush1.msra.mxu0 0.0
    %4930 = vmatprep.subr.mxu0 0.0
    %4931 = vmatpush1.msra.mxu0 0.0
    %4932 = vmatprep.subr.mxu0 0.0
    %4933 = vmatpush1.msra.mxu0 0.0
    %4934 = vmatprep.subr.mxu0 0.0
    %4935 = vmatpush1.msra.mxu0 0.0
    %4936 = vmatprep.subr.mxu0 0.0
    %4937 = vmatpush1.msra.mxu0 0.0
    %4938 = vmatprep.subr.mxu0 0.0
    %4939 = vmatpush1.msra.mxu0 0.0
    %4940 = vmatprep.subr.mxu0 0.0
    %4941 = vmatpush1.msra.mxu0 0.0
    %4942 = vmatprep.subr.mxu0 0.0
    %4943 = vmatpush1.msra.mxu0 0.0
    %4944 = vmatprep.subr.mxu0 0.0
    %4945 = vmatpush1.msra.mxu0 0.0
    %4946 = vmatprep.subr.mxu0 0.0
    %4947 = vmatpush1.msra.mxu0 0.0
    %4948 = vmatprep.subr.mxu0 0.0
    %4949 = vmatpush1.msra.mxu0 0.0
    %4950 = vmatprep.subr.mxu0 0.0
    %4951 = vmatpush1.msra.mxu0 0.0
    %4952 = vmatprep.subr.mxu0 0.0
    %4953 = vmatpush1.msra.mxu0 0.0
    %4954 = vmatprep.subr.mxu0 0.0
    %4955 = vmatpush1.msra.mxu0 0.0
    %4956 = vmatprep.subr.mxu0 0.0
    %4957 = vmatpush1.msra.mxu0 0.0
    %4958 = vmatprep.subr.mxu0 0.0
    %4959 = vmatpush1.msra.mxu0 0.0
    %4960 = vmatprep.subr.mxu0 0.0
    %4961 = vmatpush1.msra.mxu0 0.0
    %4962 = vmatprep.subr.mxu0 0.0
    %4963 = vmatpush1.msra.mxu0 0.0
    %4964 = vmatprep.subr.mxu0 0.0
    %4965 = vmatpush1.msra.mxu0 0.0
    %4966 = vmatprep.subr.mxu0 0.0
    %4967 = vmatpush1.msra.mxu0 0.0
    %4968 = vmatprep.subr.mxu0 0.0
    %4969 = vmatpush1.msra.mxu0 0.0
    %4970 = vmatprep.mubr.f32.mxu0 0.0
    %4971 = vmatmul.mubr.f32.gmra.mrb[0].mxu0 %v4764
    %v4972 = vpop.f32.mrb[0].mxu0
    %v4973 = vadd.f32 %v3662, %v4972
    %v4974 = vpop.f32.mrb[0].mxu0
    %4975 = vdwg.mxu0
    %4976 = vmatprep.subr.mxu0 0.0
    %4977 = vmatpush1.msra.mxu0 %v3460
    %4978 = vmatprep.subr.mxu0 0.0
    %4979 = vmatpush1.msra.mxu0 %v3461
    %4980 = vmatprep.subr.mxu0 0.0
    %4981 = vmatpush1.msra.mxu0 %v3462
    %4982 = vmatprep.subr.mxu0 0.0
    %4983 = vmatpush1.msra.mxu0 %v3463
    %4984 = vmatprep.subr.mxu0 0.0
    %4985 = vmatpush1.msra.mxu0 %v3464
    %4986 = vmatprep.subr.mxu0 0.0
    %4987 = vmatpush1.msra.mxu0 %v3465
    %4988 = vmatprep.subr.mxu0 0.0
    %4989 = vmatpush1.msra.mxu0 %v3466
    %4990 = vmatprep.subr.mxu0 0.0
    %4991 = vmatpush1.msra.mxu0 %v3467
    %4992 = vmatprep.subr.mxu0 0.0
    %4993 = vmatpush1.msra.mxu0 0.0
    %4994 = vmatprep.subr.mxu0 0.0
    %4995 = vmatpush1.msra.mxu0 0.0
    %4996 = vmatprep.subr.mxu0 0.0
    %4997 = vmatpush1.msra.mxu0 0.0
    %4998 = vmatprep.subr.mxu0 0.0
    %4999 = vmatpush1.msra.mxu0 0.0
    %5000 = vmatprep.subr.mxu0 0.0
    %5001 = vmatpush1.msra.mxu0 0.0
    %5002 = vmatprep.subr.mxu0 0.0
    %5003 = vmatpush1.msra.mxu0 0.0
    %5004 = vmatprep.subr.mxu0 0.0
    %5005 = vmatpush1.msra.mxu0 0.0
    %5006 = vmatprep.subr.mxu0 0.0
    %5007 = vmatpush1.msra.mxu0 0.0
    %5008 = vmatprep.subr.mxu0 0.0
    %5009 = vmatpush1.msra.mxu0 0.0
    %5010 = vmatprep.subr.mxu0 0.0
    %5011 = vmatpush1.msra.mxu0 0.0
    %5012 = vmatprep.subr.mxu0 0.0
    %5013 = vmatpush1.msra.mxu0 0.0
    %5014 = vmatprep.subr.mxu0 0.0
    %5015 = vmatpush1.msra.mxu0 0.0
    %5016 = vmatprep.subr.mxu0 0.0
    %5017 = vmatpush1.msra.mxu0 0.0
    %5018 = vmatprep.subr.mxu0 0.0
    %5019 = vmatpush1.msra.mxu0 0.0
    %5020 = vmatprep.subr.mxu0 0.0
    %5021 = vmatpush1.msra.mxu0 0.0
    %5022 = vmatprep.subr.mxu0 0.0
    %5023 = vmatpush1.msra.mxu0 0.0
    %5024 = vmatprep.subr.mxu0 0.0
    %5025 = vmatpush1.msra.mxu0 0.0
    %5026 = vmatprep.subr.mxu0 0.0
    %5027 = vmatpush1.msra.mxu0 0.0
    %5028 = vmatprep.subr.mxu0 0.0
    %5029 = vmatpush1.msra.mxu0 0.0
    %5030 = vmatprep.subr.mxu0 0.0
    %5031 = vmatpush1.msra.mxu0 0.0
    %5032 = vmatprep.subr.mxu0 0.0
    %5033 = vmatpush1.msra.mxu0 0.0
    %5034 = vmatprep.subr.mxu0 0.0
    %5035 = vmatpush1.msra.mxu0 0.0
    %5036 = vmatprep.subr.mxu0 0.0
    %5037 = vmatpush1.msra.mxu0 0.0
    %5038 = vmatprep.subr.mxu0 0.0
    %5039 = vmatpush1.msra.mxu0 0.0
    %5040 = vmatprep.mubr.f32.mxu0 0.0
    %5041 = vmatmul.mubr.f32.gmra.mrb[0].mxu0 %v4764
    %v5042 = vpop.f32.mrb[0].mxu0
    %v5043 = vadd.f32 %v3738, %v5042
    %v5044 = vpop.f32.mrb[0].mxu0
    %5045 = vdwg.mxu0
    %v5046 = vxor.u32 %v4903, 2147483648
    %v5047 = vmul.f32 %v5046, 1.442695
    %v5048 = vpow.pop %v5047
    %v5049 = vadd.f32 %v5048, 1.0
    %v5050 = vrcp.pop %v5049
    %v5051 = vmul.f32 1.0, %v5050
    %v5052 = vmul.f32 %v5051, %v4753
    %v5053 = vxor.u32 %v4833, 2147483648
    %v5054 = vmul.f32 %v5053, 1.442695
    %v5055 = vpow.pop %v5054
    %v5056 = vadd.f32 %v5055, 1.0
    %v5057 = vrcp.pop %v5056
    %v5058 = vmul.f32 1.0, %v5057
    %v5059 = vtanh.pop %v4973
    %v5060 = vmul.f32 %v5058, %v5059
    %v5061 = vadd.f32 %v5052, %v5060
    %v5062 = vxor.u32 %v5043, 2147483648
    %v5063 = vmul.f32 %v5062, 1.442695
    %v5064 = vpow.pop %v5063
    %v5065 = vadd.f32 %v5064, 1.0
    %v5066 = vrcp.pop %v5065
    %v5067 = vmul.f32 1.0, %v5066
    %v5068 = vtanh.pop %v5061
    %v5069 = vmul.f32 %v5067, %v5068
    %5070 = vst.msk [vmem:[#allocation2 + $0x14] sm:$0xf] %vm3501, %v5069
    %v5072 = vsel %vm3509, %v5069, 0
    %5074 = vmatprep.subr.mxu0 0.0
    %5075 = vmatpush1.msra.mxu0 %v3433
    %5076 = vmatprep.subr.mxu0 0.0
    %5077 = vmatpush1.msra.mxu0 %v3434
    %5078 = vmatprep.subr.mxu0 0.0
    %5079 = vmatpush1.msra.mxu0 %v3435
    %5080 = vmatprep.subr.mxu0 0.0
    %5081 = vmatpush1.msra.mxu0 %v3436
    %5082 = vmatprep.subr.mxu0 0.0
    %5083 = vmatpush1.msra.mxu0 %v3437
    %5084 = vmatprep.subr.mxu0 0.0
    %5085 = vmatpush1.msra.mxu0 %v3438
    %5086 = vmatprep.subr.mxu0 0.0
    %5087 = vmatpush1.msra.mxu0 %v3439
    %5088 = vmatprep.subr.mxu0 0.0
    %5089 = vmatpush1.msra.mxu0 %v3440
    %5090 = vmatprep.subr.mxu0 0.0
    %5091 = vmatpush1.msra.mxu0 0.0
    %5092 = vmatprep.subr.mxu0 0.0
    %5093 = vmatpush1.msra.mxu0 0.0
    %5094 = vmatprep.subr.mxu0 0.0
    %5095 = vmatpush1.msra.mxu0 0.0
    %5096 = vmatprep.subr.mxu0 0.0
    %5097 = vmatpush1.msra.mxu0 0.0
    %5098 = vmatprep.subr.mxu0 0.0
    %5099 = vmatpush1.msra.mxu0 0.0
    %5100 = vmatprep.subr.mxu0 0.0
    %5101 = vmatpush1.msra.mxu0 0.0
    %5102 = vmatprep.subr.mxu0 0.0
    %5103 = vmatpush1.msra.mxu0 0.0
    %5104 = vmatprep.subr.mxu0 0.0
    %5105 = vmatpush1.msra.mxu0 0.0
    %5106 = vmatprep.subr.mxu0 0.0
    %5107 = vmatpush1.msra.mxu0 0.0
    %5108 = vmatprep.subr.mxu0 0.0
    %5109 = vmatpush1.msra.mxu0 0.0
    %5110 = vmatprep.subr.mxu0 0.0
    %5111 = vmatpush1.msra.mxu0 0.0
    %5112 = vmatprep.subr.mxu0 0.0
    %5113 = vmatpush1.msra.mxu0 0.0
    %5114 = vmatprep.subr.mxu0 0.0
    %5115 = vmatpush1.msra.mxu0 0.0
    %5116 = vmatprep.subr.mxu0 0.0
    %5117 = vmatpush1.msra.mxu0 0.0
    %5118 = vmatprep.subr.mxu0 0.0
    %5119 = vmatpush1.msra.mxu0 0.0
    %5120 = vmatprep.subr.mxu0 0.0
    %5121 = vmatpush1.msra.mxu0 0.0
    %5122 = vmatprep.subr.mxu0 0.0
    %5123 = vmatpush1.msra.mxu0 0.0
    %5124 = vmatprep.subr.mxu0 0.0
    %5125 = vmatpush1.msra.mxu0 0.0
    %5126 = vmatprep.subr.mxu0 0.0
    %5127 = vmatpush1.msra.mxu0 0.0
    %5128 = vmatprep.subr.mxu0 0.0
    %5129 = vmatpush1.msra.mxu0 0.0
    %5130 = vmatprep.subr.mxu0 0.0
    %5131 = vmatpush1.msra.mxu0 0.0
    %5132 = vmatprep.subr.mxu0 0.0
    %5133 = vmatpush1.msra.mxu0 0.0
    %5134 = vmatprep.subr.mxu0 0.0
    %5135 = vmatpush1.msra.mxu0 0.0
    %5136 = vmatprep.subr.mxu0 0.0
    %5137 = vmatpush1.msra.mxu0 0.0
    %5138 = vmatprep.mubr.f32.mxu0 0.0
    %5139 = vmatmul.mubr.f32.gmra.mrb[0].mxu0 %v5072
    %v5140 = vpop.f32.mrb[0].mxu0
    %v5141 = vadd.f32 %v3507, %v5140
    %v5142 = vpop.f32.mrb[0].mxu0
    %5143 = vdwg.mxu0
    %5144 = vmatprep.subr.mxu0 0.0
    %5145 = vmatpush1.msra.mxu0 %v3442
    %5146 = vmatprep.subr.mxu0 0.0
    %5147 = vmatpush1.msra.mxu0 %v3443
    %5148 = vmatprep.subr.mxu0 0.0
    %5149 = vmatpush1.msra.mxu0 %v3444
    %5150 = vmatprep.subr.mxu0 0.0
    %5151 = vmatpush1.msra.mxu0 %v3445
    %5152 = vmatprep.subr.mxu0 0.0
    %5153 = vmatpush1.msra.mxu0 %v3446
    %5154 = vmatprep.subr.mxu0 0.0
    %5155 = vmatpush1.msra.mxu0 %v3447
    %5156 = vmatprep.subr.mxu0 0.0
    %5157 = vmatpush1.msra.mxu0 %v3448
    %5158 = vmatprep.subr.mxu0 0.0
    %5159 = vmatpush1.msra.mxu0 %v3449
    %5160 = vmatprep.subr.mxu0 0.0
    %5161 = vmatpush1.msra.mxu0 0.0
    %5162 = vmatprep.subr.mxu0 0.0
    %5163 = vmatpush1.msra.mxu0 0.0
    %5164 = vmatprep.subr.mxu0 0.0
    %5165 = vmatpush1.msra.mxu0 0.0
    %5166 = vmatprep.subr.mxu0 0.0
    %5167 = vmatpush1.msra.mxu0 0.0
    %5168 = vmatprep.subr.mxu0 0.0
    %5169 = vmatpush1.msra.mxu0 0.0
    %5170 = vmatprep.subr.mxu0 0.0
    %5171 = vmatpush1.msra.mxu0 0.0
    %5172 = vmatprep.subr.mxu0 0.0
    %5173 = vmatpush1.msra.mxu0 0.0
    %5174 = vmatprep.subr.mxu0 0.0
    %5175 = vmatpush1.msra.mxu0 0.0
    %5176 = vmatprep.subr.mxu0 0.0
    %5177 = vmatpush1.msra.mxu0 0.0
    %5178 = vmatprep.subr.mxu0 0.0
    %5179 = vmatpush1.msra.mxu0 0.0
    %5180 = vmatprep.subr.mxu0 0.0
    %5181 = vmatpush1.msra.mxu0 0.0
    %5182 = vmatprep.subr.mxu0 0.0
    %5183 = vmatpush1.msra.mxu0 0.0
    %5184 = vmatprep.subr.mxu0 0.0
    %5185 = vmatpush1.msra.mxu0 0.0
    %5186 = vmatprep.subr.mxu0 0.0
    %5187 = vmatpush1.msra.mxu0 0.0
    %5188 = vmatprep.subr.mxu0 0.0
    %5189 = vmatpush1.msra.mxu0 0.0
    %5190 = vmatprep.subr.mxu0 0.0
    %5191 = vmatpush1.msra.mxu0 0.0
    %5192 = vmatprep.subr.mxu0 0.0
    %5193 = vmatpush1.msra.mxu0 0.0
    %5194 = vmatprep.subr.mxu0 0.0
    %5195 = vmatpush1.msra.mxu0 0.0
    %5196 = vmatprep.subr.mxu0 0.0
    %5197 = vmatpush1.msra.mxu0 0.0
    %5198 = vmatprep.subr.mxu0 0.0
    %5199 = vmatpush1.msra.mxu0 0.0
    %5200 = vmatprep.subr.mxu0 0.0
    %5201 = vmatpush1.msra.mxu0 0.0
    %5202 = vmatprep.subr.mxu0 0.0
    %5203 = vmatpush1.msra.mxu0 0.0
    %5204 = vmatprep.subr.mxu0 0.0
    %5205 = vmatpush1.msra.mxu0 0.0
    %5206 = vmatprep.subr.mxu0 0.0
    %5207 = vmatpush1.msra.mxu0 0.0
    %5208 = vmatprep.mubr.f32.mxu0 0.0
    %5209 = vmatmul.mubr.f32.gmra.mrb[0].mxu0 %v5072
    %v5210 = vpop.f32.mrb[0].mxu0
    %v5211 = vadd.f32 %v3586, %v5210
    %v5212 = vpop.f32.mrb[0].mxu0
    %5213 = vdwg.mxu0
    %5214 = vmatprep.subr.mxu0 0.0
    %5215 = vmatpush1.msra.mxu0 %v3451
    %5216 = vmatprep.subr.mxu0 0.0
    %5217 = vmatpush1.msra.mxu0 %v3452
    %5218 = vmatprep.subr.mxu0 0.0
    %5219 = vmatpush1.msra.mxu0 %v3453
    %5220 = vmatprep.subr.mxu0 0.0
    %5221 = vmatpush1.msra.mxu0 %v3454
    %5222 = vmatprep.subr.mxu0 0.0
    %5223 = vmatpush1.msra.mxu0 %v3455
    %5224 = vmatprep.subr.mxu0 0.0
    %5225 = vmatpush1.msra.mxu0 %v3456
    %5226 = vmatprep.subr.mxu0 0.0
    %5227 = vmatpush1.msra.mxu0 %v3457
    %5228 = vmatprep.subr.mxu0 0.0
    %5229 = vmatpush1.msra.mxu0 %v3458
    %5230 = vmatprep.subr.mxu0 0.0
    %5231 = vmatpush1.msra.mxu0 0.0
    %5232 = vmatprep.subr.mxu0 0.0
    %5233 = vmatpush1.msra.mxu0 0.0
    %5234 = vmatprep.subr.mxu0 0.0
    %5235 = vmatpush1.msra.mxu0 0.0
    %5236 = vmatprep.subr.mxu0 0.0
    %5237 = vmatpush1.msra.mxu0 0.0
    %5238 = vmatprep.subr.mxu0 0.0
    %5239 = vmatpush1.msra.mxu0 0.0
    %5240 = vmatprep.subr.mxu0 0.0
    %5241 = vmatpush1.msra.mxu0 0.0
    %5242 = vmatprep.subr.mxu0 0.0
    %5243 = vmatpush1.msra.mxu0 0.0
    %5244 = vmatprep.subr.mxu0 0.0
    %5245 = vmatpush1.msra.mxu0 0.0
    %5246 = vmatprep.subr.mxu0 0.0
    %5247 = vmatpush1.msra.mxu0 0.0
    %5248 = vmatprep.subr.mxu0 0.0
    %5249 = vmatpush1.msra.mxu0 0.0
    %5250 = vmatprep.subr.mxu0 0.0
    %5251 = vmatpush1.msra.mxu0 0.0
    %5252 = vmatprep.subr.mxu0 0.0
    %5253 = vmatpush1.msra.mxu0 0.0
    %5254 = vmatprep.subr.mxu0 0.0
    %5255 = vmatpush1.msra.mxu0 0.0
    %5256 = vmatprep.subr.mxu0 0.0
    %5257 = vmatpush1.msra.mxu0 0.0
    %5258 = vmatprep.subr.mxu0 0.0
    %5259 = vmatpush1.msra.mxu0 0.0
    %5260 = vmatprep.subr.mxu0 0.0
    %5261 = vmatpush1.msra.mxu0 0.0
    %5262 = vmatprep.subr.mxu0 0.0
    %5263 = vmatpush1.msra.mxu0 0.0
    %5264 = vmatprep.subr.mxu0 0.0
    %5265 = vmatpush1.msra.mxu0 0.0
    %5266 = vmatprep.subr.mxu0 0.0
    %5267 = vmatpush1.msra.mxu0 0.0
    %5268 = vmatprep.subr.mxu0 0.0
    %5269 = vmatpush1.msra.mxu0 0.0
    %5270 = vmatprep.subr.mxu0 0.0
    %5271 = vmatpush1.msra.mxu0 0.0
    %5272 = vmatprep.subr.mxu0 0.0
    %5273 = vmatpush1.msra.mxu0 0.0
    %5274 = vmatprep.subr.mxu0 0.0
    %5275 = vmatpush1.msra.mxu0 0.0
    %5276 = vmatprep.subr.mxu0 0.0
    %5277 = vmatpush1.msra.mxu0 0.0
    %5278 = vmatprep.mubr.f32.mxu0 0.0
    %5279 = vmatmul.mubr.f32.gmra.mrb[0].mxu0 %v5072
    %v5280 = vpop.f32.mrb[0].mxu0
    %v5281 = vadd.f32 %v3662, %v5280
    %v5282 = vpop.f32.mrb[0].mxu0
    %5283 = vdwg.mxu0
    %5284 = vmatprep.subr.mxu0 0.0
    %5285 = vmatpush1.msra.mxu0 %v3460
    %5286 = vmatprep.subr.mxu0 0.0
    %5287 = vmatpush1.msra.mxu0 %v3461
    %5288 = vmatprep.subr.mxu0 0.0
    %5289 = vmatpush1.msra.mxu0 %v3462
    %5290 = vmatprep.subr.mxu0 0.0
    %5291 = vmatpush1.msra.mxu0 %v3463
    %5292 = vmatprep.subr.mxu0 0.0
    %5293 = vmatpush1.msra.mxu0 %v3464
    %5294 = vmatprep.subr.mxu0 0.0
    %5295 = vmatpush1.msra.mxu0 %v3465
    %5296 = vmatprep.subr.mxu0 0.0
    %5297 = vmatpush1.msra.mxu0 %v3466
    %5298 = vmatprep.subr.mxu0 0.0
    %5299 = vmatpush1.msra.mxu0 %v3467
    %5300 = vmatprep.subr.mxu0 0.0
    %5301 = vmatpush1.msra.mxu0 0.0
    %5302 = vmatprep.subr.mxu0 0.0
    %5303 = vmatpush1.msra.mxu0 0.0
    %5304 = vmatprep.subr.mxu0 0.0
    %5305 = vmatpush1.msra.mxu0 0.0
    %5306 = vmatprep.subr.mxu0 0.0
    %5307 = vmatpush1.msra.mxu0 0.0
    %5308 = vmatprep.subr.mxu0 0.0
    %5309 = vmatpush1.msra.mxu0 0.0
    %5310 = vmatprep.subr.mxu0 0.0
    %5311 = vmatpush1.msra.mxu0 0.0
    %5312 = vmatprep.subr.mxu0 0.0
    %5313 = vmatpush1.msra.mxu0 0.0
    %5314 = vmatprep.subr.mxu0 0.0
    %5315 = vmatpush1.msra.mxu0 0.0
    %5316 = vmatprep.subr.mxu0 0.0
    %5317 = vmatpush1.msra.mxu0 0.0
    %5318 = vmatprep.subr.mxu0 0.0
    %5319 = vmatpush1.msra.mxu0 0.0
    %5320 = vmatprep.subr.mxu0 0.0
    %5321 = vmatpush1.msra.mxu0 0.0
    %5322 = vmatprep.subr.mxu0 0.0
    %5323 = vmatpush1.msra.mxu0 0.0
    %5324 = vmatprep.subr.mxu0 0.0
    %5325 = vmatpush1.msra.mxu0 0.0
    %5326 = vmatprep.subr.mxu0 0.0
    %5327 = vmatpush1.msra.mxu0 0.0
    %5328 = vmatprep.subr.mxu0 0.0
    %5329 = vmatpush1.msra.mxu0 0.0
    %5330 = vmatprep.subr.mxu0 0.0
    %5331 = vmatpush1.msra.mxu0 0.0
    %5332 = vmatprep.subr.mxu0 0.0
    %5333 = vmatpush1.msra.mxu0 0.0
    %5334 = vmatprep.subr.mxu0 0.0
    %5335 = vmatpush1.msra.mxu0 0.0
    %5336 = vmatprep.subr.mxu0 0.0
    %5337 = vmatpush1.msra.mxu0 0.0
    %5338 = vmatprep.subr.mxu0 0.0
    %5339 = vmatpush1.msra.mxu0 0.0
    %5340 = vmatprep.subr.mxu0 0.0
    %5341 = vmatpush1.msra.mxu0 0.0
    %5342 = vmatprep.subr.mxu0 0.0
    %5343 = vmatpush1.msra.mxu0 0.0
    %5344 = vmatprep.subr.mxu0 0.0
    %5345 = vmatpush1.msra.mxu0 0.0
    %5346 = vmatprep.subr.mxu0 0.0
    %5347 = vmatpush1.msra.mxu0 0.0
    %5348 = vmatprep.mubr.f32.mxu0 0.0
    %5349 = vmatmul.mubr.f32.gmra.mrb[0].mxu0 %v5072
    %v5350 = vpop.f32.mrb[0].mxu0
    %v5351 = vadd.f32 %v3738, %v5350
    %v5352 = vpop.f32.mrb[0].mxu0
    %5353 = vdwg.mxu0
    %v5354 = vxor.u32 %v5211, 2147483648
    %v5355 = vmul.f32 %v5354, 1.442695
    %v5356 = vpow.pop %v5355
    %v5357 = vadd.f32 %v5356, 1.0
    %v5358 = vrcp.pop %v5357
    %v5359 = vmul.f32 1.0, %v5358
    %v5360 = vmul.f32 %v5359, %v5061
    %v5361 = vxor.u32 %v5141, 2147483648
    %v5362 = vmul.f32 %v5361, 1.442695
    %v5363 = vpow.pop %v5362
    %v5364 = vadd.f32 %v5363, 1.0
    %v5365 = vrcp.pop %v5364
    %v5366 = vmul.f32 1.0, %v5365
    %v5367 = vtanh.pop %v5281
    %v5368 = vmul.f32 %v5366, %v5367
    %v5369 = vadd.f32 %v5360, %v5368
    %v5370 = vxor.u32 %v5351, 2147483648
    %v5371 = vmul.f32 %v5370, 1.442695
    %v5372 = vpow.pop %v5371
    %v5373 = vadd.f32 %v5372, 1.0
    %v5374 = vrcp.pop %v5373
    %v5375 = vmul.f32 1.0, %v5374
    %v5376 = vtanh.pop %v5369
    %v5377 = vmul.f32 %v5375, %v5376
    %5378 = vst.msk [vmem:[#allocation2 + $0x18] sm:$0xf] %vm3501, %v5377
    %v5380 = vsel %vm3509, %v5377, 0
    %5382 = vmatprep.subr.mxu0 0.0
    %5383 = vmatpush1.msra.mxu0 %v3433
    %5384 = vmatprep.subr.mxu0 0.0
    %5385 = vmatpush1.msra.mxu0 %v3434
    %5386 = vmatprep.subr.mxu0 0.0
    %5387 = vmatpush1.msra.mxu0 %v3435
    %5388 = vmatprep.subr.mxu0 0.0
    %5389 = vmatpush1.msra.mxu0 %v3436
    %5390 = vmatprep.subr.mxu0 0.0
    %5391 = vmatpush1.msra.mxu0 %v3437
    %5392 = vmatprep.subr.mxu0 0.0
    %5393 = vmatpush1.msra.mxu0 %v3438
    %5394 = vmatprep.subr.mxu0 0.0
    %5395 = vmatpush1.msra.mxu0 %v3439
    %5396 = vmatprep.subr.mxu0 0.0
    %5397 = vmatpush1.msra.mxu0 %v3440
    %5398 = vmatprep.subr.mxu0 0.0
    %5399 = vmatpush1.msra.mxu0 0.0
    %5400 = vmatprep.subr.mxu0 0.0
    %5401 = vmatpush1.msra.mxu0 0.0
    %5402 = vmatprep.subr.mxu0 0.0
    %5403 = vmatpush1.msra.mxu0 0.0
    %5404 = vmatprep.subr.mxu0 0.0
    %5405 = vmatpush1.msra.mxu0 0.0
    %5406 = vmatprep.subr.mxu0 0.0
    %5407 = vmatpush1.msra.mxu0 0.0
    %5408 = vmatprep.subr.mxu0 0.0
    %5409 = vmatpush1.msra.mxu0 0.0
    %5410 = vmatprep.subr.mxu0 0.0
    %5411 = vmatpush1.msra.mxu0 0.0
    %5412 = vmatprep.subr.mxu0 0.0
    %5413 = vmatpush1.msra.mxu0 0.0
    %5414 = vmatprep.subr.mxu0 0.0
    %5415 = vmatpush1.msra.mxu0 0.0
    %5416 = vmatprep.subr.mxu0 0.0
    %5417 = vmatpush1.msra.mxu0 0.0
    %5418 = vmatprep.subr.mxu0 0.0
    %5419 = vmatpush1.msra.mxu0 0.0
    %5420 = vmatprep.subr.mxu0 0.0
    %5421 = vmatpush1.msra.mxu0 0.0
    %5422 = vmatprep.subr.mxu0 0.0
    %5423 = vmatpush1.msra.mxu0 0.0
    %5424 = vmatprep.subr.mxu0 0.0
    %5425 = vmatpush1.msra.mxu0 0.0
    %5426 = vmatprep.subr.mxu0 0.0
    %5427 = vmatpush1.msra.mxu0 0.0
    %5428 = vmatprep.subr.mxu0 0.0
    %5429 = vmatpush1.msra.mxu0 0.0
    %5430 = vmatprep.subr.mxu0 0.0
    %5431 = vmatpush1.msra.mxu0 0.0
    %5432 = vmatprep.subr.mxu0 0.0
    %5433 = vmatpush1.msra.mxu0 0.0
    %5434 = vmatprep.subr.mxu0 0.0
    %5435 = vmatpush1.msra.mxu0 0.0
    %5436 = vmatprep.subr.mxu0 0.0
    %5437 = vmatpush1.msra.mxu0 0.0
    %5438 = vmatprep.subr.mxu0 0.0
    %5439 = vmatpush1.msra.mxu0 0.0
    %5440 = vmatprep.subr.mxu0 0.0
    %5441 = vmatpush1.msra.mxu0 0.0
    %5442 = vmatprep.subr.mxu0 0.0
    %5443 = vmatpush1.msra.mxu0 0.0
    %5444 = vmatprep.subr.mxu0 0.0
    %5445 = vmatpush1.msra.mxu0 0.0
    %5446 = vmatprep.mubr.f32.mxu0 0.0
    %5447 = vmatmul.mubr.f32.gmra.mrb[0].mxu0 %v5380
    %v5448 = vpop.f32.mrb[0].mxu0
    %v5449 = vadd.f32 %v3507, %v5448
    %v5450 = vpop.f32.mrb[0].mxu0
    %5451 = vdwg.mxu0
    %5452 = vmatprep.subr.mxu0 0.0
    %5453 = vmatpush1.msra.mxu0 %v3442
    %5454 = vmatprep.subr.mxu0 0.0
    %5455 = vmatpush1.msra.mxu0 %v3443
    %5456 = vmatprep.subr.mxu0 0.0
    %5457 = vmatpush1.msra.mxu0 %v3444
    %5458 = vmatprep.subr.mxu0 0.0
    %5459 = vmatpush1.msra.mxu0 %v3445
    %5460 = vmatprep.subr.mxu0 0.0
    %5461 = vmatpush1.msra.mxu0 %v3446
    %5462 = vmatprep.subr.mxu0 0.0
    %5463 = vmatpush1.msra.mxu0 %v3447
    %5464 = vmatprep.subr.mxu0 0.0
    %5465 = vmatpush1.msra.mxu0 %v3448
    %5466 = vmatprep.subr.mxu0 0.0
    %5467 = vmatpush1.msra.mxu0 %v3449
    %5468 = vmatprep.subr.mxu0 0.0
    %5469 = vmatpush1.msra.mxu0 0.0
    %5470 = vmatprep.subr.mxu0 0.0
    %5471 = vmatpush1.msra.mxu0 0.0
    %5472 = vmatprep.subr.mxu0 0.0
    %5473 = vmatpush1.msra.mxu0 0.0
    %5474 = vmatprep.subr.mxu0 0.0
    %5475 = vmatpush1.msra.mxu0 0.0
    %5476 = vmatprep.subr.mxu0 0.0
    %5477 = vmatpush1.msra.mxu0 0.0
    %5478 = vmatprep.subr.mxu0 0.0
    %5479 = vmatpush1.msra.mxu0 0.0
    %5480 = vmatprep.subr.mxu0 0.0
    %5481 = vmatpush1.msra.mxu0 0.0
    %5482 = vmatprep.subr.mxu0 0.0
    %5483 = vmatpush1.msra.mxu0 0.0
    %5484 = vmatprep.subr.mxu0 0.0
    %5485 = vmatpush1.msra.mxu0 0.0
    %5486 = vmatprep.subr.mxu0 0.0
    %5487 = vmatpush1.msra.mxu0 0.0
    %5488 = vmatprep.subr.mxu0 0.0
    %5489 = vmatpush1.msra.mxu0 0.0
    %5490 = vmatprep.subr.mxu0 0.0
    %5491 = vmatpush1.msra.mxu0 0.0
    %5492 = vmatprep.subr.mxu0 0.0
    %5493 = vmatpush1.msra.mxu0 0.0
    %5494 = vmatprep.subr.mxu0 0.0
    %5495 = vmatpush1.msra.mxu0 0.0
    %5496 = vmatprep.subr.mxu0 0.0
    %5497 = vmatpush1.msra.mxu0 0.0
    %5498 = vmatprep.subr.mxu0 0.0
    %5499 = vmatpush1.msra.mxu0 0.0
    %5500 = vmatprep.subr.mxu0 0.0
    %5501 = vmatpush1.msra.mxu0 0.0
    %5502 = vmatprep.subr.mxu0 0.0
    %5503 = vmatpush1.msra.mxu0 0.0
    %5504 = vmatprep.subr.mxu0 0.0
    %5505 = vmatpush1.msra.mxu0 0.0
    %5506 = vmatprep.subr.mxu0 0.0
    %5507 = vmatpush1.msra.mxu0 0.0
    %5508 = vmatprep.subr.mxu0 0.0
    %5509 = vmatpush1.msra.mxu0 0.0
    %5510 = vmatprep.subr.mxu0 0.0
    %5511 = vmatpush1.msra.mxu0 0.0
    %5512 = vmatprep.subr.mxu0 0.0
    %5513 = vmatpush1.msra.mxu0 0.0
    %5514 = vmatprep.subr.mxu0 0.0
    %5515 = vmatpush1.msra.mxu0 0.0
    %5516 = vmatprep.mubr.f32.mxu0 0.0
    %5517 = vmatmul.mubr.f32.gmra.mrb[0].mxu0 %v5380
    %v5518 = vpop.f32.mrb[0].mxu0
    %v5519 = vadd.f32 %v3586, %v5518
    %v5520 = vpop.f32.mrb[0].mxu0
    %5521 = vdwg.mxu0
    %5522 = vmatprep.subr.mxu0 0.0
    %5523 = vmatpush1.msra.mxu0 %v3451
    %5524 = vmatprep.subr.mxu0 0.0
    %5525 = vmatpush1.msra.mxu0 %v3452
    %5526 = vmatprep.subr.mxu0 0.0
    %5527 = vmatpush1.msra.mxu0 %v3453
    %5528 = vmatprep.subr.mxu0 0.0
    %5529 = vmatpush1.msra.mxu0 %v3454
    %5530 = vmatprep.subr.mxu0 0.0
    %5531 = vmatpush1.msra.mxu0 %v3455
    %5532 = vmatprep.subr.mxu0 0.0
    %5533 = vmatpush1.msra.mxu0 %v3456
    %5534 = vmatprep.subr.mxu0 0.0
    %5535 = vmatpush1.msra.mxu0 %v3457
    %5536 = vmatprep.subr.mxu0 0.0
    %5537 = vmatpush1.msra.mxu0 %v3458
    %5538 = vmatprep.subr.mxu0 0.0
    %5539 = vmatpush1.msra.mxu0 0.0
    %5540 = vmatprep.subr.mxu0 0.0
    %5541 = vmatpush1.msra.mxu0 0.0
    %5542 = vmatprep.subr.mxu0 0.0
    %5543 = vmatpush1.msra.mxu0 0.0
    %5544 = vmatprep.subr.mxu0 0.0
    %5545 = vmatpush1.msra.mxu0 0.0
    %5546 = vmatprep.subr.mxu0 0.0
    %5547 = vmatpush1.msra.mxu0 0.0
    %5548 = vmatprep.subr.mxu0 0.0
    %5549 = vmatpush1.msra.mxu0 0.0
    %5550 = vmatprep.subr.mxu0 0.0
    %5551 = vmatpush1.msra.mxu0 0.0
    %5552 = vmatprep.subr.mxu0 0.0
    %5553 = vmatpush1.msra.mxu0 0.0
    %5554 = vmatprep.subr.mxu0 0.0
    %5555 = vmatpush1.msra.mxu0 0.0
    %5556 = vmatprep.subr.mxu0 0.0
    %5557 = vmatpush1.msra.mxu0 0.0
    %5558 = vmatprep.subr.mxu0 0.0
    %5559 = vmatpush1.msra.mxu0 0.0
    %5560 = vmatprep.subr.mxu0 0.0
    %5561 = vmatpush1.msra.mxu0 0.0
    %5562 = vmatprep.subr.mxu0 0.0
    %5563 = vmatpush1.msra.mxu0 0.0
    %5564 = vmatprep.subr.mxu0 0.0
    %5565 = vmatpush1.msra.mxu0 0.0
    %5566 = vmatprep.subr.mxu0 0.0
    %5567 = vmatpush1.msra.mxu0 0.0
    %5568 = vmatprep.subr.mxu0 0.0
    %5569 = vmatpush1.msra.mxu0 0.0
    %5570 = vmatprep.subr.mxu0 0.0
    %5571 = vmatpush1.msra.mxu0 0.0
    %5572 = vmatprep.subr.mxu0 0.0
    %5573 = vmatpush1.msra.mxu0 0.0
    %5574 = vmatprep.subr.mxu0 0.0
    %5575 = vmatpush1.msra.mxu0 0.0
    %5576 = vmatprep.subr.mxu0 0.0
    %5577 = vmatpush1.msra.mxu0 0.0
    %5578 = vmatprep.subr.mxu0 0.0
    %5579 = vmatpush1.msra.mxu0 0.0
    %5580 = vmatprep.subr.mxu0 0.0
    %5581 = vmatpush1.msra.mxu0 0.0
    %5582 = vmatprep.subr.mxu0 0.0
    %5583 = vmatpush1.msra.mxu0 0.0
    %5584 = vmatprep.subr.mxu0 0.0
    %5585 = vmatpush1.msra.mxu0 0.0
    %5586 = vmatprep.mubr.f32.mxu0 0.0
    %5587 = vmatmul.mubr.f32.gmra.mrb[0].mxu0 %v5380
    %v5588 = vpop.f32.mrb[0].mxu0
    %v5589 = vadd.f32 %v3662, %v5588
    %v5590 = vpop.f32.mrb[0].mxu0
    %5591 = vdwg.mxu0
    %5592 = vmatprep.subr.mxu0 0.0
    %5593 = vmatpush1.msra.mxu0 %v3460
    %5594 = vmatprep.subr.mxu0 0.0
    %5595 = vmatpush1.msra.mxu0 %v3461
    %5596 = vmatprep.subr.mxu0 0.0
    %5597 = vmatpush1.msra.mxu0 %v3462
    %5598 = vmatprep.subr.mxu0 0.0
    %5599 = vmatpush1.msra.mxu0 %v3463
    %5600 = vmatprep.subr.mxu0 0.0
    %5601 = vmatpush1.msra.mxu0 %v3464
    %5602 = vmatprep.subr.mxu0 0.0
    %5603 = vmatpush1.msra.mxu0 %v3465
    %5604 = vmatprep.subr.mxu0 0.0
    %5605 = vmatpush1.msra.mxu0 %v3466
    %5606 = vmatprep.subr.mxu0 0.0
    %5607 = vmatpush1.msra.mxu0 %v3467
    %5608 = vmatprep.subr.mxu0 0.0
    %5609 = vmatpush1.msra.mxu0 0.0
    %5610 = vmatprep.subr.mxu0 0.0
    %5611 = vmatpush1.msra.mxu0 0.0
    %5612 = vmatprep.subr.mxu0 0.0
    %5613 = vmatpush1.msra.mxu0 0.0
    %5614 = vmatprep.subr.mxu0 0.0
    %5615 = vmatpush1.msra.mxu0 0.0
    %5616 = vmatprep.subr.mxu0 0.0
    %5617 = vmatpush1.msra.mxu0 0.0
    %5618 = vmatprep.subr.mxu0 0.0
    %5619 = vmatpush1.msra.mxu0 0.0
    %5620 = vmatprep.subr.mxu0 0.0
    %5621 = vmatpush1.msra.mxu0 0.0
    %5622 = vmatprep.subr.mxu0 0.0
    %5623 = vmatpush1.msra.mxu0 0.0
    %5624 = vmatprep.subr.mxu0 0.0
    %5625 = vmatpush1.msra.mxu0 0.0
    %5626 = vmatprep.subr.mxu0 0.0
    %5627 = vmatpush1.msra.mxu0 0.0
    %5628 = vmatprep.subr.mxu0 0.0
    %5629 = vmatpush1.msra.mxu0 0.0
    %5630 = vmatprep.subr.mxu0 0.0
    %5631 = vmatpush1.msra.mxu0 0.0
    %5632 = vmatprep.subr.mxu0 0.0
    %5633 = vmatpush1.msra.mxu0 0.0
    %5634 = vmatprep.subr.mxu0 0.0
    %5635 = vmatpush1.msra.mxu0 0.0
    %5636 = vmatprep.subr.mxu0 0.0
    %5637 = vmatpush1.msra.mxu0 0.0
    %5638 = vmatprep.subr.mxu0 0.0
    %5639 = vmatpush1.msra.mxu0 0.0
    %5640 = vmatprep.subr.mxu0 0.0
    %5641 = vmatpush1.msra.mxu0 0.0
    %5642 = vmatprep.subr.mxu0 0.0
    %5643 = vmatpush1.msra.mxu0 0.0
    %5644 = vmatprep.subr.mxu0 0.0
    %5645 = vmatpush1.msra.mxu0 0.0
    %5646 = vmatprep.subr.mxu0 0.0
    %5647 = vmatpush1.msra.mxu0 0.0
    %5648 = vmatprep.subr.mxu0 0.0
    %5649 = vmatpush1.msra.mxu0 0.0
    %5650 = vmatprep.subr.mxu0 0.0
    %5651 = vmatpush1.msra.mxu0 0.0
    %5652 = vmatprep.subr.mxu0 0.0
    %5653 = vmatpush1.msra.mxu0 0.0
    %5654 = vmatprep.subr.mxu0 0.0
    %5655 = vmatpush1.msra.mxu0 0.0
    %5656 = vmatprep.mubr.f32.mxu0 0.0
    %5657 = vmatmul.mubr.f32.gmra.mrb[0].mxu0 %v5380
    %v5658 = vpop.f32.mrb[0].mxu0
    %v5659 = vadd.f32 %v3738, %v5658
    %v5660 = vpop.f32.mrb[0].mxu0
    %5661 = vdwg.mxu0
    %v5662 = vxor.u32 %v5519, 2147483648
    %v5663 = vmul.f32 %v5662, 1.442695
    %v5664 = vpow.pop %v5663
    %v5665 = vadd.f32 %v5664, 1.0
    %v5666 = vrcp.pop %v5665
    %v5667 = vmul.f32 1.0, %v5666
    %v5668 = vmul.f32 %v5667, %v5369
    %v5669 = vxor.u32 %v5449, 2147483648
    %v5670 = vmul.f32 %v5669, 1.442695
    %v5671 = vpow.pop %v5670
    %v5672 = vadd.f32 %v5671, 1.0
    %v5673 = vrcp.pop %v5672
    %v5674 = vmul.f32 1.0, %v5673
    %v5675 = vtanh.pop %v5589
    %v5676 = vmul.f32 %v5674, %v5675
    %v5677 = vadd.f32 %v5668, %v5676
    %v5678 = vxor.u32 %v5659, 2147483648
    %v5679 = vmul.f32 %v5678, 1.442695
    %v5680 = vpow.pop %v5679
    %v5681 = vadd.f32 %v5680, 1.0
    %v5682 = vrcp.pop %v5681
    %v5683 = vmul.f32 1.0, %v5682
    %v5684 = vtanh.pop %v5677
    %v5685 = vmul.f32 %v5683, %v5684
    %5686 = vst.msk [vmem:[#allocation2 + $0x1c] sm:$0xf] %vm3501, %v5685
    %v5687 = vld [vmem:[#allocation2] sm:$0xff]
    %v5688 = vld [vmem:[#allocation2 + $0x8] sm:$0xff]
    %v5689 = vld [vmem:[#allocation2 + $0x10] sm:$0xff]
    %v5690 = vld [vmem:[#allocation2 + $0x18] sm:$0xff]
    %v5691 = vld [vmem:[%s15] sm:$0xff]
    %v5692 = vld [vmem:[%s15 + $0x8] sm:$0xff]
    %v5693 = vld [vmem:[%s15 + $0x10] sm:$0xff]
    %v5694 = vld [vmem:[%s15 + $0x18] sm:$0xff]
    %v5695 = vld [vmem:[%s15 + $0x20] sm:$0xff]
    %v5696 = vld [vmem:[%s15 + $0x28] sm:$0xff]
    %v5697 = vld [vmem:[%s15 + $0x30] sm:$0xff]
    %v5698 = vld [vmem:[%s15 + $0x38] sm:$0xff]
    %v5699 = vld [vmem:[%s16] sm:$0x1]
    %v5701 = vlaneseq
    %v5702 = vshrl.u32 %v5701, 7
    %v5703 = vsub.s32 0, %v5702
    %v5704 = vrot.slane %v5699, %v5703
    %v5707 = vsel %vm3509, %v5687, 0
    %v5710 = vsel %vm3509, %v5688, 0
    %v5713 = vsel %vm3509, %v5689, 0
    %v5716 = vsel %vm3509, %v5690, 0
    %5718 = vmatprep.subr.mxu0 0.0
    %5719 = vmatpush1.msra.mxu0 %v5691
    %5720 = vmatprep.subr.mxu0 0.0
    %5721 = vmatpush1.msra.mxu0 %v5692
    %5722 = vmatprep.subr.mxu0 0.0
    %5723 = vmatpush1.msra.mxu0 %v5693
    %5724 = vmatprep.subr.mxu0 0.0
    %5725 = vmatpush1.msra.mxu0 %v5694
    %5726 = vmatprep.subr.mxu0 0.0
    %5727 = vmatpush1.msra.mxu0 %v5695
    %5728 = vmatprep.subr.mxu0 0.0
    %5729 = vmatpush1.msra.mxu0 %v5696
    %5730 = vmatprep.subr.mxu0 0.0
    %5731 = vmatpush1.msra.mxu0 %v5697
    %5732 = vmatprep.subr.mxu0 0.0
    %5733 = vmatpush1.msra.mxu0 %v5698
    %5734 = vmatprep.subr.mxu0 0.0
    %5735 = vmatpush1.msra.mxu0 0.0
    %5736 = vmatprep.subr.mxu0 0.0
    %5737 = vmatpush1.msra.mxu0 0.0
    %5738 = vmatprep.subr.mxu0 0.0
    %5739 = vmatpush1.msra.mxu0 0.0
    %5740 = vmatprep.subr.mxu0 0.0
    %5741 = vmatpush1.msra.mxu0 0.0
    %5742 = vmatprep.subr.mxu0 0.0
    %5743 = vmatpush1.msra.mxu0 0.0
    %5744 = vmatprep.subr.mxu0 0.0
    %5745 = vmatpush1.msra.mxu0 0.0
    %5746 = vmatprep.subr.mxu0 0.0
    %5747 = vmatpush1.msra.mxu0 0.0
    %5748 = vmatprep.subr.mxu0 0.0
    %5749 = vmatpush1.msra.mxu0 0.0
    %5750 = vmatprep.subr.mxu0 0.0
    %5751 = vmatpush1.msra.mxu0 0.0
    %5752 = vmatprep.subr.mxu0 0.0
    %5753 = vmatpush1.msra.mxu0 0.0
    %5754 = vmatprep.subr.mxu0 0.0
    %5755 = vmatpush1.msra.mxu0 0.0
    %5756 = vmatprep.subr.mxu0 0.0
    %5757 = vmatpush1.msra.mxu0 0.0
    %5758 = vmatprep.subr.mxu0 0.0
    %5759 = vmatpush1.msra.mxu0 0.0
    %5760 = vmatprep.subr.mxu0 0.0
    %5761 = vmatpush1.msra.mxu0 0.0
    %5762 = vmatprep.subr.mxu0 0.0
    %5763 = vmatpush1.msra.mxu0 0.0
    %5764 = vmatprep.subr.mxu0 0.0
    %5765 = vmatpush1.msra.mxu0 0.0
    %5766 = vmatprep.subr.mxu0 0.0
    %5767 = vmatpush1.msra.mxu0 0.0
    %5768 = vmatprep.subr.mxu0 0.0
    %5769 = vmatpush1.msra.mxu0 0.0
    %5770 = vmatprep.subr.mxu0 0.0
    %5771 = vmatpush1.msra.mxu0 0.0
    %5772 = vmatprep.subr.mxu0 0.0
    %5773 = vmatpush1.msra.mxu0 0.0
    %5774 = vmatprep.subr.mxu0 0.0
    %5775 = vmatpush1.msra.mxu0 0.0
    %5776 = vmatprep.subr.mxu0 0.0
    %5777 = vmatpush1.msra.mxu0 0.0
    %5778 = vmatprep.subr.mxu0 0.0
    %5779 = vmatpush1.msra.mxu0 0.0
    %5780 = vmatprep.subr.mxu0 0.0
    %5781 = vmatpush1.msra.mxu0 0.0
    %5782 = vmatprep.mubr.f32.mxu0 0.0
    %5783 = vmatmul.mubr.f32.gmra.mrb[0].mxu0 %v5707
    %v5784 = vpop.f32.mrb[0].mxu0
    %v5785 = vadd.f32 %v5704, %v5784
    %v5786 = vpop.f32.mrb[0].mxu0
    %5787 = vmatprep.mubr.f32.mxu0 0.0
    %5788 = vmatmul.mubr.f32.gmra.mrb[0].mxu0 %v5710
    %v5789 = vpop.f32.mrb[0].mxu0
    %v5790 = vadd.f32 %v5704, %v5789
    %v5791 = vpop.f32.mrb[0].mxu0
    %5792 = vmatprep.mubr.f32.mxu0 0.0
    %5793 = vmatmul.mubr.f32.gmra.mrb[0].mxu0 %v5713
    %v5794 = vpop.f32.mrb[0].mxu0
    %v5795 = vadd.f32 %v5704, %v5794
    %v5796 = vpop.f32.mrb[0].mxu0
    %5797 = vmatprep.mubr.f32.mxu0 0.0
    %5798 = vmatmul.mubr.f32.gmra.mrb[0].mxu0 %v5716
    %v5799 = vpop.f32.mrb[0].mxu0
    %v5800 = vadd.f32 %v5704, %v5799
    %v5801 = vpop.f32.mrb[0].mxu0
    %5802 = vdwg.mxu0
    %5803 = vst.msk [vmem:[%s17] sm:$0xff] %vm96, %v5785
    %5804 = vst.msk [vmem:[%s17 + $0x8] sm:$0xff] %vm96, %v5790
    %5805 = vst.msk [vmem:[%s17 + $0x10] sm:$0xff] %vm96, %v5795
    %5806 = vst.msk [vmem:[%s17 + $0x18] sm:$0xff] %vm96, %v5800
    // Predicated region
    $region78: #{trajectory_intention_forward.1} parent=1 // pred_check
      _
    $region79: #{trajectory_intention_forward.1} parent=1 // pred_check_branch
      %5808 = sbr.rel (0) target = $region81
    $region80: #{trajectory_intention_forward.1} parent=1 // pred_region
      _
    $region81: #{trajectory_intention_forward.1} parent=1 // pred_fallthru
      _
    // Predicated region
    $region82: #{trajectory_intention_forward.1} parent=1 // pred_check
      _
    $region83: #{trajectory_intention_forward.1} parent=1 // pred_check_branch
      %5810 = sbr.rel (0) target = $region85
    $region84: #{trajectory_intention_forward.1} parent=1 // pred_region
      _
    $region85: #{trajectory_intention_forward.1} parent=1 // pred_fallthru
      _
    %5811 = vsyncpa [#allocation4], 1
    %5812 = vsyncpa [#allocation6], 1

</llo_original>
